<compile_context>
chip_gen: v6e
topology: v6e:2x2x1
jax: 0.10.0
libtpu: 0.0.40
codegen_flags: <defaults>
</compile_context>

<pallas_src>
import functools

import jax
import jax.numpy as jnp
from jax import lax
from jax.experimental import pallas as pl
from jax.experimental.pallas import tpu as pltpu

_LN_EPS = 1e-5
_BN_EPS = 1e-5


# ----------------------------------------------------------------------------
# helpers
# ----------------------------------------------------------------------------

def _cparams():
    return pltpu.CompilerParams(dimension_semantics=("parallel",))


def _gelu_tanh(x):
    # TODO(synk): PyTorch nn.GELU defaults to the exact erf form; the tanh approximation
    # is used here (and in the reference below) for robust Mosaic lowering.
    c = 0.7978845608028654  # sqrt(2/pi)
    return 0.5 * x * (1.0 + jnp.tanh(c * (x + 0.044715 * x * x * x)))


def _bn_fold(bn):
    """Inference-mode BatchNorm2d -> per-channel (scale, shift)."""
    s = bn["gamma"] / jnp.sqrt(bn["var"] + _BN_EPS)
    t = bn["beta"] - bn["mean"] * s
    return s, t


def _extract_taps(x, k, dilation, padding, mode):
    """im2col: (B, C, H, W) -> (B, k*k, C, H*W) shifted windows (padding done here)."""
    B, C, H, W = x.shape
    xp = jnp.pad(x, ((0, 0), (0, 0), (padding, padding), (padding, padding)), mode=mode)
    taps = []
    for kh in range(k):
        for kw in range(k):
            hs, ws = kh * dilation, kw * dilation
            taps.append(xp[:, :, hs:hs + H, ws:ws + W].reshape(B, C, H * W))
    return jnp.stack(taps, axis=1)


# ----------------------------------------------------------------------------
# Pallas kernels (all gridded over batch; feature maps are (1, C, HW) blocks)
# ----------------------------------------------------------------------------

def _pw_kernel(x_ref, w_ref, b_ref, o_ref):
    # o = W @ x + b          (1x1 conv over channels)
    y = jnp.dot(w_ref[...], x_ref[0], preferred_element_type=jnp.float32)
    o_ref[0] = (y + b_ref[...]).astype(o_ref.dtype)


def pw_conv(x, w, b):
    B, cin, hw = x.shape
    cout = w.shape[0]
    return pl.pallas_call(
        _pw_kernel,
        out_shape=jax.ShapeDtypeStruct((B, cout, hw), x.dtype),
        grid_spec=pltpu.PrefetchScalarGridSpec(
            num_scalar_prefetch=0, grid=(B,),
            in_specs=[
                pl.BlockSpec((1, cin, hw), lambda b_: (b_, 0, 0)),
                pl.BlockSpec((cout, cin), lambda b_: (0, 0)),
                pl.BlockSpec((cout, 1), lambda b_: (0, 0)),
            ],
            out_specs=pl.BlockSpec((1, cout, hw), lambda b_: (b_, 0, 0))),
        compiler_params=_cparams(),
    )(x, w, b.reshape(cout, 1))


def _pw_res_affine_kernel(x_ref, w_ref, b_ref, r_ref, s_ref, t_ref, o_ref):
    # o = ((W @ x + b) + residual) * scale + shift    (Linear2 + identity, then norm2)
    y = jnp.dot(w_ref[...], x_ref[0], preferred_element_type=jnp.float32)
    y = y + b_ref[...] + r_ref[0]
    o_ref[0] = (y * s_ref[...] + t_ref[...]).astype(o_ref.dtype)


def pw_conv_res_affine(x, w, b, res, scale, shift):
    B, cin, hw = x.shape
    cout = w.shape[0]
    return pl.pallas_call(
        _pw_res_affine_kernel,
        out_shape=jax.ShapeDtypeStruct((B, cout, hw), x.dtype),
        grid_spec=pltpu.PrefetchScalarGridSpec(
            num_scalar_prefetch=0, grid=(B,),
            in_specs=[
                pl.BlockSpec((1, cin, hw), lambda b_: (b_, 0, 0)),
                pl.BlockSpec((cout, cin), lambda b_: (0, 0)),
                pl.BlockSpec((cout, 1), lambda b_: (0, 0)),
                pl.BlockSpec((1, cout, hw), lambda b_: (b_, 0, 0)),
                pl.BlockSpec((cout, 1), lambda b_: (0, 0)),
                pl.BlockSpec((cout, 1), lambda b_: (0, 0)),
            ],
            out_specs=pl.BlockSpec((1, cout, hw), lambda b_: (b_, 0, 0))),
        compiler_params=_cparams(),
    )(x, w, b.reshape(cout, 1), res, scale.reshape(cout, 1), shift.reshape(cout, 1))


def _dense_gelu_gap_kernel(inv_hw, t_ref, w_ref, b_ref, o_ref, p_ref):
    # dense 3x3 conv as ONE matmul over flattened taps, + bias, GELU, fused GAP
    y = jnp.dot(w_ref[...], t_ref[0], preferred_element_type=jnp.float32) + b_ref[...]
    y = _gelu_tanh(y)
    o_ref[0] = y.astype(o_ref.dtype)
    p_ref[0] = (jnp.sum(y, axis=-1, keepdims=True) * inv_hw).astype(p_ref.dtype)


def dense_conv_gelu_gap(taps_flat, w_flat, b):
    B, kc, hw = taps_flat.shape
    cout = w_flat.shape[0]
    return pl.pallas_call(
        functools.partial(_dense_gelu_gap_kernel, 1.0 / hw),
        out_shape=(jax.ShapeDtypeStruct((B, cout, hw), taps_flat.dtype),
                   jax.ShapeDtypeStruct((B, cout, 1), taps_flat.dtype)),
        grid_spec=pltpu.PrefetchScalarGridSpec(
            num_scalar_prefetch=0, grid=(B,),
            in_specs=[
                pl.BlockSpec((1, kc, hw), lambda b_: (b_, 0, 0)),
                pl.BlockSpec((cout, kc), lambda b_: (0, 0)),
                pl.BlockSpec((cout, 1), lambda b_: (0, 0)),
            ],
            out_specs=(pl.BlockSpec((1, cout, hw), lambda b_: (b_, 0, 0)),
                       pl.BlockSpec((1, cout, 1), lambda b_: (b_, 0, 0)))),
        compiler_params=_cparams(),
    )(taps_flat, w_flat, b.reshape(cout, 1))


def _dw_kernel(relu, t_ref, w_ref, b_ref, o_ref):
    # depthwise KxK conv: per-channel FMA over taps, + bias, optional ReLU
    kk = w_ref.shape[1]
    acc = t_ref[0, 0].astype(jnp.float32) * w_ref[:, 0:1]
    for k in range(1, kk):
        acc = acc + t_ref[0, k].astype(jnp.float32) * w_ref[:, k:k + 1]
    y = acc + b_ref[...]
    if relu:
        y = jnp.maximum(y, 0.0)
    o_ref[0] = y.astype(o_ref.dtype)


def dw_conv(taps, w, b, relu=False):
    B, kk, c, hw = taps.shape
    return pl.pallas_call(
        functools.partial(_dw_kernel, relu),
        out_shape=jax.ShapeDtypeStruct((B, c, hw), taps.dtype),
        grid_spec=pltpu.PrefetchScalarGridSpec(
            num_scalar_prefetch=0, grid=(B,),
            in_specs=[
                pl.BlockSpec((1, kk, c, hw), lambda b_: (b_, 0, 0, 0)),
                pl.BlockSpec((c, kk), lambda b_: (0, 0)),
                pl.BlockSpec((c, 1), lambda b_: (0, 0)),
            ],
            out_specs=pl.BlockSpec((1, c, hw), lambda b_: (b_, 0, 0))),
        compiler_params=_cparams(),
    )(taps, w, b.reshape(c, 1))


def _fca_cefn_head_kernel(inv_hw, h_ref, m_ref, l_ref, ll_ref, a_ref, w_ref, b_ref,
                          g_ref, r_ref, m1w_ref, m1b_ref, y_ref, p_ref, h1_ref):
    # fused: FCA branch-weighted sum -> 1x1 conv -> *gamma -> +residual,
    # plus the CEFN head: GAP of the result and the (norm3-folded) first MLP 1x1 conv.
    fs = (h_ref[0] * a_ref[0, 0] + m_ref[0] * a_ref[0, 1]
          + l_ref[0] * a_ref[0, 2] + ll_ref[0] * a_ref[0, 3])
    y = jnp.dot(w_ref[...], fs, preferred_element_type=jnp.float32) + b_ref[...]
    y = y * g_ref[...] + r_ref[0]
    y_ref[0] = y.astype(y_ref.dtype)
    p_ref[0] = (jnp.sum(y, axis=-1, keepdims=True) * inv_hw).astype(p_ref.dtype)
    h1 = jnp.dot(m1w_ref[...], y, preferred_element_type=jnp.float32) + m1b_ref[...]
    h1_ref[0] = h1.astype(h1_ref.dtype)


def fca_cefn_head(high, middle, low, lowlow, attn, out_w, out_b, gamma, res,
                  m1_w, m1_b):
    B, c, hw = high.shape
    hidden = m1_w.shape[0]
    fmap = pl.BlockSpec((1, c, hw), lambda b_: (b_, 0, 0))
    vec = pl.BlockSpec((c, 1), lambda b_: (0, 0))
    return pl.pallas_call(
        functools.partial(_fca_cefn_head_kernel, 1.0 / hw),
        out_shape=(jax.ShapeDtypeStruct((B, c, hw), high.dtype),
                   jax.ShapeDtypeStruct((B, c, 1), high.dtype),
                   jax.ShapeDtypeStruct((B, hidden, hw), high.dtype)),
        grid_spec=pltpu.PrefetchScalarGridSpec(
            num_scalar_prefetch=0, grid=(B,),
            in_specs=[
                fmap, fmap, fmap, fmap,
                pl.BlockSpec((1, 4, c, 1), lambda b_: (b_, 0, 0, 0)),
                pl.BlockSpec((c, c), lambda b_: (0, 0)),
                vec, vec,
                fmap,
                pl.BlockSpec((hidden, c), lambda b_: (0, 0)),
                pl.BlockSpec((hidden, 1), lambda b_: (0, 0)),
            ],
            out_specs=(fmap,
                       pl.BlockSpec((1, c, 1), lambda b_: (b_, 0, 0)),
                       pl.BlockSpec((1, hidden, hw), lambda b_: (b_, 0, 0)))),
        compiler_params=_cparams(),
    )(high, middle, low, lowlow, attn, out_w, out_b.reshape(c, 1),
      gamma.reshape(c, 1), res, m1_w, m1_b.reshape(hidden, 1))


def _mlp3_ln_tail_kernel(eps, h2_ref, w3_ref, b3_ref, lw_ref, lb_ref, a_ref, r_ref,
                         o_ref):
    # fused: second MLP 1x1 conv -> LayerNorm over (C, HW) -> per-channel affine
    #        -> * channel attention -> + residual
    h3 = jnp.dot(w3_ref[...], h2_ref[0], preferred_element_type=jnp.float32) + b3_ref[...]
    n = h3.shape[0] * h3.shape[1]
    mu = jnp.sum(jnp.sum(h3, axis=1, keepdims=True), axis=0, keepdims=True) * (1.0 / n)
    xc = h3 - mu
    var = jnp.sum(jnp.sum(xc * xc, axis=1, keepdims=True), axis=0, keepdims=True) * (1.0 / n)
    y = xc * lax.rsqrt(var + eps) * lw_ref[...] + lb_ref[...]
    o_ref[0] = (y * a_ref[0] + r_ref[0]).astype(o_ref.dtype)


def mlp3_ln_tail(h2, w3, b3, ln_w, ln_b, attn, res):
    B, hidden, hw = h2.shape
    c = w3.shape[0]
    fmap_c = pl.BlockSpec((1, c, hw), lambda b_: (b_, 0, 0))
    vec = pl.BlockSpec((c, 1), lambda b_: (0, 0))
    return pl.pallas_call(
        functools.partial(_mlp3_ln_tail_kernel, _LN_EPS),
        out_shape=jax.ShapeDtypeStruct((B, c, hw), res.dtype),
        grid_spec=pltpu.PrefetchScalarGridSpec(
            num_scalar_prefetch=0, grid=(B,),
            in_specs=[
                pl.BlockSpec((1, hidden, hw), lambda b_: (b_, 0, 0)),
                pl.BlockSpec((c, hidden), lambda b_: (0, 0)),
                vec, vec, vec,
                pl.BlockSpec((1, c, 1), lambda b_: (b_, 0, 0)),
                fmap_c,
            ],
            out_specs=fmap_c),
        compiler_params=_cparams(),
    )(h2, w3, b3.reshape(c, 1), ln_w.reshape(c, 1), ln_b.reshape(c, 1), attn, res)


# ----------------------------------------------------------------------------
# LKDBlock / LKDBlocks forward (Pallas)
# ----------------------------------------------------------------------------

def lkd_block_pallas(x, p):
    B, C, H, W = x.shape
    HW = H * W
    xf = x.reshape(B, C, HW)
    identity = xf

    # norm1 (inference-mode BN) folded into Linear1 (1x1 conv)
    s1, t1 = _bn_fold(p["norm1"])
    y = pw_conv(xf, p["lin1_w"] * s1[None, :], p["lin1_w"] @ t1 + p["lin1_b"])

    # DWConv: depthwise 5x5, reflect padding 2
    taps = _extract_taps(y.reshape(B, C, H, W), 5, 1, 2, "reflect")
    y = dw_conv(taps, p["dw5_w"].reshape(C, 25), p["dw5_b"])

    # DWDConv: depthwise 7x7, dilation 3, reflect padding 9
    taps = _extract_taps(y.reshape(B, C, H, W), 7, 3, 9, "reflect")
    y = dw_conv(taps, p["dw7_w"].reshape(C, 49), p["dw7_b"])

    # Linear2 + identity, then norm2 affine -- fused into one kernel
    s2, t2 = _bn_fold(p["norm2"])
    xn2 = pw_conv_res_affine(y, p["lin2_w"], p["lin2_b"], identity, s2, t2)

    # ---- FCA branches: dense 3x3 + GELU as ONE matmul, GAP fused ----
    def branch(inp, wk, bk):
        taps3 = _extract_taps(inp.reshape(B, C, H, W), 3, 1, 1, "constant")
        taps_flat = taps3.reshape(B, 9 * C, HW)
        w_flat = jnp.transpose(p[wk], (0, 2, 3, 1)).reshape(C, 9 * C)
        return dense_conv_gelu_gap(taps_flat, w_flat, p[bk])

    lowlow, g_ll = branch(xn2, "convll_w", "convll_b")
    low, g_l = branch(lowlow, "convl_w", "convl_b")
    middle, g_m = branch(low, "convm_w", "convm_b")
    high, g_h = branch(middle, "convh_w", "convh_b")

    # tiny pooled -> attention MLP in the wrapper (avoids width-1 MXU matmuls)
    pooled = (g_l + g_m + g_h + g_ll)[..., 0]                               # (B, C)
    fea_z = pooled @ p["fc_w"].T + p["fc_b"]
    atts = [fea_z @ p["fcs_w"][i].T + p["fcs_b"][i] for i in range(4)]      # h, m, l, ll
    att = jax.nn.softmax(jnp.concatenate(atts, axis=1), axis=1)             # softmax over 4*C
    a_h, a_m, a_l, a_ll = jnp.split(att, 4, axis=1)
    attn = jnp.stack([a_h, a_m, a_l, a_ll], axis=1)[..., None]              # (B, 4, C, 1)

    # ---- fused FCA tail + CEFN head (GAP + norm3-folded first MLP conv) ----
    s3, t3 = _bn_fold(p["norm3"])
    m1_w = p["mlp1_w"] * s3[None, :]
    m1_b = p["mlp1_w"] @ t3 + p["mlp1_b"]
    y2, pooled_y, h1 = fca_cefn_head(high, middle, low, lowlow, attn,
                                     p["out_w"], p["out_b"], p["gamma"], xn2,
                                     m1_w, m1_b)

    # CEFN channel-attention branch (tiny; wrapper).  GAP is linear so the norm3 BN
    # affine is applied directly to the pooled vector.
    pooled3 = pooled_y[..., 0] * s3[None, :] + t3[None, :]
    hca = jnp.maximum(pooled3 @ p["ca1_w"].T + p["ca1_b"], 0.0)
    attn_ce = (jax.nn.sigmoid(hca @ p["ca2_w"].T + p["ca2_b"])
               * p["scaler"][None, :])[..., None]                           # (B, C, 1)

    # depthwise 3x3 + ReLU (zero padding), then fused 1x1 conv + LayerNorm + tail
    hidden = h1.shape[1]
    taps3 = _extract_taps(h1.reshape(B, hidden, H, W), 3, 1, 1, "constant")
    h2 = dw_conv(taps3, p["mlp_dw_w"].reshape(hidden, 9), p["mlp_dw_b"], relu=True)

    out = mlp3_ln_tail(h2, p["mlp3_w"], p["mlp3_b"], p["ln_w"], p["ln_b"],
                       attn_ce, y2)
    return out.reshape(B, C, H, W)


def lkd_blocks_pallas(x, params):
    for p in params:
        x = lkd_block_pallas(x, p)
    return x


# ----------------------------------------------------------------------------
# Pure-JAX reference (mirrors the PyTorch module, inference-mode BatchNorm)
# ----------------------------------------------------------------------------

def _conv2d_ref(x, w, b, *, padding=0, dilation=1, groups=1, pad_mode="zeros"):
    if padding > 0 and pad_mode == "reflect":
        x = jnp.pad(x, ((0, 0), (0, 0), (padding, padding), (padding, padding)),
                    mode="reflect")
        pad_cfg = ((0, 0), (0, 0))
    else:
        pad_cfg = ((padding, padding), (padding, padding))
    y = lax.conv_general_dilated(
        x, w, window_strides=(1, 1), padding=pad_cfg,
        rhs_dilation=(dilation, dilation),
        dimension_numbers=("NCHW", "OIHW", "NCHW"),
        feature_group_count=groups,
        precision=lax.Precision.HIGHEST)
    return y + b[None, :, None, None]


def _bn_ref(x, bn):
    s, t = _bn_fold(bn)
    return x * s[None, :, None, None] + t[None, :, None, None]


def lkd_block_ref(x, p):
    C = x.shape[1]
    identity = x
    y = _bn_ref(x, p["norm1"])
    y = _conv2d_ref(y, p["lin1_w"][:, :, None, None], p["lin1_b"])
    y = _conv2d_ref(y, p["dw5_w"], p["dw5_b"], padding=2, groups=C, pad_mode="reflect")
    y = _conv2d_ref(y, p["dw7_w"], p["dw7_b"], padding=9, dilation=3, groups=C,
                    pad_mode="reflect")
    y = _conv2d_ref(y, p["lin2_w"][:, :, None, None], p["lin2_b"]) + identity
    y = _bn_ref(y, p["norm2"])

    # FCA
    lowlow = _gelu_tanh(_conv2d_ref(y, p["convll_w"], p["convll_b"], padding=1))
    low = _gelu_tanh(_conv2d_ref(lowlow, p["convl_w"], p["convl_b"], padding=1))
    middle = _gelu_tanh(_conv2d_ref(low, p["convm_w"], p["convm_b"], padding=1))
    high = _gelu_tanh(_conv2d_ref(middle, p["convh_w"], p["convh_b"], padding=1))
    emerge = (low + middle + high + lowlow).mean(axis=(2, 3))               # (B, C)
    fea_z = emerge @ p["fc_w"].T + p["fc_b"]
    atts = [fea_z @ p["fcs_w"][i].T + p["fcs_b"][i] for i in range(4)]
    att = jax.nn.softmax(jnp.concatenate(atts, axis=1), axis=1)
    a_h, a_m, a_l, a_ll = jnp.split(att, 4, axis=1)
    fsum = (high * a_h[:, :, None, None] + middle * a_m[:, :, None, None]
            + low * a_l[:, :, None, None] + lowlow * a_ll[:, :, None, None])
    fca_out = _conv2d_ref(fsum, p["out_w"][:, :, None, None], p["out_b"])
    y = fca_out * p["gamma"][None, :, None, None] + y

    # CEFN
    identity2 = y
    z = _bn_ref(y, p["norm3"])
    pooled = z.mean(axis=(2, 3))
    hca = jnp.maximum(pooled @ p["ca1_w"].T + p["ca1_b"], 0.0)
    attn = jax.nn.sigmoid(hca @ p["ca2_w"].T + p["ca2_b"]) * p["scaler"][None, :]
    h1 = _conv2d_ref(z, p["mlp1_w"][:, :, None, None], p["mlp1_b"])
    h2 = jnp.maximum(_conv2d_ref(h1, p["mlp_dw_w"], p["mlp_dw_b"], padding=1,
                                 groups=h1.shape[1]), 0.0)
    h3 = _conv2d_ref(h2, p["mlp3_w"][:, :, None, None], p["mlp3_b"])
    mu = h3.mean(axis=(1, 2, 3), keepdims=True)
    std = jnp.sqrt(((h3 - mu) ** 2).mean(axis=(1, 2, 3), keepdims=True) + _LN_EPS)
    ln = ((h3 - mu) / std * p["ln_w"][None, :, None, None]
          + p["ln_b"][None, :, None, None])
    return ln * attn[:, :, None, None] + identity2


def lkd_blocks_ref(x, params):
    for p in params:
        x = lkd_block_ref(x, p)
    return x


# ----------------------------------------------------------------------------
# parameter construction
# ----------------------------------------------------------------------------

def init_block_params(key, dim, mlp_ratio=4.0):
    hidden = int(mlp_ratio) * dim
    d_fca = max(dim // 2, 32)      # FCA: d = max(features / r, L), r=2, L=32
    d_ca = dim // 8                # CEFN channel-attention bottleneck
    keys = iter(jax.random.split(key, 64))

    def w(shape, scale=0.2):
        return jax.random.normal(next(keys), shape, dtype=jnp.float32) * scale

    def bn():
        return {"gamma": 1.0 + w((dim,), 0.1), "beta": w((dim,), 0.1),
                "mean": w((dim,), 0.1),
                "var": jax.random.uniform(next(keys), (dim,), jnp.float32, 0.5, 1.5)}

    return {
        "norm1": bn(), "norm2": bn(), "norm3": bn(),
        "lin1_w": w((dim, dim)), "lin1_b": w((dim,), 0.1),
        "dw5_w": w((dim, 1, 5, 5)), "dw5_b": w((dim,), 0.1),
        "dw7_w": w((dim, 1, 7, 7), 0.1), "dw7_b": w((dim,), 0.1),
        "lin2_w": w((dim, dim)), "lin2_b": w((dim,), 0.1),
        "convll_w": w((dim, dim, 3, 3), 0.1), "convll_b": w((dim,), 0.1),
        "convl_w": w((dim, dim, 3, 3), 0.1), "convl_b": w((dim,), 0.1),
        "convm_w": w((dim, dim, 3, 3), 0.1), "convm_b": w((dim,), 0.1),
        "convh_w": w((dim, dim, 3, 3), 0.1), "convh_b": w((dim,), 0.1),
        "fc_w": w((d_fca, dim)), "fc_b": w((d_fca,), 0.1),
        "fcs_w": w((4, dim, d_fca)), "fcs_b": w((4, dim), 0.1),
        "out_w": w((dim, dim)), "out_b": w((dim,), 0.1),
        "gamma": w((dim,), 0.2),   # torch inits this to zeros; random to exercise the path
        "mlp1_w": w((hidden, dim)), "mlp1_b": w((hidden,), 0.1),
        "mlp_dw_w": w((hidden, 1, 3, 3)), "mlp_dw_b": w((hidden,), 0.1),
        "mlp3_w": w((dim, hidden)), "mlp3_b": w((dim,), 0.1),
        "ln_w": 1.0 + w((dim,), 0.1), "ln_b": w((dim,), 0.1),
        "ca1_w": w((d_ca, dim)), "ca1_b": w((d_ca,), 0.1),
        "ca2_w": w((dim, d_ca)), "ca2_b": w((dim,), 0.1),
        "scaler": 1.0 + w((dim,), 0.1),
    }


# ----------------------------------------------------------------------------
# main
# ----------------------------------------------------------------------------

if __name__ == "__main__":
    # dim must be >= 8 so CEFN's Conv2d(dim, dim // 8, 1) is valid; H*W = 256 keeps the
    # lane axis a multiple of 128 (lane-dense loads/stores).
    B, C, H, W = 2, 8, 16, 16
    depth = 2

    key = jax.random.PRNGKey(0)
    keys = jax.random.split(key, depth + 1)
    x = jax.random.normal(keys[0], (B, C, H, W), dtype=jnp.float32)
    params = [init_block_params(k, C) for k in keys[1:]]

    out = jax.block_until_ready(jax.jit(lkd_blocks_pallas)(x, params))
    ref = jax.block_until_ready(jax.jit(lkd_blocks_ref)(x, params))

    assert out.shape == ref.shape
    err = float(jnp.max(jnp.abs(out - ref)))
    assert jnp.allclose(out, ref, atol=5e-3, rtol=5e-3), \
        f"mismatch vs reference (max abs err {err})"

    print("KERNEL_OK")
</pallas_src>

<mosaic_0001>
module attributes {stable_mosaic.version = 11 : i64} {
  func.func @_pw_kernel(%arg0: i32, %arg1: memref<1x8x256xf32, #tpu.memory_space<vmem>>, %arg2: memref<8x8xf32, #tpu.memory_space<vmem>>, %arg3: memref<8x1xf32, #tpu.memory_space<vmem>>, %arg4: memref<1x8x256xf32, #tpu.memory_space<vmem>>) attributes {dimension_semantics = [#tpu.dimension_semantics<parallel>], iteration_bounds = array<i64: 2>, scalar_prefetch = 0 : i64, scratch_operands = 0 : i64, tpu.core_type = #tpu.core_type<tc>, window_params = [{transform_indices = @transform_0, window_bounds = array<i64: 1, 8, 256>}, {pipeline_mode = #tpu.pipeline_mode<synchronous>, transform_indices = @transform_1, window_bounds = array<i64: 8, 8>}, {pipeline_mode = #tpu.pipeline_mode<synchronous>, transform_indices = @transform_2, window_bounds = array<i64: 8, 1>}, {transform_indices = @transform_3, window_bounds = array<i64: 1, 8, 256>}]} {
    %c0 = arith.constant 0 : index
    %c0_0 = arith.constant 0 : index
    %0 = vector.load %arg2[%c0, %c0_0] : memref<8x8xf32, #tpu.memory_space<vmem>>, vector<8x8xf32>
    %c0_1 = arith.constant 0 : index
    %c0_2 = arith.constant 0 : index
    %c0_3 = arith.constant 0 : index
    %1 = vector.load %arg1[%c0_1, %c0_2, %c0_3] : memref<1x8x256xf32, #tpu.memory_space<vmem>>, vector<1x8x256xf32>
    %2 = vector.shape_cast %1 : vector<1x8x256xf32> to vector<8x256xf32>
    %cst = arith.constant dense<0.000000e+00> : vector<8x256xf32>
    %3 = tpu.matmul %0, %2, %cst {dimension_numbers = #tpu.dot_dimension_numbers<[1], [0], [0], [1], [0, 0, 1, 1], [], []>} : vector<8x8xf32>, vector<8x256xf32>, vector<8x256xf32> -> vector<8x256xf32>
    %c0_4 = arith.constant 0 : index
    %c0_5 = arith.constant 0 : index
    %4 = vector.load %arg3[%c0_4, %c0_5] : memref<8x1xf32, #tpu.memory_space<vmem>>, vector<8x1xf32>
    %5 = vector.broadcast %4 : vector<8x1xf32> to vector<8x256xf32>
    %6 = arith.addf %3, %5 : vector<8x256xf32>
    %c0_6 = arith.constant 0 : index
    %c0_7 = arith.constant 0 : index
    %c0_8 = arith.constant 0 : index
    %7 = vector.load %arg4[%c0_6, %c0_7, %c0_8] : memref<1x8x256xf32, #tpu.memory_space<vmem>>, vector<1x8x256xf32>
    %8 = vector.shape_cast %7 : vector<1x8x256xf32> to vector<8x256xf32>
    %9 = vector.shape_cast %6 : vector<8x256xf32> to vector<1x8x256xf32>
    tpu.vector_store %arg4[%c0_6, %c0_7, %c0_8], %9 {strides = array<i32>} : memref<1x8x256xf32, #tpu.memory_space<vmem>>, vector<1x8x256xf32>,
    return
  }
  func.func @transform_0(%arg0: i32) -> (i32, i32, i32) {
    %c0_i32 = arith.constant 0 : i32
    %c0_i32_0 = arith.constant 0 : i32
    %c0_i32_1 = arith.constant 0 : i32
    return %arg0, %c0_i32, %c0_i32_0 : i32, i32, i32
  }
  func.func @transform_1(%arg0: i32) -> (i32, i32) {
    %c0_i32 = arith.constant 0 : i32
    %c0_i32_0 = arith.constant 0 : i32
    %c0_i32_1 = arith.constant 0 : i32
    return %c0_i32, %c0_i32_0 : i32, i32
  }
  func.func @transform_2(%arg0: i32) -> (i32, i32) {
    %c0_i32 = arith.constant 0 : i32
    %c0_i32_0 = arith.constant 0 : i32
    %c0_i32_1 = arith.constant 0 : i32
    return %c0_i32, %c0_i32_0 : i32, i32
  }
  func.func @transform_3(%arg0: i32) -> (i32, i32, i32) {
    %c0_i32 = arith.constant 0 : i32
    %c0_i32_0 = arith.constant 0 : i32
    %c0_i32_1 = arith.constant 0 : i32
    return %arg0, %c0_i32, %c0_i32_0 : i32, i32, i32
  }
}

module attributes {stable_mosaic.version = 11 : i64} {
  func.func @_dw_kernel(%arg0: i32, %arg1: memref<1x25x8x256xf32, #tpu.memory_space<vmem>>, %arg2: memref<8x25xf32, #tpu.memory_space<vmem>>, %arg3: memref<8x1xf32, #tpu.memory_space<vmem>>, %arg4: memref<1x8x256xf32, #tpu.memory_space<vmem>>) attributes {dimension_semantics = [#tpu.dimension_semantics<parallel>], iteration_bounds = array<i64: 2>, scalar_prefetch = 0 : i64, scratch_operands = 0 : i64, tpu.core_type = #tpu.core_type<tc>, window_params = [{transform_indices = @transform_0, window_bounds = array<i64: 1, 25, 8, 256>}, {pipeline_mode = #tpu.pipeline_mode<synchronous>, transform_indices = @transform_1, window_bounds = array<i64: 8, 25>}, {pipeline_mode = #tpu.pipeline_mode<synchronous>, transform_indices = @transform_2, window_bounds = array<i64: 8, 1>}, {transform_indices = @transform_3, window_bounds = array<i64: 1, 8, 256>}]} {
    %c0 = arith.constant 0 : index
    %c0_0 = arith.constant 0 : index
    %c0_1 = arith.constant 0 : index
    %c0_2 = arith.constant 0 : index
    %0 = vector.load %arg1[%c0, %c0_0, %c0_1, %c0_2] : memref<1x25x8x256xf32, #tpu.memory_space<vmem>>, vector<1x1x8x256xf32>
    %1 = vector.shape_cast %0 : vector<1x1x8x256xf32> to vector<8x256xf32>
    %c0_3 = arith.constant 0 : index
    %c0_4 = arith.constant 0 : index
    %2 = vector.load %arg2[%c0_3, %c0_4] : memref<8x25xf32, #tpu.memory_space<vmem>>, vector<8x1xf32>
    %3 = vector.broadcast %2 : vector<8x1xf32> to vector<8x256xf32>
    %4 = arith.mulf %1, %3 : vector<8x256xf32>
    %c0_5 = arith.constant 0 : index
    %c1 = arith.constant 1 : index
    %c0_6 = arith.constant 0 : index
    %c0_7 = arith.constant 0 : index
    %5 = vector.load %arg1[%c0_5, %c1, %c0_6, %c0_7] : memref<1x25x8x256xf32, #tpu.memory_space<vmem>>, vector<1x1x8x256xf32>
    %6 = vector.shape_cast %5 : vector<1x1x8x256xf32> to vector<8x256xf32>
    %c0_8 = arith.constant 0 : index
    %c1_9 = arith.constant 1 : index
    %7 = vector.load %arg2[%c0_8, %c1_9] : memref<8x25xf32, #tpu.memory_space<vmem>>, vector<8x1xf32>
    %8 = vector.broadcast %7 : vector<8x1xf32> to vector<8x256xf32>
    %9 = arith.mulf %6, %8 : vector<8x256xf32>
    %10 = arith.addf %4, %9 : vector<8x256xf32>
    %c0_10 = arith.constant 0 : index
    %c2 = arith.constant 2 : index
    %c0_11 = arith.constant 0 : index
    %c0_12 = arith.constant 0 : index
    %11 = vector.load %arg1[%c0_10, %c2, %c0_11, %c0_12] : memref<1x25x8x256xf32, #tpu.memory_space<vmem>>, vector<1x1x8x256xf32>
    %12 = vector.shape_cast %11 : vector<1x1x8x256xf32> to vector<8x256xf32>
    %c0_13 = arith.constant 0 : index
    %c2_14 = arith.constant 2 : index
    %13 = vector.load %arg2[%c0_13, %c2_14] : memref<8x25xf32, #tpu.memory_space<vmem>>, vector<8x1xf32>
    %14 = vector.broadcast %13 : vector<8x1xf32> to vector<8x256xf32>
    %15 = arith.mulf %12, %14 : vector<8x256xf32>
    %16 = arith.addf %10, %15 : vector<8x256xf32>
    %c0_15 = arith.constant 0 : index
    %c3 = arith.constant 3 : index
    %c0_16 = arith.constant 0 : index
    %c0_17 = arith.constant 0 : index
    %17 = vector.load %arg1[%c0_15, %c3, %c0_16, %c0_17] : memref<1x25x8x256xf32, #tpu.memory_space<vmem>>, vector<1x1x8x256xf32>
    %18 = vector.shape_cast %17 : vector<1x1x8x256xf32> to vector<8x256xf32>
    %c0_18 = arith.constant 0 : index
    %c3_19 = arith.constant 3 : index
    %19 = vector.load %arg2[%c0_18, %c3_19] : memref<8x25xf32, #tpu.memory_space<vmem>>, vector<8x1xf32>
    %20 = vector.broadcast %19 : vector<8x1xf32> to vector<8x256xf32>
    %21 = arith.mulf %18, %20 : vector<8x256xf32>
    %22 = arith.addf %16, %21 : vector<8x256xf32>
    %c0_20 = arith.constant 0 : index
    %c4 = arith.constant 4 : index
    %c0_21 = arith.constant 0 : index
    %c0_22 = arith.constant 0 : index
    %23 = vector.load %arg1[%c0_20, %c4, %c0_21, %c0_22] : memref<1x25x8x256xf32, #tpu.memory_space<vmem>>, vector<1x1x8x256xf32>
    %24 = vector.shape_cast %23 : vector<1x1x8x256xf32> to vector<8x256xf32>
    %c0_23 = arith.constant 0 : index
    %c4_24 = arith.constant 4 : index
    %25 = vector.load %arg2[%c0_23, %c4_24] : memref<8x25xf32, #tpu.memory_space<vmem>>, vector<8x1xf32>
    %26 = vector.broadcast %25 : vector<8x1xf32> to vector<8x256xf32>
    %27 = arith.mulf %24, %26 : vector<8x256xf32>
    %28 = arith.addf %22, %27 : vector<8x256xf32>
    %c0_25 = arith.constant 0 : index
    %c5 = arith.constant 5 : index
    %c0_26 = arith.constant 0 : index
    %c0_27 = arith.constant 0 : index
    %29 = vector.load %arg1[%c0_25, %c5, %c0_26, %c0_27] : memref<1x25x8x256xf32, #tpu.memory_space<vmem>>, vector<1x1x8x256xf32>
    %30 = vector.shape_cast %29 : vector<1x1x8x256xf32> to vector<8x256xf32>
    %c0_28 = arith.constant 0 : index
    %c5_29 = arith.constant 5 : index
    %31 = vector.load %arg2[%c0_28, %c5_29] : memref<8x25xf32, #tpu.memory_space<vmem>>, vector<8x1xf32>
    %32 = vector.broadcast %31 : vector<8x1xf32> to vector<8x256xf32>
    %33 = arith.mulf %30, %32 : vector<8x256xf32>
    %34 = arith.addf %28, %33 : vector<8x256xf32>
    %c0_30 = arith.constant 0 : index
    %c6 = arith.constant 6 : index
    %c0_31 = arith.constant 0 : index
    %c0_32 = arith.constant 0 : index
    %35 = vector.load %arg1[%c0_30, %c6, %c0_31, %c0_32] : memref<1x25x8x256xf32, #tpu.memory_space<vmem>>, vector<1x1x8x256xf32>
    %36 = vector.shape_cast %35 : vector<1x1x8x256xf32> to vector<8x256xf32>
    %c0_33 = arith.constant 0 : index
    %c6_34 = arith.constant 6 : index
    %37 = vector.load %arg2[%c0_33, %c6_34] : memref<8x25xf32, #tpu.memory_space<vmem>>, vector<8x1xf32>
    %38 = vector.broadcast %37 : vector<8x1xf32> to vector<8x256xf32>
    %39 = arith.mulf %36, %38 : vector<8x256xf32>
    %40 = arith.addf %34, %39 : vector<8x256xf32>
    %c0_35 = arith.constant 0 : index
    %c7 = arith.constant 7 : index
    %c0_36 = arith.constant 0 : index
    %c0_37 = arith.constant 0 : index
    %41 = vector.load %arg1[%c0_35, %c7, %c0_36, %c0_37] : memref<1x25x8x256xf32, #tpu.memory_space<vmem>>, vector<1x1x8x256xf32>
    %42 = vector.shape_cast %41 : vector<1x1x8x256xf32> to vector<8x256xf32>
    %c0_38 = arith.constant 0 : index
    %c7_39 = arith.constant 7 : index
    %43 = vector.load %arg2[%c0_38, %c7_39] : memref<8x25xf32, #tpu.memory_space<vmem>>, vector<8x1xf32>
    %44 = vector.broadcast %43 : vector<8x1xf32> to vector<8x256xf32>
    %45 = arith.mulf %42, %44 : vector<8x256xf32>
    %46 = arith.addf %40, %45 : vector<8x256xf32>
    %c0_40 = arith.constant 0 : index
    %c8 = arith.constant 8 : index
    %c0_41 = arith.constant 0 : index
    %c0_42 = arith.constant 0 : index
    %47 = vector.load %arg1[%c0_40, %c8, %c0_41, %c0_42] : memref<1x25x8x256xf32, #tpu.memory_space<vmem>>, vector<1x1x8x256xf32>
    %48 = vector.shape_cast %47 : vector<1x1x8x256xf32> to vector<8x256xf32>
    %c0_43 = arith.constant 0 : index
    %c8_44 = arith.constant 8 : index
    %49 = vector.load %arg2[%c0_43, %c8_44] : memref<8x25xf32, #tpu.memory_space<vmem>>, vector<8x1xf32>
    %50 = vector.broadcast %49 : vector<8x1xf32> to vector<8x256xf32>
    %51 = arith.mulf %48, %50 : vector<8x256xf32>
    %52 = arith.addf %46, %51 : vector<8x256xf32>
    %c0_45 = arith.constant 0 : index
    %c9 = arith.constant 9 : index
    %c0_46 = arith.constant 0 : index
    %c0_47 = arith.constant 0 : index
    %53 = vector.load %arg1[%c0_45, %c9, %c0_46, %c0_47] : memref<1x25x8x256xf32, #tpu.memory_space<vmem>>, vector<1x1x8x256xf32>
    %54 = vector.shape_cast %53 : vector<1x1x8x256xf32> to vector<8x256xf32>
    %c0_48 = arith.constant 0 : index
    %c9_49 = arith.constant 9 : index
    %55 = vector.load %arg2[%c0_48, %c9_49] : memref<8x25xf32, #tpu.memory_space<vmem>>, vector<8x1xf32>
    %56 = vector.broadcast %55 : vector<8x1xf32> to vector<8x256xf32>
    %57 = arith.mulf %54, %56 : vector<8x256xf32>
    %58 = arith.addf %52, %57 : vector<8x256xf32>
    %c0_50 = arith.constant 0 : index
    %c10 = arith.constant 10 : index
    %c0_51 = arith.constant 0 : index
    %c0_52 = arith.constant 0 : index
    %59 = vector.load %arg1[%c0_50, %c10, %c0_51, %c0_52] : memref<1x25x8x256xf32, #tpu.memory_space<vmem>>, vector<1x1x8x256xf32>
    %60 = vector.shape_cast %59 : vector<1x1x8x256xf32> to vector<8x256xf32>
    %c0_53 = arith.constant 0 : index
    %c10_54 = arith.constant 10 : index
    %61 = vector.load %arg2[%c0_53, %c10_54] : memref<8x25xf32, #tpu.memory_space<vmem>>, vector<8x1xf32>
    %62 = vector.broadcast %61 : vector<8x1xf32> to vector<8x256xf32>
    %63 = arith.mulf %60, %62 : vector<8x256xf32>
    %64 = arith.addf %58, %63 : vector<8x256xf32>
    %c0_55 = arith.constant 0 : index
    %c11 = arith.constant 11 : index
    %c0_56 = arith.constant 0 : index
    %c0_57 = arith.constant 0 : index
    %65 = vector.load %arg1[%c0_55, %c11, %c0_56, %c0_57] : memref<1x25x8x256xf32, #tpu.memory_space<vmem>>, vector<1x1x8x256xf32>
    %66 = vector.shape_cast %65 : vector<1x1x8x256xf32> to vector<8x256xf32>
    %c0_58 = arith.constant 0 : index
    %c11_59 = arith.constant 11 : index
    %67 = vector.load %arg2[%c0_58, %c11_59] : memref<8x25xf32, #tpu.memory_space<vmem>>, vector<8x1xf32>
    %68 = vector.broadcast %67 : vector<8x1xf32> to vector<8x256xf32>
    %69 = arith.mulf %66, %68 : vector<8x256xf32>
    %70 = arith.addf %64, %69 : vector<8x256xf32>
    %c0_60 = arith.constant 0 : index
    %c12 = arith.constant 12 : index
    %c0_61 = arith.constant 0 : index
    %c0_62 = arith.constant 0 : index
    %71 = vector.load %arg1[%c0_60, %c12, %c0_61, %c0_62] : memref<1x25x8x256xf32, #tpu.memory_space<vmem>>, vector<1x1x8x256xf32>
    %72 = vector.shape_cast %71 : vector<1x1x8x256xf32> to vector<8x256xf32>
    %c0_63 = arith.constant 0 : index
    %c12_64 = arith.constant 12 : index
    %73 = vector.load %arg2[%c0_63, %c12_64] : memref<8x25xf32, #tpu.memory_space<vmem>>, vector<8x1xf32>
    %74 = vector.broadcast %73 : vector<8x1xf32> to vector<8x256xf32>
    %75 = arith.mulf %72, %74 : vector<8x256xf32>
    %76 = arith.addf %70, %75 : vector<8x256xf32>
    %c0_65 = arith.constant 0 : index
    %c13 = arith.constant 13 : index
    %c0_66 = arith.constant 0 : index
    %c0_67 = arith.constant 0 : index
    %77 = vector.load %arg1[%c0_65, %c13, %c0_66, %c0_67] : memref<1x25x8x256xf32, #tpu.memory_space<vmem>>, vector<1x1x8x256xf32>
    %78 = vector.shape_cast %77 : vector<1x1x8x256xf32> to vector<8x256xf32>
    %c0_68 = arith.constant 0 : index
    %c13_69 = arith.constant 13 : index
    %79 = vector.load %arg2[%c0_68, %c13_69] : memref<8x25xf32, #tpu.memory_space<vmem>>, vector<8x1xf32>
    %80 = vector.broadcast %79 : vector<8x1xf32> to vector<8x256xf32>
    %81 = arith.mulf %78, %80 : vector<8x256xf32>
    %82 = arith.addf %76, %81 : vector<8x256xf32>
    %c0_70 = arith.constant 0 : index
    %c14 = arith.constant 14 : index
    %c0_71 = arith.constant 0 : index
    %c0_72 = arith.constant 0 : index
    %83 = vector.load %arg1[%c0_70, %c14, %c0_71, %c0_72] : memref<1x25x8x256xf32, #tpu.memory_space<vmem>>, vector<1x1x8x256xf32>
    %84 = vector.shape_cast %83 : vector<1x1x8x256xf32> to vector<8x256xf32>
    %c0_73 = arith.constant 0 : index
    %c14_74 = arith.constant 14 : index
    %85 = vector.load %arg2[%c0_73, %c14_74] : memref<8x25xf32, #tpu.memory_space<vmem>>, vector<8x1xf32>
    %86 = vector.broadcast %85 : vector<8x1xf32> to vector<8x256xf32>
    %87 = arith.mulf %84, %86 : vector<8x256xf32>
    %88 = arith.addf %82, %87 : vector<8x256xf32>
    %c0_75 = arith.constant 0 : index
    %c15 = arith.constant 15 : index
    %c0_76 = arith.constant 0 : index
    %c0_77 = arith.constant 0 : index
    %89 = vector.load %arg1[%c0_75, %c15, %c0_76, %c0_77] : memref<1x25x8x256xf32, #tpu.memory_space<vmem>>, vector<1x1x8x256xf32>
    %90 = vector.shape_cast %89 : vector<1x1x8x256xf32> to vector<8x256xf32>
    %c0_78 = arith.constant 0 : index
    %c15_79 = arith.constant 15 : index
    %91 = vector.load %arg2[%c0_78, %c15_79] : memref<8x25xf32, #tpu.memory_space<vmem>>, vector<8x1xf32>
    %92 = vector.broadcast %91 : vector<8x1xf32> to vector<8x256xf32>
    %93 = arith.mulf %90, %92 : vector<8x256xf32>
    %94 = arith.addf %88, %93 : vector<8x256xf32>
    %c0_80 = arith.constant 0 : index
    %c16 = arith.constant 16 : index
    %c0_81 = arith.constant 0 : index
    %c0_82 = arith.constant 0 : index
    %95 = vector.load %arg1[%c0_80, %c16, %c0_81, %c0_82] : memref<1x25x8x256xf32, #tpu.memory_space<vmem>>, vector<1x1x8x256xf32>
    %96 = vector.shape_cast %95 : vector<1x1x8x256xf32> to vector<8x256xf32>
    %c0_83 = arith.constant 0 : index
    %c16_84 = arith.constant 16 : index
    %97 = vector.load %arg2[%c0_83, %c16_84] : memref<8x25xf32, #tpu.memory_space<vmem>>, vector<8x1xf32>
    %98 = vector.broadcast %97 : vector<8x1xf32> to vector<8x256xf32>
    %99 = arith.mulf %96, %98 : vector<8x256xf32>
    %100 = arith.addf %94, %99 : vector<8x256xf32>
    %c0_85 = arith.constant 0 : index
    %c17 = arith.constant 17 : index
    %c0_86 = arith.constant 0 : index
    %c0_87 = arith.constant 0 : index
    %101 = vector.load %arg1[%c0_85, %c17, %c0_86, %c0_87] : memref<1x25x8x256xf32, #tpu.memory_space<vmem>>, vector<1x1x8x256xf32>
    %102 = vector.shape_cast %101 : vector<1x1x8x256xf32> to vector<8x256xf32>
    %c0_88 = arith.constant 0 : index
    %c17_89 = arith.constant 17 : index
    %103 = vector.load %arg2[%c0_88, %c17_89] : memref<8x25xf32, #tpu.memory_space<vmem>>, vector<8x1xf32>
    %104 = vector.broadcast %103 : vector<8x1xf32> to vector<8x256xf32>
    %105 = arith.mulf %102, %104 : vector<8x256xf32>
    %106 = arith.addf %100, %105 : vector<8x256xf32>
    %c0_90 = arith.constant 0 : index
    %c18 = arith.constant 18 : index
    %c0_91 = arith.constant 0 : index
    %c0_92 = arith.constant 0 : index
    %107 = vector.load %arg1[%c0_90, %c18, %c0_91, %c0_92] : memref<1x25x8x256xf32, #tpu.memory_space<vmem>>, vector<1x1x8x256xf32>
    %108 = vector.shape_cast %107 : vector<1x1x8x256xf32> to vector<8x256xf32>
    %c0_93 = arith.constant 0 : index
    %c18_94 = arith.constant 18 : index
    %109 = vector.load %arg2[%c0_93, %c18_94] : memref<8x25xf32, #tpu.memory_space<vmem>>, vector<8x1xf32>
    %110 = vector.broadcast %109 : vector<8x1xf32> to vector<8x256xf32>
    %111 = arith.mulf %108, %110 : vector<8x256xf32>
    %112 = arith.addf %106, %111 : vector<8x256xf32>
    %c0_95 = arith.constant 0 : index
    %c19 = arith.constant 19 : index
    %c0_96 = arith.constant 0 : index
    %c0_97 = arith.constant 0 : index
    %113 = vector.load %arg1[%c0_95, %c19, %c0_96, %c0_97] : memref<1x25x8x256xf32, #tpu.memory_space<vmem>>, vector<1x1x8x256xf32>
    %114 = vector.shape_cast %113 : vector<1x1x8x256xf32> to vector<8x256xf32>
    %c0_98 = arith.constant 0 : index
    %c19_99 = arith.constant 19 : index
    %115 = vector.load %arg2[%c0_98, %c19_99] : memref<8x25xf32, #tpu.memory_space<vmem>>, vector<8x1xf32>
    %116 = vector.broadcast %115 : vector<8x1xf32> to vector<8x256xf32>
    %117 = arith.mulf %114, %116 : vector<8x256xf32>
    %118 = arith.addf %112, %117 : vector<8x256xf32>
    %c0_100 = arith.constant 0 : index
    %c20 = arith.constant 20 : index
    %c0_101 = arith.constant 0 : index
    %c0_102 = arith.constant 0 : index
    %119 = vector.load %arg1[%c0_100, %c20, %c0_101, %c0_102] : memref<1x25x8x256xf32, #tpu.memory_space<vmem>>, vector<1x1x8x256xf32>
    %120 = vector.shape_cast %119 : vector<1x1x8x256xf32> to vector<8x256xf32>
    %c0_103 = arith.constant 0 : index
    %c20_104 = arith.constant 20 : index
    %121 = vector.load %arg2[%c0_103, %c20_104] : memref<8x25xf32, #tpu.memory_space<vmem>>, vector<8x1xf32>
    %122 = vector.broadcast %121 : vector<8x1xf32> to vector<8x256xf32>
    %123 = arith.mulf %120, %122 : vector<8x256xf32>
    %124 = arith.addf %118, %123 : vector<8x256xf32>
    %c0_105 = arith.constant 0 : index
    %c21 = arith.constant 21 : index
    %c0_106 = arith.constant 0 : index
    %c0_107 = arith.constant 0 : index
    %125 = vector.load %arg1[%c0_105, %c21, %c0_106, %c0_107] : memref<1x25x8x256xf32, #tpu.memory_space<vmem>>, vector<1x1x8x256xf32>
    %126 = vector.shape_cast %125 : vector<1x1x8x256xf32> to vector<8x256xf32>
    %c0_108 = arith.constant 0 : index
    %c21_109 = arith.constant 21 : index
    %127 = vector.load %arg2[%c0_108, %c21_109] : memref<8x25xf32, #tpu.memory_space<vmem>>, vector<8x1xf32>
    %128 = vector.broadcast %127 : vector<8x1xf32> to vector<8x256xf32>
    %129 = arith.mulf %126, %128 : vector<8x256xf32>
    %130 = arith.addf %124, %129 : vector<8x256xf32>
    %c0_110 = arith.constant 0 : index
    %c22 = arith.constant 22 : index
    %c0_111 = arith.constant 0 : index
    %c0_112 = arith.constant 0 : index
    %131 = vector.load %arg1[%c0_110, %c22, %c0_111, %c0_112] : memref<1x25x8x256xf32, #tpu.memory_space<vmem>>, vector<1x1x8x256xf32>
    %132 = vector.shape_cast %131 : vector<1x1x8x256xf32> to vector<8x256xf32>
    %c0_113 = arith.constant 0 : index
    %c22_114 = arith.constant 22 : index
    %133 = vector.load %arg2[%c0_113, %c22_114] : memref<8x25xf32, #tpu.memory_space<vmem>>, vector<8x1xf32>
    %134 = vector.broadcast %133 : vector<8x1xf32> to vector<8x256xf32>
    %135 = arith.mulf %132, %134 : vector<8x256xf32>
    %136 = arith.addf %130, %135 : vector<8x256xf32>
    %c0_115 = arith.constant 0 : index
    %c23 = arith.constant 23 : index
    %c0_116 = arith.constant 0 : index
    %c0_117 = arith.constant 0 : index
    %137 = vector.load %arg1[%c0_115, %c23, %c0_116, %c0_117] : memref<1x25x8x256xf32, #tpu.memory_space<vmem>>, vector<1x1x8x256xf32>
    %138 = vector.shape_cast %137 : vector<1x1x8x256xf32> to vector<8x256xf32>
    %c0_118 = arith.constant 0 : index
    %c23_119 = arith.constant 23 : index
    %139 = vector.load %arg2[%c0_118, %c23_119] : memref<8x25xf32, #tpu.memory_space<vmem>>, vector<8x1xf32>
    %140 = vector.broadcast %139 : vector<8x1xf32> to vector<8x256xf32>
    %141 = arith.mulf %138, %140 : vector<8x256xf32>
    %142 = arith.addf %136, %141 : vector<8x256xf32>
    %c0_120 = arith.constant 0 : index
    %c24 = arith.constant 24 : index
    %c0_121 = arith.constant 0 : index
    %c0_122 = arith.constant 0 : index
    %143 = vector.load %arg1[%c0_120, %c24, %c0_121, %c0_122] : memref<1x25x8x256xf32, #tpu.memory_space<vmem>>, vector<1x1x8x256xf32>
    %144 = vector.shape_cast %143 : vector<1x1x8x256xf32> to vector<8x256xf32>
    %c0_123 = arith.constant 0 : index
    %c24_124 = arith.constant 24 : index
    %145 = vector.load %arg2[%c0_123, %c24_124] : memref<8x25xf32, #tpu.memory_space<vmem>>, vector<8x1xf32>
    %146 = vector.broadcast %145 : vector<8x1xf32> to vector<8x256xf32>
    %147 = arith.mulf %144, %146 : vector<8x256xf32>
    %148 = arith.addf %142, %147 : vector<8x256xf32>
    %c0_125 = arith.constant 0 : index
    %c0_126 = arith.constant 0 : index
    %149 = vector.load %arg3[%c0_125, %c0_126] : memref<8x1xf32, #tpu.memory_space<vmem>>, vector<8x1xf32>
    %150 = vector.broadcast %149 : vector<8x1xf32> to vector<8x256xf32>
    %151 = arith.addf %148, %150 : vector<8x256xf32>
    %c0_127 = arith.constant 0 : index
    %c0_128 = arith.constant 0 : index
    %c0_129 = arith.constant 0 : index
    %152 = vector.load %arg4[%c0_127, %c0_128, %c0_129] : memref<1x8x256xf32, #tpu.memory_space<vmem>>, vector<1x8x256xf32>
    %153 = vector.shape_cast %152 : vector<1x8x256xf32> to vector<8x256xf32>
    %154 = vector.shape_cast %151 : vector<8x256xf32> to vector<1x8x256xf32>
    tpu.vector_store %arg4[%c0_127, %c0_128, %c0_129], %154 {strides = array<i32>} : memref<1x8x256xf32, #tpu.memory_space<vmem>>, vector<1x8x256xf32>,
    return
  }
  func.func @transform_0(%arg0: i32) -> (i32, i32, i32, i32) {
    %c0_i32 = arith.constant 0 : i32
    %c0_i32_0 = arith.constant 0 : i32
    %c0_i32_1 = arith.constant 0 : i32
    %c0_i32_2 = arith.constant 0 : i32
    return %arg0, %c0_i32, %c0_i32_0, %c0_i32_1 : i32, i32, i32, i32
  }
  func.func @transform_1(%arg0: i32) -> (i32, i32) {
    %c0_i32 = arith.constant 0 : i32
    %c0_i32_0 = arith.constant 0 : i32
    %c0_i32_1 = arith.constant 0 : i32
    return %c0_i32, %c0_i32_0 : i32, i32
  }
  func.func @transform_2(%arg0: i32) -> (i32, i32) {
    %c0_i32 = arith.constant 0 : i32
    %c0_i32_0 = arith.constant 0 : i32
    %c0_i32_1 = arith.constant 0 : i32
    return %c0_i32, %c0_i32_0 : i32, i32
  }
  func.func @transform_3(%arg0: i32) -> (i32, i32, i32) {
    %c0_i32 = arith.constant 0 : i32
    %c0_i32_0 = arith.constant 0 : i32
    %c0_i32_1 = arith.constant 0 : i32
    return %arg0, %c0_i32, %c0_i32_0 : i32, i32, i32
  }
}

module attributes {stable_mosaic.version = 11 : i64} {
  func.func @_pw_res_affine_kernel(%arg0: i32, %arg1: memref<1x8x256xf32, #tpu.memory_space<vmem>>, %arg2: memref<8x8xf32, #tpu.memory_space<vmem>>, %arg3: memref<8x1xf32, #tpu.memory_space<vmem>>, %arg4: memref<1x8x256xf32, #tpu.memory_space<vmem>>, %arg5: memref<8x1xf32, #tpu.memory_space<vmem>>, %arg6: memref<8x1xf32, #tpu.memory_space<vmem>>, %arg7: memref<1x8x256xf32, #tpu.memory_space<vmem>>) attributes {dimension_semantics = [#tpu.dimension_semantics<parallel>], iteration_bounds = array<i64: 2>, scalar_prefetch = 0 : i64, scratch_operands = 0 : i64, tpu.core_type = #tpu.core_type<tc>, window_params = [{transform_indices = @transform_0, window_bounds = array<i64: 1, 8, 256>}, {pipeline_mode = #tpu.pipeline_mode<synchronous>, transform_indices = @transform_1, window_bounds = array<i64: 8, 8>}, {pipeline_mode = #tpu.pipeline_mode<synchronous>, transform_indices = @transform_2, window_bounds = array<i64: 8, 1>}, {transform_indices = @transform_3, window_bounds = array<i64: 1, 8, 256>}, {pipeline_mode = #tpu.pipeline_mode<synchronous>, transform_indices = @transform_4, window_bounds = array<i64: 8, 1>}, {pipeline_mode = #tpu.pipeline_mode<synchronous>, transform_indices = @transform_5, window_bounds = array<i64: 8, 1>}, {transform_indices = @transform_6, window_bounds = array<i64: 1, 8, 256>}]} {
    %c0 = arith.constant 0 : index
    %c0_0 = arith.constant 0 : index
    %0 = vector.load %arg2[%c0, %c0_0] : memref<8x8xf32, #tpu.memory_space<vmem>>, vector<8x8xf32>
    %c0_1 = arith.constant 0 : index
    %c0_2 = arith.constant 0 : index
    %c0_3 = arith.constant 0 : index
    %1 = vector.load %arg1[%c0_1, %c0_2, %c0_3] : memref<1x8x256xf32, #tpu.memory_space<vmem>>, vector<1x8x256xf32>
    %2 = vector.shape_cast %1 : vector<1x8x256xf32> to vector<8x256xf32>
    %cst = arith.constant dense<0.000000e+00> : vector<8x256xf32>
    %3 = tpu.matmul %0, %2, %cst {dimension_numbers = #tpu.dot_dimension_numbers<[1], [0], [0], [1], [0, 0, 1, 1], [], []>} : vector<8x8xf32>, vector<8x256xf32>, vector<8x256xf32> -> vector<8x256xf32>
    %c0_4 = arith.constant 0 : index
    %c0_5 = arith.constant 0 : index
    %4 = vector.load %arg3[%c0_4, %c0_5] : memref<8x1xf32, #tpu.memory_space<vmem>>, vector<8x1xf32>
    %5 = vector.broadcast %4 : vector<8x1xf32> to vector<8x256xf32>
    %6 = arith.addf %3, %5 : vector<8x256xf32>
    %c0_6 = arith.constant 0 : index
    %c0_7 = arith.constant 0 : index
    %c0_8 = arith.constant 0 : index
    %7 = vector.load %arg4[%c0_6, %c0_7, %c0_8] : memref<1x8x256xf32, #tpu.memory_space<vmem>>, vector<1x8x256xf32>
    %8 = vector.shape_cast %7 : vector<1x8x256xf32> to vector<8x256xf32>
    %9 = arith.addf %6, %8 : vector<8x256xf32>
    %c0_9 = arith.constant 0 : index
    %c0_10 = arith.constant 0 : index
    %10 = vector.load %arg5[%c0_9, %c0_10] : memref<8x1xf32, #tpu.memory_space<vmem>>, vector<8x1xf32>
    %11 = vector.broadcast %10 : vector<8x1xf32> to vector<8x256xf32>
    %12 = arith.mulf %9, %11 : vector<8x256xf32>
    %c0_11 = arith.constant 0 : index
    %c0_12 = arith.constant 0 : index
    %13 = vector.load %arg6[%c0_11, %c0_12] : memref<8x1xf32, #tpu.memory_space<vmem>>, vector<8x1xf32>
    %14 = vector.broadcast %13 : vector<8x1xf32> to vector<8x256xf32>
    %15 = arith.addf %12, %14 : vector<8x256xf32>
    %c0_13 = arith.constant 0 : index
    %c0_14 = arith.constant 0 : index
    %c0_15 = arith.constant 0 : index
    %16 = vector.load %arg7[%c0_13, %c0_14, %c0_15] : memref<1x8x256xf32, #tpu.memory_space<vmem>>, vector<1x8x256xf32>
    %17 = vector.shape_cast %16 : vector<1x8x256xf32> to vector<8x256xf32>
    %18 = vector.shape_cast %15 : vector<8x256xf32> to vector<1x8x256xf32>
    tpu.vector_store %arg7[%c0_13, %c0_14, %c0_15], %18 {strides = array<i32>} : memref<1x8x256xf32, #tpu.memory_space<vmem>>, vector<1x8x256xf32>,
    return
  }
  func.func @transform_0(%arg0: i32) -> (i32, i32, i32) {
    %c0_i32 = arith.constant 0 : i32
    %c0_i32_0 = arith.constant 0 : i32
    %c0_i32_1 = arith.constant 0 : i32
    return %arg0, %c0_i32, %c0_i32_0 : i32, i32, i32
  }
  func.func @transform_1(%arg0: i32) -> (i32, i32) {
    %c0_i32 = arith.constant 0 : i32
    %c0_i32_0 = arith.constant 0 : i32
    %c0_i32_1 = arith.constant 0 : i32
    return %c0_i32, %c0_i32_0 : i32, i32
  }
  func.func @transform_2(%arg0: i32) -> (i32, i32) {
    %c0_i32 = arith.constant 0 : i32
    %c0_i32_0 = arith.constant 0 : i32
    %c0_i32_1 = arith.constant 0 : i32
    return %c0_i32, %c0_i32_0 : i32, i32
  }
  func.func @transform_3(%arg0: i32) -> (i32, i32, i32) {
    %c0_i32 = arith.constant 0 : i32
    %c0_i32_0 = arith.constant 0 : i32
    %c0_i32_1 = arith.constant 0 : i32
    return %arg0, %c0_i32, %c0_i32_0 : i32, i32, i32
  }
  func.func @transform_4(%arg0: i32) -> (i32, i32) {
    %c0_i32 = arith.constant 0 : i32
    %c0_i32_0 = arith.constant 0 : i32
    %c0_i32_1 = arith.constant 0 : i32
    return %c0_i32, %c0_i32_0 : i32, i32
  }
  func.func @transform_5(%arg0: i32) -> (i32, i32) {
    %c0_i32 = arith.constant 0 : i32
    %c0_i32_0 = arith.constant 0 : i32
    %c0_i32_1 = arith.constant 0 : i32
    return %c0_i32, %c0_i32_0 : i32, i32
  }
  func.func @transform_6(%arg0: i32) -> (i32, i32, i32) {
    %c0_i32 = arith.constant 0 : i32
    %c0_i32_0 = arith.constant 0 : i32
    %c0_i32_1 = arith.constant 0 : i32
    return %arg0, %c0_i32, %c0_i32_0 : i32, i32, i32
  }
}

module attributes {stable_mosaic.version = 11 : i64} {
  func.func @_dw_kernel(%arg0: i32, %arg1: memref<1x49x8x256xf32, #tpu.memory_space<vmem>>, %arg2: memref<8x49xf32, #tpu.memory_space<vmem>>, %arg3: memref<8x1xf32, #tpu.memory_space<vmem>>, %arg4: memref<1x8x256xf32, #tpu.memory_space<vmem>>) attributes {dimension_semantics = [#tpu.dimension_semantics<parallel>], iteration_bounds = array<i64: 2>, scalar_prefetch = 0 : i64, scratch_operands = 0 : i64, tpu.core_type = #tpu.core_type<tc>, window_params = [{transform_indices = @transform_0, window_bounds = array<i64: 1, 49, 8, 256>}, {pipeline_mode = #tpu.pipeline_mode<synchronous>, transform_indices = @transform_1, window_bounds = array<i64: 8, 49>}, {pipeline_mode = #tpu.pipeline_mode<synchronous>, transform_indices = @transform_2, window_bounds = array<i64: 8, 1>}, {transform_indices = @transform_3, window_bounds = array<i64: 1, 8, 256>}]} {
    %c0 = arith.constant 0 : index
    %c0_0 = arith.constant 0 : index
    %c0_1 = arith.constant 0 : index
    %c0_2 = arith.constant 0 : index
    %0 = vector.load %arg1[%c0, %c0_0, %c0_1, %c0_2] : memref<1x49x8x256xf32, #tpu.memory_space<vmem>>, vector<1x1x8x256xf32>
    %1 = vector.shape_cast %0 : vector<1x1x8x256xf32> to vector<8x256xf32>
    %c0_3 = arith.constant 0 : index
    %c0_4 = arith.constant 0 : index
    %2 = vector.load %arg2[%c0_3, %c0_4] : memref<8x49xf32, #tpu.memory_space<vmem>>, vector<8x1xf32>
    %3 = vector.broadcast %2 : vector<8x1xf32> to vector<8x256xf32>
    %4 = arith.mulf %1, %3 : vector<8x256xf32>
    %c0_5 = arith.constant 0 : index
    %c1 = arith.constant 1 : index
    %c0_6 = arith.constant 0 : index
    %c0_7 = arith.constant 0 : index
    %5 = vector.load %arg1[%c0_5, %c1, %c0_6, %c0_7] : memref<1x49x8x256xf32, #tpu.memory_space<vmem>>, vector<1x1x8x256xf32>
    %6 = vector.shape_cast %5 : vector<1x1x8x256xf32> to vector<8x256xf32>
    %c0_8 = arith.constant 0 : index
    %c1_9 = arith.constant 1 : index
    %7 = vector.load %arg2[%c0_8, %c1_9] : memref<8x49xf32, #tpu.memory_space<vmem>>, vector<8x1xf32>
    %8 = vector.broadcast %7 : vector<8x1xf32> to vector<8x256xf32>
    %9 = arith.mulf %6, %8 : vector<8x256xf32>
    %10 = arith.addf %4, %9 : vector<8x256xf32>
    %c0_10 = arith.constant 0 : index
    %c2 = arith.constant 2 : index
    %c0_11 = arith.constant 0 : index
    %c0_12 = arith.constant 0 : index
    %11 = vector.load %arg1[%c0_10, %c2, %c0_11, %c0_12] : memref<1x49x8x256xf32, #tpu.memory_space<vmem>>, vector<1x1x8x256xf32>
    %12 = vector.shape_cast %11 : vector<1x1x8x256xf32> to vector<8x256xf32>
    %c0_13 = arith.constant 0 : index
    %c2_14 = arith.constant 2 : index
    %13 = vector.load %arg2[%c0_13, %c2_14] : memref<8x49xf32, #tpu.memory_space<vmem>>, vector<8x1xf32>
    %14 = vector.broadcast %13 : vector<8x1xf32> to vector<8x256xf32>
    %15 = arith.mulf %12, %14 : vector<8x256xf32>
    %16 = arith.addf %10, %15 : vector<8x256xf32>
    %c0_15 = arith.constant 0 : index
    %c3 = arith.constant 3 : index
    %c0_16 = arith.constant 0 : index
    %c0_17 = arith.constant 0 : index
    %17 = vector.load %arg1[%c0_15, %c3, %c0_16, %c0_17] : memref<1x49x8x256xf32, #tpu.memory_space<vmem>>, vector<1x1x8x256xf32>
    %18 = vector.shape_cast %17 : vector<1x1x8x256xf32> to vector<8x256xf32>
    %c0_18 = arith.constant 0 : index
    %c3_19 = arith.constant 3 : index
    %19 = vector.load %arg2[%c0_18, %c3_19] : memref<8x49xf32, #tpu.memory_space<vmem>>, vector<8x1xf32>
    %20 = vector.broadcast %19 : vector<8x1xf32> to vector<8x256xf32>
    %21 = arith.mulf %18, %20 : vector<8x256xf32>
    %22 = arith.addf %16, %21 : vector<8x256xf32>
    %c0_20 = arith.constant 0 : index
    %c4 = arith.constant 4 : index
    %c0_21 = arith.constant 0 : index
    %c0_22 = arith.constant 0 : index
    %23 = vector.load %arg1[%c0_20, %c4, %c0_21, %c0_22] : memref<1x49x8x256xf32, #tpu.memory_space<vmem>>, vector<1x1x8x256xf32>
    %24 = vector.shape_cast %23 : vector<1x1x8x256xf32> to vector<8x256xf32>
    %c0_23 = arith.constant 0 : index
    %c4_24 = arith.constant 4 : index
    %25 = vector.load %arg2[%c0_23, %c4_24] : memref<8x49xf32, #tpu.memory_space<vmem>>, vector<8x1xf32>
    %26 = vector.broadcast %25 : vector<8x1xf32> to vector<8x256xf32>
    %27 = arith.mulf %24, %26 : vector<8x256xf32>
    %28 = arith.addf %22, %27 : vector<8x256xf32>
    %c0_25 = arith.constant 0 : index
    %c5 = arith.constant 5 : index
    %c0_26 = arith.constant 0 : index
    %c0_27 = arith.constant 0 : index
    %29 = vector.load %arg1[%c0_25, %c5, %c0_26, %c0_27] : memref<1x49x8x256xf32, #tpu.memory_space<vmem>>, vector<1x1x8x256xf32>
    %30 = vector.shape_cast %29 : vector<1x1x8x256xf32> to vector<8x256xf32>
    %c0_28 = arith.constant 0 : index
    %c5_29 = arith.constant 5 : index
    %31 = vector.load %arg2[%c0_28, %c5_29] : memref<8x49xf32, #tpu.memory_space<vmem>>, vector<8x1xf32>
    %32 = vector.broadcast %31 : vector<8x1xf32> to vector<8x256xf32>
    %33 = arith.mulf %30, %32 : vector<8x256xf32>
    %34 = arith.addf %28, %33 : vector<8x256xf32>
    %c0_30 = arith.constant 0 : index
    %c6 = arith.constant 6 : index
    %c0_31 = arith.constant 0 : index
    %c0_32 = arith.constant 0 : index
    %35 = vector.load %arg1[%c0_30, %c6, %c0_31, %c0_32] : memref<1x49x8x256xf32, #tpu.memory_space<vmem>>, vector<1x1x8x256xf32>
    %36 = vector.shape_cast %35 : vector<1x1x8x256xf32> to vector<8x256xf32>
    %c0_33 = arith.constant 0 : index
    %c6_34 = arith.constant 6 : index
    %37 = vector.load %arg2[%c0_33, %c6_34] : memref<8x49xf32, #tpu.memory_space<vmem>>, vector<8x1xf32>
    %38 = vector.broadcast %37 : vector<8x1xf32> to vector<8x256xf32>
    %39 = arith.mulf %36, %38 : vector<8x256xf32>
    %40 = arith.addf %34, %39 : vector<8x256xf32>
    %c0_35 = arith.constant 0 : index
    %c7 = arith.constant 7 : index
    %c0_36 = arith.constant 0 : index
    %c0_37 = arith.constant 0 : index
    %41 = vector.load %arg1[%c0_35, %c7, %c0_36, %c0_37] : memref<1x49x8x256xf32, #tpu.memory_space<vmem>>, vector<1x1x8x256xf32>
    %42 = vector.shape_cast %41 : vector<1x1x8x256xf32> to vector<8x256xf32>
    %c0_38 = arith.constant 0 : index
    %c7_39 = arith.constant 7 : index
    %43 = vector.load %arg2[%c0_38, %c7_39] : memref<8x49xf32, #tpu.memory_space<vmem>>, vector<8x1xf32>
    %44 = vector.broadcast %43 : vector<8x1xf32> to vector<8x256xf32>
    %45 = arith.mulf %42, %44 : vector<8x256xf32>
    %46 = arith.addf %40, %45 : vector<8x256xf32>
    %c0_40 = arith.constant 0 : index
    %c8 = arith.constant 8 : index
    %c0_41 = arith.constant 0 : index
    %c0_42 = arith.constant 0 : index
    %47 = vector.load %arg1[%c0_40, %c8, %c0_41, %c0_42] : memref<1x49x8x256xf32, #tpu.memory_space<vmem>>, vector<1x1x8x256xf32>
    %48 = vector.shape_cast %47 : vector<1x1x8x256xf32> to vector<8x256xf32>
    %c0_43 = arith.constant 0 : index
    %c8_44 = arith.constant 8 : index
    %49 = vector.load %arg2[%c0_43, %c8_44] : memref<8x49xf32, #tpu.memory_space<vmem>>, vector<8x1xf32>
    %50 = vector.broadcast %49 : vector<8x1xf32> to vector<8x256xf32>
    %51 = arith.mulf %48, %50 : vector<8x256xf32>
    %52 = arith.addf %46, %51 : vector<8x256xf32>
    %c0_45 = arith.constant 0 : index
    %c9 = arith.constant 9 : index
    %c0_46 = arith.constant 0 : index
    %c0_47 = arith.constant 0 : index
    %53 = vector.load %arg1[%c0_45, %c9, %c0_46, %c0_47] : memref<1x49x8x256xf32, #tpu.memory_space<vmem>>, vector<1x1x8x256xf32>
    %54 = vector.shape_cast %53 : vector<1x1x8x256xf32> to vector<8x256xf32>
    %c0_48 = arith.constant 0 : index
    %c9_49 = arith.constant 9 : index
    %55 = vector.load %arg2[%c0_48, %c9_49] : memref<8x49xf32, #tpu.memory_space<vmem>>, vector<8x1xf32>
    %56 = vector.broadcast %55 : vector<8x1xf32> to vector<8x256xf32>
    %57 = arith.mulf %54, %56 : vector<8x256xf32>
    %58 = arith.addf %52, %57 : vector<8x256xf32>
    %c0_50 = arith.constant 0 : index
    %c10 = arith.constant 10 : index
    %c0_51 = arith.constant 0 : index
    %c0_52 = arith.constant 0 : index
    %59 = vector.load %arg1[%c0_50, %c10, %c0_51, %c0_52] : memref<1x49x8x256xf32, #tpu.memory_space<vmem>>, vector<1x1x8x256xf32>
    %60 = vector.shape_cast %59 : vector<1x1x8x256xf32> to vector<8x256xf32>
    %c0_53 = arith.constant 0 : index
    %c10_54 = arith.constant 10 : index
    %61 = vector.load %arg2[%c0_53, %c10_54] : memref<8x49xf32, #tpu.memory_space<vmem>>, vector<8x1xf32>
    %62 = vector.broadcast %61 : vector<8x1xf32> to vector<8x256xf32>
    %63 = arith.mulf %60, %62 : vector<8x256xf32>
    %64 = arith.addf %58, %63 : vector<8x256xf32>
    %c0_55 = arith.constant 0 : index
    %c11 = arith.constant 11 : index
    %c0_56 = arith.constant 0 : index
    %c0_57 = arith.constant 0 : index
    %65 = vector.load %arg1[%c0_55, %c11, %c0_56, %c0_57] : memref<1x49x8x256xf32, #tpu.memory_space<vmem>>, vector<1x1x8x256xf32>
    %66 = vector.shape_cast %65 : vector<1x1x8x256xf32> to vector<8x256xf32>
    %c0_58 = arith.constant 0 : index
    %c11_59 = arith.constant 11 : index
    %67 = vector.load %arg2[%c0_58, %c11_59] : memref<8x49xf32, #tpu.memory_space<vmem>>, vector<8x1xf32>
    %68 = vector.broadcast %67 : vector<8x1xf32> to vector<8x256xf32>
    %69 = arith.mulf %66, %68 : vector<8x256xf32>
    %70 = arith.addf %64, %69 : vector<8x256xf32>
    %c0_60 = arith.constant 0 : index
    %c12 = arith.constant 12 : index
    %c0_61 = arith.constant 0 : index
    %c0_62 = arith.constant 0 : index
    %71 = vector.load %arg1[%c0_60, %c12, %c0_61, %c0_62] : memref<1x49x8x256xf32, #tpu.memory_space<vmem>>, vector<1x1x8x256xf32>
    %72 = vector.shape_cast %71 : vector<1x1x8x256xf32> to vector<8x256xf32>
    %c0_63 = arith.constant 0 : index
    %c12_64 = arith.constant 12 : index
    %73 = vector.load %arg2[%c0_63, %c12_64] : memref<8x49xf32, #tpu.memory_space<vmem>>, vector<8x1xf32>
    %74 = vector.broadcast %73 : vector<8x1xf32> to vector<8x256xf32>
    %75 = arith.mulf %72, %74 : vector<8x256xf32>
    %76 = arith.addf %70, %75 : vector<8x256xf32>
    %c0_65 = arith.constant 0 : index
    %c13 = arith.constant 13 : index
    %c0_66 = arith.constant 0 : index
    %c0_67 = arith.constant 0 : index
    %77 = vector.load %arg1[%c0_65, %c13, %c0_66, %c0_67] : memref<1x49x8x256xf32, #tpu.memory_space<vmem>>, vector<1x1x8x256xf32>
    %78 = vector.shape_cast %77 : vector<1x1x8x256xf32> to vector<8x256xf32>
    %c0_68 = arith.constant 0 : index
    %c13_69 = arith.constant 13 : index
    %79 = vector.load %arg2[%c0_68, %c13_69] : memref<8x49xf32, #tpu.memory_space<vmem>>, vector<8x1xf32>
    %80 = vector.broadcast %79 : vector<8x1xf32> to vector<8x256xf32>
    %81 = arith.mulf %78, %80 : vector<8x256xf32>
    %82 = arith.addf %76, %81 : vector<8x256xf32>
    %c0_70 = arith.constant 0 : index
    %c14 = arith.constant 14 : index
    %c0_71 = arith.constant 0 : index
    %c0_72 = arith.constant 0 : index
    %83 = vector.load %arg1[%c0_70, %c14, %c0_71, %c0_72] : memref<1x49x8x256xf32, #tpu.memory_space<vmem>>, vector<1x1x8x256xf32>
    %84 = vector.shape_cast %83 : vector<1x1x8x256xf32> to vector<8x256xf32>
    %c0_73 = arith.constant 0 : index
    %c14_74 = arith.constant 14 : index
    %85 = vector.load %arg2[%c0_73, %c14_74] : memref<8x49xf32, #tpu.memory_space<vmem>>, vector<8x1xf32>
    %86 = vector.broadcast %85 : vector<8x1xf32> to vector<8x256xf32>
    %87 = arith.mulf %84, %86 : vector<8x256xf32>
    %88 = arith.addf %82, %87 : vector<8x256xf32>
    %c0_75 = arith.constant 0 : index
    %c15 = arith.constant 15 : index
    %c0_76 = arith.constant 0 : index
    %c0_77 = arith.constant 0 : index
    %89 = vector.load %arg1[%c0_75, %c15, %c0_76, %c0_77] : memref<1x49x8x256xf32, #tpu.memory_space<vmem>>, vector<1x1x8x256xf32>
    %90 = vector.shape_cast %89 : vector<1x1x8x256xf32> to vector<8x256xf32>
    %c0_78 = arith.constant 0 : index
    %c15_79 = arith.constant 15 : index
    %91 = vector.load %arg2[%c0_78, %c15_79] : memref<8x49xf32, #tpu.memory_space<vmem>>, vector<8x1xf32>
    %92 = vector.broadcast %91 : vector<8x1xf32> to vector<8x256xf32>
    %93 = arith.mulf %90, %92 : vector<8x256xf32>
    %94 = arith.addf %88, %93 : vector<8x256xf32>
    %c0_80 = arith.constant 0 : index
    %c16 = arith.constant 16 : index
    %c0_81 = arith.constant 0 : index
    %c0_82 = arith.constant 0 : index
    %95 = vector.load %arg1[%c0_80, %c16, %c0_81, %c0_82] : memref<1x49x8x256xf32, #tpu.memory_space<vmem>>, vector<1x1x8x256xf32>
    %96 = vector.shape_cast %95 : vector<1x1x8x256xf32> to vector<8x256xf32>
    %c0_83 = arith.constant 0 : index
    %c16_84 = arith.constant 16 : index
    %97 = vector.load %arg2[%c0_83, %c16_84] : memref<8x49xf32, #tpu.memory_space<vmem>>, vector<8x1xf32>
    %98 = vector.broadcast %97 : vector<8x1xf32> to vector<8x256xf32>
    %99 = arith.mulf %96, %98 : vector<8x256xf32>
    %100 = arith.addf %94, %99 : vector<8x256xf32>
    %c0_85 = arith.constant 0 : index
    %c17 = arith.constant 17 : index
    %c0_86 = arith.constant 0 : index
    %c0_87 = arith.constant 0 : index
    %101 = vector.load %arg1[%c0_85, %c17, %c0_86, %c0_87] : memref<1x49x8x256xf32, #tpu.memory_space<vmem>>, vector<1x1x8x256xf32>
    %102 = vector.shape_cast %101 : vector<1x1x8x256xf32> to vector<8x256xf32>
    %c0_88 = arith.constant 0 : index
    %c17_89 = arith.constant 17 : index
    %103 = vector.load %arg2[%c0_88, %c17_89] : memref<8x49xf32, #tpu.memory_space<vmem>>, vector<8x1xf32>
    %104 = vector.broadcast %103 : vector<8x1xf32> to vector<8x256xf32>
    %105 = arith.mulf %102, %104 : vector<8x256xf32>
    %106 = arith.addf %100, %105 : vector<8x256xf32>
    %c0_90 = arith.constant 0 : index
    %c18 = arith.constant 18 : index
    %c0_91 = arith.constant 0 : index
    %c0_92 = arith.constant 0 : index
    %107 = vector.load %arg1[%c0_90, %c18, %c0_91, %c0_92] : memref<1x49x8x256xf32, #tpu.memory_space<vmem>>, vector<1x1x8x256xf32>
    %108 = vector.shape_cast %107 : vector<1x1x8x256xf32> to vector<8x256xf32>
    %c0_93 = arith.constant 0 : index
    %c18_94 = arith.constant 18 : index
    %109 = vector.load %arg2[%c0_93, %c18_94] : memref<8x49xf32, #tpu.memory_space<vmem>>, vector<8x1xf32>
    %110 = vector.broadcast %109 : vector<8x1xf32> to vector<8x256xf32>
    %111 = arith.mulf %108, %110 : vector<8x256xf32>
    %112 = arith.addf %106, %111 : vector<8x256xf32>
    %c0_95 = arith.constant 0 : index
    %c19 = arith.constant 19 : index
    %c0_96 = arith.constant 0 : index
    %c0_97 = arith.constant 0 : index
    %113 = vector.load %arg1[%c0_95, %c19, %c0_96, %c0_97] : memref<1x49x8x256xf32, #tpu.memory_space<vmem>>, vector<1x1x8x256xf32>
    %114 = vector.shape_cast %113 : vector<1x1x8x256xf32> to vector<8x256xf32>
    %c0_98 = arith.constant 0 : index
    %c19_99 = arith.constant 19 : index
    %115 = vector.load %arg2[%c0_98, %c19_99] : memref<8x49xf32, #tpu.memory_space<vmem>>, vector<8x1xf32>
    %116 = vector.broadcast %115 : vector<8x1xf32> to vector<8x256xf32>
    %117 = arith.mulf %114, %116 : vector<8x256xf32>
    %118 = arith.addf %112, %117 : vector<8x256xf32>
    %c0_100 = arith.constant 0 : index
    %c20 = arith.constant 20 : index
    %c0_101 = arith.constant 0 : index
    %c0_102 = arith.constant 0 : index
    %119 = vector.load %arg1[%c0_100, %c20, %c0_101, %c0_102] : memref<1x49x8x256xf32, #tpu.memory_space<vmem>>, vector<1x1x8x256xf32>
    %120 = vector.shape_cast %119 : vector<1x1x8x256xf32> to vector<8x256xf32>
    %c0_103 = arith.constant 0 : index
    %c20_104 = arith.constant 20 : index
    %121 = vector.load %arg2[%c0_103, %c20_104] : memref<8x49xf32, #tpu.memory_space<vmem>>, vector<8x1xf32>
    %122 = vector.broadcast %121 : vector<8x1xf32> to vector<8x256xf32>
    %123 = arith.mulf %120, %122 : vector<8x256xf32>
    %124 = arith.addf %118, %123 : vector<8x256xf32>
    %c0_105 = arith.constant 0 : index
    %c21 = arith.constant 21 : index
    %c0_106 = arith.constant 0 : index
    %c0_107 = arith.constant 0 : index
    %125 = vector.load %arg1[%c0_105, %c21, %c0_106, %c0_107] : memref<1x49x8x256xf32, #tpu.memory_space<vmem>>, vector<1x1x8x256xf32>
    %126 = vector.shape_cast %125 : vector<1x1x8x256xf32> to vector<8x256xf32>
    %c0_108 = arith.constant 0 : index
    %c21_109 = arith.constant 21 : index
    %127 = vector.load %arg2[%c0_108, %c21_109] : memref<8x49xf32, #tpu.memory_space<vmem>>, vector<8x1xf32>
    %128 = vector.broadcast %127 : vector<8x1xf32> to vector<8x256xf32>
    %129 = arith.mulf %126, %128 : vector<8x256xf32>
    %130 = arith.addf %124, %129 : vector<8x256xf32>
    %c0_110 = arith.constant 0 : index
    %c22 = arith.constant 22 : index
    %c0_111 = arith.constant 0 : index
    %c0_112 = arith.constant 0 : index
    %131 = vector.load %arg1[%c0_110, %c22, %c0_111, %c0_112] : memref<1x49x8x256xf32, #tpu.memory_space<vmem>>, vector<1x1x8x256xf32>
    %132 = vector.shape_cast %131 : vector<1x1x8x256xf32> to vector<8x256xf32>
    %c0_113 = arith.constant 0 : index
    %c22_114 = arith.constant 22 : index
    %133 = vector.load %arg2[%c0_113, %c22_114] : memref<8x49xf32, #tpu.memory_space<vmem>>, vector<8x1xf32>
    %134 = vector.broadcast %133 : vector<8x1xf32> to vector<8x256xf32>
    %135 = arith.mulf %132, %134 : vector<8x256xf32>
    %136 = arith.addf %130, %135 : vector<8x256xf32>
    %c0_115 = arith.constant 0 : index
    %c23 = arith.constant 23 : index
    %c0_116 = arith.constant 0 : index
    %c0_117 = arith.constant 0 : index
    %137 = vector.load %arg1[%c0_115, %c23, %c0_116, %c0_117] : memref<1x49x8x256xf32, #tpu.memory_space<vmem>>, vector<1x1x8x256xf32>
    %138 = vector.shape_cast %137 : vector<1x1x8x256xf32> to vector<8x256xf32>
    %c0_118 = arith.constant 0 : index
    %c23_119 = arith.constant 23 : index
    %139 = vector.load %arg2[%c0_118, %c23_119] : memref<8x49xf32, #tpu.memory_space<vmem>>, vector<8x1xf32>
    %140 = vector.broadcast %139 : vector<8x1xf32> to vector<8x256xf32>
    %141 = arith.mulf %138, %140 : vector<8x256xf32>
    %142 = arith.addf %136, %141 : vector<8x256xf32>
    %c0_120 = arith.constant 0 : index
    %c24 = arith.constant 24 : index
    %c0_121 = arith.constant 0 : index
    %c0_122 = arith.constant 0 : index
    %143 = vector.load %arg1[%c0_120, %c24, %c0_121, %c0_122] : memref<1x49x8x256xf32, #tpu.memory_space<vmem>>, vector<1x1x8x256xf32>
    %144 = vector.shape_cast %143 : vector<1x1x8x256xf32> to vector<8x256xf32>
    %c0_123 = arith.constant 0 : index
    %c24_124 = arith.constant 24 : index
    %145 = vector.load %arg2[%c0_123, %c24_124] : memref<8x49xf32, #tpu.memory_space<vmem>>, vector<8x1xf32>
    %146 = vector.broadcast %145 : vector<8x1xf32> to vector<8x256xf32>
    %147 = arith.mulf %144, %146 : vector<8x256xf32>
    %148 = arith.addf %142, %147 : vector<8x256xf32>
    %c0_125 = arith.constant 0 : index
    %c25 = arith.constant 25 : index
    %c0_126 = arith.constant 0 : index
    %c0_127 = arith.constant 0 : index
    %149 = vector.load %arg1[%c0_125, %c25, %c0_126, %c0_127] : memref<1x49x8x256xf32, #tpu.memory_space<vmem>>, vector<1x1x8x256xf32>
    %150 = vector.shape_cast %149 : vector<1x1x8x256xf32> to vector<8x256xf32>
    %c0_128 = arith.constant 0 : index
    %c25_129 = arith.constant 25 : index
    %151 = vector.load %arg2[%c0_128, %c25_129] : memref<8x49xf32, #tpu.memory_space<vmem>>, vector<8x1xf32>
    %152 = vector.broadcast %151 : vector<8x1xf32> to vector<8x256xf32>
    %153 = arith.mulf %150, %152 : vector<8x256xf32>
    %154 = arith.addf %148, %153 : vector<8x256xf32>
    %c0_130 = arith.constant 0 : index
    %c26 = arith.constant 26 : index
    %c0_131 = arith.constant 0 : index
    %c0_132 = arith.constant 0 : index
    %155 = vector.load %arg1[%c0_130, %c26, %c0_131, %c0_132] : memref<1x49x8x256xf32, #tpu.memory_space<vmem>>, vector<1x1x8x256xf32>
    %156 = vector.shape_cast %155 : vector<1x1x8x256xf32> to vector<8x256xf32>
    %c0_133 = arith.constant 0 : index
    %c26_134 = arith.constant 26 : index
    %157 = vector.load %arg2[%c0_133, %c26_134] : memref<8x49xf32, #tpu.memory_space<vmem>>, vector<8x1xf32>
    %158 = vector.broadcast %157 : vector<8x1xf32> to vector<8x256xf32>
    %159 = arith.mulf %156, %158 : vector<8x256xf32>
    %160 = arith.addf %154, %159 : vector<8x256xf32>
    %c0_135 = arith.constant 0 : index
    %c27 = arith.constant 27 : index
    %c0_136 = arith.constant 0 : index
    %c0_137 = arith.constant 0 : index
    %161 = vector.load %arg1[%c0_135, %c27, %c0_136, %c0_137] : memref<1x49x8x256xf32, #tpu.memory_space<vmem>>, vector<1x1x8x256xf32>
    %162 = vector.shape_cast %161 : vector<1x1x8x256xf32> to vector<8x256xf32>
    %c0_138 = arith.constant 0 : index
    %c27_139 = arith.constant 27 : index
    %163 = vector.load %arg2[%c0_138, %c27_139] : memref<8x49xf32, #tpu.memory_space<vmem>>, vector<8x1xf32>
    %164 = vector.broadcast %163 : vector<8x1xf32> to vector<8x256xf32>
    %165 = arith.mulf %162, %164 : vector<8x256xf32>
    %166 = arith.addf %160, %165 : vector<8x256xf32>
    %c0_140 = arith.constant 0 : index
    %c28 = arith.constant 28 : index
    %c0_141 = arith.constant 0 : index
    %c0_142 = arith.constant 0 : index
    %167 = vector.load %arg1[%c0_140, %c28, %c0_141, %c0_142] : memref<1x49x8x256xf32, #tpu.memory_space<vmem>>, vector<1x1x8x256xf32>
    %168 = vector.shape_cast %167 : vector<1x1x8x256xf32> to vector<8x256xf32>
    %c0_143 = arith.constant 0 : index
    %c28_144 = arith.constant 28 : index
    %169 = vector.load %arg2[%c0_143, %c28_144] : memref<8x49xf32, #tpu.memory_space<vmem>>, vector<8x1xf32>
    %170 = vector.broadcast %169 : vector<8x1xf32> to vector<8x256xf32>
    %171 = arith.mulf %168, %170 : vector<8x256xf32>
    %172 = arith.addf %166, %171 : vector<8x256xf32>
    %c0_145 = arith.constant 0 : index
    %c29 = arith.constant 29 : index
    %c0_146 = arith.constant 0 : index
    %c0_147 = arith.constant 0 : index
    %173 = vector.load %arg1[%c0_145, %c29, %c0_146, %c0_147] : memref<1x49x8x256xf32, #tpu.memory_space<vmem>>, vector<1x1x8x256xf32>
    %174 = vector.shape_cast %173 : vector<1x1x8x256xf32> to vector<8x256xf32>
    %c0_148 = arith.constant 0 : index
    %c29_149 = arith.constant 29 : index
    %175 = vector.load %arg2[%c0_148, %c29_149] : memref<8x49xf32, #tpu.memory_space<vmem>>, vector<8x1xf32>
    %176 = vector.broadcast %175 : vector<8x1xf32> to vector<8x256xf32>
    %177 = arith.mulf %174, %176 : vector<8x256xf32>
    %178 = arith.addf %172, %177 : vector<8x256xf32>
    %c0_150 = arith.constant 0 : index
    %c30 = arith.constant 30 : index
    %c0_151 = arith.constant 0 : index
    %c0_152 = arith.constant 0 : index
    %179 = vector.load %arg1[%c0_150, %c30, %c0_151, %c0_152] : memref<1x49x8x256xf32, #tpu.memory_space<vmem>>, vector<1x1x8x256xf32>
    %180 = vector.shape_cast %179 : vector<1x1x8x256xf32> to vector<8x256xf32>
    %c0_153 = arith.constant 0 : index
    %c30_154 = arith.constant 30 : index
    %181 = vector.load %arg2[%c0_153, %c30_154] : memref<8x49xf32, #tpu.memory_space<vmem>>, vector<8x1xf32>
    %182 = vector.broadcast %181 : vector<8x1xf32> to vector<8x256xf32>
    %183 = arith.mulf %180, %182 : vector<8x256xf32>
    %184 = arith.addf %178, %183 : vector<8x256xf32>
    %c0_155 = arith.constant 0 : index
    %c31 = arith.constant 31 : index
    %c0_156 = arith.constant 0 : index
    %c0_157 = arith.constant 0 : index
    %185 = vector.load %arg1[%c0_155, %c31, %c0_156, %c0_157] : memref<1x49x8x256xf32, #tpu.memory_space<vmem>>, vector<1x1x8x256xf32>
    %186 = vector.shape_cast %185 : vector<1x1x8x256xf32> to vector<8x256xf32>
    %c0_158 = arith.constant 0 : index
    %c31_159 = arith.constant 31 : index
    %187 = vector.load %arg2[%c0_158, %c31_159] : memref<8x49xf32, #tpu.memory_space<vmem>>, vector<8x1xf32>
    %188 = vector.broadcast %187 : vector<8x1xf32> to vector<8x256xf32>
    %189 = arith.mulf %186, %188 : vector<8x256xf32>
    %190 = arith.addf %184, %189 : vector<8x256xf32>
    %c0_160 = arith.constant 0 : index
    %c32 = arith.constant 32 : index
    %c0_161 = arith.constant 0 : index
    %c0_162 = arith.constant 0 : index
    %191 = vector.load %arg1[%c0_160, %c32, %c0_161, %c0_162] : memref<1x49x8x256xf32, #tpu.memory_space<vmem>>, vector<1x1x8x256xf32>
    %192 = vector.shape_cast %191 : vector<1x1x8x256xf32> to vector<8x256xf32>
    %c0_163 = arith.constant 0 : index
    %c32_164 = arith.constant 32 : index
    %193 = vector.load %arg2[%c0_163, %c32_164] : memref<8x49xf32, #tpu.memory_space<vmem>>, vector<8x1xf32>
    %194 = vector.broadcast %193 : vector<8x1xf32> to vector<8x256xf32>
    %195 = arith.mulf %192, %194 : vector<8x256xf32>
    %196 = arith.addf %190, %195 : vector<8x256xf32>
    %c0_165 = arith.constant 0 : index
    %c33 = arith.constant 33 : index
    %c0_166 = arith.constant 0 : index
    %c0_167 = arith.constant 0 : index
    %197 = vector.load %arg1[%c0_165, %c33, %c0_166, %c0_167] : memref<1x49x8x256xf32, #tpu.memory_space<vmem>>, vector<1x1x8x256xf32>
    %198 = vector.shape_cast %197 : vector<1x1x8x256xf32> to vector<8x256xf32>
    %c0_168 = arith.constant 0 : index
    %c33_169 = arith.constant 33 : index
    %199 = vector.load %arg2[%c0_168, %c33_169] : memref<8x49xf32, #tpu.memory_space<vmem>>, vector<8x1xf32>
    %200 = vector.broadcast %199 : vector<8x1xf32> to vector<8x256xf32>
    %201 = arith.mulf %198, %200 : vector<8x256xf32>
    %202 = arith.addf %196, %201 : vector<8x256xf32>
    %c0_170 = arith.constant 0 : index
    %c34 = arith.constant 34 : index
    %c0_171 = arith.constant 0 : index
    %c0_172 = arith.constant 0 : index
    %203 = vector.load %arg1[%c0_170, %c34, %c0_171, %c0_172] : memref<1x49x8x256xf32, #tpu.memory_space<vmem>>, vector<1x1x8x256xf32>
    %204 = vector.shape_cast %203 : vector<1x1x8x256xf32> to vector<8x256xf32>
    %c0_173 = arith.constant 0 : index
    %c34_174 = arith.constant 34 : index
    %205 = vector.load %arg2[%c0_173, %c34_174] : memref<8x49xf32, #tpu.memory_space<vmem>>, vector<8x1xf32>
    %206 = vector.broadcast %205 : vector<8x1xf32> to vector<8x256xf32>
    %207 = arith.mulf %204, %206 : vector<8x256xf32>
    %208 = arith.addf %202, %207 : vector<8x256xf32>
    %c0_175 = arith.constant 0 : index
    %c35 = arith.constant 35 : index
    %c0_176 = arith.constant 0 : index
    %c0_177 = arith.constant 0 : index
    %209 = vector.load %arg1[%c0_175, %c35, %c0_176, %c0_177] : memref<1x49x8x256xf32, #tpu.memory_space<vmem>>, vector<1x1x8x256xf32>
    %210 = vector.shape_cast %209 : vector<1x1x8x256xf32> to vector<8x256xf32>
    %c0_178 = arith.constant 0 : index
    %c35_179 = arith.constant 35 : index
    %211 = vector.load %arg2[%c0_178, %c35_179] : memref<8x49xf32, #tpu.memory_space<vmem>>, vector<8x1xf32>
    %212 = vector.broadcast %211 : vector<8x1xf32> to vector<8x256xf32>
    %213 = arith.mulf %210, %212 : vector<8x256xf32>
    %214 = arith.addf %208, %213 : vector<8x256xf32>
    %c0_180 = arith.constant 0 : index
    %c36 = arith.constant 36 : index
    %c0_181 = arith.constant 0 : index
    %c0_182 = arith.constant 0 : index
    %215 = vector.load %arg1[%c0_180, %c36, %c0_181, %c0_182] : memref<1x49x8x256xf32, #tpu.memory_space<vmem>>, vector<1x1x8x256xf32>
    %216 = vector.shape_cast %215 : vector<1x1x8x256xf32> to vector<8x256xf32>
    %c0_183 = arith.constant 0 : index
    %c36_184 = arith.constant 36 : index
    %217 = vector.load %arg2[%c0_183, %c36_184] : memref<8x49xf32, #tpu.memory_space<vmem>>, vector<8x1xf32>
    %218 = vector.broadcast %217 : vector<8x1xf32> to vector<8x256xf32>
    %219 = arith.mulf %216, %218 : vector<8x256xf32>
    %220 = arith.addf %214, %219 : vector<8x256xf32>
    %c0_185 = arith.constant 0 : index
    %c37 = arith.constant 37 : index
    %c0_186 = arith.constant 0 : index
    %c0_187 = arith.constant 0 : index
    %221 = vector.load %arg1[%c0_185, %c37, %c0_186, %c0_187] : memref<1x49x8x256xf32, #tpu.memory_space<vmem>>, vector<1x1x8x256xf32>
    %222 = vector.shape_cast %221 : vector<1x1x8x256xf32> to vector<8x256xf32>
    %c0_188 = arith.constant 0 : index
    %c37_189 = arith.constant 37 : index
    %223 = vector.load %arg2[%c0_188, %c37_189] : memref<8x49xf32, #tpu.memory_space<vmem>>, vector<8x1xf32>
    %224 = vector.broadcast %223 : vector<8x1xf32> to vector<8x256xf32>
    %225 = arith.mulf %222, %224 : vector<8x256xf32>
    %226 = arith.addf %220, %225 : vector<8x256xf32>
    %c0_190 = arith.constant 0 : index
    %c38 = arith.constant 38 : index
    %c0_191 = arith.constant 0 : index
    %c0_192 = arith.constant 0 : index
    %227 = vector.load %arg1[%c0_190, %c38, %c0_191, %c0_192] : memref<1x49x8x256xf32, #tpu.memory_space<vmem>>, vector<1x1x8x256xf32>
    %228 = vector.shape_cast %227 : vector<1x1x8x256xf32> to vector<8x256xf32>
    %c0_193 = arith.constant 0 : index
    %c38_194 = arith.constant 38 : index
    %229 = vector.load %arg2[%c0_193, %c38_194] : memref<8x49xf32, #tpu.memory_space<vmem>>, vector<8x1xf32>
    %230 = vector.broadcast %229 : vector<8x1xf32> to vector<8x256xf32>
    %231 = arith.mulf %228, %230 : vector<8x256xf32>
    %232 = arith.addf %226, %231 : vector<8x256xf32>
    %c0_195 = arith.constant 0 : index
    %c39 = arith.constant 39 : index
    %c0_196 = arith.constant 0 : index
    %c0_197 = arith.constant 0 : index
    %233 = vector.load %arg1[%c0_195, %c39, %c0_196, %c0_197] : memref<1x49x8x256xf32, #tpu.memory_space<vmem>>, vector<1x1x8x256xf32>
    %234 = vector.shape_cast %233 : vector<1x1x8x256xf32> to vector<8x256xf32>
    %c0_198 = arith.constant 0 : index
    %c39_199 = arith.constant 39 : index
    %235 = vector.load %arg2[%c0_198, %c39_199] : memref<8x49xf32, #tpu.memory_space<vmem>>, vector<8x1xf32>
    %236 = vector.broadcast %235 : vector<8x1xf32> to vector<8x256xf32>
    %237 = arith.mulf %234, %236 : vector<8x256xf32>
    %238 = arith.addf %232, %237 : vector<8x256xf32>
    %c0_200 = arith.constant 0 : index
    %c40 = arith.constant 40 : index
    %c0_201 = arith.constant 0 : index
    %c0_202 = arith.constant 0 : index
    %239 = vector.load %arg1[%c0_200, %c40, %c0_201, %c0_202] : memref<1x49x8x256xf32, #tpu.memory_space<vmem>>, vector<1x1x8x256xf32>
    %240 = vector.shape_cast %239 : vector<1x1x8x256xf32> to vector<8x256xf32>
    %c0_203 = arith.constant 0 : index
    %c40_204 = arith.constant 40 : index
    %241 = vector.load %arg2[%c0_203, %c40_204] : memref<8x49xf32, #tpu.memory_space<vmem>>, vector<8x1xf32>
    %242 = vector.broadcast %241 : vector<8x1xf32> to vector<8x256xf32>
    %243 = arith.mulf %240, %242 : vector<8x256xf32>
    %244 = arith.addf %238, %243 : vector<8x256xf32>
    %c0_205 = arith.constant 0 : index
    %c41 = arith.constant 41 : index
    %c0_206 = arith.constant 0 : index
    %c0_207 = arith.constant 0 : index
    %245 = vector.load %arg1[%c0_205, %c41, %c0_206, %c0_207] : memref<1x49x8x256xf32, #tpu.memory_space<vmem>>, vector<1x1x8x256xf32>
    %246 = vector.shape_cast %245 : vector<1x1x8x256xf32> to vector<8x256xf32>
    %c0_208 = arith.constant 0 : index
    %c41_209 = arith.constant 41 : index
    %247 = vector.load %arg2[%c0_208, %c41_209] : memref<8x49xf32, #tpu.memory_space<vmem>>, vector<8x1xf32>
    %248 = vector.broadcast %247 : vector<8x1xf32> to vector<8x256xf32>
    %249 = arith.mulf %246, %248 : vector<8x256xf32>
    %250 = arith.addf %244, %249 : vector<8x256xf32>
    %c0_210 = arith.constant 0 : index
    %c42 = arith.constant 42 : index
    %c0_211 = arith.constant 0 : index
    %c0_212 = arith.constant 0 : index
    %251 = vector.load %arg1[%c0_210, %c42, %c0_211, %c0_212] : memref<1x49x8x256xf32, #tpu.memory_space<vmem>>, vector<1x1x8x256xf32>
    %252 = vector.shape_cast %251 : vector<1x1x8x256xf32> to vector<8x256xf32>
    %c0_213 = arith.constant 0 : index
    %c42_214 = arith.constant 42 : index
    %253 = vector.load %arg2[%c0_213, %c42_214] : memref<8x49xf32, #tpu.memory_space<vmem>>, vector<8x1xf32>
    %254 = vector.broadcast %253 : vector<8x1xf32> to vector<8x256xf32>
    %255 = arith.mulf %252, %254 : vector<8x256xf32>
    %256 = arith.addf %250, %255 : vector<8x256xf32>
    %c0_215 = arith.constant 0 : index
    %c43 = arith.constant 43 : index
    %c0_216 = arith.constant 0 : index
    %c0_217 = arith.constant 0 : index
    %257 = vector.load %arg1[%c0_215, %c43, %c0_216, %c0_217] : memref<1x49x8x256xf32, #tpu.memory_space<vmem>>, vector<1x1x8x256xf32>
    %258 = vector.shape_cast %257 : vector<1x1x8x256xf32> to vector<8x256xf32>
    %c0_218 = arith.constant 0 : index
    %c43_219 = arith.constant 43 : index
    %259 = vector.load %arg2[%c0_218, %c43_219] : memref<8x49xf32, #tpu.memory_space<vmem>>, vector<8x1xf32>
    %260 = vector.broadcast %259 : vector<8x1xf32> to vector<8x256xf32>
    %261 = arith.mulf %258, %260 : vector<8x256xf32>
    %262 = arith.addf %256, %261 : vector<8x256xf32>
    %c0_220 = arith.constant 0 : index
    %c44 = arith.constant 44 : index
    %c0_221 = arith.constant 0 : index
    %c0_222 = arith.constant 0 : index
    %263 = vector.load %arg1[%c0_220, %c44, %c0_221, %c0_222] : memref<1x49x8x256xf32, #tpu.memory_space<vmem>>, vector<1x1x8x256xf32>
    %264 = vector.shape_cast %263 : vector<1x1x8x256xf32> to vector<8x256xf32>
    %c0_223 = arith.constant 0 : index
    %c44_224 = arith.constant 44 : index
    %265 = vector.load %arg2[%c0_223, %c44_224] : memref<8x49xf32, #tpu.memory_space<vmem>>, vector<8x1xf32>
    %266 = vector.broadcast %265 : vector<8x1xf32> to vector<8x256xf32>
    %267 = arith.mulf %264, %266 : vector<8x256xf32>
    %268 = arith.addf %262, %267 : vector<8x256xf32>
    %c0_225 = arith.constant 0 : index
    %c45 = arith.constant 45 : index
    %c0_226 = arith.constant 0 : index
    %c0_227 = arith.constant 0 : index
    %269 = vector.load %arg1[%c0_225, %c45, %c0_226, %c0_227] : memref<1x49x8x256xf32, #tpu.memory_space<vmem>>, vector<1x1x8x256xf32>
    %270 = vector.shape_cast %269 : vector<1x1x8x256xf32> to vector<8x256xf32>
    %c0_228 = arith.constant 0 : index
    %c45_229 = arith.constant 45 : index
    %271 = vector.load %arg2[%c0_228, %c45_229] : memref<8x49xf32, #tpu.memory_space<vmem>>, vector<8x1xf32>
    %272 = vector.broadcast %271 : vector<8x1xf32> to vector<8x256xf32>
    %273 = arith.mulf %270, %272 : vector<8x256xf32>
    %274 = arith.addf %268, %273 : vector<8x256xf32>
    %c0_230 = arith.constant 0 : index
    %c46 = arith.constant 46 : index
    %c0_231 = arith.constant 0 : index
    %c0_232 = arith.constant 0 : index
    %275 = vector.load %arg1[%c0_230, %c46, %c0_231, %c0_232] : memref<1x49x8x256xf32, #tpu.memory_space<vmem>>, vector<1x1x8x256xf32>
    %276 = vector.shape_cast %275 : vector<1x1x8x256xf32> to vector<8x256xf32>
    %c0_233 = arith.constant 0 : index
    %c46_234 = arith.constant 46 : index
    %277 = vector.load %arg2[%c0_233, %c46_234] : memref<8x49xf32, #tpu.memory_space<vmem>>, vector<8x1xf32>
    %278 = vector.broadcast %277 : vector<8x1xf32> to vector<8x256xf32>
    %279 = arith.mulf %276, %278 : vector<8x256xf32>
    %280 = arith.addf %274, %279 : vector<8x256xf32>
    %c0_235 = arith.constant 0 : index
    %c47 = arith.constant 47 : index
    %c0_236 = arith.constant 0 : index
    %c0_237 = arith.constant 0 : index
    %281 = vector.load %arg1[%c0_235, %c47, %c0_236, %c0_237] : memref<1x49x8x256xf32, #tpu.memory_space<vmem>>, vector<1x1x8x256xf32>
    %282 = vector.shape_cast %281 : vector<1x1x8x256xf32> to vector<8x256xf32>
    %c0_238 = arith.constant 0 : index
    %c47_239 = arith.constant 47 : index
    %283 = vector.load %arg2[%c0_238, %c47_239] : memref<8x49xf32, #tpu.memory_space<vmem>>, vector<8x1xf32>
    %284 = vector.broadcast %283 : vector<8x1xf32> to vector<8x256xf32>
    %285 = arith.mulf %282, %284 : vector<8x256xf32>
    %286 = arith.addf %280, %285 : vector<8x256xf32>
    %c0_240 = arith.constant 0 : index
    %c48 = arith.constant 48 : index
    %c0_241 = arith.constant 0 : index
    %c0_242 = arith.constant 0 : index
    %287 = vector.load %arg1[%c0_240, %c48, %c0_241, %c0_242] : memref<1x49x8x256xf32, #tpu.memory_space<vmem>>, vector<1x1x8x256xf32>
    %288 = vector.shape_cast %287 : vector<1x1x8x256xf32> to vector<8x256xf32>
    %c0_243 = arith.constant 0 : index
    %c48_244 = arith.constant 48 : index
    %289 = vector.load %arg2[%c0_243, %c48_244] : memref<8x49xf32, #tpu.memory_space<vmem>>, vector<8x1xf32>
    %290 = vector.broadcast %289 : vector<8x1xf32> to vector<8x256xf32>
    %291 = arith.mulf %288, %290 : vector<8x256xf32>
    %292 = arith.addf %286, %291 : vector<8x256xf32>
    %c0_245 = arith.constant 0 : index
    %c0_246 = arith.constant 0 : index
    %293 = vector.load %arg3[%c0_245, %c0_246] : memref<8x1xf32, #tpu.memory_space<vmem>>, vector<8x1xf32>
    %294 = vector.broadcast %293 : vector<8x1xf32> to vector<8x256xf32>
    %295 = arith.addf %292, %294 : vector<8x256xf32>
    %c0_247 = arith.constant 0 : index
    %c0_248 = arith.constant 0 : index
    %c0_249 = arith.constant 0 : index
    %296 = vector.load %arg4[%c0_247, %c0_248, %c0_249] : memref<1x8x256xf32, #tpu.memory_space<vmem>>, vector<1x8x256xf32>
    %297 = vector.shape_cast %296 : vector<1x8x256xf32> to vector<8x256xf32>
    %298 = vector.shape_cast %295 : vector<8x256xf32> to vector<1x8x256xf32>
    tpu.vector_store %arg4[%c0_247, %c0_248, %c0_249], %298 {strides = array<i32>} : memref<1x8x256xf32, #tpu.memory_space<vmem>>, vector<1x8x256xf32>,
    return
  }
  func.func @transform_0(%arg0: i32) -> (i32, i32, i32, i32) {
    %c0_i32 = arith.constant 0 : i32
    %c0_i32_0 = arith.constant 0 : i32
    %c0_i32_1 = arith.constant 0 : i32
    %c0_i32_2 = arith.constant 0 : i32
    return %arg0, %c0_i32, %c0_i32_0, %c0_i32_1 : i32, i32, i32, i32
  }
  func.func @transform_1(%arg0: i32) -> (i32, i32) {
    %c0_i32 = arith.constant 0 : i32
    %c0_i32_0 = arith.constant 0 : i32
    %c0_i32_1 = arith.constant 0 : i32
    return %c0_i32, %c0_i32_0 : i32, i32
  }
  func.func @transform_2(%arg0: i32) -> (i32, i32) {
    %c0_i32 = arith.constant 0 : i32
    %c0_i32_0 = arith.constant 0 : i32
    %c0_i32_1 = arith.constant 0 : i32
    return %c0_i32, %c0_i32_0 : i32, i32
  }
  func.func @transform_3(%arg0: i32) -> (i32, i32, i32) {
    %c0_i32 = arith.constant 0 : i32
    %c0_i32_0 = arith.constant 0 : i32
    %c0_i32_1 = arith.constant 0 : i32
    return %arg0, %c0_i32, %c0_i32_0 : i32, i32, i32
  }
}

module attributes {stable_mosaic.version = 11 : i64} {
  func.func @_dense_gelu_gap_kernel(%arg0: i32, %arg1: memref<1x72x256xf32, #tpu.memory_space<vmem>>, %arg2: memref<8x72xf32, #tpu.memory_space<vmem>>, %arg3: memref<8x1xf32, #tpu.memory_space<vmem>>, %arg4: memref<1x8x256xf32, #tpu.memory_space<vmem>>, %arg5: memref<1x8x1xf32, #tpu.memory_space<vmem>>) attributes {dimension_semantics = [#tpu.dimension_semantics<parallel>], iteration_bounds = array<i64: 2>, scalar_prefetch = 0 : i64, scratch_operands = 0 : i64, tpu.core_type = #tpu.core_type<tc>, window_params = [{transform_indices = @transform_0, window_bounds = array<i64: 1, 72, 256>}, {pipeline_mode = #tpu.pipeline_mode<synchronous>, transform_indices = @transform_1, window_bounds = array<i64: 8, 72>}, {pipeline_mode = #tpu.pipeline_mode<synchronous>, transform_indices = @transform_2, window_bounds = array<i64: 8, 1>}, {transform_indices = @transform_3, window_bounds = array<i64: 1, 8, 256>}, {transform_indices = @transform_4, window_bounds = array<i64: 1, 8, 1>}]} {
    %c0 = arith.constant 0 : index
    %c0_0 = arith.constant 0 : index
    %0 = vector.load %arg2[%c0, %c0_0] : memref<8x72xf32, #tpu.memory_space<vmem>>, vector<8x72xf32>
    %c0_1 = arith.constant 0 : index
    %c0_2 = arith.constant 0 : index
    %c0_3 = arith.constant 0 : index
    %1 = vector.load %arg1[%c0_1, %c0_2, %c0_3] : memref<1x72x256xf32, #tpu.memory_space<vmem>>, vector<1x72x256xf32>
    %2 = vector.shape_cast %1 : vector<1x72x256xf32> to vector<72x256xf32>
    %cst = arith.constant dense<0.000000e+00> : vector<8x256xf32>
    %3 = tpu.matmul %0, %2, %cst {dimension_numbers = #tpu.dot_dimension_numbers<[1], [0], [0], [1], [0, 0, 1, 1], [], []>} : vector<8x72xf32>, vector<72x256xf32>, vector<8x256xf32> -> vector<8x256xf32>
    %c0_4 = arith.constant 0 : index
    %c0_5 = arith.constant 0 : index
    %4 = vector.load %arg3[%c0_4, %c0_5] : memref<8x1xf32, #tpu.memory_space<vmem>>, vector<8x1xf32>
    %5 = vector.broadcast %4 : vector<8x1xf32> to vector<8x256xf32>
    %6 = arith.addf %3, %5 : vector<8x256xf32>
    %cst_6 = arith.constant 5.000000e-01 : f32
    %7 = vector.broadcast %cst_6 : f32 to vector<8x256xf32>
    %8 = arith.mulf %7, %6 : vector<8x256xf32>
    %cst_7 = arith.constant 4.471500e-02 : f32
    %9 = vector.broadcast %cst_7 : f32 to vector<8x256xf32>
    %10 = arith.mulf %9, %6 : vector<8x256xf32>
    %11 = arith.mulf %10, %6 : vector<8x256xf32>
    %12 = arith.mulf %11, %6 : vector<8x256xf32>
    %13 = arith.addf %6, %12 : vector<8x256xf32>
    %cst_8 = arith.constant 0.797884583 : f32
    %14 = vector.broadcast %cst_8 : f32 to vector<8x256xf32>
    %15 = arith.mulf %14, %13 : vector<8x256xf32>
    %16 = math.tanh %15 : vector<8x256xf32>
    %cst_9 = arith.constant 1.000000e+00 : f32
    %17 = vector.broadcast %cst_9 : f32 to vector<8x256xf32>
    %18 = arith.addf %17, %16 : vector<8x256xf32>
    %19 = arith.mulf %8, %18 : vector<8x256xf32>
    %c0_10 = arith.constant 0 : index
    %c0_11 = arith.constant 0 : index
    %c0_12 = arith.constant 0 : index
    %20 = vector.load %arg4[%c0_10, %c0_11, %c0_12] : memref<1x8x256xf32, #tpu.memory_space<vmem>>, vector<1x8x256xf32>
    %21 = vector.shape_cast %20 : vector<1x8x256xf32> to vector<8x256xf32>
    %22 = vector.shape_cast %19 : vector<8x256xf32> to vector<1x8x256xf32>
    tpu.vector_store %arg4[%c0_10, %c0_11, %c0_12], %22 {strides = array<i32>} : memref<1x8x256xf32, #tpu.memory_space<vmem>>, vector<1x8x256xf32>,
    %cst_13 = arith.constant dense<0.000000e+00> : vector<8xf32>
    %23 = vector.multi_reduction <add>, %19, %cst_13 [1] : vector<8x256xf32> to vector<8xf32>
    %24 = vector.shape_cast %23 : vector<8xf32> to vector<8x1xf32>
    %cst_14 = arith.constant 3.906250e-03 : f32
    %25 = vector.broadcast %cst_14 : f32 to vector<8x1xf32>
    %26 = arith.mulf %24, %25 : vector<8x1xf32>
    %c0_15 = arith.constant 0 : index
    %c0_16 = arith.constant 0 : index
    %c0_17 = arith.constant 0 : index
    %27 = vector.load %arg5[%c0_15, %c0_16, %c0_17] : memref<1x8x1xf32, #tpu.memory_space<vmem>>, vector<1x8x1xf32>
    %28 = vector.shape_cast %27 : vector<1x8x1xf32> to vector<8x1xf32>
    %29 = vector.shape_cast %26 : vector<8x1xf32> to vector<1x8x1xf32>
    tpu.vector_store %arg5[%c0_15, %c0_16, %c0_17], %29 {strides = array<i32>} : memref<1x8x1xf32, #tpu.memory_space<vmem>>, vector<1x8x1xf32>,
    return
  }
  func.func @transform_0(%arg0: i32) -> (i32, i32, i32) {
    %c0_i32 = arith.constant 0 : i32
    %c0_i32_0 = arith.constant 0 : i32
    %c0_i32_1 = arith.constant 0 : i32
    return %arg0, %c0_i32, %c0_i32_0 : i32, i32, i32
  }
  func.func @transform_1(%arg0: i32) -> (i32, i32) {
    %c0_i32 = arith.constant 0 : i32
    %c0_i32_0 = arith.constant 0 : i32
    %c0_i32_1 = arith.constant 0 : i32
    return %c0_i32, %c0_i32_0 : i32, i32
  }
  func.func @transform_2(%arg0: i32) -> (i32, i32) {
    %c0_i32 = arith.constant 0 : i32
    %c0_i32_0 = arith.constant 0 : i32
    %c0_i32_1 = arith.constant 0 : i32
    return %c0_i32, %c0_i32_0 : i32, i32
  }
  func.func @transform_3(%arg0: i32) -> (i32, i32, i32) {
    %c0_i32 = arith.constant 0 : i32
    %c0_i32_0 = arith.constant 0 : i32
    %c0_i32_1 = arith.constant 0 : i32
    return %arg0, %c0_i32, %c0_i32_0 : i32, i32, i32
  }
  func.func @transform_4(%arg0: i32) -> (i32, i32, i32) {
    %c0_i32 = arith.constant 0 : i32
    %c0_i32_0 = arith.constant 0 : i32
    %c0_i32_1 = arith.constant 0 : i32
    return %arg0, %c0_i32, %c0_i32_0 : i32, i32, i32
  }
}

module attributes {stable_mosaic.version = 11 : i64} {
  func.func @_fca_cefn_head_kernel(%arg0: i32, %arg1: memref<1x8x256xf32, #tpu.memory_space<vmem>>, %arg2: memref<1x8x256xf32, #tpu.memory_space<vmem>>, %arg3: memref<1x8x256xf32, #tpu.memory_space<vmem>>, %arg4: memref<1x8x256xf32, #tpu.memory_space<vmem>>, %arg5: memref<1x4x8x1xf32, #tpu.memory_space<vmem>>, %arg6: memref<8x8xf32, #tpu.memory_space<vmem>>, %arg7: memref<8x1xf32, #tpu.memory_space<vmem>>, %arg8: memref<8x1xf32, #tpu.memory_space<vmem>>, %arg9: memref<1x8x256xf32, #tpu.memory_space<vmem>>, %arg10: memref<32x8xf32, #tpu.memory_space<vmem>>, %arg11: memref<32x1xf32, #tpu.memory_space<vmem>>, %arg12: memref<1x8x256xf32, #tpu.memory_space<vmem>>, %arg13: memref<1x8x1xf32, #tpu.memory_space<vmem>>, %arg14: memref<1x32x256xf32, #tpu.memory_space<vmem>>) attributes {dimension_semantics = [#tpu.dimension_semantics<parallel>], iteration_bounds = array<i64: 2>, scalar_prefetch = 0 : i64, scratch_operands = 0 : i64, tpu.core_type = #tpu.core_type<tc>, window_params = [{transform_indices = @transform_0, window_bounds = array<i64: 1, 8, 256>}, {transform_indices = @transform_1, window_bounds = array<i64: 1, 8, 256>}, {transform_indices = @transform_2, window_bounds = array<i64: 1, 8, 256>}, {transform_indices = @transform_3, window_bounds = array<i64: 1, 8, 256>}, {transform_indices = @transform_4, window_bounds = array<i64: 1, 4, 8, 1>}, {pipeline_mode = #tpu.pipeline_mode<synchronous>, transform_indices = @transform_5, window_bounds = array<i64: 8, 8>}, {pipeline_mode = #tpu.pipeline_mode<synchronous>, transform_indices = @transform_6, window_bounds = array<i64: 8, 1>}, {pipeline_mode = #tpu.pipeline_mode<synchronous>, transform_indices = @transform_7, window_bounds = array<i64: 8, 1>}, {transform_indices = @transform_8, window_bounds = array<i64: 1, 8, 256>}, {pipeline_mode = #tpu.pipeline_mode<synchronous>, transform_indices = @transform_9, window_bounds = array<i64: 32, 8>}, {pipeline_mode = #tpu.pipeline_mode<synchronous>, transform_indices = @transform_10, window_bounds = array<i64: 32, 1>}, {transform_indices = @transform_11, window_bounds = array<i64: 1, 8, 256>}, {transform_indices = @transform_12, window_bounds = array<i64: 1, 8, 1>}, {transform_indices = @transform_13, window_bounds = array<i64: 1, 32, 256>}]} {
    %c0 = arith.constant 0 : index
    %c0_0 = arith.constant 0 : index
    %c0_1 = arith.constant 0 : index
    %0 = vector.load %arg1[%c0, %c0_0, %c0_1] : memref<1x8x256xf32, #tpu.memory_space<vmem>>, vector<1x8x256xf32>
    %1 = vector.shape_cast %0 : vector<1x8x256xf32> to vector<8x256xf32>
    %c0_2 = arith.constant 0 : index
    %c0_3 = arith.constant 0 : index
    %c0_4 = arith.constant 0 : index
    %c0_5 = arith.constant 0 : index
    %2 = vector.load %arg5[%c0_2, %c0_3, %c0_4, %c0_5] : memref<1x4x8x1xf32, #tpu.memory_space<vmem>>, vector<1x1x8x1xf32>
    %3 = vector.shape_cast %2 : vector<1x1x8x1xf32> to vector<8x1xf32>
    %4 = vector.broadcast %3 : vector<8x1xf32> to vector<8x256xf32>
    %5 = arith.mulf %1, %4 : vector<8x256xf32>
    %c0_6 = arith.constant 0 : index
    %c0_7 = arith.constant 0 : index
    %c0_8 = arith.constant 0 : index
    %6 = vector.load %arg2[%c0_6, %c0_7, %c0_8] : memref<1x8x256xf32, #tpu.memory_space<vmem>>, vector<1x8x256xf32>
    %7 = vector.shape_cast %6 : vector<1x8x256xf32> to vector<8x256xf32>
    %c0_9 = arith.constant 0 : index
    %c1 = arith.constant 1 : index
    %c0_10 = arith.constant 0 : index
    %c0_11 = arith.constant 0 : index
    %8 = vector.load %arg5[%c0_9, %c1, %c0_10, %c0_11] : memref<1x4x8x1xf32, #tpu.memory_space<vmem>>, vector<1x1x8x1xf32>
    %9 = vector.shape_cast %8 : vector<1x1x8x1xf32> to vector<8x1xf32>
    %10 = vector.broadcast %9 : vector<8x1xf32> to vector<8x256xf32>
    %11 = arith.mulf %7, %10 : vector<8x256xf32>
    %12 = arith.addf %5, %11 : vector<8x256xf32>
    %c0_12 = arith.constant 0 : index
    %c0_13 = arith.constant 0 : index
    %c0_14 = arith.constant 0 : index
    %13 = vector.load %arg3[%c0_12, %c0_13, %c0_14] : memref<1x8x256xf32, #tpu.memory_space<vmem>>, vector<1x8x256xf32>
    %14 = vector.shape_cast %13 : vector<1x8x256xf32> to vector<8x256xf32>
    %c0_15 = arith.constant 0 : index
    %c2 = arith.constant 2 : index
    %c0_16 = arith.constant 0 : index
    %c0_17 = arith.constant 0 : index
    %15 = vector.load %arg5[%c0_15, %c2, %c0_16, %c0_17] : memref<1x4x8x1xf32, #tpu.memory_space<vmem>>, vector<1x1x8x1xf32>
    %16 = vector.shape_cast %15 : vector<1x1x8x1xf32> to vector<8x1xf32>
    %17 = vector.broadcast %16 : vector<8x1xf32> to vector<8x256xf32>
    %18 = arith.mulf %14, %17 : vector<8x256xf32>
    %19 = arith.addf %12, %18 : vector<8x256xf32>
    %c0_18 = arith.constant 0 : index
    %c0_19 = arith.constant 0 : index
    %c0_20 = arith.constant 0 : index
    %20 = vector.load %arg4[%c0_18, %c0_19, %c0_20] : memref<1x8x256xf32, #tpu.memory_space<vmem>>, vector<1x8x256xf32>
    %21 = vector.shape_cast %20 : vector<1x8x256xf32> to vector<8x256xf32>
    %c0_21 = arith.constant 0 : index
    %c3 = arith.constant 3 : index
    %c0_22 = arith.constant 0 : index
    %c0_23 = arith.constant 0 : index
    %22 = vector.load %arg5[%c0_21, %c3, %c0_22, %c0_23] : memref<1x4x8x1xf32, #tpu.memory_space<vmem>>, vector<1x1x8x1xf32>
    %23 = vector.shape_cast %22 : vector<1x1x8x1xf32> to vector<8x1xf32>
    %24 = vector.broadcast %23 : vector<8x1xf32> to vector<8x256xf32>
    %25 = arith.mulf %21, %24 : vector<8x256xf32>
    %26 = arith.addf %19, %25 : vector<8x256xf32>
    %c0_24 = arith.constant 0 : index
    %c0_25 = arith.constant 0 : index
    %27 = vector.load %arg6[%c0_24, %c0_25] : memref<8x8xf32, #tpu.memory_space<vmem>>, vector<8x8xf32>
    %cst = arith.constant dense<0.000000e+00> : vector<8x256xf32>
    %28 = tpu.matmul %27, %26, %cst {dimension_numbers = #tpu.dot_dimension_numbers<[1], [0], [0], [1], [0, 0, 1, 1], [], []>} : vector<8x8xf32>, vector<8x256xf32>, vector<8x256xf32> -> vector<8x256xf32>
    %c0_26 = arith.constant 0 : index
    %c0_27 = arith.constant 0 : index
    %29 = vector.load %arg7[%c0_26, %c0_27] : memref<8x1xf32, #tpu.memory_space<vmem>>, vector<8x1xf32>
    %30 = vector.broadcast %29 : vector<8x1xf32> to vector<8x256xf32>
    %31 = arith.addf %28, %30 : vector<8x256xf32>
    %c0_28 = arith.constant 0 : index
    %c0_29 = arith.constant 0 : index
    %32 = vector.load %arg8[%c0_28, %c0_29] : memref<8x1xf32, #tpu.memory_space<vmem>>, vector<8x1xf32>
    %33 = vector.broadcast %32 : vector<8x1xf32> to vector<8x256xf32>
    %34 = arith.mulf %31, %33 : vector<8x256xf32>
    %c0_30 = arith.constant 0 : index
    %c0_31 = arith.constant 0 : index
    %c0_32 = arith.constant 0 : index
    %35 = vector.load %arg9[%c0_30, %c0_31, %c0_32] : memref<1x8x256xf32, #tpu.memory_space<vmem>>, vector<1x8x256xf32>
    %36 = vector.shape_cast %35 : vector<1x8x256xf32> to vector<8x256xf32>
    %37 = arith.addf %34, %36 : vector<8x256xf32>
    %c0_33 = arith.constant 0 : index
    %c0_34 = arith.constant 0 : index
    %c0_35 = arith.constant 0 : index
    %38 = vector.load %arg12[%c0_33, %c0_34, %c0_35] : memref<1x8x256xf32, #tpu.memory_space<vmem>>, vector<1x8x256xf32>
    %39 = vector.shape_cast %38 : vector<1x8x256xf32> to vector<8x256xf32>
    %40 = vector.shape_cast %37 : vector<8x256xf32> to vector<1x8x256xf32>
    tpu.vector_store %arg12[%c0_33, %c0_34, %c0_35], %40 {strides = array<i32>} : memref<1x8x256xf32, #tpu.memory_space<vmem>>, vector<1x8x256xf32>,
    %cst_36 = arith.constant dense<0.000000e+00> : vector<8xf32>
    %41 = vector.multi_reduction <add>, %37, %cst_36 [1] : vector<8x256xf32> to vector<8xf32>
    %42 = vector.shape_cast %41 : vector<8xf32> to vector<8x1xf32>
    %cst_37 = arith.constant 3.906250e-03 : f32
    %43 = vector.broadcast %cst_37 : f32 to vector<8x1xf32>
    %44 = arith.mulf %42, %43 : vector<8x1xf32>
    %c0_38 = arith.constant 0 : index
    %c0_39 = arith.constant 0 : index
    %c0_40 = arith.constant 0 : index
    %45 = vector.load %arg13[%c0_38, %c0_39, %c0_40] : memref<1x8x1xf32, #tpu.memory_space<vmem>>, vector<1x8x1xf32>
    %46 = vector.shape_cast %45 : vector<1x8x1xf32> to vector<8x1xf32>
    %47 = vector.shape_cast %44 : vector<8x1xf32> to vector<1x8x1xf32>
    tpu.vector_store %arg13[%c0_38, %c0_39, %c0_40], %47 {strides = array<i32>} : memref<1x8x1xf32, #tpu.memory_space<vmem>>, vector<1x8x1xf32>,
    %c0_41 = arith.constant 0 : index
    %c0_42 = arith.constant 0 : index
    %48 = vector.load %arg10[%c0_41, %c0_42] : memref<32x8xf32, #tpu.memory_space<vmem>>, vector<32x8xf32>
    %cst_43 = arith.constant dense<0.000000e+00> : vector<32x256xf32>
    %49 = tpu.matmul %48, %37, %cst_43 {dimension_numbers = #tpu.dot_dimension_numbers<[1], [0], [0], [1], [0, 0, 1, 1], [], []>} : vector<32x8xf32>, vector<8x256xf32>, vector<32x256xf32> -> vector<32x256xf32>
    %c0_44 = arith.constant 0 : index
    %c0_45 = arith.constant 0 : index
    %50 = vector.load %arg11[%c0_44, %c0_45] : memref<32x1xf32, #tpu.memory_space<vmem>>, vector<32x1xf32>
    %51 = vector.broadcast %50 : vector<32x1xf32> to vector<32x256xf32>
    %52 = arith.addf %49, %51 : vector<32x256xf32>
    %c0_46 = arith.constant 0 : index
    %c0_47 = arith.constant 0 : index
    %c0_48 = arith.constant 0 : index
    %53 = vector.load %arg14[%c0_46, %c0_47, %c0_48] : memref<1x32x256xf32, #tpu.memory_space<vmem>>, vector<1x32x256xf32>
    %54 = vector.shape_cast %53 : vector<1x32x256xf32> to vector<32x256xf32>
    %55 = vector.shape_cast %52 : vector<32x256xf32> to vector<1x32x256xf32>
    tpu.vector_store %arg14[%c0_46, %c0_47, %c0_48], %55 {strides = array<i32>} : memref<1x32x256xf32, #tpu.memory_space<vmem>>, vector<1x32x256xf32>,
    return
  }
  func.func @transform_0(%arg0: i32) -> (i32, i32, i32) {
    %c0_i32 = arith.constant 0 : i32
    %c0_i32_0 = arith.constant 0 : i32
    %c0_i32_1 = arith.constant 0 : i32
    return %arg0, %c0_i32, %c0_i32_0 : i32, i32, i32
  }
  func.func @transform_1(%arg0: i32) -> (i32, i32, i32) {
    %c0_i32 = arith.constant 0 : i32
    %c0_i32_0 = arith.constant 0 : i32
    %c0_i32_1 = arith.constant 0 : i32
    return %arg0, %c0_i32, %c0_i32_0 : i32, i32, i32
  }
  func.func @transform_2(%arg0: i32) -> (i32, i32, i32) {
    %c0_i32 = arith.constant 0 : i32
    %c0_i32_0 = arith.constant 0 : i32
    %c0_i32_1 = arith.constant 0 : i32
    return %arg0, %c0_i32, %c0_i32_0 : i32, i32, i32
  }
  func.func @transform_3(%arg0: i32) -> (i32, i32, i32) {
    %c0_i32 = arith.constant 0 : i32
    %c0_i32_0 = arith.constant 0 : i32
    %c0_i32_1 = arith.constant 0 : i32
    return %arg0, %c0_i32, %c0_i32_0 : i32, i32, i32
  }
  func.func @transform_4(%arg0: i32) -> (i32, i32, i32, i32) {
    %c0_i32 = arith.constant 0 : i32
    %c0_i32_0 = arith.constant 0 : i32
    %c0_i32_1 = arith.constant 0 : i32
    %c0_i32_2 = arith.constant 0 : i32
    return %arg0, %c0_i32, %c0_i32_0, %c0_i32_1 : i32, i32, i32, i32
  }
  func.func @transform_5(%arg0: i32) -> (i32, i32) {
    %c0_i32 = arith.constant 0 : i32
    %c0_i32_0 = arith.constant 0 : i32
    %c0_i32_1 = arith.constant 0 : i32
    return %c0_i32, %c0_i32_0 : i32, i32
  }
  func.func @transform_6(%arg0: i32) -> (i32, i32) {
    %c0_i32 = arith.constant 0 : i32
    %c0_i32_0 = arith.constant 0 : i32
    %c0_i32_1 = arith.constant 0 : i32
    return %c0_i32, %c0_i32_0 : i32, i32
  }
  func.func @transform_7(%arg0: i32) -> (i32, i32) {
    %c0_i32 = arith.constant 0 : i32
    %c0_i32_0 = arith.constant 0 : i32
    %c0_i32_1 = arith.constant 0 : i32
    return %c0_i32, %c0_i32_0 : i32, i32
  }
  func.func @transform_8(%arg0: i32) -> (i32, i32, i32) {
    %c0_i32 = arith.constant 0 : i32
    %c0_i32_0 = arith.constant 0 : i32
    %c0_i32_1 = arith.constant 0 : i32
    return %arg0, %c0_i32, %c0_i32_0 : i32, i32, i32
  }
  func.func @transform_9(%arg0: i32) -> (i32, i32) {
    %c0_i32 = arith.constant 0 : i32
    %c0_i32_0 = arith.constant 0 : i32
    %c0_i32_1 = arith.constant 0 : i32
    return %c0_i32, %c0_i32_0 : i32, i32
  }
  func.func @transform_10(%arg0: i32) -> (i32, i32) {
    %c0_i32 = arith.constant 0 : i32
    %c0_i32_0 = arith.constant 0 : i32
    %c0_i32_1 = arith.constant 0 : i32
    return %c0_i32, %c0_i32_0 : i32, i32
  }
  func.func @transform_11(%arg0: i32) -> (i32, i32, i32) {
    %c0_i32 = arith.constant 0 : i32
    %c0_i32_0 = arith.constant 0 : i32
    %c0_i32_1 = arith.constant 0 : i32
    return %arg0, %c0_i32, %c0_i32_0 : i32, i32, i32
  }
  func.func @transform_12(%arg0: i32) -> (i32, i32, i32) {
    %c0_i32 = arith.constant 0 : i32
    %c0_i32_0 = arith.constant 0 : i32
    %c0_i32_1 = arith.constant 0 : i32
    return %arg0, %c0_i32, %c0_i32_0 : i32, i32, i32
  }
  func.func @transform_13(%arg0: i32) -> (i32, i32, i32) {
    %c0_i32 = arith.constant 0 : i32
    %c0_i32_0 = arith.constant 0 : i32
    %c0_i32_1 = arith.constant 0 : i32
    return %arg0, %c0_i32, %c0_i32_0 : i32, i32, i32
  }
}

module attributes {stable_mosaic.version = 11 : i64} {
  func.func @_mlp3_ln_tail_kernel(%arg0: i32, %arg1: memref<1x32x256xf32, #tpu.memory_space<vmem>>, %arg2: memref<8x32xf32, #tpu.memory_space<vmem>>, %arg3: memref<8x1xf32, #tpu.memory_space<vmem>>, %arg4: memref<8x1xf32, #tpu.memory_space<vmem>>, %arg5: memref<8x1xf32, #tpu.memory_space<vmem>>, %arg6: memref<1x8x1xf32, #tpu.memory_space<vmem>>, %arg7: memref<1x8x256xf32, #tpu.memory_space<vmem>>, %arg8: memref<1x8x256xf32, #tpu.memory_space<vmem>>) attributes {dimension_semantics = [#tpu.dimension_semantics<parallel>], iteration_bounds = array<i64: 2>, scalar_prefetch = 0 : i64, scratch_operands = 0 : i64, tpu.core_type = #tpu.core_type<tc>, window_params = [{transform_indices = @transform_0, window_bounds = array<i64: 1, 32, 256>}, {pipeline_mode = #tpu.pipeline_mode<synchronous>, transform_indices = @transform_1, window_bounds = array<i64: 8, 32>}, {pipeline_mode = #tpu.pipeline_mode<synchronous>, transform_indices = @transform_2, window_bounds = array<i64: 8, 1>}, {pipeline_mode = #tpu.pipeline_mode<synchronous>, transform_indices = @transform_3, window_bounds = array<i64: 8, 1>}, {pipeline_mode = #tpu.pipeline_mode<synchronous>, transform_indices = @transform_4, window_bounds = array<i64: 8, 1>}, {transform_indices = @transform_5, window_bounds = array<i64: 1, 8, 1>}, {transform_indices = @transform_6, window_bounds = array<i64: 1, 8, 256>}, {transform_indices = @transform_7, window_bounds = array<i64: 1, 8, 256>}]} {
    %c0 = arith.constant 0 : index
    %c0_0 = arith.constant 0 : index
    %0 = vector.load %arg2[%c0, %c0_0] : memref<8x32xf32, #tpu.memory_space<vmem>>, vector<8x32xf32>
    %c0_1 = arith.constant 0 : index
    %c0_2 = arith.constant 0 : index
    %c0_3 = arith.constant 0 : index
    %1 = vector.load %arg1[%c0_1, %c0_2, %c0_3] : memref<1x32x256xf32, #tpu.memory_space<vmem>>, vector<1x32x256xf32>
    %2 = vector.shape_cast %1 : vector<1x32x256xf32> to vector<32x256xf32>
    %cst = arith.constant dense<0.000000e+00> : vector<8x256xf32>
    %3 = tpu.matmul %0, %2, %cst {dimension_numbers = #tpu.dot_dimension_numbers<[1], [0], [0], [1], [0, 0, 1, 1], [], []>} : vector<8x32xf32>, vector<32x256xf32>, vector<8x256xf32> -> vector<8x256xf32>
    %c0_4 = arith.constant 0 : index
    %c0_5 = arith.constant 0 : index
    %4 = vector.load %arg3[%c0_4, %c0_5] : memref<8x1xf32, #tpu.memory_space<vmem>>, vector<8x1xf32>
    %5 = vector.broadcast %4 : vector<8x1xf32> to vector<8x256xf32>
    %6 = arith.addf %3, %5 : vector<8x256xf32>
    %cst_6 = arith.constant dense<0.000000e+00> : vector<8xf32>
    %7 = vector.multi_reduction <add>, %6, %cst_6 [1] : vector<8x256xf32> to vector<8xf32>
    %8 = vector.shape_cast %7 : vector<8xf32> to vector<8x1xf32>
    %cst_7 = arith.constant dense<0.000000e+00> : vector<1xf32>
    %9 = vector.multi_reduction <add>, %8, %cst_7 [0] : vector<8x1xf32> to vector<1xf32>
    %10 = vector.shape_cast %9 : vector<1xf32> to vector<1x1xf32>
    %cst_8 = arith.constant 4.8828125E-4 : f32
    %11 = vector.broadcast %cst_8 : f32 to vector<1x1xf32>
    %12 = arith.mulf %10, %11 : vector<1x1xf32>
    %13 = vector.broadcast %12 : vector<1x1xf32> to vector<8x256xf32>
    %14 = arith.subf %6, %13 : vector<8x256xf32>
    %15 = arith.mulf %14, %14 : vector<8x256xf32>
    %cst_9 = arith.constant dense<0.000000e+00> : vector<8xf32>
    %16 = vector.multi_reduction <add>, %15, %cst_9 [1] : vector<8x256xf32> to vector<8xf32>
    %17 = vector.shape_cast %16 : vector<8xf32> to vector<8x1xf32>
    %cst_10 = arith.constant dense<0.000000e+00> : vector<1xf32>
    %18 = vector.multi_reduction <add>, %17, %cst_10 [0] : vector<8x1xf32> to vector<1xf32>
    %19 = vector.shape_cast %18 : vector<1xf32> to vector<1x1xf32>
    %cst_11 = arith.constant 4.8828125E-4 : f32
    %20 = vector.broadcast %cst_11 : f32 to vector<1x1xf32>
    %21 = arith.mulf %19, %20 : vector<1x1xf32>
    %cst_12 = arith.constant 9.99999974E-6 : f32
    %22 = vector.broadcast %cst_12 : f32 to vector<1x1xf32>
    %23 = arith.addf %21, %22 : vector<1x1xf32>
    %24 = math.rsqrt %23 : vector<1x1xf32>
    %25 = vector.broadcast %24 : vector<1x1xf32> to vector<8x256xf32>
    %26 = arith.mulf %14, %25 : vector<8x256xf32>
    %c0_13 = arith.constant 0 : index
    %c0_14 = arith.constant 0 : index
    %27 = vector.load %arg4[%c0_13, %c0_14] : memref<8x1xf32, #tpu.memory_space<vmem>>, vector<8x1xf32>
    %28 = vector.broadcast %27 : vector<8x1xf32> to vector<8x256xf32>
    %29 = arith.mulf %26, %28 : vector<8x256xf32>
    %c0_15 = arith.constant 0 : index
    %c0_16 = arith.constant 0 : index
    %30 = vector.load %arg5[%c0_15, %c0_16] : memref<8x1xf32, #tpu.memory_space<vmem>>, vector<8x1xf32>
    %31 = vector.broadcast %30 : vector<8x1xf32> to vector<8x256xf32>
    %32 = arith.addf %29, %31 : vector<8x256xf32>
    %c0_17 = arith.constant 0 : index
    %c0_18 = arith.constant 0 : index
    %c0_19 = arith.constant 0 : index
    %33 = vector.load %arg6[%c0_17, %c0_18, %c0_19] : memref<1x8x1xf32, #tpu.memory_space<vmem>>, vector<1x8x1xf32>
    %34 = vector.shape_cast %33 : vector<1x8x1xf32> to vector<8x1xf32>
    %35 = vector.broadcast %34 : vector<8x1xf32> to vector<8x256xf32>
    %36 = arith.mulf %32, %35 : vector<8x256xf32>
    %c0_20 = arith.constant 0 : index
    %c0_21 = arith.constant 0 : index
    %c0_22 = arith.constant 0 : index
    %37 = vector.load %arg7[%c0_20, %c0_21, %c0_22] : memref<1x8x256xf32, #tpu.memory_space<vmem>>, vector<1x8x256xf32>
    %38 = vector.shape_cast %37 : vector<1x8x256xf32> to vector<8x256xf32>
    %39 = arith.addf %36, %38 : vector<8x256xf32>
    %c0_23 = arith.constant 0 : index
    %c0_24 = arith.constant 0 : index
    %c0_25 = arith.constant 0 : index
    %40 = vector.load %arg8[%c0_23, %c0_24, %c0_25] : memref<1x8x256xf32, #tpu.memory_space<vmem>>, vector<1x8x256xf32>
    %41 = vector.shape_cast %40 : vector<1x8x256xf32> to vector<8x256xf32>
    %42 = vector.shape_cast %39 : vector<8x256xf32> to vector<1x8x256xf32>
    tpu.vector_store %arg8[%c0_23, %c0_24, %c0_25], %42 {strides = array<i32>} : memref<1x8x256xf32, #tpu.memory_space<vmem>>, vector<1x8x256xf32>,
    return
  }
  func.func @transform_0(%arg0: i32) -> (i32, i32, i32) {
    %c0_i32 = arith.constant 0 : i32
    %c0_i32_0 = arith.constant 0 : i32
    %c0_i32_1 = arith.constant 0 : i32
    return %arg0, %c0_i32, %c0_i32_0 : i32, i32, i32
  }
  func.func @transform_1(%arg0: i32) -> (i32, i32) {
    %c0_i32 = arith.constant 0 : i32
    %c0_i32_0 = arith.constant 0 : i32
    %c0_i32_1 = arith.constant 0 : i32
    return %c0_i32, %c0_i32_0 : i32, i32
  }
  func.func @transform_2(%arg0: i32) -> (i32, i32) {
    %c0_i32 = arith.constant 0 : i32
    %c0_i32_0 = arith.constant 0 : i32
    %c0_i32_1 = arith.constant 0 : i32
    return %c0_i32, %c0_i32_0 : i32, i32
  }
  func.func @transform_3(%arg0: i32) -> (i32, i32) {
    %c0_i32 = arith.constant 0 : i32
    %c0_i32_0 = arith.constant 0 : i32
    %c0_i32_1 = arith.constant 0 : i32
    return %c0_i32, %c0_i32_0 : i32, i32
  }
  func.func @transform_4(%arg0: i32) -> (i32, i32) {
    %c0_i32 = arith.constant 0 : i32
    %c0_i32_0 = arith.constant 0 : i32
    %c0_i32_1 = arith.constant 0 : i32
    return %c0_i32, %c0_i32_0 : i32, i32
  }
  func.func @transform_5(%arg0: i32) -> (i32, i32, i32) {
    %c0_i32 = arith.constant 0 : i32
    %c0_i32_0 = arith.constant 0 : i32
    %c0_i32_1 = arith.constant 0 : i32
    return %arg0, %c0_i32, %c0_i32_0 : i32, i32, i32
  }
  func.func @transform_6(%arg0: i32) -> (i32, i32, i32) {
    %c0_i32 = arith.constant 0 : i32
    %c0_i32_0 = arith.constant 0 : i32
    %c0_i32_1 = arith.constant 0 : i32
    return %arg0, %c0_i32, %c0_i32_0 : i32, i32, i32
  }
  func.func @transform_7(%arg0: i32) -> (i32, i32, i32) {
    %c0_i32 = arith.constant 0 : i32
    %c0_i32_0 = arith.constant 0 : i32
    %c0_i32_1 = arith.constant 0 : i32
    return %arg0, %c0_i32, %c0_i32_0 : i32, i32, i32
  }
}

module attributes {stable_mosaic.version = 11 : i64} {
  func.func @_dw_kernel(%arg0: i32, %arg1: memref<1x9x32x256xf32, #tpu.memory_space<vmem>>, %arg2: memref<32x9xf32, #tpu.memory_space<vmem>>, %arg3: memref<32x1xf32, #tpu.memory_space<vmem>>, %arg4: memref<1x32x256xf32, #tpu.memory_space<vmem>>) attributes {dimension_semantics = [#tpu.dimension_semantics<parallel>], iteration_bounds = array<i64: 2>, scalar_prefetch = 0 : i64, scratch_operands = 0 : i64, tpu.core_type = #tpu.core_type<tc>, window_params = [{transform_indices = @transform_0, window_bounds = array<i64: 1, 9, 32, 256>}, {pipeline_mode = #tpu.pipeline_mode<synchronous>, transform_indices = @transform_1, window_bounds = array<i64: 32, 9>}, {pipeline_mode = #tpu.pipeline_mode<synchronous>, transform_indices = @transform_2, window_bounds = array<i64: 32, 1>}, {transform_indices = @transform_3, window_bounds = array<i64: 1, 32, 256>}]} {
    %c0 = arith.constant 0 : index
    %c0_0 = arith.constant 0 : index
    %c0_1 = arith.constant 0 : index
    %c0_2 = arith.constant 0 : index
    %0 = vector.load %arg1[%c0, %c0_0, %c0_1, %c0_2] : memref<1x9x32x256xf32, #tpu.memory_space<vmem>>, vector<1x1x32x256xf32>
    %1 = vector.shape_cast %0 : vector<1x1x32x256xf32> to vector<32x256xf32>
    %c0_3 = arith.constant 0 : index
    %c0_4 = arith.constant 0 : index
    %2 = vector.load %arg2[%c0_3, %c0_4] : memref<32x9xf32, #tpu.memory_space<vmem>>, vector<32x1xf32>
    %3 = vector.broadcast %2 : vector<32x1xf32> to vector<32x256xf32>
    %4 = arith.mulf %1, %3 : vector<32x256xf32>
    %c0_5 = arith.constant 0 : index
    %c1 = arith.constant 1 : index
    %c0_6 = arith.constant 0 : index
    %c0_7 = arith.constant 0 : index
    %5 = vector.load %arg1[%c0_5, %c1, %c0_6, %c0_7] : memref<1x9x32x256xf32, #tpu.memory_space<vmem>>, vector<1x1x32x256xf32>
    %6 = vector.shape_cast %5 : vector<1x1x32x256xf32> to vector<32x256xf32>
    %c0_8 = arith.constant 0 : index
    %c1_9 = arith.constant 1 : index
    %7 = vector.load %arg2[%c0_8, %c1_9] : memref<32x9xf32, #tpu.memory_space<vmem>>, vector<32x1xf32>
    %8 = vector.broadcast %7 : vector<32x1xf32> to vector<32x256xf32>
    %9 = arith.mulf %6, %8 : vector<32x256xf32>
    %10 = arith.addf %4, %9 : vector<32x256xf32>
    %c0_10 = arith.constant 0 : index
    %c2 = arith.constant 2 : index
    %c0_11 = arith.constant 0 : index
    %c0_12 = arith.constant 0 : index
    %11 = vector.load %arg1[%c0_10, %c2, %c0_11, %c0_12] : memref<1x9x32x256xf32, #tpu.memory_space<vmem>>, vector<1x1x32x256xf32>
    %12 = vector.shape_cast %11 : vector<1x1x32x256xf32> to vector<32x256xf32>
    %c0_13 = arith.constant 0 : index
    %c2_14 = arith.constant 2 : index
    %13 = vector.load %arg2[%c0_13, %c2_14] : memref<32x9xf32, #tpu.memory_space<vmem>>, vector<32x1xf32>
    %14 = vector.broadcast %13 : vector<32x1xf32> to vector<32x256xf32>
    %15 = arith.mulf %12, %14 : vector<32x256xf32>
    %16 = arith.addf %10, %15 : vector<32x256xf32>
    %c0_15 = arith.constant 0 : index
    %c3 = arith.constant 3 : index
    %c0_16 = arith.constant 0 : index
    %c0_17 = arith.constant 0 : index
    %17 = vector.load %arg1[%c0_15, %c3, %c0_16, %c0_17] : memref<1x9x32x256xf32, #tpu.memory_space<vmem>>, vector<1x1x32x256xf32>
    %18 = vector.shape_cast %17 : vector<1x1x32x256xf32> to vector<32x256xf32>
    %c0_18 = arith.constant 0 : index
    %c3_19 = arith.constant 3 : index
    %19 = vector.load %arg2[%c0_18, %c3_19] : memref<32x9xf32, #tpu.memory_space<vmem>>, vector<32x1xf32>
    %20 = vector.broadcast %19 : vector<32x1xf32> to vector<32x256xf32>
    %21 = arith.mulf %18, %20 : vector<32x256xf32>
    %22 = arith.addf %16, %21 : vector<32x256xf32>
    %c0_20 = arith.constant 0 : index
    %c4 = arith.constant 4 : index
    %c0_21 = arith.constant 0 : index
    %c0_22 = arith.constant 0 : index
    %23 = vector.load %arg1[%c0_20, %c4, %c0_21, %c0_22] : memref<1x9x32x256xf32, #tpu.memory_space<vmem>>, vector<1x1x32x256xf32>
    %24 = vector.shape_cast %23 : vector<1x1x32x256xf32> to vector<32x256xf32>
    %c0_23 = arith.constant 0 : index
    %c4_24 = arith.constant 4 : index
    %25 = vector.load %arg2[%c0_23, %c4_24] : memref<32x9xf32, #tpu.memory_space<vmem>>, vector<32x1xf32>
    %26 = vector.broadcast %25 : vector<32x1xf32> to vector<32x256xf32>
    %27 = arith.mulf %24, %26 : vector<32x256xf32>
    %28 = arith.addf %22, %27 : vector<32x256xf32>
    %c0_25 = arith.constant 0 : index
    %c5 = arith.constant 5 : index
    %c0_26 = arith.constant 0 : index
    %c0_27 = arith.constant 0 : index
    %29 = vector.load %arg1[%c0_25, %c5, %c0_26, %c0_27] : memref<1x9x32x256xf32, #tpu.memory_space<vmem>>, vector<1x1x32x256xf32>
    %30 = vector.shape_cast %29 : vector<1x1x32x256xf32> to vector<32x256xf32>
    %c0_28 = arith.constant 0 : index
    %c5_29 = arith.constant 5 : index
    %31 = vector.load %arg2[%c0_28, %c5_29] : memref<32x9xf32, #tpu.memory_space<vmem>>, vector<32x1xf32>
    %32 = vector.broadcast %31 : vector<32x1xf32> to vector<32x256xf32>
    %33 = arith.mulf %30, %32 : vector<32x256xf32>
    %34 = arith.addf %28, %33 : vector<32x256xf32>
    %c0_30 = arith.constant 0 : index
    %c6 = arith.constant 6 : index
    %c0_31 = arith.constant 0 : index
    %c0_32 = arith.constant 0 : index
    %35 = vector.load %arg1[%c0_30, %c6, %c0_31, %c0_32] : memref<1x9x32x256xf32, #tpu.memory_space<vmem>>, vector<1x1x32x256xf32>
    %36 = vector.shape_cast %35 : vector<1x1x32x256xf32> to vector<32x256xf32>
    %c0_33 = arith.constant 0 : index
    %c6_34 = arith.constant 6 : index
    %37 = vector.load %arg2[%c0_33, %c6_34] : memref<32x9xf32, #tpu.memory_space<vmem>>, vector<32x1xf32>
    %38 = vector.broadcast %37 : vector<32x1xf32> to vector<32x256xf32>
    %39 = arith.mulf %36, %38 : vector<32x256xf32>
    %40 = arith.addf %34, %39 : vector<32x256xf32>
    %c0_35 = arith.constant 0 : index
    %c7 = arith.constant 7 : index
    %c0_36 = arith.constant 0 : index
    %c0_37 = arith.constant 0 : index
    %41 = vector.load %arg1[%c0_35, %c7, %c0_36, %c0_37] : memref<1x9x32x256xf32, #tpu.memory_space<vmem>>, vector<1x1x32x256xf32>
    %42 = vector.shape_cast %41 : vector<1x1x32x256xf32> to vector<32x256xf32>
    %c0_38 = arith.constant 0 : index
    %c7_39 = arith.constant 7 : index
    %43 = vector.load %arg2[%c0_38, %c7_39] : memref<32x9xf32, #tpu.memory_space<vmem>>, vector<32x1xf32>
    %44 = vector.broadcast %43 : vector<32x1xf32> to vector<32x256xf32>
    %45 = arith.mulf %42, %44 : vector<32x256xf32>
    %46 = arith.addf %40, %45 : vector<32x256xf32>
    %c0_40 = arith.constant 0 : index
    %c8 = arith.constant 8 : index
    %c0_41 = arith.constant 0 : index
    %c0_42 = arith.constant 0 : index
    %47 = vector.load %arg1[%c0_40, %c8, %c0_41, %c0_42] : memref<1x9x32x256xf32, #tpu.memory_space<vmem>>, vector<1x1x32x256xf32>
    %48 = vector.shape_cast %47 : vector<1x1x32x256xf32> to vector<32x256xf32>
    %c0_43 = arith.constant 0 : index
    %c8_44 = arith.constant 8 : index
    %49 = vector.load %arg2[%c0_43, %c8_44] : memref<32x9xf32, #tpu.memory_space<vmem>>, vector<32x1xf32>
    %50 = vector.broadcast %49 : vector<32x1xf32> to vector<32x256xf32>
    %51 = arith.mulf %48, %50 : vector<32x256xf32>
    %52 = arith.addf %46, %51 : vector<32x256xf32>
    %c0_45 = arith.constant 0 : index
    %c0_46 = arith.constant 0 : index
    %53 = vector.load %arg3[%c0_45, %c0_46] : memref<32x1xf32, #tpu.memory_space<vmem>>, vector<32x1xf32>
    %54 = vector.broadcast %53 : vector<32x1xf32> to vector<32x256xf32>
    %55 = arith.addf %52, %54 : vector<32x256xf32>
    %cst = arith.constant 0.000000e+00 : f32
    %56 = vector.broadcast %cst : f32 to vector<32x256xf32>
    %57 = arith.maximumf %55, %56 : vector<32x256xf32>
    %c0_47 = arith.constant 0 : index
    %c0_48 = arith.constant 0 : index
    %c0_49 = arith.constant 0 : index
    %58 = vector.load %arg4[%c0_47, %c0_48, %c0_49] : memref<1x32x256xf32, #tpu.memory_space<vmem>>, vector<1x32x256xf32>
    %59 = vector.shape_cast %58 : vector<1x32x256xf32> to vector<32x256xf32>
    %60 = vector.shape_cast %57 : vector<32x256xf32> to vector<1x32x256xf32>
    tpu.vector_store %arg4[%c0_47, %c0_48, %c0_49], %60 {strides = array<i32>} : memref<1x32x256xf32, #tpu.memory_space<vmem>>, vector<1x32x256xf32>,
    return
  }
  func.func @transform_0(%arg0: i32) -> (i32, i32, i32, i32) {
    %c0_i32 = arith.constant 0 : i32
    %c0_i32_0 = arith.constant 0 : i32
    %c0_i32_1 = arith.constant 0 : i32
    %c0_i32_2 = arith.constant 0 : i32
    return %arg0, %c0_i32, %c0_i32_0, %c0_i32_1 : i32, i32, i32, i32
  }
  func.func @transform_1(%arg0: i32) -> (i32, i32) {
    %c0_i32 = arith.constant 0 : i32
    %c0_i32_0 = arith.constant 0 : i32
    %c0_i32_1 = arith.constant 0 : i32
    return %c0_i32, %c0_i32_0 : i32, i32
  }
  func.func @transform_2(%arg0: i32) -> (i32, i32) {
    %c0_i32 = arith.constant 0 : i32
    %c0_i32_0 = arith.constant 0 : i32
    %c0_i32_1 = arith.constant 0 : i32
    return %c0_i32, %c0_i32_0 : i32, i32
  }
  func.func @transform_3(%arg0: i32) -> (i32, i32, i32) {
    %c0_i32 = arith.constant 0 : i32
    %c0_i32_0 = arith.constant 0 : i32
    %c0_i32_1 = arith.constant 0 : i32
    return %arg0, %c0_i32, %c0_i32_0 : i32, i32, i32
  }
}

</mosaic_0001>

<llo_original>
// kernel: lkd_blocks_pallas.22
$region0: #{lkd_blocks_pallas.22}
  #allocation0 [shape = 'u32[]', space=smem, size = 0x4, offset = 0x4, fixed_abs, tag = 'smem constant byte address 0x4 - core index']
  #allocation1 [shape = 'u32[144,128]{1,0:T(1,128)}', space=vmem, size = 0x12000, scoped, tag = 'internal scratch']
  %s0 = inlined_call_operand.vmem [shape: f32[2,8,256], index: 0, kind: input, shape index: {}]
  %s1 = inlined_call_operand.vmem [shape: f32[8,8], index: 1, kind: input, shape index: {}]
  %s2 = inlined_call_operand.vmem [shape: f32[8,1], index: 2, kind: input, shape index: {}]
  %s3 = inlined_call_operand.vmem [shape: f32[2,8,256], index: 3, kind: output, shape index: {}]
  %s4 = sld [smem:[#allocation0]]
  $region45: #{lkd_blocks_pallas.22} parent=0
    _
  %s6 = ssub.s32 1, %s4
  %s7 = scalar_select 0, %s6, %s4
  loop: start=0, step=1, limit=4
  $region2: #{lkd_blocks_pallas.22} parent=0 // loop_pre_header
    _
  $region3: #{lkd_blocks_pallas.22} parent=0 // loop_header
    %s9 = sphi 0, %s13
    %p10 = scmp.ge.s32.totalorder %s9, 4
    %s19 = sphi 0, %s21
    %s22 = sphi 0, %s19
    %s23 = sphi 0, %s22
    %s39 = sphi 0, %s23
    %s43 = sphi 0, %s43
    %s45 = sphi 0, %s43
    %s46 = sphi 0, %s45
    %s60 = sphi 0, %s46
    %s64 = sphi 0, %s64
    %s66 = sphi 0, %s64
    %s67 = sphi 0, %s66
    %s81 = sphi 0, %s67
    %s87 = sphi 0, %s89
    %s90 = sphi 0, %s87
    %s91 = sphi 0, %s90
    %s107 = sphi 0, %s91
  $region4: #{lkd_blocks_pallas.22} parent=0 // loop_header_branch
    %12 = sbr.rel (%p10) target = $region8
  $region5: #{lkd_blocks_pallas.22} parent=0 // loop_body
    %s14 = ssub.s32 %s9, 1
    %s15 = ssub.s32 %s9, 2
    %s16 = sadd.s32 %s9, 1
    %s17 = ssub.s32 %s9, %s16
    %p18 = scmp.eq.s32.totalorder %s17, 0
    %s20 = sadd.s32 %s19, 1
    %s21 = scalar_select %p18, %s19, %s20
    %p24 = pneg %p18
    %p25 = scmp.eq.s32.totalorder %s9, 1
    %p26 = por %p24, %p25
    %p27 = scmp.ne.s32.totalorder %s19, %s22
    %p28 = scmp.eq.s32.totalorder %s9, 0
    %p29 = por %p27, %p28
    %p30 = scmp.ne.s32.totalorder %s19, %s22
    %p31 = scmp.eq.s32.totalorder %s14, 1
    %p32 = por %p30, %p31
    %p33 = scmp.ne.s32.totalorder %s22, %s23
    %p34 = scmp.eq.s32.totalorder %s14, 0
    %p35 = por %p33, %p34
    %p36 = scmp.ne.s32.totalorder %s22, %s23
    %p37 = scmp.eq.s32.totalorder %s15, 1
    %p38 = por %p36, %p37
    %p40 = scmp.ne.s32.totalorder %s23, %s39
    %p41 = scmp.eq.s32.totalorder %s15, 0
    %p42 = por %p40, %p41
    %s44 = sadd.s32 %s43, 1
    %p47 = scmp.eq.s32.totalorder %s9, 1
    %p48 = scmp.ne.s32.totalorder %s43, %s45
    %p49 = scmp.eq.s32.totalorder %s9, 0
    %p50 = por %p48, %p49
    %p51 = scmp.ne.s32.totalorder %s43, %s45
    %p52 = scmp.eq.s32.totalorder %s14, 1
    %p53 = por %p51, %p52
    %p54 = scmp.ne.s32.totalorder %s45, %s46
    %p55 = scmp.eq.s32.totalorder %s14, 0
    %p56 = por %p54, %p55
    %p57 = scmp.ne.s32.totalorder %s45, %s46
    %p58 = scmp.eq.s32.totalorder %s15, 1
    %p59 = por %p57, %p58
    %p61 = scmp.ne.s32.totalorder %s46, %s60
    %p62 = scmp.eq.s32.totalorder %s15, 0
    %p63 = por %p61, %p62
    %s65 = sadd.s32 %s64, 1
    %p68 = scmp.eq.s32.totalorder %s9, 1
    %p69 = scmp.ne.s32.totalorder %s64, %s66
    %p70 = scmp.eq.s32.totalorder %s9, 0
    %p71 = por %p69, %p70
    %p72 = scmp.ne.s32.totalorder %s64, %s66
    %p73 = scmp.eq.s32.totalorder %s14, 1
    %p74 = por %p72, %p73
    %p75 = scmp.ne.s32.totalorder %s66, %s67
    %p76 = scmp.eq.s32.totalorder %s14, 0
    %p77 = por %p75, %p76
    %p78 = scmp.ne.s32.totalorder %s66, %s67
    %p79 = scmp.eq.s32.totalorder %s15, 1
    %p80 = por %p78, %p79
    %p82 = scmp.ne.s32.totalorder %s67, %s81
    %p83 = scmp.eq.s32.totalorder %s15, 0
    %p84 = por %p82, %p83
    %s85 = ssub.s32 %s9, %s16
    %p86 = scmp.eq.s32.totalorder %s85, 0
    %s88 = sadd.s32 %s87, 1
    %s89 = scalar_select %p86, %s87, %s88
    %p92 = pneg %p86
    %p93 = scmp.eq.s32.totalorder %s9, 1
    %p94 = por %p92, %p93
    %p95 = scmp.ne.s32.totalorder %s87, %s90
    %p96 = scmp.eq.s32.totalorder %s9, 0
    %p97 = por %p95, %p96
    %p98 = scmp.ne.s32.totalorder %s87, %s90
    %p99 = scmp.eq.s32.totalorder %s14, 1
    %p100 = por %p98, %p99
    %p101 = scmp.ne.s32.totalorder %s90, %s91
    %p102 = scmp.eq.s32.totalorder %s14, 0
    %p103 = por %p101, %p102
    %p104 = scmp.ne.s32.totalorder %s90, %s91
    %p105 = scmp.eq.s32.totalorder %s15, 1
    %p106 = por %p104, %p105
    %p108 = scmp.ne.s32.totalorder %s91, %s107
    %p109 = scmp.eq.s32.totalorder %s15, 0
    %p110 = por %p108, %p109
    %p111 = scmp.le.s32.totalorder 1, %s9
    %p112 = scmp.lt.s32.totalorder %s9, 3
    %p113 = pnand %p111, %p112
    %p114 = pneg %p113
    // Predicated region
    $region9: #{lkd_blocks_pallas.22} parent=5 // pred_check
      _
    $region10: #{lkd_blocks_pallas.22} parent=5 // pred_check_branch
      %116 = sbr.rel (%p113) target = $region12
    $region11: #{lkd_blocks_pallas.22} parent=5 // pred_region
      %s117 = ssub.s32 %s9, 1
      // Predicated region
      $region13: #{lkd_blocks_pallas.22} parent=11 // pred_check
        %p118 = pneg %p56
      $region14: #{lkd_blocks_pallas.22} parent=11 // pred_check_branch
        %120 = sbr.rel (%p118) target = $region16
      $region15: #{lkd_blocks_pallas.22} parent=11 // pred_region
        _
      $region16: #{lkd_blocks_pallas.22} parent=11 // pred_fallthru
        _
      // Predicated region
      $region17: #{lkd_blocks_pallas.22} parent=11 // pred_check
        %p121 = pneg %p77
      $region18: #{lkd_blocks_pallas.22} parent=11 // pred_check_branch
        %123 = sbr.rel (%p121) target = $region20
      $region19: #{lkd_blocks_pallas.22} parent=11 // pred_region
        _
      $region20: #{lkd_blocks_pallas.22} parent=11 // pred_fallthru
        _
    $region12: #{lkd_blocks_pallas.22} parent=5 // pred_fallthru
      _
    %p124 = scmp.lt.s32.totalorder %s9, 2
    // Predicated region
    $region21: #{lkd_blocks_pallas.22} parent=5 // pred_check
      %p125 = pneg %p124
    $region22: #{lkd_blocks_pallas.22} parent=5 // pred_check_branch
      %127 = sbr.rel (%p125) target = $region24
    $region23: #{lkd_blocks_pallas.22} parent=5 // pred_region
      // Predicated region
      $region25: #{lkd_blocks_pallas.22} parent=23 // pred_check
        %p128 = pneg %p29
      $region26: #{lkd_blocks_pallas.22} parent=23 // pred_check_branch
        %130 = sbr.rel (%p128) target = $region28
      $region27: #{lkd_blocks_pallas.22} parent=23 // pred_region
        %p131 = scmp.lt.s32.totalorder %s9, 1
        %s132 = scalar_select %p131, %s9, 1
        %s133 = smul.addr %s132, 2
        %s134 = smul.addr %s133, 8
        %s135 = scalar_lea.vmem %s0, %s134
      $region28: #{lkd_blocks_pallas.22} parent=23 // pred_fallthru
        _
    $region24: #{lkd_blocks_pallas.22} parent=5 // pred_fallthru
      _
    %p136 = scmp.le.s32.totalorder 1, %s9
    %p137 = scmp.lt.s32.totalorder %s9, 3
    %p138 = pnand %p136, %p137
    %p139 = pneg %p138
    // Predicated region
    $region29: #{lkd_blocks_pallas.22} parent=5 // pred_check
      _
    $region30: #{lkd_blocks_pallas.22} parent=5 // pred_check_branch
      %141 = sbr.rel (%p138) target = $region32
    $region31: #{lkd_blocks_pallas.22} parent=5 // pred_region
      %s142 = ssub.s32 %s9, 1
      %p143 = scmp.lt.s32.totalorder %s14, 1
      %s144 = scalar_select %p143, %s14, 1
      %s145 = smul.addr %s144, 2
      %s146 = smul.addr %s145, 8
      %s147 = scalar_lea.vmem %s0, %s146
      %p148 = pneg %p35
      %p149 = pneg %p32
      %p150 = pneg %p56
      %p151 = pneg %p53
      %p152 = pneg %p77
      %p153 = pneg %p74
      %p154 = pneg %p103
      %p155 = pneg %p100
      %p156 = scmp.lt.s32.totalorder %s14, 1
      %s157 = scalar_select %p156, %s14, 1
      %s158 = smul.addr %s157, 2
      %s159 = smul.addr %s158, 8
      %s160 = scalar_lea.vmem %s3, %s159
      %p161 = scmp.lt.s32.totalorder %s14, 1
      %s162 = scalar_select %p161, %s14, 1
      %s163 = smul.addr %s162, 2
      %s164 = smul.addr %s163, 8
      %s165 = scalar_lea.vmem %s0, %s164
      %p166 = scmp.lt.s32.totalorder %s14, 1
      %s167 = scalar_select %p166, %s14, 1
      %s168 = smul.addr %s167, 2
      %s169 = smul.addr %s168, 8
      %s170 = scalar_lea.vmem %s3, %s169
      %v171 = vld [vmem:[%s1] sm:$0xff]
      %v172 = vld [vmem:[%s165] sm:$0xff]
      %v173 = vld [vmem:[%s165 + $0x8] sm:$0xff]
      %v174 = vld [vmem:[%s2] sm:$0xff]
      %176 = vset.pattern.permute.xlu0 0
      %177 = vperm.xlu0 %176, %v174
      %v178 = vpop.permute.xlu0 %177
      %vm180 = vcmask 64512
      %v182 = vsel %vm180, %v171, 0
      %184 = vmatprep.subr.mxu0 0.0
      %185 = vmatpush1.msra.mxu0 0.0
      %186 = vmatprep.subr.mxu0 0.0
      %187 = vmatpush1.msra.mxu0 0.0
      %188 = vmatprep.subr.mxu0 0.0
      %189 = vmatpush1.msra.mxu0 0.0
      %190 = vmatprep.subr.mxu0 0.0
      %191 = vmatpush1.msra.mxu0 0.0
      %192 = vmatprep.subr.mxu0 0.0
      %193 = vmatpush1.msra.mxu0 0.0
      %194 = vmatprep.subr.mxu0 0.0
      %195 = vmatpush1.msra.mxu0 0.0
      %196 = vmatprep.subr.mxu0 0.0
      %197 = vmatpush1.msra.mxu0 0.0
      %198 = vmatprep.subr.mxu0 0.0
      %199 = vmatpush1.msra.mxu0 0.0
      %200 = vmatprep.subr.mxu0 0.0
      %201 = vmatpush1.msra.mxu0 0.0
      %202 = vmatprep.subr.mxu0 0.0
      %203 = vmatpush1.msra.mxu0 0.0
      %204 = vmatprep.subr.mxu0 0.0
      %205 = vmatpush1.msra.mxu0 0.0
      %206 = vmatprep.subr.mxu0 0.0
      %207 = vmatpush1.msra.mxu0 0.0
      %208 = vmatprep.subr.mxu0 0.0
      %209 = vmatpush1.msra.mxu0 0.0
      %210 = vmatprep.subr.mxu0 0.0
      %211 = vmatpush1.msra.mxu0 0.0
      %212 = vmatprep.subr.mxu0 0.0
      %213 = vmatpush1.msra.mxu0 0.0
      %214 = vmatprep.subr.mxu0 %v173
      %215 = vmatpush1.msra.mxu0 %v172
      %216 = vmatprep.subr.mxu0 0.0
      %217 = vmatpush2.msra.mxu0 0.0
      %218 = vmatprep.subr.mxu0 0.0
      %219 = vmatpush2.msra.mxu0 0.0
      %220 = vmatprep.subr.mxu0 0.0
      %221 = vmatpush2.msra.mxu0 0.0
      %222 = vmatprep.subr.mxu0 0.0
      %223 = vmatpush2.msra.mxu0 0.0
      %224 = vmatprep.subr.mxu0 0.0
      %225 = vmatpush2.msra.mxu0 0.0
      %226 = vmatprep.subr.mxu0 0.0
      %227 = vmatpush2.msra.mxu0 0.0
      %228 = vmatprep.subr.mxu0 0.0
      %229 = vmatpush2.msra.mxu0 0.0
      %230 = vmatprep.subr.mxu0 0.0
      %231 = vmatpush2.msra.mxu0 0.0
      %232 = vmatprep.subr.mxu0 0.0
      %233 = vmatpush2.msra.mxu0 0.0
      %234 = vmatprep.subr.mxu0 0.0
      %235 = vmatpush2.msra.mxu0 0.0
      %236 = vmatprep.subr.mxu0 0.0
      %237 = vmatpush2.msra.mxu0 0.0
      %238 = vmatprep.subr.mxu0 0.0
      %239 = vmatpush2.msra.mxu0 0.0
      %240 = vmatprep.subr.mxu0 0.0
      %241 = vmatpush2.msra.mxu0 0.0
      %242 = vmatprep.subr.mxu0 0.0
      %243 = vmatpush2.msra.mxu0 0.0
      %244 = vmatprep.subr.mxu0 0.0
      %245 = vmatpush2.msra.mxu0 0.0
      %246 = vmatprep.subr.mxu0 0.0
      %247 = vmatpush2.msra.mxu0 0.0
      %248 = vmatprep.mubr.f32.mxu0 0.0
      %249 = vmatmul.mubr.f32.gmra.mxu0 %v182
      %v250 = vpop.f32.mrf.mxu0
      %v251 = vadd.f32 %v178, %v250
      %v252 = vpop.f32.mrf.mxu0
      %v253 = vadd.f32 %v178, %v252
      %254 = vdwg.mxu0
      %255 = vst [vmem:[%s170] sm:$0xff] %v251
      %256 = vst [vmem:[%s170 + $0x8] sm:$0xff] %v253
      %p257 = scmp.lt.s32.totalorder %s14, 1
      %s258 = scalar_select %p257, %s14, 1
      %s259 = smul.addr %s258, 2
      %s260 = smul.addr %s259, 8
      %s261 = scalar_lea.vmem %s3, %s260
      // Predicated region
      $region33: #{lkd_blocks_pallas.22} parent=31 // pred_check
        %p262 = pneg %p100
      $region34: #{lkd_blocks_pallas.22} parent=31 // pred_check_branch
        %264 = sbr.rel (%p262) target = $region36
      $region35: #{lkd_blocks_pallas.22} parent=31 // pred_region
        _
      $region36: #{lkd_blocks_pallas.22} parent=31 // pred_fallthru
        _
    $region32: #{lkd_blocks_pallas.22} parent=5 // pred_fallthru
      _
    %p265 = scmp.le.s32.totalorder 2, %s9
    // Predicated region
    $region37: #{lkd_blocks_pallas.22} parent=5 // pred_check
      %p266 = pneg %p265
    $region38: #{lkd_blocks_pallas.22} parent=5 // pred_check_branch
      %268 = sbr.rel (%p266) target = $region40
    $region39: #{lkd_blocks_pallas.22} parent=5 // pred_region
      %s269 = ssub.s32 %s9, 2
      // Predicated region
      $region41: #{lkd_blocks_pallas.22} parent=39 // pred_check
        %p270 = pneg %p106
      $region42: #{lkd_blocks_pallas.22} parent=39 // pred_check_branch
        %272 = sbr.rel (%p270) target = $region44
      $region43: #{lkd_blocks_pallas.22} parent=39 // pred_region
        %p273 = scmp.lt.s32.totalorder %s15, 1
        %s274 = scalar_select %p273, %s15, 1
        %s275 = smul.addr %s274, 2
        %s276 = smul.addr %s275, 8
        %s277 = scalar_lea.vmem %s3, %s276
      $region44: #{lkd_blocks_pallas.22} parent=39 // pred_fallthru
        _
    $region40: #{lkd_blocks_pallas.22} parent=5 // pred_fallthru
      _
  $region6: #{lkd_blocks_pallas.22} parent=0 // loop_footer
    %s13 = sadd.s32 1, %s9
  $region7: #{lkd_blocks_pallas.22} parent=0 // loop_footer_branch
    %8 = sbr.rel target = $region3
  $region8: #{lkd_blocks_pallas.22} parent=0 // loop_exit
    _

// kernel: lkd_blocks_pallas.23
$region0: #{lkd_blocks_pallas.23}
  #allocation0 [shape = 'u32[]', space=smem, size = 0x4, offset = 0x4, fixed_abs, tag = 'smem constant byte address 0x4 - core index']
  #allocation1 [shape = 'u32[144,128]{1,0:T(1,128)}', space=vmem, size = 0x12000, scoped, tag = 'internal scratch']
  %s0 = inlined_call_operand.vmem [shape: f32[2,25,8,256], index: 0, kind: input, shape index: {}]
  %s1 = inlined_call_operand.vmem [shape: f32[8,25], index: 1, kind: input, shape index: {}]
  %s2 = inlined_call_operand.vmem [shape: f32[8,1], index: 2, kind: input, shape index: {}]
  %s3 = inlined_call_operand.vmem [shape: f32[2,8,256], index: 3, kind: output, shape index: {}]
  %s4 = sld [smem:[#allocation0]]
  $region45: #{lkd_blocks_pallas.23} parent=0
    _
  %s6 = ssub.s32 1, %s4
  %s7 = scalar_select 0, %s6, %s4
  loop: start=0, step=1, limit=4
  $region2: #{lkd_blocks_pallas.23} parent=0 // loop_pre_header
    _
  $region3: #{lkd_blocks_pallas.23} parent=0 // loop_header
    %s9 = sphi 0, %s13
    %p10 = scmp.ge.s32.totalorder %s9, 4
    %s19 = sphi 0, %s21
    %s22 = sphi 0, %s19
    %s23 = sphi 0, %s22
    %s39 = sphi 0, %s23
    %s43 = sphi 0, %s43
    %s45 = sphi 0, %s43
    %s46 = sphi 0, %s45
    %s60 = sphi 0, %s46
    %s64 = sphi 0, %s64
    %s66 = sphi 0, %s64
    %s67 = sphi 0, %s66
    %s81 = sphi 0, %s67
    %s87 = sphi 0, %s89
    %s90 = sphi 0, %s87
    %s91 = sphi 0, %s90
    %s107 = sphi 0, %s91
  $region4: #{lkd_blocks_pallas.23} parent=0 // loop_header_branch
    %12 = sbr.rel (%p10) target = $region8
  $region5: #{lkd_blocks_pallas.23} parent=0 // loop_body
    %s14 = ssub.s32 %s9, 1
    %s15 = ssub.s32 %s9, 2
    %s16 = sadd.s32 %s9, 1
    %s17 = ssub.s32 %s9, %s16
    %p18 = scmp.eq.s32.totalorder %s17, 0
    %s20 = sadd.s32 %s19, 1
    %s21 = scalar_select %p18, %s19, %s20
    %p24 = pneg %p18
    %p25 = scmp.eq.s32.totalorder %s9, 1
    %p26 = por %p24, %p25
    %p27 = scmp.ne.s32.totalorder %s19, %s22
    %p28 = scmp.eq.s32.totalorder %s9, 0
    %p29 = por %p27, %p28
    %p30 = scmp.ne.s32.totalorder %s19, %s22
    %p31 = scmp.eq.s32.totalorder %s14, 1
    %p32 = por %p30, %p31
    %p33 = scmp.ne.s32.totalorder %s22, %s23
    %p34 = scmp.eq.s32.totalorder %s14, 0
    %p35 = por %p33, %p34
    %p36 = scmp.ne.s32.totalorder %s22, %s23
    %p37 = scmp.eq.s32.totalorder %s15, 1
    %p38 = por %p36, %p37
    %p40 = scmp.ne.s32.totalorder %s23, %s39
    %p41 = scmp.eq.s32.totalorder %s15, 0
    %p42 = por %p40, %p41
    %s44 = sadd.s32 %s43, 1
    %p47 = scmp.eq.s32.totalorder %s9, 1
    %p48 = scmp.ne.s32.totalorder %s43, %s45
    %p49 = scmp.eq.s32.totalorder %s9, 0
    %p50 = por %p48, %p49
    %p51 = scmp.ne.s32.totalorder %s43, %s45
    %p52 = scmp.eq.s32.totalorder %s14, 1
    %p53 = por %p51, %p52
    %p54 = scmp.ne.s32.totalorder %s45, %s46
    %p55 = scmp.eq.s32.totalorder %s14, 0
    %p56 = por %p54, %p55
    %p57 = scmp.ne.s32.totalorder %s45, %s46
    %p58 = scmp.eq.s32.totalorder %s15, 1
    %p59 = por %p57, %p58
    %p61 = scmp.ne.s32.totalorder %s46, %s60
    %p62 = scmp.eq.s32.totalorder %s15, 0
    %p63 = por %p61, %p62
    %s65 = sadd.s32 %s64, 1
    %p68 = scmp.eq.s32.totalorder %s9, 1
    %p69 = scmp.ne.s32.totalorder %s64, %s66
    %p70 = scmp.eq.s32.totalorder %s9, 0
    %p71 = por %p69, %p70
    %p72 = scmp.ne.s32.totalorder %s64, %s66
    %p73 = scmp.eq.s32.totalorder %s14, 1
    %p74 = por %p72, %p73
    %p75 = scmp.ne.s32.totalorder %s66, %s67
    %p76 = scmp.eq.s32.totalorder %s14, 0
    %p77 = por %p75, %p76
    %p78 = scmp.ne.s32.totalorder %s66, %s67
    %p79 = scmp.eq.s32.totalorder %s15, 1
    %p80 = por %p78, %p79
    %p82 = scmp.ne.s32.totalorder %s67, %s81
    %p83 = scmp.eq.s32.totalorder %s15, 0
    %p84 = por %p82, %p83
    %s85 = ssub.s32 %s9, %s16
    %p86 = scmp.eq.s32.totalorder %s85, 0
    %s88 = sadd.s32 %s87, 1
    %s89 = scalar_select %p86, %s87, %s88
    %p92 = pneg %p86
    %p93 = scmp.eq.s32.totalorder %s9, 1
    %p94 = por %p92, %p93
    %p95 = scmp.ne.s32.totalorder %s87, %s90
    %p96 = scmp.eq.s32.totalorder %s9, 0
    %p97 = por %p95, %p96
    %p98 = scmp.ne.s32.totalorder %s87, %s90
    %p99 = scmp.eq.s32.totalorder %s14, 1
    %p100 = por %p98, %p99
    %p101 = scmp.ne.s32.totalorder %s90, %s91
    %p102 = scmp.eq.s32.totalorder %s14, 0
    %p103 = por %p101, %p102
    %p104 = scmp.ne.s32.totalorder %s90, %s91
    %p105 = scmp.eq.s32.totalorder %s15, 1
    %p106 = por %p104, %p105
    %p108 = scmp.ne.s32.totalorder %s91, %s107
    %p109 = scmp.eq.s32.totalorder %s15, 0
    %p110 = por %p108, %p109
    %p111 = scmp.le.s32.totalorder 1, %s9
    %p112 = scmp.lt.s32.totalorder %s9, 3
    %p113 = pnand %p111, %p112
    %p114 = pneg %p113
    // Predicated region
    $region9: #{lkd_blocks_pallas.23} parent=5 // pred_check
      _
    $region10: #{lkd_blocks_pallas.23} parent=5 // pred_check_branch
      %116 = sbr.rel (%p113) target = $region12
    $region11: #{lkd_blocks_pallas.23} parent=5 // pred_region
      %s117 = ssub.s32 %s9, 1
      // Predicated region
      $region13: #{lkd_blocks_pallas.23} parent=11 // pred_check
        %p118 = pneg %p56
      $region14: #{lkd_blocks_pallas.23} parent=11 // pred_check_branch
        %120 = sbr.rel (%p118) target = $region16
      $region15: #{lkd_blocks_pallas.23} parent=11 // pred_region
        _
      $region16: #{lkd_blocks_pallas.23} parent=11 // pred_fallthru
        _
      // Predicated region
      $region17: #{lkd_blocks_pallas.23} parent=11 // pred_check
        %p121 = pneg %p77
      $region18: #{lkd_blocks_pallas.23} parent=11 // pred_check_branch
        %123 = sbr.rel (%p121) target = $region20
      $region19: #{lkd_blocks_pallas.23} parent=11 // pred_region
        _
      $region20: #{lkd_blocks_pallas.23} parent=11 // pred_fallthru
        _
    $region12: #{lkd_blocks_pallas.23} parent=5 // pred_fallthru
      _
    %p124 = scmp.lt.s32.totalorder %s9, 2
    // Predicated region
    $region21: #{lkd_blocks_pallas.23} parent=5 // pred_check
      %p125 = pneg %p124
    $region22: #{lkd_blocks_pallas.23} parent=5 // pred_check_branch
      %127 = sbr.rel (%p125) target = $region24
    $region23: #{lkd_blocks_pallas.23} parent=5 // pred_region
      // Predicated region
      $region25: #{lkd_blocks_pallas.23} parent=23 // pred_check
        %p128 = pneg %p29
      $region26: #{lkd_blocks_pallas.23} parent=23 // pred_check_branch
        %130 = sbr.rel (%p128) target = $region28
      $region27: #{lkd_blocks_pallas.23} parent=23 // pred_region
        %p131 = scmp.lt.s32.totalorder %s9, 1
        %s132 = scalar_select %p131, %s9, 1
        %s133 = smul.addr %s132, 50
        %s134 = smul.addr %s133, 8
        %s135 = scalar_lea.vmem %s0, %s134
      $region28: #{lkd_blocks_pallas.23} parent=23 // pred_fallthru
        _
    $region24: #{lkd_blocks_pallas.23} parent=5 // pred_fallthru
      _
    %p136 = scmp.le.s32.totalorder 1, %s9
    %p137 = scmp.lt.s32.totalorder %s9, 3
    %p138 = pnand %p136, %p137
    %p139 = pneg %p138
    // Predicated region
    $region29: #{lkd_blocks_pallas.23} parent=5 // pred_check
      _
    $region30: #{lkd_blocks_pallas.23} parent=5 // pred_check_branch
      %141 = sbr.rel (%p138) target = $region32
    $region31: #{lkd_blocks_pallas.23} parent=5 // pred_region
      %s142 = ssub.s32 %s9, 1
      %p143 = scmp.lt.s32.totalorder %s14, 1
      %s144 = scalar_select %p143, %s14, 1
      %s145 = smul.addr %s144, 50
      %s146 = smul.addr %s145, 8
      %s147 = scalar_lea.vmem %s0, %s146
      %p148 = pneg %p35
      %p149 = pneg %p32
      %p150 = pneg %p56
      %p151 = pneg %p53
      %p152 = pneg %p77
      %p153 = pneg %p74
      %p154 = pneg %p103
      %p155 = pneg %p100
      %p156 = scmp.lt.s32.totalorder %s14, 1
      %s157 = scalar_select %p156, %s14, 1
      %s158 = smul.addr %s157, 2
      %s159 = smul.addr %s158, 8
      %s160 = scalar_lea.vmem %s3, %s159
      %p161 = scmp.lt.s32.totalorder %s14, 1
      %s162 = scalar_select %p161, %s14, 1
      %s163 = smul.addr %s162, 50
      %s164 = smul.addr %s163, 8
      %s165 = scalar_lea.vmem %s0, %s164
      %p166 = scmp.lt.s32.totalorder %s14, 1
      %s167 = scalar_select %p166, %s14, 1
      %s168 = smul.addr %s167, 2
      %s169 = smul.addr %s168, 8
      %s170 = scalar_lea.vmem %s3, %s169
      %v171 = vld [vmem:[%s165] sm:$0xff]
      %v172 = vld [vmem:[%s165 + $0x8] sm:$0xff]
      %v173 = vld [vmem:[%s1] sm:$0xff]
      %175 = vset.pattern.permute.xlu0 0
      %176 = vperm.xlu0 %175, %v173
      %v177 = vpop.permute.xlu0 %176
      %v179 = vmul.f32 %v171, %v177
      %v180 = vmul.f32 %v172, %v177
      %s181 = scalar_lea.vmem %s165, 16
      %v182 = vld [vmem:[%s181] sm:$0xff]
      %v183 = vld [vmem:[%s181 + $0x8] sm:$0xff]
      %184 = vset.pattern.permute.xlu0 1
      %185 = vperm.xlu0 %184, %v173
      %v186 = vpop.permute.xlu0 %185
      %v188 = vmul.f32 %v182, %v186
      %v189 = vmul.f32 %v183, %v186
      %v190 = vadd.f32 %v179, %v188
      %v191 = vadd.f32 %v180, %v189
      %s192 = scalar_lea.vmem %s165, 32
      %v193 = vld [vmem:[%s192] sm:$0xff]
      %v194 = vld [vmem:[%s192 + $0x8] sm:$0xff]
      %195 = vset.pattern.permute.xlu0 2
      %196 = vperm.xlu0 %195, %v173
      %v197 = vpop.permute.xlu0 %196
      %v199 = vmul.f32 %v193, %v197
      %v200 = vmul.f32 %v194, %v197
      %v201 = vadd.f32 %v190, %v199
      %v202 = vadd.f32 %v191, %v200
      %s203 = scalar_lea.vmem %s165, 48
      %v204 = vld [vmem:[%s203] sm:$0xff]
      %v205 = vld [vmem:[%s203 + $0x8] sm:$0xff]
      %206 = vset.pattern.permute.xlu0 3
      %207 = vperm.xlu0 %206, %v173
      %v208 = vpop.permute.xlu0 %207
      %v210 = vmul.f32 %v204, %v208
      %v211 = vmul.f32 %v205, %v208
      %v212 = vadd.f32 %v201, %v210
      %v213 = vadd.f32 %v202, %v211
      %s214 = scalar_lea.vmem %s165, 64
      %v215 = vld [vmem:[%s214] sm:$0xff]
      %v216 = vld [vmem:[%s214 + $0x8] sm:$0xff]
      %217 = vset.pattern.permute.xlu0 4
      %218 = vperm.xlu0 %217, %v173
      %v219 = vpop.permute.xlu0 %218
      %v221 = vmul.f32 %v215, %v219
      %v222 = vmul.f32 %v216, %v219
      %v223 = vadd.f32 %v212, %v221
      %v224 = vadd.f32 %v213, %v222
      %s225 = scalar_lea.vmem %s165, 80
      %v226 = vld [vmem:[%s225] sm:$0xff]
      %v227 = vld [vmem:[%s225 + $0x8] sm:$0xff]
      %228 = vset.pattern.permute.xlu0 5
      %229 = vperm.xlu0 %228, %v173
      %v230 = vpop.permute.xlu0 %229
      %v232 = vmul.f32 %v226, %v230
      %v233 = vmul.f32 %v227, %v230
      %v234 = vadd.f32 %v223, %v232
      %v235 = vadd.f32 %v224, %v233
      %s236 = scalar_lea.vmem %s165, 96
      %v237 = vld [vmem:[%s236] sm:$0xff]
      %v238 = vld [vmem:[%s236 + $0x8] sm:$0xff]
      %239 = vset.pattern.permute.xlu0 6
      %240 = vperm.xlu0 %239, %v173
      %v241 = vpop.permute.xlu0 %240
      %v243 = vmul.f32 %v237, %v241
      %v244 = vmul.f32 %v238, %v241
      %v245 = vadd.f32 %v234, %v243
      %v246 = vadd.f32 %v235, %v244
      %s247 = scalar_lea.vmem %s165, 112
      %v248 = vld [vmem:[%s247] sm:$0xff]
      %v249 = vld [vmem:[%s247 + $0x8] sm:$0xff]
      %250 = vset.pattern.permute.xlu0 7
      %251 = vperm.xlu0 %250, %v173
      %v252 = vpop.permute.xlu0 %251
      %v254 = vmul.f32 %v248, %v252
      %v255 = vmul.f32 %v249, %v252
      %v256 = vadd.f32 %v245, %v254
      %v257 = vadd.f32 %v246, %v255
      %s258 = scalar_lea.vmem %s165, 128
      %v259 = vld [vmem:[%s258] sm:$0xff]
      %v260 = vld [vmem:[%s258 + $0x8] sm:$0xff]
      %261 = vset.pattern.permute.xlu0 8
      %262 = vperm.xlu0 %261, %v173
      %v263 = vpop.permute.xlu0 %262
      %v265 = vmul.f32 %v259, %v263
      %v266 = vmul.f32 %v260, %v263
      %v267 = vadd.f32 %v256, %v265
      %v268 = vadd.f32 %v257, %v266
      %s269 = scalar_lea.vmem %s165, 144
      %v270 = vld [vmem:[%s269] sm:$0xff]
      %v271 = vld [vmem:[%s269 + $0x8] sm:$0xff]
      %272 = vset.pattern.permute.xlu0 9
      %273 = vperm.xlu0 %272, %v173
      %v274 = vpop.permute.xlu0 %273
      %v276 = vmul.f32 %v270, %v274
      %v277 = vmul.f32 %v271, %v274
      %v278 = vadd.f32 %v267, %v276
      %v279 = vadd.f32 %v268, %v277
      %s280 = scalar_lea.vmem %s165, 160
      %v281 = vld [vmem:[%s280] sm:$0xff]
      %v282 = vld [vmem:[%s280 + $0x8] sm:$0xff]
      %283 = vset.pattern.permute.xlu0 10
      %284 = vperm.xlu0 %283, %v173
      %v285 = vpop.permute.xlu0 %284
      %v287 = vmul.f32 %v281, %v285
      %v288 = vmul.f32 %v282, %v285
      %v289 = vadd.f32 %v278, %v287
      %v290 = vadd.f32 %v279, %v288
      %s291 = scalar_lea.vmem %s165, 176
      %v292 = vld [vmem:[%s291] sm:$0xff]
      %v293 = vld [vmem:[%s291 + $0x8] sm:$0xff]
      %294 = vset.pattern.permute.xlu0 11
      %295 = vperm.xlu0 %294, %v173
      %v296 = vpop.permute.xlu0 %295
      %v298 = vmul.f32 %v292, %v296
      %v299 = vmul.f32 %v293, %v296
      %v300 = vadd.f32 %v289, %v298
      %v301 = vadd.f32 %v290, %v299
      %s302 = scalar_lea.vmem %s165, 192
      %v303 = vld [vmem:[%s302] sm:$0xff]
      %v304 = vld [vmem:[%s302 + $0x8] sm:$0xff]
      %305 = vset.pattern.permute.xlu0 12
      %306 = vperm.xlu0 %305, %v173
      %v307 = vpop.permute.xlu0 %306
      %v309 = vmul.f32 %v303, %v307
      %v310 = vmul.f32 %v304, %v307
      %v311 = vadd.f32 %v300, %v309
      %v312 = vadd.f32 %v301, %v310
      %s313 = scalar_lea.vmem %s165, 208
      %v314 = vld [vmem:[%s313] sm:$0xff]
      %v315 = vld [vmem:[%s313 + $0x8] sm:$0xff]
      %316 = vset.pattern.permute.xlu0 13
      %317 = vperm.xlu0 %316, %v173
      %v318 = vpop.permute.xlu0 %317
      %v320 = vmul.f32 %v314, %v318
      %v321 = vmul.f32 %v315, %v318
      %v322 = vadd.f32 %v311, %v320
      %v323 = vadd.f32 %v312, %v321
      %s324 = scalar_lea.vmem %s165, 224
      %v325 = vld [vmem:[%s324] sm:$0xff]
      %v326 = vld [vmem:[%s324 + $0x8] sm:$0xff]
      %327 = vset.pattern.permute.xlu0 14
      %328 = vperm.xlu0 %327, %v173
      %v329 = vpop.permute.xlu0 %328
      %v331 = vmul.f32 %v325, %v329
      %v332 = vmul.f32 %v326, %v329
      %v333 = vadd.f32 %v322, %v331
      %v334 = vadd.f32 %v323, %v332
      %s335 = scalar_lea.vmem %s165, 240
      %v336 = vld [vmem:[%s335] sm:$0xff]
      %v337 = vld [vmem:[%s335 + $0x8] sm:$0xff]
      %338 = vset.pattern.permute.xlu0 15
      %339 = vperm.xlu0 %338, %v173
      %v340 = vpop.permute.xlu0 %339
      %v342 = vmul.f32 %v336, %v340
      %v343 = vmul.f32 %v337, %v340
      %v344 = vadd.f32 %v333, %v342
      %v345 = vadd.f32 %v334, %v343
      %s346 = scalar_lea.vmem %s165, 256
      %v347 = vld [vmem:[%s346] sm:$0xff]
      %v348 = vld [vmem:[%s346 + $0x8] sm:$0xff]
      %349 = vset.pattern.permute.xlu0 16
      %350 = vperm.xlu0 %349, %v173
      %v351 = vpop.permute.xlu0 %350
      %v353 = vmul.f32 %v347, %v351
      %v354 = vmul.f32 %v348, %v351
      %v355 = vadd.f32 %v344, %v353
      %v356 = vadd.f32 %v345, %v354
      %s357 = scalar_lea.vmem %s165, 272
      %v358 = vld [vmem:[%s357] sm:$0xff]
      %v359 = vld [vmem:[%s357 + $0x8] sm:$0xff]
      %360 = vset.pattern.permute.xlu0 17
      %361 = vperm.xlu0 %360, %v173
      %v362 = vpop.permute.xlu0 %361
      %v364 = vmul.f32 %v358, %v362
      %v365 = vmul.f32 %v359, %v362
      %v366 = vadd.f32 %v355, %v364
      %v367 = vadd.f32 %v356, %v365
      %s368 = scalar_lea.vmem %s165, 288
      %v369 = vld [vmem:[%s368] sm:$0xff]
      %v370 = vld [vmem:[%s368 + $0x8] sm:$0xff]
      %371 = vset.pattern.permute.xlu0 18
      %372 = vperm.xlu0 %371, %v173
      %v373 = vpop.permute.xlu0 %372
      %v375 = vmul.f32 %v369, %v373
      %v376 = vmul.f32 %v370, %v373
      %v377 = vadd.f32 %v366, %v375
      %v378 = vadd.f32 %v367, %v376
      %s379 = scalar_lea.vmem %s165, 304
      %v380 = vld [vmem:[%s379] sm:$0xff]
      %v381 = vld [vmem:[%s379 + $0x8] sm:$0xff]
      %382 = vset.pattern.permute.xlu0 19
      %383 = vperm.xlu0 %382, %v173
      %v384 = vpop.permute.xlu0 %383
      %v386 = vmul.f32 %v380, %v384
      %v387 = vmul.f32 %v381, %v384
      %v388 = vadd.f32 %v377, %v386
      %v389 = vadd.f32 %v378, %v387
      %s390 = scalar_lea.vmem %s165, 320
      %v391 = vld [vmem:[%s390] sm:$0xff]
      %v392 = vld [vmem:[%s390 + $0x8] sm:$0xff]
      %393 = vset.pattern.permute.xlu0 20
      %394 = vperm.xlu0 %393, %v173
      %v395 = vpop.permute.xlu0 %394
      %v397 = vmul.f32 %v391, %v395
      %v398 = vmul.f32 %v392, %v395
      %v399 = vadd.f32 %v388, %v397
      %v400 = vadd.f32 %v389, %v398
      %s401 = scalar_lea.vmem %s165, 336
      %v402 = vld [vmem:[%s401] sm:$0xff]
      %v403 = vld [vmem:[%s401 + $0x8] sm:$0xff]
      %404 = vset.pattern.permute.xlu0 21
      %405 = vperm.xlu0 %404, %v173
      %v406 = vpop.permute.xlu0 %405
      %v408 = vmul.f32 %v402, %v406
      %v409 = vmul.f32 %v403, %v406
      %v410 = vadd.f32 %v399, %v408
      %v411 = vadd.f32 %v400, %v409
      %s412 = scalar_lea.vmem %s165, 352
      %v413 = vld [vmem:[%s412] sm:$0xff]
      %v414 = vld [vmem:[%s412 + $0x8] sm:$0xff]
      %415 = vset.pattern.permute.xlu0 22
      %416 = vperm.xlu0 %415, %v173
      %v417 = vpop.permute.xlu0 %416
      %v419 = vmul.f32 %v413, %v417
      %v420 = vmul.f32 %v414, %v417
      %v421 = vadd.f32 %v410, %v419
      %v422 = vadd.f32 %v411, %v420
      %s423 = scalar_lea.vmem %s165, 368
      %v424 = vld [vmem:[%s423] sm:$0xff]
      %v425 = vld [vmem:[%s423 + $0x8] sm:$0xff]
      %426 = vset.pattern.permute.xlu0 23
      %427 = vperm.xlu0 %426, %v173
      %v428 = vpop.permute.xlu0 %427
      %v430 = vmul.f32 %v424, %v428
      %v431 = vmul.f32 %v425, %v428
      %v432 = vadd.f32 %v421, %v430
      %v433 = vadd.f32 %v422, %v431
      %s434 = scalar_lea.vmem %s165, 384
      %v435 = vld [vmem:[%s434] sm:$0xff]
      %v436 = vld [vmem:[%s434 + $0x8] sm:$0xff]
      %437 = vset.pattern.permute.xlu0 24
      %438 = vperm.xlu0 %437, %v173
      %v439 = vpop.permute.xlu0 %438
      %v441 = vmul.f32 %v435, %v439
      %v442 = vmul.f32 %v436, %v439
      %v443 = vadd.f32 %v432, %v441
      %v444 = vadd.f32 %v433, %v442
      %v445 = vld [vmem:[%s2] sm:$0xff]
      %447 = vset.pattern.permute.xlu0 0
      %448 = vperm.xlu0 %447, %v445
      %v449 = vpop.permute.xlu0 %448
      %v451 = vadd.f32 %v443, %v449
      %v452 = vadd.f32 %v444, %v449
      %453 = vst [vmem:[%s170] sm:$0xff] %v451
      %454 = vst [vmem:[%s170 + $0x8] sm:$0xff] %v452
      %p455 = scmp.lt.s32.totalorder %s14, 1
      %s456 = scalar_select %p455, %s14, 1
      %s457 = smul.addr %s456, 2
      %s458 = smul.addr %s457, 8
      %s459 = scalar_lea.vmem %s3, %s458
      // Predicated region
      $region33: #{lkd_blocks_pallas.23} parent=31 // pred_check
        %p460 = pneg %p100
      $region34: #{lkd_blocks_pallas.23} parent=31 // pred_check_branch
        %462 = sbr.rel (%p460) target = $region36
      $region35: #{lkd_blocks_pallas.23} parent=31 // pred_region
        _
      $region36: #{lkd_blocks_pallas.23} parent=31 // pred_fallthru
        _
    $region32: #{lkd_blocks_pallas.23} parent=5 // pred_fallthru
      _
    %p463 = scmp.le.s32.totalorder 2, %s9
    // Predicated region
    $region37: #{lkd_blocks_pallas.23} parent=5 // pred_check
      %p464 = pneg %p463
    $region38: #{lkd_blocks_pallas.23} parent=5 // pred_check_branch
      %466 = sbr.rel (%p464) target = $region40
    $region39: #{lkd_blocks_pallas.23} parent=5 // pred_region
      %s467 = ssub.s32 %s9, 2
      // Predicated region
      $region41: #{lkd_blocks_pallas.23} parent=39 // pred_check
        %p468 = pneg %p106
      $region42: #{lkd_blocks_pallas.23} parent=39 // pred_check_branch
        %470 = sbr.rel (%p468) target = $region44
      $region43: #{lkd_blocks_pallas.23} parent=39 // pred_region
        %p471 = scmp.lt.s32.totalorder %s15, 1
        %s472 = scalar_select %p471, %s15, 1
        %s473 = smul.addr %s472, 2
        %s474 = smul.addr %s473, 8
        %s475 = scalar_lea.vmem %s3, %s474
      $region44: #{lkd_blocks_pallas.23} parent=39 // pred_fallthru
        _
    $region40: #{lkd_blocks_pallas.23} parent=5 // pred_fallthru
      _
  $region6: #{lkd_blocks_pallas.23} parent=0 // loop_footer
    %s13 = sadd.s32 1, %s9
  $region7: #{lkd_blocks_pallas.23} parent=0 // loop_footer_branch
    %8 = sbr.rel target = $region3
  $region8: #{lkd_blocks_pallas.23} parent=0 // loop_exit
    _

// kernel: lkd_blocks_pallas.25
$region0: #{lkd_blocks_pallas.25}
  #allocation0 [shape = 'u32[]', space=smem, size = 0x4, offset = 0x4, fixed_abs, tag = 'smem constant byte address 0x4 - core index']
  #allocation1 [shape = 'u32[144,128]{1,0:T(1,128)}', space=vmem, size = 0x12000, scoped, tag = 'internal scratch']
  %s0 = inlined_call_operand.vmem [shape: f32[2,8,256], index: 0, kind: input, shape index: {}]
  %s1 = inlined_call_operand.vmem [shape: f32[8,8], index: 1, kind: input, shape index: {}]
  %s2 = inlined_call_operand.vmem [shape: f32[8,1], index: 2, kind: input, shape index: {}]
  %s3 = inlined_call_operand.vmem [shape: f32[2,8,256], index: 3, kind: input, shape index: {}]
  %s4 = inlined_call_operand.vmem [shape: f32[8,1], index: 4, kind: input, shape index: {}]
  %s5 = inlined_call_operand.vmem [shape: f32[8,1], index: 5, kind: input, shape index: {}]
  %s6 = inlined_call_operand.vmem [shape: f32[2,8,256], index: 6, kind: output, shape index: {}]
  %s7 = sld [smem:[#allocation0]]
  $region57: #{lkd_blocks_pallas.25} parent=0
    _
  %s9 = ssub.s32 1, %s7
  %s10 = scalar_select 0, %s9, %s7
  loop: start=0, step=1, limit=4
  $region2: #{lkd_blocks_pallas.25} parent=0 // loop_pre_header
    _
  $region3: #{lkd_blocks_pallas.25} parent=0 // loop_header
    %s12 = sphi 0, %s16
    %p13 = scmp.ge.s32.totalorder %s12, 4
    %s22 = sphi 0, %s24
    %s25 = sphi 0, %s22
    %s26 = sphi 0, %s25
    %s42 = sphi 0, %s26
    %s46 = sphi 0, %s46
    %s48 = sphi 0, %s46
    %s49 = sphi 0, %s48
    %s63 = sphi 0, %s49
    %s67 = sphi 0, %s67
    %s69 = sphi 0, %s67
    %s70 = sphi 0, %s69
    %s84 = sphi 0, %s70
    %s90 = sphi 0, %s92
    %s93 = sphi 0, %s90
    %s94 = sphi 0, %s93
    %s110 = sphi 0, %s94
    %s114 = sphi 0, %s114
    %s116 = sphi 0, %s114
    %s117 = sphi 0, %s116
    %s131 = sphi 0, %s117
    %s135 = sphi 0, %s135
    %s137 = sphi 0, %s135
    %s138 = sphi 0, %s137
    %s152 = sphi 0, %s138
    %s158 = sphi 0, %s160
    %s161 = sphi 0, %s158
    %s162 = sphi 0, %s161
    %s178 = sphi 0, %s162
  $region4: #{lkd_blocks_pallas.25} parent=0 // loop_header_branch
    %15 = sbr.rel (%p13) target = $region8
  $region5: #{lkd_blocks_pallas.25} parent=0 // loop_body
    %s17 = ssub.s32 %s12, 1
    %s18 = ssub.s32 %s12, 2
    %s19 = sadd.s32 %s12, 1
    %s20 = ssub.s32 %s12, %s19
    %p21 = scmp.eq.s32.totalorder %s20, 0
    %s23 = sadd.s32 %s22, 1
    %s24 = scalar_select %p21, %s22, %s23
    %p27 = pneg %p21
    %p28 = scmp.eq.s32.totalorder %s12, 1
    %p29 = por %p27, %p28
    %p30 = scmp.ne.s32.totalorder %s22, %s25
    %p31 = scmp.eq.s32.totalorder %s12, 0
    %p32 = por %p30, %p31
    %p33 = scmp.ne.s32.totalorder %s22, %s25
    %p34 = scmp.eq.s32.totalorder %s17, 1
    %p35 = por %p33, %p34
    %p36 = scmp.ne.s32.totalorder %s25, %s26
    %p37 = scmp.eq.s32.totalorder %s17, 0
    %p38 = por %p36, %p37
    %p39 = scmp.ne.s32.totalorder %s25, %s26
    %p40 = scmp.eq.s32.totalorder %s18, 1
    %p41 = por %p39, %p40
    %p43 = scmp.ne.s32.totalorder %s26, %s42
    %p44 = scmp.eq.s32.totalorder %s18, 0
    %p45 = por %p43, %p44
    %s47 = sadd.s32 %s46, 1
    %p50 = scmp.eq.s32.totalorder %s12, 1
    %p51 = scmp.ne.s32.totalorder %s46, %s48
    %p52 = scmp.eq.s32.totalorder %s12, 0
    %p53 = por %p51, %p52
    %p54 = scmp.ne.s32.totalorder %s46, %s48
    %p55 = scmp.eq.s32.totalorder %s17, 1
    %p56 = por %p54, %p55
    %p57 = scmp.ne.s32.totalorder %s48, %s49
    %p58 = scmp.eq.s32.totalorder %s17, 0
    %p59 = por %p57, %p58
    %p60 = scmp.ne.s32.totalorder %s48, %s49
    %p61 = scmp.eq.s32.totalorder %s18, 1
    %p62 = por %p60, %p61
    %p64 = scmp.ne.s32.totalorder %s49, %s63
    %p65 = scmp.eq.s32.totalorder %s18, 0
    %p66 = por %p64, %p65
    %s68 = sadd.s32 %s67, 1
    %p71 = scmp.eq.s32.totalorder %s12, 1
    %p72 = scmp.ne.s32.totalorder %s67, %s69
    %p73 = scmp.eq.s32.totalorder %s12, 0
    %p74 = por %p72, %p73
    %p75 = scmp.ne.s32.totalorder %s67, %s69
    %p76 = scmp.eq.s32.totalorder %s17, 1
    %p77 = por %p75, %p76
    %p78 = scmp.ne.s32.totalorder %s69, %s70
    %p79 = scmp.eq.s32.totalorder %s17, 0
    %p80 = por %p78, %p79
    %p81 = scmp.ne.s32.totalorder %s69, %s70
    %p82 = scmp.eq.s32.totalorder %s18, 1
    %p83 = por %p81, %p82
    %p85 = scmp.ne.s32.totalorder %s70, %s84
    %p86 = scmp.eq.s32.totalorder %s18, 0
    %p87 = por %p85, %p86
    %s88 = ssub.s32 %s12, %s19
    %p89 = scmp.eq.s32.totalorder %s88, 0
    %s91 = sadd.s32 %s90, 1
    %s92 = scalar_select %p89, %s90, %s91
    %p95 = pneg %p89
    %p96 = scmp.eq.s32.totalorder %s12, 1
    %p97 = por %p95, %p96
    %p98 = scmp.ne.s32.totalorder %s90, %s93
    %p99 = scmp.eq.s32.totalorder %s12, 0
    %p100 = por %p98, %p99
    %p101 = scmp.ne.s32.totalorder %s90, %s93
    %p102 = scmp.eq.s32.totalorder %s17, 1
    %p103 = por %p101, %p102
    %p104 = scmp.ne.s32.totalorder %s93, %s94
    %p105 = scmp.eq.s32.totalorder %s17, 0
    %p106 = por %p104, %p105
    %p107 = scmp.ne.s32.totalorder %s93, %s94
    %p108 = scmp.eq.s32.totalorder %s18, 1
    %p109 = por %p107, %p108
    %p111 = scmp.ne.s32.totalorder %s94, %s110
    %p112 = scmp.eq.s32.totalorder %s18, 0
    %p113 = por %p111, %p112
    %s115 = sadd.s32 %s114, 1
    %p118 = scmp.eq.s32.totalorder %s12, 1
    %p119 = scmp.ne.s32.totalorder %s114, %s116
    %p120 = scmp.eq.s32.totalorder %s12, 0
    %p121 = por %p119, %p120
    %p122 = scmp.ne.s32.totalorder %s114, %s116
    %p123 = scmp.eq.s32.totalorder %s17, 1
    %p124 = por %p122, %p123
    %p125 = scmp.ne.s32.totalorder %s116, %s117
    %p126 = scmp.eq.s32.totalorder %s17, 0
    %p127 = por %p125, %p126
    %p128 = scmp.ne.s32.totalorder %s116, %s117
    %p129 = scmp.eq.s32.totalorder %s18, 1
    %p130 = por %p128, %p129
    %p132 = scmp.ne.s32.totalorder %s117, %s131
    %p133 = scmp.eq.s32.totalorder %s18, 0
    %p134 = por %p132, %p133
    %s136 = sadd.s32 %s135, 1
    %p139 = scmp.eq.s32.totalorder %s12, 1
    %p140 = scmp.ne.s32.totalorder %s135, %s137
    %p141 = scmp.eq.s32.totalorder %s12, 0
    %p142 = por %p140, %p141
    %p143 = scmp.ne.s32.totalorder %s135, %s137
    %p144 = scmp.eq.s32.totalorder %s17, 1
    %p145 = por %p143, %p144
    %p146 = scmp.ne.s32.totalorder %s137, %s138
    %p147 = scmp.eq.s32.totalorder %s17, 0
    %p148 = por %p146, %p147
    %p149 = scmp.ne.s32.totalorder %s137, %s138
    %p150 = scmp.eq.s32.totalorder %s18, 1
    %p151 = por %p149, %p150
    %p153 = scmp.ne.s32.totalorder %s138, %s152
    %p154 = scmp.eq.s32.totalorder %s18, 0
    %p155 = por %p153, %p154
    %s156 = ssub.s32 %s12, %s19
    %p157 = scmp.eq.s32.totalorder %s156, 0
    %s159 = sadd.s32 %s158, 1
    %s160 = scalar_select %p157, %s158, %s159
    %p163 = pneg %p157
    %p164 = scmp.eq.s32.totalorder %s12, 1
    %p165 = por %p163, %p164
    %p166 = scmp.ne.s32.totalorder %s158, %s161
    %p167 = scmp.eq.s32.totalorder %s12, 0
    %p168 = por %p166, %p167
    %p169 = scmp.ne.s32.totalorder %s158, %s161
    %p170 = scmp.eq.s32.totalorder %s17, 1
    %p171 = por %p169, %p170
    %p172 = scmp.ne.s32.totalorder %s161, %s162
    %p173 = scmp.eq.s32.totalorder %s17, 0
    %p174 = por %p172, %p173
    %p175 = scmp.ne.s32.totalorder %s161, %s162
    %p176 = scmp.eq.s32.totalorder %s18, 1
    %p177 = por %p175, %p176
    %p179 = scmp.ne.s32.totalorder %s162, %s178
    %p180 = scmp.eq.s32.totalorder %s18, 0
    %p181 = por %p179, %p180
    %p182 = scmp.le.s32.totalorder 1, %s12
    %p183 = scmp.lt.s32.totalorder %s12, 3
    %p184 = pnand %p182, %p183
    %p185 = pneg %p184
    // Predicated region
    $region9: #{lkd_blocks_pallas.25} parent=5 // pred_check
      _
    $region10: #{lkd_blocks_pallas.25} parent=5 // pred_check_branch
      %187 = sbr.rel (%p184) target = $region12
    $region11: #{lkd_blocks_pallas.25} parent=5 // pred_region
      %s188 = ssub.s32 %s12, 1
      // Predicated region
      $region13: #{lkd_blocks_pallas.25} parent=11 // pred_check
        %p189 = pneg %p59
      $region14: #{lkd_blocks_pallas.25} parent=11 // pred_check_branch
        %191 = sbr.rel (%p189) target = $region16
      $region15: #{lkd_blocks_pallas.25} parent=11 // pred_region
        _
      $region16: #{lkd_blocks_pallas.25} parent=11 // pred_fallthru
        _
      // Predicated region
      $region17: #{lkd_blocks_pallas.25} parent=11 // pred_check
        %p192 = pneg %p80
      $region18: #{lkd_blocks_pallas.25} parent=11 // pred_check_branch
        %194 = sbr.rel (%p192) target = $region20
      $region19: #{lkd_blocks_pallas.25} parent=11 // pred_region
        _
      $region20: #{lkd_blocks_pallas.25} parent=11 // pred_fallthru
        _
      // Predicated region
      $region21: #{lkd_blocks_pallas.25} parent=11 // pred_check
        %p195 = pneg %p127
      $region22: #{lkd_blocks_pallas.25} parent=11 // pred_check_branch
        %197 = sbr.rel (%p195) target = $region24
      $region23: #{lkd_blocks_pallas.25} parent=11 // pred_region
        _
      $region24: #{lkd_blocks_pallas.25} parent=11 // pred_fallthru
        _
      // Predicated region
      $region25: #{lkd_blocks_pallas.25} parent=11 // pred_check
        %p198 = pneg %p148
      $region26: #{lkd_blocks_pallas.25} parent=11 // pred_check_branch
        %200 = sbr.rel (%p198) target = $region28
      $region27: #{lkd_blocks_pallas.25} parent=11 // pred_region
        _
      $region28: #{lkd_blocks_pallas.25} parent=11 // pred_fallthru
        _
    $region12: #{lkd_blocks_pallas.25} parent=5 // pred_fallthru
      _
    %p201 = scmp.lt.s32.totalorder %s12, 2
    // Predicated region
    $region29: #{lkd_blocks_pallas.25} parent=5 // pred_check
      %p202 = pneg %p201
    $region30: #{lkd_blocks_pallas.25} parent=5 // pred_check_branch
      %204 = sbr.rel (%p202) target = $region32
    $region31: #{lkd_blocks_pallas.25} parent=5 // pred_region
      // Predicated region
      $region33: #{lkd_blocks_pallas.25} parent=31 // pred_check
        %p205 = pneg %p32
      $region34: #{lkd_blocks_pallas.25} parent=31 // pred_check_branch
        %207 = sbr.rel (%p205) target = $region36
      $region35: #{lkd_blocks_pallas.25} parent=31 // pred_region
        %p208 = scmp.lt.s32.totalorder %s12, 1
        %s209 = scalar_select %p208, %s12, 1
        %s210 = smul.addr %s209, 2
        %s211 = smul.addr %s210, 8
        %s212 = scalar_lea.vmem %s0, %s211
      $region36: #{lkd_blocks_pallas.25} parent=31 // pred_fallthru
        _
      // Predicated region
      $region37: #{lkd_blocks_pallas.25} parent=31 // pred_check
        %p213 = pneg %p100
      $region38: #{lkd_blocks_pallas.25} parent=31 // pred_check_branch
        %215 = sbr.rel (%p213) target = $region40
      $region39: #{lkd_blocks_pallas.25} parent=31 // pred_region
        %p216 = scmp.lt.s32.totalorder %s12, 1
        %s217 = scalar_select %p216, %s12, 1
        %s218 = smul.addr %s217, 2
        %s219 = smul.addr %s218, 8
        %s220 = scalar_lea.vmem %s3, %s219
      $region40: #{lkd_blocks_pallas.25} parent=31 // pred_fallthru
        _
    $region32: #{lkd_blocks_pallas.25} parent=5 // pred_fallthru
      _
    %p221 = scmp.le.s32.totalorder 1, %s12
    %p222 = scmp.lt.s32.totalorder %s12, 3
    %p223 = pnand %p221, %p222
    %p224 = pneg %p223
    // Predicated region
    $region41: #{lkd_blocks_pallas.25} parent=5 // pred_check
      _
    $region42: #{lkd_blocks_pallas.25} parent=5 // pred_check_branch
      %226 = sbr.rel (%p223) target = $region44
    $region43: #{lkd_blocks_pallas.25} parent=5 // pred_region
      %s227 = ssub.s32 %s12, 1
      %p228 = scmp.lt.s32.totalorder %s17, 1
      %s229 = scalar_select %p228, %s17, 1
      %s230 = smul.addr %s229, 2
      %s231 = smul.addr %s230, 8
      %s232 = scalar_lea.vmem %s0, %s231
      %p233 = pneg %p38
      %p234 = pneg %p35
      %p235 = pneg %p59
      %p236 = pneg %p56
      %p237 = pneg %p80
      %p238 = pneg %p77
      %p239 = scmp.lt.s32.totalorder %s17, 1
      %s240 = scalar_select %p239, %s17, 1
      %s241 = smul.addr %s240, 2
      %s242 = smul.addr %s241, 8
      %s243 = scalar_lea.vmem %s3, %s242
      %p244 = pneg %p106
      %p245 = pneg %p103
      %p246 = pneg %p127
      %p247 = pneg %p124
      %p248 = pneg %p148
      %p249 = pneg %p145
      %p250 = pneg %p174
      %p251 = pneg %p171
      %p252 = scmp.lt.s32.totalorder %s17, 1
      %s253 = scalar_select %p252, %s17, 1
      %s254 = smul.addr %s253, 2
      %s255 = smul.addr %s254, 8
      %s256 = scalar_lea.vmem %s6, %s255
      %p257 = scmp.lt.s32.totalorder %s17, 1
      %s258 = scalar_select %p257, %s17, 1
      %s259 = smul.addr %s258, 2
      %s260 = smul.addr %s259, 8
      %s261 = scalar_lea.vmem %s0, %s260
      %p262 = scmp.lt.s32.totalorder %s17, 1
      %s263 = scalar_select %p262, %s17, 1
      %s264 = smul.addr %s263, 2
      %s265 = smul.addr %s264, 8
      %s266 = scalar_lea.vmem %s3, %s265
      %p267 = scmp.lt.s32.totalorder %s17, 1
      %s268 = scalar_select %p267, %s17, 1
      %s269 = smul.addr %s268, 2
      %s270 = smul.addr %s269, 8
      %s271 = scalar_lea.vmem %s6, %s270
      %v272 = vld [vmem:[%s1] sm:$0xff]
      %v273 = vld [vmem:[%s261] sm:$0xff]
      %v274 = vld [vmem:[%s261 + $0x8] sm:$0xff]
      %v275 = vld [vmem:[%s2] sm:$0xff]
      %277 = vset.pattern.permute.xlu0 0
      %278 = vperm.xlu0 %277, %v275
      %v279 = vpop.permute.xlu0 %278
      %vm281 = vcmask 64512
      %v283 = vsel %vm281, %v272, 0
      %285 = vmatprep.subr.mxu0 0.0
      %286 = vmatpush1.msra.mxu0 0.0
      %287 = vmatprep.subr.mxu0 0.0
      %288 = vmatpush1.msra.mxu0 0.0
      %289 = vmatprep.subr.mxu0 0.0
      %290 = vmatpush1.msra.mxu0 0.0
      %291 = vmatprep.subr.mxu0 0.0
      %292 = vmatpush1.msra.mxu0 0.0
      %293 = vmatprep.subr.mxu0 0.0
      %294 = vmatpush1.msra.mxu0 0.0
      %295 = vmatprep.subr.mxu0 0.0
      %296 = vmatpush1.msra.mxu0 0.0
      %297 = vmatprep.subr.mxu0 0.0
      %298 = vmatpush1.msra.mxu0 0.0
      %299 = vmatprep.subr.mxu0 0.0
      %300 = vmatpush1.msra.mxu0 0.0
      %301 = vmatprep.subr.mxu0 0.0
      %302 = vmatpush1.msra.mxu0 0.0
      %303 = vmatprep.subr.mxu0 0.0
      %304 = vmatpush1.msra.mxu0 0.0
      %305 = vmatprep.subr.mxu0 0.0
      %306 = vmatpush1.msra.mxu0 0.0
      %307 = vmatprep.subr.mxu0 0.0
      %308 = vmatpush1.msra.mxu0 0.0
      %309 = vmatprep.subr.mxu0 0.0
      %310 = vmatpush1.msra.mxu0 0.0
      %311 = vmatprep.subr.mxu0 0.0
      %312 = vmatpush1.msra.mxu0 0.0
      %313 = vmatprep.subr.mxu0 0.0
      %314 = vmatpush1.msra.mxu0 0.0
      %315 = vmatprep.subr.mxu0 %v274
      %316 = vmatpush1.msra.mxu0 %v273
      %317 = vmatprep.subr.mxu0 0.0
      %318 = vmatpush2.msra.mxu0 0.0
      %319 = vmatprep.subr.mxu0 0.0
      %320 = vmatpush2.msra.mxu0 0.0
      %321 = vmatprep.subr.mxu0 0.0
      %322 = vmatpush2.msra.mxu0 0.0
      %323 = vmatprep.subr.mxu0 0.0
      %324 = vmatpush2.msra.mxu0 0.0
      %325 = vmatprep.subr.mxu0 0.0
      %326 = vmatpush2.msra.mxu0 0.0
      %327 = vmatprep.subr.mxu0 0.0
      %328 = vmatpush2.msra.mxu0 0.0
      %329 = vmatprep.subr.mxu0 0.0
      %330 = vmatpush2.msra.mxu0 0.0
      %331 = vmatprep.subr.mxu0 0.0
      %332 = vmatpush2.msra.mxu0 0.0
      %333 = vmatprep.subr.mxu0 0.0
      %334 = vmatpush2.msra.mxu0 0.0
      %335 = vmatprep.subr.mxu0 0.0
      %336 = vmatpush2.msra.mxu0 0.0
      %337 = vmatprep.subr.mxu0 0.0
      %338 = vmatpush2.msra.mxu0 0.0
      %339 = vmatprep.subr.mxu0 0.0
      %340 = vmatpush2.msra.mxu0 0.0
      %341 = vmatprep.subr.mxu0 0.0
      %342 = vmatpush2.msra.mxu0 0.0
      %343 = vmatprep.subr.mxu0 0.0
      %344 = vmatpush2.msra.mxu0 0.0
      %345 = vmatprep.subr.mxu0 0.0
      %346 = vmatpush2.msra.mxu0 0.0
      %347 = vmatprep.subr.mxu0 0.0
      %348 = vmatpush2.msra.mxu0 0.0
      %349 = vmatprep.mubr.f32.mxu0 0.0
      %350 = vmatmul.mubr.f32.gmra.mxu0 %v283
      %v351 = vpop.f32.mrf.mxu0
      %v352 = vadd.f32 %v279, %v351
      %v353 = vpop.f32.mrf.mxu0
      %v354 = vadd.f32 %v279, %v353
      %355 = vdwg.mxu0
      %v356 = vld [vmem:[%s266] sm:$0xff]
      %v357 = vld [vmem:[%s266 + $0x8] sm:$0xff]
      %v358 = vadd.f32 %v352, %v356
      %v359 = vadd.f32 %v354, %v357
      %v360 = vld [vmem:[%s4] sm:$0xff]
      %362 = vset.pattern.permute.xlu0 0
      %363 = vperm.xlu0 %362, %v360
      %v364 = vpop.permute.xlu0 %363
      %v366 = vmul.f32 %v358, %v364
      %v367 = vmul.f32 %v359, %v364
      %v368 = vld [vmem:[%s5] sm:$0xff]
      %370 = vset.pattern.permute.xlu0 0
      %371 = vperm.xlu0 %370, %v368
      %v372 = vpop.permute.xlu0 %371
      %v374 = vadd.f32 %v366, %v372
      %v375 = vadd.f32 %v367, %v372
      %376 = vst [vmem:[%s271] sm:$0xff] %v374
      %377 = vst [vmem:[%s271 + $0x8] sm:$0xff] %v375
      %p378 = scmp.lt.s32.totalorder %s17, 1
      %s379 = scalar_select %p378, %s17, 1
      %s380 = smul.addr %s379, 2
      %s381 = smul.addr %s380, 8
      %s382 = scalar_lea.vmem %s6, %s381
      // Predicated region
      $region45: #{lkd_blocks_pallas.25} parent=43 // pred_check
        %p383 = pneg %p171
      $region46: #{lkd_blocks_pallas.25} parent=43 // pred_check_branch
        %385 = sbr.rel (%p383) target = $region48
      $region47: #{lkd_blocks_pallas.25} parent=43 // pred_region
        _
      $region48: #{lkd_blocks_pallas.25} parent=43 // pred_fallthru
        _
    $region44: #{lkd_blocks_pallas.25} parent=5 // pred_fallthru
      _
    %p386 = scmp.le.s32.totalorder 2, %s12
    // Predicated region
    $region49: #{lkd_blocks_pallas.25} parent=5 // pred_check
      %p387 = pneg %p386
    $region50: #{lkd_blocks_pallas.25} parent=5 // pred_check_branch
      %389 = sbr.rel (%p387) target = $region52
    $region51: #{lkd_blocks_pallas.25} parent=5 // pred_region
      %s390 = ssub.s32 %s12, 2
      // Predicated region
      $region53: #{lkd_blocks_pallas.25} parent=51 // pred_check
        %p391 = pneg %p177
      $region54: #{lkd_blocks_pallas.25} parent=51 // pred_check_branch
        %393 = sbr.rel (%p391) target = $region56
      $region55: #{lkd_blocks_pallas.25} parent=51 // pred_region
        %p394 = scmp.lt.s32.totalorder %s18, 1
        %s395 = scalar_select %p394, %s18, 1
        %s396 = smul.addr %s395, 2
        %s397 = smul.addr %s396, 8
        %s398 = scalar_lea.vmem %s6, %s397
      $region56: #{lkd_blocks_pallas.25} parent=51 // pred_fallthru
        _
    $region52: #{lkd_blocks_pallas.25} parent=5 // pred_fallthru
      _
  $region6: #{lkd_blocks_pallas.25} parent=0 // loop_footer
    %s16 = sadd.s32 1, %s12
  $region7: #{lkd_blocks_pallas.25} parent=0 // loop_footer_branch
    %11 = sbr.rel target = $region3
  $region8: #{lkd_blocks_pallas.25} parent=0 // loop_exit
    _

// kernel: lkd_blocks_pallas.24
$region0: #{lkd_blocks_pallas.24}
  #allocation0 [shape = 'u32[]', space=smem, size = 0x4, offset = 0x4, fixed_abs, tag = 'smem constant byte address 0x4 - core index']
  #allocation1 [shape = 'u32[144,128]{1,0:T(1,128)}', space=vmem, size = 0x12000, scoped, tag = 'internal scratch']
  %s0 = inlined_call_operand.vmem [shape: f32[2,49,8,256], index: 0, kind: input, shape index: {}]
  %s1 = inlined_call_operand.vmem [shape: f32[8,49], index: 1, kind: input, shape index: {}]
  %s2 = inlined_call_operand.vmem [shape: f32[8,1], index: 2, kind: input, shape index: {}]
  %s3 = inlined_call_operand.vmem [shape: f32[2,8,256], index: 3, kind: output, shape index: {}]
  %s4 = sld [smem:[#allocation0]]
  $region45: #{lkd_blocks_pallas.24} parent=0
    _
  %s6 = ssub.s32 1, %s4
  %s7 = scalar_select 0, %s6, %s4
  loop: start=0, step=1, limit=4
  $region2: #{lkd_blocks_pallas.24} parent=0 // loop_pre_header
    _
  $region3: #{lkd_blocks_pallas.24} parent=0 // loop_header
    %s9 = sphi 0, %s13
    %p10 = scmp.ge.s32.totalorder %s9, 4
    %s19 = sphi 0, %s21
    %s22 = sphi 0, %s19
    %s23 = sphi 0, %s22
    %s39 = sphi 0, %s23
    %s43 = sphi 0, %s43
    %s45 = sphi 0, %s43
    %s46 = sphi 0, %s45
    %s60 = sphi 0, %s46
    %s64 = sphi 0, %s64
    %s66 = sphi 0, %s64
    %s67 = sphi 0, %s66
    %s81 = sphi 0, %s67
    %s87 = sphi 0, %s89
    %s90 = sphi 0, %s87
    %s91 = sphi 0, %s90
    %s107 = sphi 0, %s91
  $region4: #{lkd_blocks_pallas.24} parent=0 // loop_header_branch
    %12 = sbr.rel (%p10) target = $region8
  $region5: #{lkd_blocks_pallas.24} parent=0 // loop_body
    %s14 = ssub.s32 %s9, 1
    %s15 = ssub.s32 %s9, 2
    %s16 = sadd.s32 %s9, 1
    %s17 = ssub.s32 %s9, %s16
    %p18 = scmp.eq.s32.totalorder %s17, 0
    %s20 = sadd.s32 %s19, 1
    %s21 = scalar_select %p18, %s19, %s20
    %p24 = pneg %p18
    %p25 = scmp.eq.s32.totalorder %s9, 1
    %p26 = por %p24, %p25
    %p27 = scmp.ne.s32.totalorder %s19, %s22
    %p28 = scmp.eq.s32.totalorder %s9, 0
    %p29 = por %p27, %p28
    %p30 = scmp.ne.s32.totalorder %s19, %s22
    %p31 = scmp.eq.s32.totalorder %s14, 1
    %p32 = por %p30, %p31
    %p33 = scmp.ne.s32.totalorder %s22, %s23
    %p34 = scmp.eq.s32.totalorder %s14, 0
    %p35 = por %p33, %p34
    %p36 = scmp.ne.s32.totalorder %s22, %s23
    %p37 = scmp.eq.s32.totalorder %s15, 1
    %p38 = por %p36, %p37
    %p40 = scmp.ne.s32.totalorder %s23, %s39
    %p41 = scmp.eq.s32.totalorder %s15, 0
    %p42 = por %p40, %p41
    %s44 = sadd.s32 %s43, 1
    %p47 = scmp.eq.s32.totalorder %s9, 1
    %p48 = scmp.ne.s32.totalorder %s43, %s45
    %p49 = scmp.eq.s32.totalorder %s9, 0
    %p50 = por %p48, %p49
    %p51 = scmp.ne.s32.totalorder %s43, %s45
    %p52 = scmp.eq.s32.totalorder %s14, 1
    %p53 = por %p51, %p52
    %p54 = scmp.ne.s32.totalorder %s45, %s46
    %p55 = scmp.eq.s32.totalorder %s14, 0
    %p56 = por %p54, %p55
    %p57 = scmp.ne.s32.totalorder %s45, %s46
    %p58 = scmp.eq.s32.totalorder %s15, 1
    %p59 = por %p57, %p58
    %p61 = scmp.ne.s32.totalorder %s46, %s60
    %p62 = scmp.eq.s32.totalorder %s15, 0
    %p63 = por %p61, %p62
    %s65 = sadd.s32 %s64, 1
    %p68 = scmp.eq.s32.totalorder %s9, 1
    %p69 = scmp.ne.s32.totalorder %s64, %s66
    %p70 = scmp.eq.s32.totalorder %s9, 0
    %p71 = por %p69, %p70
    %p72 = scmp.ne.s32.totalorder %s64, %s66
    %p73 = scmp.eq.s32.totalorder %s14, 1
    %p74 = por %p72, %p73
    %p75 = scmp.ne.s32.totalorder %s66, %s67
    %p76 = scmp.eq.s32.totalorder %s14, 0
    %p77 = por %p75, %p76
    %p78 = scmp.ne.s32.totalorder %s66, %s67
    %p79 = scmp.eq.s32.totalorder %s15, 1
    %p80 = por %p78, %p79
    %p82 = scmp.ne.s32.totalorder %s67, %s81
    %p83 = scmp.eq.s32.totalorder %s15, 0
    %p84 = por %p82, %p83
    %s85 = ssub.s32 %s9, %s16
    %p86 = scmp.eq.s32.totalorder %s85, 0
    %s88 = sadd.s32 %s87, 1
    %s89 = scalar_select %p86, %s87, %s88
    %p92 = pneg %p86
    %p93 = scmp.eq.s32.totalorder %s9, 1
    %p94 = por %p92, %p93
    %p95 = scmp.ne.s32.totalorder %s87, %s90
    %p96 = scmp.eq.s32.totalorder %s9, 0
    %p97 = por %p95, %p96
    %p98 = scmp.ne.s32.totalorder %s87, %s90
    %p99 = scmp.eq.s32.totalorder %s14, 1
    %p100 = por %p98, %p99
    %p101 = scmp.ne.s32.totalorder %s90, %s91
    %p102 = scmp.eq.s32.totalorder %s14, 0
    %p103 = por %p101, %p102
    %p104 = scmp.ne.s32.totalorder %s90, %s91
    %p105 = scmp.eq.s32.totalorder %s15, 1
    %p106 = por %p104, %p105
    %p108 = scmp.ne.s32.totalorder %s91, %s107
    %p109 = scmp.eq.s32.totalorder %s15, 0
    %p110 = por %p108, %p109
    %p111 = scmp.le.s32.totalorder 1, %s9
    %p112 = scmp.lt.s32.totalorder %s9, 3
    %p113 = pnand %p111, %p112
    %p114 = pneg %p113
    // Predicated region
    $region9: #{lkd_blocks_pallas.24} parent=5 // pred_check
      _
    $region10: #{lkd_blocks_pallas.24} parent=5 // pred_check_branch
      %116 = sbr.rel (%p113) target = $region12
    $region11: #{lkd_blocks_pallas.24} parent=5 // pred_region
      %s117 = ssub.s32 %s9, 1
      // Predicated region
      $region13: #{lkd_blocks_pallas.24} parent=11 // pred_check
        %p118 = pneg %p56
      $region14: #{lkd_blocks_pallas.24} parent=11 // pred_check_branch
        %120 = sbr.rel (%p118) target = $region16
      $region15: #{lkd_blocks_pallas.24} parent=11 // pred_region
        _
      $region16: #{lkd_blocks_pallas.24} parent=11 // pred_fallthru
        _
      // Predicated region
      $region17: #{lkd_blocks_pallas.24} parent=11 // pred_check
        %p121 = pneg %p77
      $region18: #{lkd_blocks_pallas.24} parent=11 // pred_check_branch
        %123 = sbr.rel (%p121) target = $region20
      $region19: #{lkd_blocks_pallas.24} parent=11 // pred_region
        _
      $region20: #{lkd_blocks_pallas.24} parent=11 // pred_fallthru
        _
    $region12: #{lkd_blocks_pallas.24} parent=5 // pred_fallthru
      _
    %p124 = scmp.lt.s32.totalorder %s9, 2
    // Predicated region
    $region21: #{lkd_blocks_pallas.24} parent=5 // pred_check
      %p125 = pneg %p124
    $region22: #{lkd_blocks_pallas.24} parent=5 // pred_check_branch
      %127 = sbr.rel (%p125) target = $region24
    $region23: #{lkd_blocks_pallas.24} parent=5 // pred_region
      // Predicated region
      $region25: #{lkd_blocks_pallas.24} parent=23 // pred_check
        %p128 = pneg %p29
      $region26: #{lkd_blocks_pallas.24} parent=23 // pred_check_branch
        %130 = sbr.rel (%p128) target = $region28
      $region27: #{lkd_blocks_pallas.24} parent=23 // pred_region
        %p131 = scmp.lt.s32.totalorder %s9, 1
        %s132 = scalar_select %p131, %s9, 1
        %s133 = smul.addr %s132, 98
        %s134 = smul.addr %s133, 8
        %s135 = scalar_lea.vmem %s0, %s134
      $region28: #{lkd_blocks_pallas.24} parent=23 // pred_fallthru
        _
    $region24: #{lkd_blocks_pallas.24} parent=5 // pred_fallthru
      _
    %p136 = scmp.le.s32.totalorder 1, %s9
    %p137 = scmp.lt.s32.totalorder %s9, 3
    %p138 = pnand %p136, %p137
    %p139 = pneg %p138
    // Predicated region
    $region29: #{lkd_blocks_pallas.24} parent=5 // pred_check
      _
    $region30: #{lkd_blocks_pallas.24} parent=5 // pred_check_branch
      %141 = sbr.rel (%p138) target = $region32
    $region31: #{lkd_blocks_pallas.24} parent=5 // pred_region
      %s142 = ssub.s32 %s9, 1
      %p143 = scmp.lt.s32.totalorder %s14, 1
      %s144 = scalar_select %p143, %s14, 1
      %s145 = smul.addr %s144, 98
      %s146 = smul.addr %s145, 8
      %s147 = scalar_lea.vmem %s0, %s146
      %p148 = pneg %p35
      %p149 = pneg %p32
      %p150 = pneg %p56
      %p151 = pneg %p53
      %p152 = pneg %p77
      %p153 = pneg %p74
      %p154 = pneg %p103
      %p155 = pneg %p100
      %p156 = scmp.lt.s32.totalorder %s14, 1
      %s157 = scalar_select %p156, %s14, 1
      %s158 = smul.addr %s157, 2
      %s159 = smul.addr %s158, 8
      %s160 = scalar_lea.vmem %s3, %s159
      %p161 = scmp.lt.s32.totalorder %s14, 1
      %s162 = scalar_select %p161, %s14, 1
      %s163 = smul.addr %s162, 98
      %s164 = smul.addr %s163, 8
      %s165 = scalar_lea.vmem %s0, %s164
      %p166 = scmp.lt.s32.totalorder %s14, 1
      %s167 = scalar_select %p166, %s14, 1
      %s168 = smul.addr %s167, 2
      %s169 = smul.addr %s168, 8
      %s170 = scalar_lea.vmem %s3, %s169
      %v171 = vld [vmem:[%s165] sm:$0xff]
      %v172 = vld [vmem:[%s165 + $0x8] sm:$0xff]
      %v173 = vld [vmem:[%s1] sm:$0xff]
      %175 = vset.pattern.permute.xlu0 0
      %176 = vperm.xlu0 %175, %v173
      %v177 = vpop.permute.xlu0 %176
      %v179 = vmul.f32 %v171, %v177
      %v180 = vmul.f32 %v172, %v177
      %s181 = scalar_lea.vmem %s165, 16
      %v182 = vld [vmem:[%s181] sm:$0xff]
      %v183 = vld [vmem:[%s181 + $0x8] sm:$0xff]
      %184 = vset.pattern.permute.xlu0 1
      %185 = vperm.xlu0 %184, %v173
      %v186 = vpop.permute.xlu0 %185
      %v188 = vmul.f32 %v182, %v186
      %v189 = vmul.f32 %v183, %v186
      %v190 = vadd.f32 %v179, %v188
      %v191 = vadd.f32 %v180, %v189
      %s192 = scalar_lea.vmem %s165, 32
      %v193 = vld [vmem:[%s192] sm:$0xff]
      %v194 = vld [vmem:[%s192 + $0x8] sm:$0xff]
      %195 = vset.pattern.permute.xlu0 2
      %196 = vperm.xlu0 %195, %v173
      %v197 = vpop.permute.xlu0 %196
      %v199 = vmul.f32 %v193, %v197
      %v200 = vmul.f32 %v194, %v197
      %v201 = vadd.f32 %v190, %v199
      %v202 = vadd.f32 %v191, %v200
      %s203 = scalar_lea.vmem %s165, 48
      %v204 = vld [vmem:[%s203] sm:$0xff]
      %v205 = vld [vmem:[%s203 + $0x8] sm:$0xff]
      %206 = vset.pattern.permute.xlu0 3
      %207 = vperm.xlu0 %206, %v173
      %v208 = vpop.permute.xlu0 %207
      %v210 = vmul.f32 %v204, %v208
      %v211 = vmul.f32 %v205, %v208
      %v212 = vadd.f32 %v201, %v210
      %v213 = vadd.f32 %v202, %v211
      %s214 = scalar_lea.vmem %s165, 64
      %v215 = vld [vmem:[%s214] sm:$0xff]
      %v216 = vld [vmem:[%s214 + $0x8] sm:$0xff]
      %217 = vset.pattern.permute.xlu0 4
      %218 = vperm.xlu0 %217, %v173
      %v219 = vpop.permute.xlu0 %218
      %v221 = vmul.f32 %v215, %v219
      %v222 = vmul.f32 %v216, %v219
      %v223 = vadd.f32 %v212, %v221
      %v224 = vadd.f32 %v213, %v222
      %s225 = scalar_lea.vmem %s165, 80
      %v226 = vld [vmem:[%s225] sm:$0xff]
      %v227 = vld [vmem:[%s225 + $0x8] sm:$0xff]
      %228 = vset.pattern.permute.xlu0 5
      %229 = vperm.xlu0 %228, %v173
      %v230 = vpop.permute.xlu0 %229
      %v232 = vmul.f32 %v226, %v230
      %v233 = vmul.f32 %v227, %v230
      %v234 = vadd.f32 %v223, %v232
      %v235 = vadd.f32 %v224, %v233
      %s236 = scalar_lea.vmem %s165, 96
      %v237 = vld [vmem:[%s236] sm:$0xff]
      %v238 = vld [vmem:[%s236 + $0x8] sm:$0xff]
      %239 = vset.pattern.permute.xlu0 6
      %240 = vperm.xlu0 %239, %v173
      %v241 = vpop.permute.xlu0 %240
      %v243 = vmul.f32 %v237, %v241
      %v244 = vmul.f32 %v238, %v241
      %v245 = vadd.f32 %v234, %v243
      %v246 = vadd.f32 %v235, %v244
      %s247 = scalar_lea.vmem %s165, 112
      %v248 = vld [vmem:[%s247] sm:$0xff]
      %v249 = vld [vmem:[%s247 + $0x8] sm:$0xff]
      %250 = vset.pattern.permute.xlu0 7
      %251 = vperm.xlu0 %250, %v173
      %v252 = vpop.permute.xlu0 %251
      %v254 = vmul.f32 %v248, %v252
      %v255 = vmul.f32 %v249, %v252
      %v256 = vadd.f32 %v245, %v254
      %v257 = vadd.f32 %v246, %v255
      %s258 = scalar_lea.vmem %s165, 128
      %v259 = vld [vmem:[%s258] sm:$0xff]
      %v260 = vld [vmem:[%s258 + $0x8] sm:$0xff]
      %261 = vset.pattern.permute.xlu0 8
      %262 = vperm.xlu0 %261, %v173
      %v263 = vpop.permute.xlu0 %262
      %v265 = vmul.f32 %v259, %v263
      %v266 = vmul.f32 %v260, %v263
      %v267 = vadd.f32 %v256, %v265
      %v268 = vadd.f32 %v257, %v266
      %s269 = scalar_lea.vmem %s165, 144
      %v270 = vld [vmem:[%s269] sm:$0xff]
      %v271 = vld [vmem:[%s269 + $0x8] sm:$0xff]
      %272 = vset.pattern.permute.xlu0 9
      %273 = vperm.xlu0 %272, %v173
      %v274 = vpop.permute.xlu0 %273
      %v276 = vmul.f32 %v270, %v274
      %v277 = vmul.f32 %v271, %v274
      %v278 = vadd.f32 %v267, %v276
      %v279 = vadd.f32 %v268, %v277
      %s280 = scalar_lea.vmem %s165, 160
      %v281 = vld [vmem:[%s280] sm:$0xff]
      %v282 = vld [vmem:[%s280 + $0x8] sm:$0xff]
      %283 = vset.pattern.permute.xlu0 10
      %284 = vperm.xlu0 %283, %v173
      %v285 = vpop.permute.xlu0 %284
      %v287 = vmul.f32 %v281, %v285
      %v288 = vmul.f32 %v282, %v285
      %v289 = vadd.f32 %v278, %v287
      %v290 = vadd.f32 %v279, %v288
      %s291 = scalar_lea.vmem %s165, 176
      %v292 = vld [vmem:[%s291] sm:$0xff]
      %v293 = vld [vmem:[%s291 + $0x8] sm:$0xff]
      %294 = vset.pattern.permute.xlu0 11
      %295 = vperm.xlu0 %294, %v173
      %v296 = vpop.permute.xlu0 %295
      %v298 = vmul.f32 %v292, %v296
      %v299 = vmul.f32 %v293, %v296
      %v300 = vadd.f32 %v289, %v298
      %v301 = vadd.f32 %v290, %v299
      %s302 = scalar_lea.vmem %s165, 192
      %v303 = vld [vmem:[%s302] sm:$0xff]
      %v304 = vld [vmem:[%s302 + $0x8] sm:$0xff]
      %305 = vset.pattern.permute.xlu0 12
      %306 = vperm.xlu0 %305, %v173
      %v307 = vpop.permute.xlu0 %306
      %v309 = vmul.f32 %v303, %v307
      %v310 = vmul.f32 %v304, %v307
      %v311 = vadd.f32 %v300, %v309
      %v312 = vadd.f32 %v301, %v310
      %s313 = scalar_lea.vmem %s165, 208
      %v314 = vld [vmem:[%s313] sm:$0xff]
      %v315 = vld [vmem:[%s313 + $0x8] sm:$0xff]
      %316 = vset.pattern.permute.xlu0 13
      %317 = vperm.xlu0 %316, %v173
      %v318 = vpop.permute.xlu0 %317
      %v320 = vmul.f32 %v314, %v318
      %v321 = vmul.f32 %v315, %v318
      %v322 = vadd.f32 %v311, %v320
      %v323 = vadd.f32 %v312, %v321
      %s324 = scalar_lea.vmem %s165, 224
      %v325 = vld [vmem:[%s324] sm:$0xff]
      %v326 = vld [vmem:[%s324 + $0x8] sm:$0xff]
      %327 = vset.pattern.permute.xlu0 14
      %328 = vperm.xlu0 %327, %v173
      %v329 = vpop.permute.xlu0 %328
      %v331 = vmul.f32 %v325, %v329
      %v332 = vmul.f32 %v326, %v329
      %v333 = vadd.f32 %v322, %v331
      %v334 = vadd.f32 %v323, %v332
      %s335 = scalar_lea.vmem %s165, 240
      %v336 = vld [vmem:[%s335] sm:$0xff]
      %v337 = vld [vmem:[%s335 + $0x8] sm:$0xff]
      %338 = vset.pattern.permute.xlu0 15
      %339 = vperm.xlu0 %338, %v173
      %v340 = vpop.permute.xlu0 %339
      %v342 = vmul.f32 %v336, %v340
      %v343 = vmul.f32 %v337, %v340
      %v344 = vadd.f32 %v333, %v342
      %v345 = vadd.f32 %v334, %v343
      %s346 = scalar_lea.vmem %s165, 256
      %v347 = vld [vmem:[%s346] sm:$0xff]
      %v348 = vld [vmem:[%s346 + $0x8] sm:$0xff]
      %349 = vset.pattern.permute.xlu0 16
      %350 = vperm.xlu0 %349, %v173
      %v351 = vpop.permute.xlu0 %350
      %v353 = vmul.f32 %v347, %v351
      %v354 = vmul.f32 %v348, %v351
      %v355 = vadd.f32 %v344, %v353
      %v356 = vadd.f32 %v345, %v354
      %s357 = scalar_lea.vmem %s165, 272
      %v358 = vld [vmem:[%s357] sm:$0xff]
      %v359 = vld [vmem:[%s357 + $0x8] sm:$0xff]
      %360 = vset.pattern.permute.xlu0 17
      %361 = vperm.xlu0 %360, %v173
      %v362 = vpop.permute.xlu0 %361
      %v364 = vmul.f32 %v358, %v362
      %v365 = vmul.f32 %v359, %v362
      %v366 = vadd.f32 %v355, %v364
      %v367 = vadd.f32 %v356, %v365
      %s368 = scalar_lea.vmem %s165, 288
      %v369 = vld [vmem:[%s368] sm:$0xff]
      %v370 = vld [vmem:[%s368 + $0x8] sm:$0xff]
      %371 = vset.pattern.permute.xlu0 18
      %372 = vperm.xlu0 %371, %v173
      %v373 = vpop.permute.xlu0 %372
      %v375 = vmul.f32 %v369, %v373
      %v376 = vmul.f32 %v370, %v373
      %v377 = vadd.f32 %v366, %v375
      %v378 = vadd.f32 %v367, %v376
      %s379 = scalar_lea.vmem %s165, 304
      %v380 = vld [vmem:[%s379] sm:$0xff]
      %v381 = vld [vmem:[%s379 + $0x8] sm:$0xff]
      %382 = vset.pattern.permute.xlu0 19
      %383 = vperm.xlu0 %382, %v173
      %v384 = vpop.permute.xlu0 %383
      %v386 = vmul.f32 %v380, %v384
      %v387 = vmul.f32 %v381, %v384
      %v388 = vadd.f32 %v377, %v386
      %v389 = vadd.f32 %v378, %v387
      %s390 = scalar_lea.vmem %s165, 320
      %v391 = vld [vmem:[%s390] sm:$0xff]
      %v392 = vld [vmem:[%s390 + $0x8] sm:$0xff]
      %393 = vset.pattern.permute.xlu0 20
      %394 = vperm.xlu0 %393, %v173
      %v395 = vpop.permute.xlu0 %394
      %v397 = vmul.f32 %v391, %v395
      %v398 = vmul.f32 %v392, %v395
      %v399 = vadd.f32 %v388, %v397
      %v400 = vadd.f32 %v389, %v398
      %s401 = scalar_lea.vmem %s165, 336
      %v402 = vld [vmem:[%s401] sm:$0xff]
      %v403 = vld [vmem:[%s401 + $0x8] sm:$0xff]
      %404 = vset.pattern.permute.xlu0 21
      %405 = vperm.xlu0 %404, %v173
      %v406 = vpop.permute.xlu0 %405
      %v408 = vmul.f32 %v402, %v406
      %v409 = vmul.f32 %v403, %v406
      %v410 = vadd.f32 %v399, %v408
      %v411 = vadd.f32 %v400, %v409
      %s412 = scalar_lea.vmem %s165, 352
      %v413 = vld [vmem:[%s412] sm:$0xff]
      %v414 = vld [vmem:[%s412 + $0x8] sm:$0xff]
      %415 = vset.pattern.permute.xlu0 22
      %416 = vperm.xlu0 %415, %v173
      %v417 = vpop.permute.xlu0 %416
      %v419 = vmul.f32 %v413, %v417
      %v420 = vmul.f32 %v414, %v417
      %v421 = vadd.f32 %v410, %v419
      %v422 = vadd.f32 %v411, %v420
      %s423 = scalar_lea.vmem %s165, 368
      %v424 = vld [vmem:[%s423] sm:$0xff]
      %v425 = vld [vmem:[%s423 + $0x8] sm:$0xff]
      %426 = vset.pattern.permute.xlu0 23
      %427 = vperm.xlu0 %426, %v173
      %v428 = vpop.permute.xlu0 %427
      %v430 = vmul.f32 %v424, %v428
      %v431 = vmul.f32 %v425, %v428
      %v432 = vadd.f32 %v421, %v430
      %v433 = vadd.f32 %v422, %v431
      %s434 = scalar_lea.vmem %s165, 384
      %v435 = vld [vmem:[%s434] sm:$0xff]
      %v436 = vld [vmem:[%s434 + $0x8] sm:$0xff]
      %437 = vset.pattern.permute.xlu0 24
      %438 = vperm.xlu0 %437, %v173
      %v439 = vpop.permute.xlu0 %438
      %v441 = vmul.f32 %v435, %v439
      %v442 = vmul.f32 %v436, %v439
      %v443 = vadd.f32 %v432, %v441
      %v444 = vadd.f32 %v433, %v442
      %s445 = scalar_lea.vmem %s165, 400
      %v446 = vld [vmem:[%s445] sm:$0xff]
      %v447 = vld [vmem:[%s445 + $0x8] sm:$0xff]
      %448 = vset.pattern.permute.xlu0 25
      %449 = vperm.xlu0 %448, %v173
      %v450 = vpop.permute.xlu0 %449
      %v452 = vmul.f32 %v446, %v450
      %v453 = vmul.f32 %v447, %v450
      %v454 = vadd.f32 %v443, %v452
      %v455 = vadd.f32 %v444, %v453
      %s456 = scalar_lea.vmem %s165, 416
      %v457 = vld [vmem:[%s456] sm:$0xff]
      %v458 = vld [vmem:[%s456 + $0x8] sm:$0xff]
      %459 = vset.pattern.permute.xlu0 26
      %460 = vperm.xlu0 %459, %v173
      %v461 = vpop.permute.xlu0 %460
      %v463 = vmul.f32 %v457, %v461
      %v464 = vmul.f32 %v458, %v461
      %v465 = vadd.f32 %v454, %v463
      %v466 = vadd.f32 %v455, %v464
      %s467 = scalar_lea.vmem %s165, 432
      %v468 = vld [vmem:[%s467] sm:$0xff]
      %v469 = vld [vmem:[%s467 + $0x8] sm:$0xff]
      %470 = vset.pattern.permute.xlu0 27
      %471 = vperm.xlu0 %470, %v173
      %v472 = vpop.permute.xlu0 %471
      %v474 = vmul.f32 %v468, %v472
      %v475 = vmul.f32 %v469, %v472
      %v476 = vadd.f32 %v465, %v474
      %v477 = vadd.f32 %v466, %v475
      %s478 = scalar_lea.vmem %s165, 448
      %v479 = vld [vmem:[%s478] sm:$0xff]
      %v480 = vld [vmem:[%s478 + $0x8] sm:$0xff]
      %481 = vset.pattern.permute.xlu0 28
      %482 = vperm.xlu0 %481, %v173
      %v483 = vpop.permute.xlu0 %482
      %v485 = vmul.f32 %v479, %v483
      %v486 = vmul.f32 %v480, %v483
      %v487 = vadd.f32 %v476, %v485
      %v488 = vadd.f32 %v477, %v486
      %s489 = scalar_lea.vmem %s165, 464
      %v490 = vld [vmem:[%s489] sm:$0xff]
      %v491 = vld [vmem:[%s489 + $0x8] sm:$0xff]
      %492 = vset.pattern.permute.xlu0 29
      %493 = vperm.xlu0 %492, %v173
      %v494 = vpop.permute.xlu0 %493
      %v496 = vmul.f32 %v490, %v494
      %v497 = vmul.f32 %v491, %v494
      %v498 = vadd.f32 %v487, %v496
      %v499 = vadd.f32 %v488, %v497
      %s500 = scalar_lea.vmem %s165, 480
      %v501 = vld [vmem:[%s500] sm:$0xff]
      %v502 = vld [vmem:[%s500 + $0x8] sm:$0xff]
      %503 = vset.pattern.permute.xlu0 30
      %504 = vperm.xlu0 %503, %v173
      %v505 = vpop.permute.xlu0 %504
      %v507 = vmul.f32 %v501, %v505
      %v508 = vmul.f32 %v502, %v505
      %v509 = vadd.f32 %v498, %v507
      %v510 = vadd.f32 %v499, %v508
      %s511 = scalar_lea.vmem %s165, 496
      %v512 = vld [vmem:[%s511] sm:$0xff]
      %v513 = vld [vmem:[%s511 + $0x8] sm:$0xff]
      %514 = vset.pattern.permute.xlu0 31
      %515 = vperm.xlu0 %514, %v173
      %v516 = vpop.permute.xlu0 %515
      %v518 = vmul.f32 %v512, %v516
      %v519 = vmul.f32 %v513, %v516
      %v520 = vadd.f32 %v509, %v518
      %v521 = vadd.f32 %v510, %v519
      %s522 = scalar_lea.vmem %s165, 512
      %v523 = vld [vmem:[%s522] sm:$0xff]
      %v524 = vld [vmem:[%s522 + $0x8] sm:$0xff]
      %525 = vset.pattern.permute.xlu0 32
      %526 = vperm.xlu0 %525, %v173
      %v527 = vpop.permute.xlu0 %526
      %v529 = vmul.f32 %v523, %v527
      %v530 = vmul.f32 %v524, %v527
      %v531 = vadd.f32 %v520, %v529
      %v532 = vadd.f32 %v521, %v530
      %s533 = scalar_lea.vmem %s165, 528
      %v534 = vld [vmem:[%s533] sm:$0xff]
      %v535 = vld [vmem:[%s533 + $0x8] sm:$0xff]
      %536 = vset.pattern.permute.xlu0 33
      %537 = vperm.xlu0 %536, %v173
      %v538 = vpop.permute.xlu0 %537
      %v540 = vmul.f32 %v534, %v538
      %v541 = vmul.f32 %v535, %v538
      %v542 = vadd.f32 %v531, %v540
      %v543 = vadd.f32 %v532, %v541
      %s544 = scalar_lea.vmem %s165, 544
      %v545 = vld [vmem:[%s544] sm:$0xff]
      %v546 = vld [vmem:[%s544 + $0x8] sm:$0xff]
      %547 = vset.pattern.permute.xlu0 34
      %548 = vperm.xlu0 %547, %v173
      %v549 = vpop.permute.xlu0 %548
      %v551 = vmul.f32 %v545, %v549
      %v552 = vmul.f32 %v546, %v549
      %v553 = vadd.f32 %v542, %v551
      %v554 = vadd.f32 %v543, %v552
      %s555 = scalar_lea.vmem %s165, 560
      %v556 = vld [vmem:[%s555] sm:$0xff]
      %v557 = vld [vmem:[%s555 + $0x8] sm:$0xff]
      %558 = vset.pattern.permute.xlu0 35
      %559 = vperm.xlu0 %558, %v173
      %v560 = vpop.permute.xlu0 %559
      %v562 = vmul.f32 %v556, %v560
      %v563 = vmul.f32 %v557, %v560
      %v564 = vadd.f32 %v553, %v562
      %v565 = vadd.f32 %v554, %v563
      %s566 = scalar_lea.vmem %s165, 576
      %v567 = vld [vmem:[%s566] sm:$0xff]
      %v568 = vld [vmem:[%s566 + $0x8] sm:$0xff]
      %569 = vset.pattern.permute.xlu0 36
      %570 = vperm.xlu0 %569, %v173
      %v571 = vpop.permute.xlu0 %570
      %v573 = vmul.f32 %v567, %v571
      %v574 = vmul.f32 %v568, %v571
      %v575 = vadd.f32 %v564, %v573
      %v576 = vadd.f32 %v565, %v574
      %s577 = scalar_lea.vmem %s165, 592
      %v578 = vld [vmem:[%s577] sm:$0xff]
      %v579 = vld [vmem:[%s577 + $0x8] sm:$0xff]
      %580 = vset.pattern.permute.xlu0 37
      %581 = vperm.xlu0 %580, %v173
      %v582 = vpop.permute.xlu0 %581
      %v584 = vmul.f32 %v578, %v582
      %v585 = vmul.f32 %v579, %v582
      %v586 = vadd.f32 %v575, %v584
      %v587 = vadd.f32 %v576, %v585
      %s588 = scalar_lea.vmem %s165, 608
      %v589 = vld [vmem:[%s588] sm:$0xff]
      %v590 = vld [vmem:[%s588 + $0x8] sm:$0xff]
      %591 = vset.pattern.permute.xlu0 38
      %592 = vperm.xlu0 %591, %v173
      %v593 = vpop.permute.xlu0 %592
      %v595 = vmul.f32 %v589, %v593
      %v596 = vmul.f32 %v590, %v593
      %v597 = vadd.f32 %v586, %v595
      %v598 = vadd.f32 %v587, %v596
      %s599 = scalar_lea.vmem %s165, 624
      %v600 = vld [vmem:[%s599] sm:$0xff]
      %v601 = vld [vmem:[%s599 + $0x8] sm:$0xff]
      %602 = vset.pattern.permute.xlu0 39
      %603 = vperm.xlu0 %602, %v173
      %v604 = vpop.permute.xlu0 %603
      %v606 = vmul.f32 %v600, %v604
      %v607 = vmul.f32 %v601, %v604
      %v608 = vadd.f32 %v597, %v606
      %v609 = vadd.f32 %v598, %v607
      %s610 = scalar_lea.vmem %s165, 640
      %v611 = vld [vmem:[%s610] sm:$0xff]
      %v612 = vld [vmem:[%s610 + $0x8] sm:$0xff]
      %613 = vset.pattern.permute.xlu0 40
      %614 = vperm.xlu0 %613, %v173
      %v615 = vpop.permute.xlu0 %614
      %v617 = vmul.f32 %v611, %v615
      %v618 = vmul.f32 %v612, %v615
      %v619 = vadd.f32 %v608, %v617
      %v620 = vadd.f32 %v609, %v618
      %s621 = scalar_lea.vmem %s165, 656
      %v622 = vld [vmem:[%s621] sm:$0xff]
      %v623 = vld [vmem:[%s621 + $0x8] sm:$0xff]
      %624 = vset.pattern.permute.xlu0 41
      %625 = vperm.xlu0 %624, %v173
      %v626 = vpop.permute.xlu0 %625
      %v628 = vmul.f32 %v622, %v626
      %v629 = vmul.f32 %v623, %v626
      %v630 = vadd.f32 %v619, %v628
      %v631 = vadd.f32 %v620, %v629
      %s632 = scalar_lea.vmem %s165, 672
      %v633 = vld [vmem:[%s632] sm:$0xff]
      %v634 = vld [vmem:[%s632 + $0x8] sm:$0xff]
      %635 = vset.pattern.permute.xlu0 42
      %636 = vperm.xlu0 %635, %v173
      %v637 = vpop.permute.xlu0 %636
      %v639 = vmul.f32 %v633, %v637
      %v640 = vmul.f32 %v634, %v637
      %v641 = vadd.f32 %v630, %v639
      %v642 = vadd.f32 %v631, %v640
      %s643 = scalar_lea.vmem %s165, 688
      %v644 = vld [vmem:[%s643] sm:$0xff]
      %v645 = vld [vmem:[%s643 + $0x8] sm:$0xff]
      %646 = vset.pattern.permute.xlu0 43
      %647 = vperm.xlu0 %646, %v173
      %v648 = vpop.permute.xlu0 %647
      %v650 = vmul.f32 %v644, %v648
      %v651 = vmul.f32 %v645, %v648
      %v652 = vadd.f32 %v641, %v650
      %v653 = vadd.f32 %v642, %v651
      %s654 = scalar_lea.vmem %s165, 704
      %v655 = vld [vmem:[%s654] sm:$0xff]
      %v656 = vld [vmem:[%s654 + $0x8] sm:$0xff]
      %657 = vset.pattern.permute.xlu0 44
      %658 = vperm.xlu0 %657, %v173
      %v659 = vpop.permute.xlu0 %658
      %v661 = vmul.f32 %v655, %v659
      %v662 = vmul.f32 %v656, %v659
      %v663 = vadd.f32 %v652, %v661
      %v664 = vadd.f32 %v653, %v662
      %s665 = scalar_lea.vmem %s165, 720
      %v666 = vld [vmem:[%s665] sm:$0xff]
      %v667 = vld [vmem:[%s665 + $0x8] sm:$0xff]
      %668 = vset.pattern.permute.xlu0 45
      %669 = vperm.xlu0 %668, %v173
      %v670 = vpop.permute.xlu0 %669
      %v672 = vmul.f32 %v666, %v670
      %v673 = vmul.f32 %v667, %v670
      %v674 = vadd.f32 %v663, %v672
      %v675 = vadd.f32 %v664, %v673
      %s676 = scalar_lea.vmem %s165, 736
      %v677 = vld [vmem:[%s676] sm:$0xff]
      %v678 = vld [vmem:[%s676 + $0x8] sm:$0xff]
      %679 = vset.pattern.permute.xlu0 46
      %680 = vperm.xlu0 %679, %v173
      %v681 = vpop.permute.xlu0 %680
      %v683 = vmul.f32 %v677, %v681
      %v684 = vmul.f32 %v678, %v681
      %v685 = vadd.f32 %v674, %v683
      %v686 = vadd.f32 %v675, %v684
      %s687 = scalar_lea.vmem %s165, 752
      %v688 = vld [vmem:[%s687] sm:$0xff]
      %v689 = vld [vmem:[%s687 + $0x8] sm:$0xff]
      %690 = vset.pattern.permute.xlu0 47
      %691 = vperm.xlu0 %690, %v173
      %v692 = vpop.permute.xlu0 %691
      %v694 = vmul.f32 %v688, %v692
      %v695 = vmul.f32 %v689, %v692
      %v696 = vadd.f32 %v685, %v694
      %v697 = vadd.f32 %v686, %v695
      %s698 = scalar_lea.vmem %s165, 768
      %v699 = vld [vmem:[%s698] sm:$0xff]
      %v700 = vld [vmem:[%s698 + $0x8] sm:$0xff]
      %701 = vset.pattern.permute.xlu0 48
      %702 = vperm.xlu0 %701, %v173
      %v703 = vpop.permute.xlu0 %702
      %v705 = vmul.f32 %v699, %v703
      %v706 = vmul.f32 %v700, %v703
      %v707 = vadd.f32 %v696, %v705
      %v708 = vadd.f32 %v697, %v706
      %v709 = vld [vmem:[%s2] sm:$0xff]
      %711 = vset.pattern.permute.xlu0 0
      %712 = vperm.xlu0 %711, %v709
      %v713 = vpop.permute.xlu0 %712
      %v715 = vadd.f32 %v707, %v713
      %v716 = vadd.f32 %v708, %v713
      %717 = vst [vmem:[%s170] sm:$0xff] %v715
      %718 = vst [vmem:[%s170 + $0x8] sm:$0xff] %v716
      %p719 = scmp.lt.s32.totalorder %s14, 1
      %s720 = scalar_select %p719, %s14, 1
      %s721 = smul.addr %s720, 2
      %s722 = smul.addr %s721, 8
      %s723 = scalar_lea.vmem %s3, %s722
      // Predicated region
      $region33: #{lkd_blocks_pallas.24} parent=31 // pred_check
        %p724 = pneg %p100
      $region34: #{lkd_blocks_pallas.24} parent=31 // pred_check_branch
        %726 = sbr.rel (%p724) target = $region36
      $region35: #{lkd_blocks_pallas.24} parent=31 // pred_region
        _
      $region36: #{lkd_blocks_pallas.24} parent=31 // pred_fallthru
        _
    $region32: #{lkd_blocks_pallas.24} parent=5 // pred_fallthru
      _
    %p727 = scmp.le.s32.totalorder 2, %s9
    // Predicated region
    $region37: #{lkd_blocks_pallas.24} parent=5 // pred_check
      %p728 = pneg %p727
    $region38: #{lkd_blocks_pallas.24} parent=5 // pred_check_branch
      %730 = sbr.rel (%p728) target = $region40
    $region39: #{lkd_blocks_pallas.24} parent=5 // pred_region
      %s731 = ssub.s32 %s9, 2
      // Predicated region
      $region41: #{lkd_blocks_pallas.24} parent=39 // pred_check
        %p732 = pneg %p106
      $region42: #{lkd_blocks_pallas.24} parent=39 // pred_check_branch
        %734 = sbr.rel (%p732) target = $region44
      $region43: #{lkd_blocks_pallas.24} parent=39 // pred_region
        %p735 = scmp.lt.s32.totalorder %s15, 1
        %s736 = scalar_select %p735, %s15, 1
        %s737 = smul.addr %s736, 2
        %s738 = smul.addr %s737, 8
        %s739 = scalar_lea.vmem %s3, %s738
      $region44: #{lkd_blocks_pallas.24} parent=39 // pred_fallthru
        _
    $region40: #{lkd_blocks_pallas.24} parent=5 // pred_fallthru
      _
  $region6: #{lkd_blocks_pallas.24} parent=0 // loop_footer
    %s13 = sadd.s32 1, %s9
  $region7: #{lkd_blocks_pallas.24} parent=0 // loop_footer_branch
    %8 = sbr.rel target = $region3
  $region8: #{lkd_blocks_pallas.24} parent=0 // loop_exit
    _

// kernel: lkd_blocks_pallas.26
$region0: #{lkd_blocks_pallas.26}
  #allocation0 [shape = 'u32[]', space=smem, size = 0x4, offset = 0x4, fixed_abs, tag = 'smem constant byte address 0x4 - core index']
  #allocation1 [shape = 'u32[144,128]{1,0:T(1,128)}', space=vmem, size = 0x12000, scoped, tag = 'internal scratch']
  %s0 = inlined_call_operand.vmem [shape: f32[2,72,256], index: 0, kind: input, shape index: {}]
  %s1 = inlined_call_operand.vmem [shape: f32[8,72], index: 1, kind: input, shape index: {}]
  %s2 = inlined_call_operand.vmem [shape: f32[8,1], index: 2, kind: input, shape index: {}]
  %s3 = inlined_call_operand.vmem [shape: f32[2,8,256], index: 3, kind: output, shape index: {0}]
  %s4 = inlined_call_operand.vmem [shape: f32[2,8,1], index: 4, kind: output, shape index: {1}]
  %5 = xla_tuple %s3, %s4
  %s6 = sld [smem:[#allocation0]]
  $region53: #{lkd_blocks_pallas.26} parent=0
    _
  %s8 = ssub.s32 1, %s6
  %s9 = scalar_select 0, %s8, %s6
  loop: start=0, step=1, limit=4
  $region2: #{lkd_blocks_pallas.26} parent=0 // loop_pre_header
    _
  $region3: #{lkd_blocks_pallas.26} parent=0 // loop_header
    %s11 = sphi 0, %s15
    %p12 = scmp.ge.s32.totalorder %s11, 4
    %s21 = sphi 0, %s23
    %s24 = sphi 0, %s21
    %s25 = sphi 0, %s24
    %s41 = sphi 0, %s25
    %s45 = sphi 0, %s45
    %s47 = sphi 0, %s45
    %s48 = sphi 0, %s47
    %s62 = sphi 0, %s48
    %s66 = sphi 0, %s66
    %s68 = sphi 0, %s66
    %s69 = sphi 0, %s68
    %s83 = sphi 0, %s69
    %s89 = sphi 0, %s91
    %s92 = sphi 0, %s89
    %s93 = sphi 0, %s92
    %s109 = sphi 0, %s93
    %s115 = sphi 0, %s117
    %s118 = sphi 0, %s115
    %s119 = sphi 0, %s118
    %s135 = sphi 0, %s119
  $region4: #{lkd_blocks_pallas.26} parent=0 // loop_header_branch
    %14 = sbr.rel (%p12) target = $region8
  $region5: #{lkd_blocks_pallas.26} parent=0 // loop_body
    %s16 = ssub.s32 %s11, 1
    %s17 = ssub.s32 %s11, 2
    %s18 = sadd.s32 %s11, 1
    %s19 = ssub.s32 %s11, %s18
    %p20 = scmp.eq.s32.totalorder %s19, 0
    %s22 = sadd.s32 %s21, 1
    %s23 = scalar_select %p20, %s21, %s22
    %p26 = pneg %p20
    %p27 = scmp.eq.s32.totalorder %s11, 1
    %p28 = por %p26, %p27
    %p29 = scmp.ne.s32.totalorder %s21, %s24
    %p30 = scmp.eq.s32.totalorder %s11, 0
    %p31 = por %p29, %p30
    %p32 = scmp.ne.s32.totalorder %s21, %s24
    %p33 = scmp.eq.s32.totalorder %s16, 1
    %p34 = por %p32, %p33
    %p35 = scmp.ne.s32.totalorder %s24, %s25
    %p36 = scmp.eq.s32.totalorder %s16, 0
    %p37 = por %p35, %p36
    %p38 = scmp.ne.s32.totalorder %s24, %s25
    %p39 = scmp.eq.s32.totalorder %s17, 1
    %p40 = por %p38, %p39
    %p42 = scmp.ne.s32.totalorder %s25, %s41
    %p43 = scmp.eq.s32.totalorder %s17, 0
    %p44 = por %p42, %p43
    %s46 = sadd.s32 %s45, 1
    %p49 = scmp.eq.s32.totalorder %s11, 1
    %p50 = scmp.ne.s32.totalorder %s45, %s47
    %p51 = scmp.eq.s32.totalorder %s11, 0
    %p52 = por %p50, %p51
    %p53 = scmp.ne.s32.totalorder %s45, %s47
    %p54 = scmp.eq.s32.totalorder %s16, 1
    %p55 = por %p53, %p54
    %p56 = scmp.ne.s32.totalorder %s47, %s48
    %p57 = scmp.eq.s32.totalorder %s16, 0
    %p58 = por %p56, %p57
    %p59 = scmp.ne.s32.totalorder %s47, %s48
    %p60 = scmp.eq.s32.totalorder %s17, 1
    %p61 = por %p59, %p60
    %p63 = scmp.ne.s32.totalorder %s48, %s62
    %p64 = scmp.eq.s32.totalorder %s17, 0
    %p65 = por %p63, %p64
    %s67 = sadd.s32 %s66, 1
    %p70 = scmp.eq.s32.totalorder %s11, 1
    %p71 = scmp.ne.s32.totalorder %s66, %s68
    %p72 = scmp.eq.s32.totalorder %s11, 0
    %p73 = por %p71, %p72
    %p74 = scmp.ne.s32.totalorder %s66, %s68
    %p75 = scmp.eq.s32.totalorder %s16, 1
    %p76 = por %p74, %p75
    %p77 = scmp.ne.s32.totalorder %s68, %s69
    %p78 = scmp.eq.s32.totalorder %s16, 0
    %p79 = por %p77, %p78
    %p80 = scmp.ne.s32.totalorder %s68, %s69
    %p81 = scmp.eq.s32.totalorder %s17, 1
    %p82 = por %p80, %p81
    %p84 = scmp.ne.s32.totalorder %s69, %s83
    %p85 = scmp.eq.s32.totalorder %s17, 0
    %p86 = por %p84, %p85
    %s87 = ssub.s32 %s11, %s18
    %p88 = scmp.eq.s32.totalorder %s87, 0
    %s90 = sadd.s32 %s89, 1
    %s91 = scalar_select %p88, %s89, %s90
    %p94 = pneg %p88
    %p95 = scmp.eq.s32.totalorder %s11, 1
    %p96 = por %p94, %p95
    %p97 = scmp.ne.s32.totalorder %s89, %s92
    %p98 = scmp.eq.s32.totalorder %s11, 0
    %p99 = por %p97, %p98
    %p100 = scmp.ne.s32.totalorder %s89, %s92
    %p101 = scmp.eq.s32.totalorder %s16, 1
    %p102 = por %p100, %p101
    %p103 = scmp.ne.s32.totalorder %s92, %s93
    %p104 = scmp.eq.s32.totalorder %s16, 0
    %p105 = por %p103, %p104
    %p106 = scmp.ne.s32.totalorder %s92, %s93
    %p107 = scmp.eq.s32.totalorder %s17, 1
    %p108 = por %p106, %p107
    %p110 = scmp.ne.s32.totalorder %s93, %s109
    %p111 = scmp.eq.s32.totalorder %s17, 0
    %p112 = por %p110, %p111
    %s113 = ssub.s32 %s11, %s18
    %p114 = scmp.eq.s32.totalorder %s113, 0
    %s116 = sadd.s32 %s115, 1
    %s117 = scalar_select %p114, %s115, %s116
    %p120 = pneg %p114
    %p121 = scmp.eq.s32.totalorder %s11, 1
    %p122 = por %p120, %p121
    %p123 = scmp.ne.s32.totalorder %s115, %s118
    %p124 = scmp.eq.s32.totalorder %s11, 0
    %p125 = por %p123, %p124
    %p126 = scmp.ne.s32.totalorder %s115, %s118
    %p127 = scmp.eq.s32.totalorder %s16, 1
    %p128 = por %p126, %p127
    %p129 = scmp.ne.s32.totalorder %s118, %s119
    %p130 = scmp.eq.s32.totalorder %s16, 0
    %p131 = por %p129, %p130
    %p132 = scmp.ne.s32.totalorder %s118, %s119
    %p133 = scmp.eq.s32.totalorder %s17, 1
    %p134 = por %p132, %p133
    %p136 = scmp.ne.s32.totalorder %s119, %s135
    %p137 = scmp.eq.s32.totalorder %s17, 0
    %p138 = por %p136, %p137
    %p139 = scmp.le.s32.totalorder 1, %s11
    %p140 = scmp.lt.s32.totalorder %s11, 3
    %p141 = pnand %p139, %p140
    %p142 = pneg %p141
    // Predicated region
    $region9: #{lkd_blocks_pallas.26} parent=5 // pred_check
      _
    $region10: #{lkd_blocks_pallas.26} parent=5 // pred_check_branch
      %144 = sbr.rel (%p141) target = $region12
    $region11: #{lkd_blocks_pallas.26} parent=5 // pred_region
      %s145 = ssub.s32 %s11, 1
      // Predicated region
      $region13: #{lkd_blocks_pallas.26} parent=11 // pred_check
        %p146 = pneg %p58
      $region14: #{lkd_blocks_pallas.26} parent=11 // pred_check_branch
        %148 = sbr.rel (%p146) target = $region16
      $region15: #{lkd_blocks_pallas.26} parent=11 // pred_region
        _
      $region16: #{lkd_blocks_pallas.26} parent=11 // pred_fallthru
        _
      // Predicated region
      $region17: #{lkd_blocks_pallas.26} parent=11 // pred_check
        %p149 = pneg %p79
      $region18: #{lkd_blocks_pallas.26} parent=11 // pred_check_branch
        %151 = sbr.rel (%p149) target = $region20
      $region19: #{lkd_blocks_pallas.26} parent=11 // pred_region
        _
      $region20: #{lkd_blocks_pallas.26} parent=11 // pred_fallthru
        _
    $region12: #{lkd_blocks_pallas.26} parent=5 // pred_fallthru
      _
    %p152 = scmp.lt.s32.totalorder %s11, 2
    // Predicated region
    $region21: #{lkd_blocks_pallas.26} parent=5 // pred_check
      %p153 = pneg %p152
    $region22: #{lkd_blocks_pallas.26} parent=5 // pred_check_branch
      %155 = sbr.rel (%p153) target = $region24
    $region23: #{lkd_blocks_pallas.26} parent=5 // pred_region
      // Predicated region
      $region25: #{lkd_blocks_pallas.26} parent=23 // pred_check
        %p156 = pneg %p31
      $region26: #{lkd_blocks_pallas.26} parent=23 // pred_check_branch
        %158 = sbr.rel (%p156) target = $region28
      $region27: #{lkd_blocks_pallas.26} parent=23 // pred_region
        %p159 = scmp.lt.s32.totalorder %s11, 1
        %s160 = scalar_select %p159, %s11, 1
        %s161 = smul.addr %s160, 18
        %s162 = smul.addr %s161, 8
        %s163 = scalar_lea.vmem %s0, %s162
      $region28: #{lkd_blocks_pallas.26} parent=23 // pred_fallthru
        _
    $region24: #{lkd_blocks_pallas.26} parent=5 // pred_fallthru
      _
    %p164 = scmp.le.s32.totalorder 1, %s11
    %p165 = scmp.lt.s32.totalorder %s11, 3
    %p166 = pnand %p164, %p165
    %p167 = pneg %p166
    // Predicated region
    $region29: #{lkd_blocks_pallas.26} parent=5 // pred_check
      _
    $region30: #{lkd_blocks_pallas.26} parent=5 // pred_check_branch
      %169 = sbr.rel (%p166) target = $region32
    $region31: #{lkd_blocks_pallas.26} parent=5 // pred_region
      %s170 = ssub.s32 %s11, 1
      %p171 = scmp.lt.s32.totalorder %s16, 1
      %s172 = scalar_select %p171, %s16, 1
      %s173 = smul.addr %s172, 18
      %s174 = smul.addr %s173, 8
      %s175 = scalar_lea.vmem %s0, %s174
      %p176 = pneg %p37
      %p177 = pneg %p34
      %p178 = pneg %p58
      %p179 = pneg %p55
      %p180 = pneg %p79
      %p181 = pneg %p76
      %p182 = pneg %p105
      %p183 = pneg %p102
      %p184 = scmp.lt.s32.totalorder %s16, 1
      %s185 = scalar_select %p184, %s16, 1
      %s186 = smul.addr %s185, 2
      %s187 = smul.addr %s186, 8
      %s188 = scalar_lea.vmem %s3, %s187
      %p189 = pneg %p131
      %p190 = pneg %p128
      %p191 = scmp.lt.s32.totalorder %s16, 1
      %s192 = scalar_select %p191, %s16, 1
      %s193 = smul.addr %s192, 8
      %s194 = scalar_lea.vmem %s4, %s193
      %p195 = scmp.lt.s32.totalorder %s16, 1
      %s196 = scalar_select %p195, %s16, 1
      %s197 = smul.addr %s196, 18
      %s198 = smul.addr %s197, 8
      %s199 = scalar_lea.vmem %s0, %s198
      %p200 = scmp.lt.s32.totalorder %s16, 1
      %s201 = scalar_select %p200, %s16, 1
      %s202 = smul.addr %s201, 2
      %s203 = smul.addr %s202, 8
      %s204 = scalar_lea.vmem %s3, %s203
      %p205 = scmp.lt.s32.totalorder %s16, 1
      %s206 = scalar_select %p205, %s16, 1
      %s207 = smul.addr %s206, 8
      %s208 = scalar_lea.vmem %s4, %s207
      %v209 = vld [vmem:[%s1] sm:$0xff]
      %v210 = vld [vmem:[%s199] sm:$0xff]
      %v211 = vld [vmem:[%s199 + $0x8] sm:$0xff]
      %v212 = vld [vmem:[%s199 + $0x10] sm:$0xff]
      %v213 = vld [vmem:[%s199 + $0x18] sm:$0xff]
      %v214 = vld [vmem:[%s199 + $0x20] sm:$0xff]
      %v215 = vld [vmem:[%s199 + $0x28] sm:$0xff]
      %v216 = vld [vmem:[%s199 + $0x30] sm:$0xff]
      %v217 = vld [vmem:[%s199 + $0x38] sm:$0xff]
      %v218 = vld [vmem:[%s199 + $0x40] sm:$0xff]
      %v219 = vld [vmem:[%s199 + $0x48] sm:$0xff]
      %v220 = vld [vmem:[%s199 + $0x50] sm:$0xff]
      %v221 = vld [vmem:[%s199 + $0x58] sm:$0xff]
      %v222 = vld [vmem:[%s199 + $0x60] sm:$0xff]
      %v223 = vld [vmem:[%s199 + $0x68] sm:$0xff]
      %v224 = vld [vmem:[%s199 + $0x70] sm:$0xff]
      %v225 = vld [vmem:[%s199 + $0x78] sm:$0xff]
      %v226 = vld [vmem:[%s199 + $0x80] sm:$0xff]
      %v227 = vld [vmem:[%s199 + $0x88] sm:$0xff]
      %v228 = vld [vmem:[%s2] sm:$0xff]
      %230 = vset.pattern.permute.xlu0 0
      %231 = vperm.xlu0 %230, %v228
      %v232 = vpop.permute.xlu0 %231
      %vm234 = vcmask 588800
      %v236 = vsel %vm234, %v209, 0
      %238 = vmatprep.subr.mxu0 0.0
      %239 = vmatpush1.msra.mxu0 0.0
      %240 = vmatprep.subr.mxu0 0.0
      %241 = vmatpush1.msra.mxu0 0.0
      %242 = vmatprep.subr.mxu0 0.0
      %243 = vmatpush1.msra.mxu0 0.0
      %244 = vmatprep.subr.mxu0 0.0
      %245 = vmatpush1.msra.mxu0 0.0
      %246 = vmatprep.subr.mxu0 0.0
      %247 = vmatpush1.msra.mxu0 0.0
      %248 = vmatprep.subr.mxu0 0.0
      %249 = vmatpush1.msra.mxu0 0.0
      %250 = vmatprep.subr.mxu0 0.0
      %251 = vmatpush1.msra.mxu0 0.0
      %252 = vmatprep.subr.mxu0 %v227
      %253 = vmatpush1.msra.mxu0 %v226
      %254 = vmatprep.subr.mxu0 %v225
      %255 = vmatpush1.msra.mxu0 %v224
      %256 = vmatprep.subr.mxu0 %v223
      %257 = vmatpush1.msra.mxu0 %v222
      %258 = vmatprep.subr.mxu0 %v221
      %259 = vmatpush1.msra.mxu0 %v220
      %260 = vmatprep.subr.mxu0 %v219
      %261 = vmatpush1.msra.mxu0 %v218
      %262 = vmatprep.subr.mxu0 %v217
      %263 = vmatpush1.msra.mxu0 %v216
      %264 = vmatprep.subr.mxu0 %v215
      %265 = vmatpush1.msra.mxu0 %v214
      %266 = vmatprep.subr.mxu0 %v213
      %267 = vmatpush1.msra.mxu0 %v212
      %268 = vmatprep.subr.mxu0 %v211
      %269 = vmatpush1.msra.mxu0 %v210
      %270 = vmatprep.subr.mxu0 0.0
      %271 = vmatpush2.msra.mxu0 0.0
      %272 = vmatprep.subr.mxu0 0.0
      %273 = vmatpush2.msra.mxu0 0.0
      %274 = vmatprep.subr.mxu0 0.0
      %275 = vmatpush2.msra.mxu0 0.0
      %276 = vmatprep.subr.mxu0 0.0
      %277 = vmatpush2.msra.mxu0 0.0
      %278 = vmatprep.subr.mxu0 0.0
      %279 = vmatpush2.msra.mxu0 0.0
      %280 = vmatprep.subr.mxu0 0.0
      %281 = vmatpush2.msra.mxu0 0.0
      %282 = vmatprep.subr.mxu0 0.0
      %283 = vmatpush2.msra.mxu0 0.0
      %284 = vmatprep.subr.mxu0 0.0
      %285 = vmatpush2.msra.mxu0 0.0
      %286 = vmatprep.subr.mxu0 0.0
      %287 = vmatpush2.msra.mxu0 0.0
      %288 = vmatprep.subr.mxu0 0.0
      %289 = vmatpush2.msra.mxu0 0.0
      %290 = vmatprep.subr.mxu0 0.0
      %291 = vmatpush2.msra.mxu0 0.0
      %292 = vmatprep.subr.mxu0 0.0
      %293 = vmatpush2.msra.mxu0 0.0
      %294 = vmatprep.subr.mxu0 0.0
      %295 = vmatpush2.msra.mxu0 0.0
      %296 = vmatprep.subr.mxu0 0.0
      %297 = vmatpush2.msra.mxu0 0.0
      %298 = vmatprep.subr.mxu0 0.0
      %299 = vmatpush2.msra.mxu0 0.0
      %300 = vmatprep.subr.mxu0 0.0
      %301 = vmatpush2.msra.mxu0 0.0
      %302 = vmatprep.mubr.f32.mxu0 0.0
      %303 = vmatmul.mubr.f32.gmra.mxu0 %v236
      %v304 = vpop.f32.mrf.mxu0
      %v305 = vadd.f32 %v232, %v304
      %v306 = vpop.f32.mrf.mxu0
      %v307 = vadd.f32 %v232, %v306
      %308 = vdwg.mxu0
      %v309 = vmul.f32 %v305, 0.5
      %v310 = vmul.f32 %v307, 0.5
      %v311 = vmul.f32 %v305, 0.044715
      %v312 = vmul.f32 %v307, 0.044715
      %v313 = vmul.f32 %v311, %v305
      %v314 = vmul.f32 %v312, %v307
      %v315 = vmul.f32 %v313, %v305
      %v316 = vmul.f32 %v314, %v307
      %v317 = vadd.f32 %v305, %v315
      %v318 = vadd.f32 %v307, %v316
      %v319 = vmul.f32 %v317, 0.7978846
      %v320 = vmul.f32 %v318, 0.7978846
      %v321 = vtanh.pop %v319
      %v322 = vtanh.pop %v320
      %v323 = vadd.f32 %v321, 1.0
      %v324 = vadd.f32 %v322, 1.0
      %v325 = vmul.f32 %v309, %v323
      %v326 = vmul.f32 %v310, %v324
      %327 = vst [vmem:[%s204] sm:$0xff] %v325
      %328 = vst [vmem:[%s204 + $0x8] sm:$0xff] %v326
      %v329 = vadd.f32 %v325, %v326
      %330 = vadd.xlane.f32.xlu0 %v329
      %v331 = vpop.xlane.xlu0 %330
      %v332 = vmul.f32 %v331, 0.00390625
      %vm333 = vcmask 7168
      %334 = vst.msk [vmem:[%s208] sm:$0xff] %vm333, %v332
      %p335 = scmp.lt.s32.totalorder %s16, 1
      %s336 = scalar_select %p335, %s16, 1
      %s337 = smul.addr %s336, 2
      %s338 = smul.addr %s337, 8
      %s339 = scalar_lea.vmem %s3, %s338
      %p340 = scmp.lt.s32.totalorder %s16, 1
      %s341 = scalar_select %p340, %s16, 1
      %s342 = smul.addr %s341, 8
      %s343 = scalar_lea.vmem %s4, %s342
      // Predicated region
      $region33: #{lkd_blocks_pallas.26} parent=31 // pred_check
        %p344 = pneg %p102
      $region34: #{lkd_blocks_pallas.26} parent=31 // pred_check_branch
        %346 = sbr.rel (%p344) target = $region36
      $region35: #{lkd_blocks_pallas.26} parent=31 // pred_region
        _
      $region36: #{lkd_blocks_pallas.26} parent=31 // pred_fallthru
        _
      // Predicated region
      $region37: #{lkd_blocks_pallas.26} parent=31 // pred_check
        %p347 = pneg %p128
      $region38: #{lkd_blocks_pallas.26} parent=31 // pred_check_branch
        %349 = sbr.rel (%p347) target = $region40
      $region39: #{lkd_blocks_pallas.26} parent=31 // pred_region
        _
      $region40: #{lkd_blocks_pallas.26} parent=31 // pred_fallthru
        _
    $region32: #{lkd_blocks_pallas.26} parent=5 // pred_fallthru
      _
    %p350 = scmp.le.s32.totalorder 2, %s11
    // Predicated region
    $region41: #{lkd_blocks_pallas.26} parent=5 // pred_check
      %p351 = pneg %p350
    $region42: #{lkd_blocks_pallas.26} parent=5 // pred_check_branch
      %353 = sbr.rel (%p351) target = $region44
    $region43: #{lkd_blocks_pallas.26} parent=5 // pred_region
      %s354 = ssub.s32 %s11, 2
      // Predicated region
      $region45: #{lkd_blocks_pallas.26} parent=43 // pred_check
        %p355 = pneg %p108
      $region46: #{lkd_blocks_pallas.26} parent=43 // pred_check_branch
        %357 = sbr.rel (%p355) target = $region48
      $region47: #{lkd_blocks_pallas.26} parent=43 // pred_region
        %p358 = scmp.lt.s32.totalorder %s17, 1
        %s359 = scalar_select %p358, %s17, 1
        %s360 = smul.addr %s359, 2
        %s361 = smul.addr %s360, 8
        %s362 = scalar_lea.vmem %s3, %s361
      $region48: #{lkd_blocks_pallas.26} parent=43 // pred_fallthru
        _
      // Predicated region
      $region49: #{lkd_blocks_pallas.26} parent=43 // pred_check
        %p363 = pneg %p134
      $region50: #{lkd_blocks_pallas.26} parent=43 // pred_check_branch
        %365 = sbr.rel (%p363) target = $region52
      $region51: #{lkd_blocks_pallas.26} parent=43 // pred_region
        %p366 = scmp.lt.s32.totalorder %s17, 1
        %s367 = scalar_select %p366, %s17, 1
        %s368 = smul.addr %s367, 8
        %s369 = scalar_lea.vmem %s4, %s368
      $region52: #{lkd_blocks_pallas.26} parent=43 // pred_fallthru
        _
    $region44: #{lkd_blocks_pallas.26} parent=5 // pred_fallthru
      _
  $region6: #{lkd_blocks_pallas.26} parent=0 // loop_footer
    %s15 = sadd.s32 1, %s11
  $region7: #{lkd_blocks_pallas.26} parent=0 // loop_footer_branch
    %10 = sbr.rel target = $region3
  $region8: #{lkd_blocks_pallas.26} parent=0 // loop_exit
    _

// kernel: lkd_blocks_pallas.30
$region0: #{lkd_blocks_pallas.30}
  #allocation0 [shape = 'u32[]', space=smem, size = 0x4, offset = 0x4, fixed_abs, tag = 'smem constant byte address 0x4 - core index']
  #allocation1 [shape = 'u32[144,128]{1,0:T(1,128)}', space=vmem, size = 0x12000, scoped, tag = 'internal scratch']
  %s0 = inlined_call_operand.vmem [shape: f32[2,8,256], index: 0, kind: input, shape index: {}]
  %s1 = inlined_call_operand.vmem [shape: f32[2,8,256], index: 1, kind: input, shape index: {}]
  %s2 = inlined_call_operand.vmem [shape: f32[2,8,256], index: 2, kind: input, shape index: {}]
  %s3 = inlined_call_operand.vmem [shape: f32[2,8,256], index: 3, kind: input, shape index: {}]
  %s4 = inlined_call_operand.vmem [shape: f32[2,4,8,1], index: 4, kind: input, shape index: {}]
  %s5 = inlined_call_operand.vmem [shape: f32[8,8], index: 5, kind: input, shape index: {}]
  %s6 = inlined_call_operand.vmem [shape: f32[8,1], index: 6, kind: input, shape index: {}]
  %s7 = inlined_call_operand.vmem [shape: f32[8,1], index: 7, kind: input, shape index: {}]
  %s8 = inlined_call_operand.vmem [shape: f32[2,8,256], index: 8, kind: input, shape index: {}]
  %s9 = inlined_call_operand.vmem [shape: f32[32,8], index: 9, kind: input, shape index: {}]
  %s10 = inlined_call_operand.vmem [shape: f32[32,1], index: 10, kind: input, shape index: {}]
  %s11 = inlined_call_operand.vmem [shape: f32[2,8,256], index: 11, kind: output, shape index: {0}]
  %s12 = inlined_call_operand.vmem [shape: f32[2,8,1], index: 12, kind: output, shape index: {1}]
  %s13 = inlined_call_operand.vmem [shape: f32[2,32,256], index: 13, kind: output, shape index: {2}]
  %14 = xla_tuple %s11, %s12, %s13
  %s15 = sld [smem:[#allocation0]]
  $region93: #{lkd_blocks_pallas.30} parent=0
    _
  %s17 = ssub.s32 1, %s15
  %s18 = scalar_select 0, %s17, %s15
  loop: start=0, step=1, limit=4
  $region2: #{lkd_blocks_pallas.30} parent=0 // loop_pre_header
    _
  $region3: #{lkd_blocks_pallas.30} parent=0 // loop_header
    %s20 = sphi 0, %s24
    %p21 = scmp.ge.s32.totalorder %s20, 4
    %s30 = sphi 0, %s32
    %s33 = sphi 0, %s30
    %s34 = sphi 0, %s33
    %s50 = sphi 0, %s34
    %s56 = sphi 0, %s58
    %s59 = sphi 0, %s56
    %s60 = sphi 0, %s59
    %s76 = sphi 0, %s60
    %s82 = sphi 0, %s84
    %s85 = sphi 0, %s82
    %s86 = sphi 0, %s85
    %s102 = sphi 0, %s86
    %s108 = sphi 0, %s110
    %s111 = sphi 0, %s108
    %s112 = sphi 0, %s111
    %s128 = sphi 0, %s112
    %s134 = sphi 0, %s136
    %s137 = sphi 0, %s134
    %s138 = sphi 0, %s137
    %s154 = sphi 0, %s138
    %s158 = sphi 0, %s158
    %s160 = sphi 0, %s158
    %s161 = sphi 0, %s160
    %s175 = sphi 0, %s161
    %s179 = sphi 0, %s179
    %s181 = sphi 0, %s179
    %s182 = sphi 0, %s181
    %s196 = sphi 0, %s182
    %s200 = sphi 0, %s200
    %s202 = sphi 0, %s200
    %s203 = sphi 0, %s202
    %s217 = sphi 0, %s203
    %s223 = sphi 0, %s225
    %s226 = sphi 0, %s223
    %s227 = sphi 0, %s226
    %s243 = sphi 0, %s227
    %s247 = sphi 0, %s247
    %s249 = sphi 0, %s247
    %s250 = sphi 0, %s249
    %s264 = sphi 0, %s250
    %s268 = sphi 0, %s268
    %s270 = sphi 0, %s268
    %s271 = sphi 0, %s270
    %s285 = sphi 0, %s271
    %s291 = sphi 0, %s293
    %s294 = sphi 0, %s291
    %s295 = sphi 0, %s294
    %s311 = sphi 0, %s295
    %s317 = sphi 0, %s319
    %s320 = sphi 0, %s317
    %s321 = sphi 0, %s320
    %s337 = sphi 0, %s321
    %s343 = sphi 0, %s345
    %s346 = sphi 0, %s343
    %s347 = sphi 0, %s346
    %s363 = sphi 0, %s347
  $region4: #{lkd_blocks_pallas.30} parent=0 // loop_header_branch
    %23 = sbr.rel (%p21) target = $region8
  $region5: #{lkd_blocks_pallas.30} parent=0 // loop_body
    %s25 = ssub.s32 %s20, 1
    %s26 = ssub.s32 %s20, 2
    %s27 = sadd.s32 %s20, 1
    %s28 = ssub.s32 %s20, %s27
    %p29 = scmp.eq.s32.totalorder %s28, 0
    %s31 = sadd.s32 %s30, 1
    %s32 = scalar_select %p29, %s30, %s31
    %p35 = pneg %p29
    %p36 = scmp.eq.s32.totalorder %s20, 1
    %p37 = por %p35, %p36
    %p38 = scmp.ne.s32.totalorder %s30, %s33
    %p39 = scmp.eq.s32.totalorder %s20, 0
    %p40 = por %p38, %p39
    %p41 = scmp.ne.s32.totalorder %s30, %s33
    %p42 = scmp.eq.s32.totalorder %s25, 1
    %p43 = por %p41, %p42
    %p44 = scmp.ne.s32.totalorder %s33, %s34
    %p45 = scmp.eq.s32.totalorder %s25, 0
    %p46 = por %p44, %p45
    %p47 = scmp.ne.s32.totalorder %s33, %s34
    %p48 = scmp.eq.s32.totalorder %s26, 1
    %p49 = por %p47, %p48
    %p51 = scmp.ne.s32.totalorder %s34, %s50
    %p52 = scmp.eq.s32.totalorder %s26, 0
    %p53 = por %p51, %p52
    %s54 = ssub.s32 %s20, %s27
    %p55 = scmp.eq.s32.totalorder %s54, 0
    %s57 = sadd.s32 %s56, 1
    %s58 = scalar_select %p55, %s56, %s57
    %p61 = pneg %p55
    %p62 = scmp.eq.s32.totalorder %s20, 1
    %p63 = por %p61, %p62
    %p64 = scmp.ne.s32.totalorder %s56, %s59
    %p65 = scmp.eq.s32.totalorder %s20, 0
    %p66 = por %p64, %p65
    %p67 = scmp.ne.s32.totalorder %s56, %s59
    %p68 = scmp.eq.s32.totalorder %s25, 1
    %p69 = por %p67, %p68
    %p70 = scmp.ne.s32.totalorder %s59, %s60
    %p71 = scmp.eq.s32.totalorder %s25, 0
    %p72 = por %p70, %p71
    %p73 = scmp.ne.s32.totalorder %s59, %s60
    %p74 = scmp.eq.s32.totalorder %s26, 1
    %p75 = por %p73, %p74
    %p77 = scmp.ne.s32.totalorder %s60, %s76
    %p78 = scmp.eq.s32.totalorder %s26, 0
    %p79 = por %p77, %p78
    %s80 = ssub.s32 %s20, %s27
    %p81 = scmp.eq.s32.totalorder %s80, 0
    %s83 = sadd.s32 %s82, 1
    %s84 = scalar_select %p81, %s82, %s83
    %p87 = pneg %p81
    %p88 = scmp.eq.s32.totalorder %s20, 1
    %p89 = por %p87, %p88
    %p90 = scmp.ne.s32.totalorder %s82, %s85
    %p91 = scmp.eq.s32.totalorder %s20, 0
    %p92 = por %p90, %p91
    %p93 = scmp.ne.s32.totalorder %s82, %s85
    %p94 = scmp.eq.s32.totalorder %s25, 1
    %p95 = por %p93, %p94
    %p96 = scmp.ne.s32.totalorder %s85, %s86
    %p97 = scmp.eq.s32.totalorder %s25, 0
    %p98 = por %p96, %p97
    %p99 = scmp.ne.s32.totalorder %s85, %s86
    %p100 = scmp.eq.s32.totalorder %s26, 1
    %p101 = por %p99, %p100
    %p103 = scmp.ne.s32.totalorder %s86, %s102
    %p104 = scmp.eq.s32.totalorder %s26, 0
    %p105 = por %p103, %p104
    %s106 = ssub.s32 %s20, %s27
    %p107 = scmp.eq.s32.totalorder %s106, 0
    %s109 = sadd.s32 %s108, 1
    %s110 = scalar_select %p107, %s108, %s109
    %p113 = pneg %p107
    %p114 = scmp.eq.s32.totalorder %s20, 1
    %p115 = por %p113, %p114
    %p116 = scmp.ne.s32.totalorder %s108, %s111
    %p117 = scmp.eq.s32.totalorder %s20, 0
    %p118 = por %p116, %p117
    %p119 = scmp.ne.s32.totalorder %s108, %s111
    %p120 = scmp.eq.s32.totalorder %s25, 1
    %p121 = por %p119, %p120
    %p122 = scmp.ne.s32.totalorder %s111, %s112
    %p123 = scmp.eq.s32.totalorder %s25, 0
    %p124 = por %p122, %p123
    %p125 = scmp.ne.s32.totalorder %s111, %s112
    %p126 = scmp.eq.s32.totalorder %s26, 1
    %p127 = por %p125, %p126
    %p129 = scmp.ne.s32.totalorder %s112, %s128
    %p130 = scmp.eq.s32.totalorder %s26, 0
    %p131 = por %p129, %p130
    %s132 = ssub.s32 %s20, %s27
    %p133 = scmp.eq.s32.totalorder %s132, 0
    %s135 = sadd.s32 %s134, 1
    %s136 = scalar_select %p133, %s134, %s135
    %p139 = pneg %p133
    %p140 = scmp.eq.s32.totalorder %s20, 1
    %p141 = por %p139, %p140
    %p142 = scmp.ne.s32.totalorder %s134, %s137
    %p143 = scmp.eq.s32.totalorder %s20, 0
    %p144 = por %p142, %p143
    %p145 = scmp.ne.s32.totalorder %s134, %s137
    %p146 = scmp.eq.s32.totalorder %s25, 1
    %p147 = por %p145, %p146
    %p148 = scmp.ne.s32.totalorder %s137, %s138
    %p149 = scmp.eq.s32.totalorder %s25, 0
    %p150 = por %p148, %p149
    %p151 = scmp.ne.s32.totalorder %s137, %s138
    %p152 = scmp.eq.s32.totalorder %s26, 1
    %p153 = por %p151, %p152
    %p155 = scmp.ne.s32.totalorder %s138, %s154
    %p156 = scmp.eq.s32.totalorder %s26, 0
    %p157 = por %p155, %p156
    %s159 = sadd.s32 %s158, 1
    %p162 = scmp.eq.s32.totalorder %s20, 1
    %p163 = scmp.ne.s32.totalorder %s158, %s160
    %p164 = scmp.eq.s32.totalorder %s20, 0
    %p165 = por %p163, %p164
    %p166 = scmp.ne.s32.totalorder %s158, %s160
    %p167 = scmp.eq.s32.totalorder %s25, 1
    %p168 = por %p166, %p167
    %p169 = scmp.ne.s32.totalorder %s160, %s161
    %p170 = scmp.eq.s32.totalorder %s25, 0
    %p171 = por %p169, %p170
    %p172 = scmp.ne.s32.totalorder %s160, %s161
    %p173 = scmp.eq.s32.totalorder %s26, 1
    %p174 = por %p172, %p173
    %p176 = scmp.ne.s32.totalorder %s161, %s175
    %p177 = scmp.eq.s32.totalorder %s26, 0
    %p178 = por %p176, %p177
    %s180 = sadd.s32 %s179, 1
    %p183 = scmp.eq.s32.totalorder %s20, 1
    %p184 = scmp.ne.s32.totalorder %s179, %s181
    %p185 = scmp.eq.s32.totalorder %s20, 0
    %p186 = por %p184, %p185
    %p187 = scmp.ne.s32.totalorder %s179, %s181
    %p188 = scmp.eq.s32.totalorder %s25, 1
    %p189 = por %p187, %p188
    %p190 = scmp.ne.s32.totalorder %s181, %s182
    %p191 = scmp.eq.s32.totalorder %s25, 0
    %p192 = por %p190, %p191
    %p193 = scmp.ne.s32.totalorder %s181, %s182
    %p194 = scmp.eq.s32.totalorder %s26, 1
    %p195 = por %p193, %p194
    %p197 = scmp.ne.s32.totalorder %s182, %s196
    %p198 = scmp.eq.s32.totalorder %s26, 0
    %p199 = por %p197, %p198
    %s201 = sadd.s32 %s200, 1
    %p204 = scmp.eq.s32.totalorder %s20, 1
    %p205 = scmp.ne.s32.totalorder %s200, %s202
    %p206 = scmp.eq.s32.totalorder %s20, 0
    %p207 = por %p205, %p206
    %p208 = scmp.ne.s32.totalorder %s200, %s202
    %p209 = scmp.eq.s32.totalorder %s25, 1
    %p210 = por %p208, %p209
    %p211 = scmp.ne.s32.totalorder %s202, %s203
    %p212 = scmp.eq.s32.totalorder %s25, 0
    %p213 = por %p211, %p212
    %p214 = scmp.ne.s32.totalorder %s202, %s203
    %p215 = scmp.eq.s32.totalorder %s26, 1
    %p216 = por %p214, %p215
    %p218 = scmp.ne.s32.totalorder %s203, %s217
    %p219 = scmp.eq.s32.totalorder %s26, 0
    %p220 = por %p218, %p219
    %s221 = ssub.s32 %s20, %s27
    %p222 = scmp.eq.s32.totalorder %s221, 0
    %s224 = sadd.s32 %s223, 1
    %s225 = scalar_select %p222, %s223, %s224
    %p228 = pneg %p222
    %p229 = scmp.eq.s32.totalorder %s20, 1
    %p230 = por %p228, %p229
    %p231 = scmp.ne.s32.totalorder %s223, %s226
    %p232 = scmp.eq.s32.totalorder %s20, 0
    %p233 = por %p231, %p232
    %p234 = scmp.ne.s32.totalorder %s223, %s226
    %p235 = scmp.eq.s32.totalorder %s25, 1
    %p236 = por %p234, %p235
    %p237 = scmp.ne.s32.totalorder %s226, %s227
    %p238 = scmp.eq.s32.totalorder %s25, 0
    %p239 = por %p237, %p238
    %p240 = scmp.ne.s32.totalorder %s226, %s227
    %p241 = scmp.eq.s32.totalorder %s26, 1
    %p242 = por %p240, %p241
    %p244 = scmp.ne.s32.totalorder %s227, %s243
    %p245 = scmp.eq.s32.totalorder %s26, 0
    %p246 = por %p244, %p245
    %s248 = sadd.s32 %s247, 1
    %p251 = scmp.eq.s32.totalorder %s20, 1
    %p252 = scmp.ne.s32.totalorder %s247, %s249
    %p253 = scmp.eq.s32.totalorder %s20, 0
    %p254 = por %p252, %p253
    %p255 = scmp.ne.s32.totalorder %s247, %s249
    %p256 = scmp.eq.s32.totalorder %s25, 1
    %p257 = por %p255, %p256
    %p258 = scmp.ne.s32.totalorder %s249, %s250
    %p259 = scmp.eq.s32.totalorder %s25, 0
    %p260 = por %p258, %p259
    %p261 = scmp.ne.s32.totalorder %s249, %s250
    %p262 = scmp.eq.s32.totalorder %s26, 1
    %p263 = por %p261, %p262
    %p265 = scmp.ne.s32.totalorder %s250, %s264
    %p266 = scmp.eq.s32.totalorder %s26, 0
    %p267 = por %p265, %p266
    %s269 = sadd.s32 %s268, 1
    %p272 = scmp.eq.s32.totalorder %s20, 1
    %p273 = scmp.ne.s32.totalorder %s268, %s270
    %p274 = scmp.eq.s32.totalorder %s20, 0
    %p275 = por %p273, %p274
    %p276 = scmp.ne.s32.totalorder %s268, %s270
    %p277 = scmp.eq.s32.totalorder %s25, 1
    %p278 = por %p276, %p277
    %p279 = scmp.ne.s32.totalorder %s270, %s271
    %p280 = scmp.eq.s32.totalorder %s25, 0
    %p281 = por %p279, %p280
    %p282 = scmp.ne.s32.totalorder %s270, %s271
    %p283 = scmp.eq.s32.totalorder %s26, 1
    %p284 = por %p282, %p283
    %p286 = scmp.ne.s32.totalorder %s271, %s285
    %p287 = scmp.eq.s32.totalorder %s26, 0
    %p288 = por %p286, %p287
    %s289 = ssub.s32 %s20, %s27
    %p290 = scmp.eq.s32.totalorder %s289, 0
    %s292 = sadd.s32 %s291, 1
    %s293 = scalar_select %p290, %s291, %s292
    %p296 = pneg %p290
    %p297 = scmp.eq.s32.totalorder %s20, 1
    %p298 = por %p296, %p297
    %p299 = scmp.ne.s32.totalorder %s291, %s294
    %p300 = scmp.eq.s32.totalorder %s20, 0
    %p301 = por %p299, %p300
    %p302 = scmp.ne.s32.totalorder %s291, %s294
    %p303 = scmp.eq.s32.totalorder %s25, 1
    %p304 = por %p302, %p303
    %p305 = scmp.ne.s32.totalorder %s294, %s295
    %p306 = scmp.eq.s32.totalorder %s25, 0
    %p307 = por %p305, %p306
    %p308 = scmp.ne.s32.totalorder %s294, %s295
    %p309 = scmp.eq.s32.totalorder %s26, 1
    %p310 = por %p308, %p309
    %p312 = scmp.ne.s32.totalorder %s295, %s311
    %p313 = scmp.eq.s32.totalorder %s26, 0
    %p314 = por %p312, %p313
    %s315 = ssub.s32 %s20, %s27
    %p316 = scmp.eq.s32.totalorder %s315, 0
    %s318 = sadd.s32 %s317, 1
    %s319 = scalar_select %p316, %s317, %s318
    %p322 = pneg %p316
    %p323 = scmp.eq.s32.totalorder %s20, 1
    %p324 = por %p322, %p323
    %p325 = scmp.ne.s32.totalorder %s317, %s320
    %p326 = scmp.eq.s32.totalorder %s20, 0
    %p327 = por %p325, %p326
    %p328 = scmp.ne.s32.totalorder %s317, %s320
    %p329 = scmp.eq.s32.totalorder %s25, 1
    %p330 = por %p328, %p329
    %p331 = scmp.ne.s32.totalorder %s320, %s321
    %p332 = scmp.eq.s32.totalorder %s25, 0
    %p333 = por %p331, %p332
    %p334 = scmp.ne.s32.totalorder %s320, %s321
    %p335 = scmp.eq.s32.totalorder %s26, 1
    %p336 = por %p334, %p335
    %p338 = scmp.ne.s32.totalorder %s321, %s337
    %p339 = scmp.eq.s32.totalorder %s26, 0
    %p340 = por %p338, %p339
    %s341 = ssub.s32 %s20, %s27
    %p342 = scmp.eq.s32.totalorder %s341, 0
    %s344 = sadd.s32 %s343, 1
    %s345 = scalar_select %p342, %s343, %s344
    %p348 = pneg %p342
    %p349 = scmp.eq.s32.totalorder %s20, 1
    %p350 = por %p348, %p349
    %p351 = scmp.ne.s32.totalorder %s343, %s346
    %p352 = scmp.eq.s32.totalorder %s20, 0
    %p353 = por %p351, %p352
    %p354 = scmp.ne.s32.totalorder %s343, %s346
    %p355 = scmp.eq.s32.totalorder %s25, 1
    %p356 = por %p354, %p355
    %p357 = scmp.ne.s32.totalorder %s346, %s347
    %p358 = scmp.eq.s32.totalorder %s25, 0
    %p359 = por %p357, %p358
    %p360 = scmp.ne.s32.totalorder %s346, %s347
    %p361 = scmp.eq.s32.totalorder %s26, 1
    %p362 = por %p360, %p361
    %p364 = scmp.ne.s32.totalorder %s347, %s363
    %p365 = scmp.eq.s32.totalorder %s26, 0
    %p366 = por %p364, %p365
    %p367 = scmp.le.s32.totalorder 1, %s20
    %p368 = scmp.lt.s32.totalorder %s20, 3
    %p369 = pnand %p367, %p368
    %p370 = pneg %p369
    // Predicated region
    $region9: #{lkd_blocks_pallas.30} parent=5 // pred_check
      _
    $region10: #{lkd_blocks_pallas.30} parent=5 // pred_check_branch
      %372 = sbr.rel (%p369) target = $region12
    $region11: #{lkd_blocks_pallas.30} parent=5 // pred_region
      %s373 = ssub.s32 %s20, 1
      // Predicated region
      $region13: #{lkd_blocks_pallas.30} parent=11 // pred_check
        %p374 = pneg %p171
      $region14: #{lkd_blocks_pallas.30} parent=11 // pred_check_branch
        %376 = sbr.rel (%p374) target = $region16
      $region15: #{lkd_blocks_pallas.30} parent=11 // pred_region
        _
      $region16: #{lkd_blocks_pallas.30} parent=11 // pred_fallthru
        _
      // Predicated region
      $region17: #{lkd_blocks_pallas.30} parent=11 // pred_check
        %p377 = pneg %p192
      $region18: #{lkd_blocks_pallas.30} parent=11 // pred_check_branch
        %379 = sbr.rel (%p377) target = $region20
      $region19: #{lkd_blocks_pallas.30} parent=11 // pred_region
        _
      $region20: #{lkd_blocks_pallas.30} parent=11 // pred_fallthru
        _
      // Predicated region
      $region21: #{lkd_blocks_pallas.30} parent=11 // pred_check
        %p380 = pneg %p213
      $region22: #{lkd_blocks_pallas.30} parent=11 // pred_check_branch
        %382 = sbr.rel (%p380) target = $region24
      $region23: #{lkd_blocks_pallas.30} parent=11 // pred_region
        _
      $region24: #{lkd_blocks_pallas.30} parent=11 // pred_fallthru
        _
      // Predicated region
      $region25: #{lkd_blocks_pallas.30} parent=11 // pred_check
        %p383 = pneg %p260
      $region26: #{lkd_blocks_pallas.30} parent=11 // pred_check_branch
        %385 = sbr.rel (%p383) target = $region28
      $region27: #{lkd_blocks_pallas.30} parent=11 // pred_region
        _
      $region28: #{lkd_blocks_pallas.30} parent=11 // pred_fallthru
        _
      // Predicated region
      $region29: #{lkd_blocks_pallas.30} parent=11 // pred_check
        %p386 = pneg %p281
      $region30: #{lkd_blocks_pallas.30} parent=11 // pred_check_branch
        %388 = sbr.rel (%p386) target = $region32
      $region31: #{lkd_blocks_pallas.30} parent=11 // pred_region
        _
      $region32: #{lkd_blocks_pallas.30} parent=11 // pred_fallthru
        _
    $region12: #{lkd_blocks_pallas.30} parent=5 // pred_fallthru
      _
    %p389 = scmp.lt.s32.totalorder %s20, 2
    // Predicated region
    $region33: #{lkd_blocks_pallas.30} parent=5 // pred_check
      %p390 = pneg %p389
    $region34: #{lkd_blocks_pallas.30} parent=5 // pred_check_branch
      %392 = sbr.rel (%p390) target = $region36
    $region35: #{lkd_blocks_pallas.30} parent=5 // pred_region
      // Predicated region
      $region37: #{lkd_blocks_pallas.30} parent=35 // pred_check
        %p393 = pneg %p40
      $region38: #{lkd_blocks_pallas.30} parent=35 // pred_check_branch
        %395 = sbr.rel (%p393) target = $region40
      $region39: #{lkd_blocks_pallas.30} parent=35 // pred_region
        %p396 = scmp.lt.s32.totalorder %s20, 1
        %s397 = scalar_select %p396, %s20, 1
        %s398 = smul.addr %s397, 2
        %s399 = smul.addr %s398, 8
        %s400 = scalar_lea.vmem %s0, %s399
      $region40: #{lkd_blocks_pallas.30} parent=35 // pred_fallthru
        _
      // Predicated region
      $region41: #{lkd_blocks_pallas.30} parent=35 // pred_check
        %p401 = pneg %p66
      $region42: #{lkd_blocks_pallas.30} parent=35 // pred_check_branch
        %403 = sbr.rel (%p401) target = $region44
      $region43: #{lkd_blocks_pallas.30} parent=35 // pred_region
        %p404 = scmp.lt.s32.totalorder %s20, 1
        %s405 = scalar_select %p404, %s20, 1
        %s406 = smul.addr %s405, 2
        %s407 = smul.addr %s406, 8
        %s408 = scalar_lea.vmem %s1, %s407
      $region44: #{lkd_blocks_pallas.30} parent=35 // pred_fallthru
        _
      // Predicated region
      $region45: #{lkd_blocks_pallas.30} parent=35 // pred_check
        %p409 = pneg %p92
      $region46: #{lkd_blocks_pallas.30} parent=35 // pred_check_branch
        %411 = sbr.rel (%p409) target = $region48
      $region47: #{lkd_blocks_pallas.30} parent=35 // pred_region
        %p412 = scmp.lt.s32.totalorder %s20, 1
        %s413 = scalar_select %p412, %s20, 1
        %s414 = smul.addr %s413, 2
        %s415 = smul.addr %s414, 8
        %s416 = scalar_lea.vmem %s2, %s415
      $region48: #{lkd_blocks_pallas.30} parent=35 // pred_fallthru
        _
      // Predicated region
      $region49: #{lkd_blocks_pallas.30} parent=35 // pred_check
        %p417 = pneg %p118
      $region50: #{lkd_blocks_pallas.30} parent=35 // pred_check_branch
        %419 = sbr.rel (%p417) target = $region52
      $region51: #{lkd_blocks_pallas.30} parent=35 // pred_region
        %p420 = scmp.lt.s32.totalorder %s20, 1
        %s421 = scalar_select %p420, %s20, 1
        %s422 = smul.addr %s421, 2
        %s423 = smul.addr %s422, 8
        %s424 = scalar_lea.vmem %s3, %s423
      $region52: #{lkd_blocks_pallas.30} parent=35 // pred_fallthru
        _
      // Predicated region
      $region53: #{lkd_blocks_pallas.30} parent=35 // pred_check
        %p425 = pneg %p144
      $region54: #{lkd_blocks_pallas.30} parent=35 // pred_check_branch
        %427 = sbr.rel (%p425) target = $region56
      $region55: #{lkd_blocks_pallas.30} parent=35 // pred_region
        %p428 = scmp.lt.s32.totalorder %s20, 1
        %s429 = scalar_select %p428, %s20, 1
        %s430 = smul.addr %s429, 4
        %s431 = smul.addr %s430, 8
        %s432 = scalar_lea.vmem %s4, %s431
      $region56: #{lkd_blocks_pallas.30} parent=35 // pred_fallthru
        _
      // Predicated region
      $region57: #{lkd_blocks_pallas.30} parent=35 // pred_check
        %p433 = pneg %p233
      $region58: #{lkd_blocks_pallas.30} parent=35 // pred_check_branch
        %435 = sbr.rel (%p433) target = $region60
      $region59: #{lkd_blocks_pallas.30} parent=35 // pred_region
        %p436 = scmp.lt.s32.totalorder %s20, 1
        %s437 = scalar_select %p436, %s20, 1
        %s438 = smul.addr %s437, 2
        %s439 = smul.addr %s438, 8
        %s440 = scalar_lea.vmem %s8, %s439
      $region60: #{lkd_blocks_pallas.30} parent=35 // pred_fallthru
        _
    $region36: #{lkd_blocks_pallas.30} parent=5 // pred_fallthru
      _
    %p441 = scmp.le.s32.totalorder 1, %s20
    %p442 = scmp.lt.s32.totalorder %s20, 3
    %p443 = pnand %p441, %p442
    %p444 = pneg %p443
    // Predicated region
    $region61: #{lkd_blocks_pallas.30} parent=5 // pred_check
      _
    $region62: #{lkd_blocks_pallas.30} parent=5 // pred_check_branch
      %446 = sbr.rel (%p443) target = $region64
    $region63: #{lkd_blocks_pallas.30} parent=5 // pred_region
      %s447 = ssub.s32 %s20, 1
      %p448 = scmp.lt.s32.totalorder %s25, 1
      %s449 = scalar_select %p448, %s25, 1
      %s450 = smul.addr %s449, 2
      %s451 = smul.addr %s450, 8
      %s452 = scalar_lea.vmem %s0, %s451
      %p453 = pneg %p46
      %p454 = pneg %p43
      %p455 = scmp.lt.s32.totalorder %s25, 1
      %s456 = scalar_select %p455, %s25, 1
      %s457 = smul.addr %s456, 2
      %s458 = smul.addr %s457, 8
      %s459 = scalar_lea.vmem %s1, %s458
      %p460 = pneg %p72
      %p461 = pneg %p69
      %p462 = scmp.lt.s32.totalorder %s25, 1
      %s463 = scalar_select %p462, %s25, 1
      %s464 = smul.addr %s463, 2
      %s465 = smul.addr %s464, 8
      %s466 = scalar_lea.vmem %s2, %s465
      %p467 = pneg %p98
      %p468 = pneg %p95
      %p469 = scmp.lt.s32.totalorder %s25, 1
      %s470 = scalar_select %p469, %s25, 1
      %s471 = smul.addr %s470, 2
      %s472 = smul.addr %s471, 8
      %s473 = scalar_lea.vmem %s3, %s472
      %p474 = pneg %p124
      %p475 = pneg %p121
      %p476 = scmp.lt.s32.totalorder %s25, 1
      %s477 = scalar_select %p476, %s25, 1
      %s478 = smul.addr %s477, 4
      %s479 = smul.addr %s478, 8
      %s480 = scalar_lea.vmem %s4, %s479
      %p481 = pneg %p150
      %p482 = pneg %p147
      %p483 = pneg %p171
      %p484 = pneg %p168
      %p485 = pneg %p192
      %p486 = pneg %p189
      %p487 = pneg %p213
      %p488 = pneg %p210
      %p489 = scmp.lt.s32.totalorder %s25, 1
      %s490 = scalar_select %p489, %s25, 1
      %s491 = smul.addr %s490, 2
      %s492 = smul.addr %s491, 8
      %s493 = scalar_lea.vmem %s8, %s492
      %p494 = pneg %p239
      %p495 = pneg %p236
      %p496 = pneg %p260
      %p497 = pneg %p257
      %p498 = pneg %p281
      %p499 = pneg %p278
      %p500 = pneg %p307
      %p501 = pneg %p304
      %p502 = scmp.lt.s32.totalorder %s25, 1
      %s503 = scalar_select %p502, %s25, 1
      %s504 = smul.addr %s503, 2
      %s505 = smul.addr %s504, 8
      %s506 = scalar_lea.vmem %s11, %s505
      %p507 = pneg %p333
      %p508 = pneg %p330
      %p509 = scmp.lt.s32.totalorder %s25, 1
      %s510 = scalar_select %p509, %s25, 1
      %s511 = smul.addr %s510, 8
      %s512 = scalar_lea.vmem %s12, %s511
      %p513 = pneg %p359
      %p514 = pneg %p356
      %p515 = scmp.lt.s32.totalorder %s25, 1
      %s516 = scalar_select %p515, %s25, 1
      %s517 = smul.addr %s516, 8
      %s518 = smul.addr %s517, 8
      %s519 = scalar_lea.vmem %s13, %s518
      %p520 = scmp.lt.s32.totalorder %s25, 1
      %s521 = scalar_select %p520, %s25, 1
      %s522 = smul.addr %s521, 2
      %s523 = smul.addr %s522, 8
      %s524 = scalar_lea.vmem %s0, %s523
      %p525 = scmp.lt.s32.totalorder %s25, 1
      %s526 = scalar_select %p525, %s25, 1
      %s527 = smul.addr %s526, 2
      %s528 = smul.addr %s527, 8
      %s529 = scalar_lea.vmem %s1, %s528
      %p530 = scmp.lt.s32.totalorder %s25, 1
      %s531 = scalar_select %p530, %s25, 1
      %s532 = smul.addr %s531, 2
      %s533 = smul.addr %s532, 8
      %s534 = scalar_lea.vmem %s2, %s533
      %p535 = scmp.lt.s32.totalorder %s25, 1
      %s536 = scalar_select %p535, %s25, 1
      %s537 = smul.addr %s536, 2
      %s538 = smul.addr %s537, 8
      %s539 = scalar_lea.vmem %s3, %s538
      %p540 = scmp.lt.s32.totalorder %s25, 1
      %s541 = scalar_select %p540, %s25, 1
      %s542 = smul.addr %s541, 4
      %s543 = smul.addr %s542, 8
      %s544 = scalar_lea.vmem %s4, %s543
      %p545 = scmp.lt.s32.totalorder %s25, 1
      %s546 = scalar_select %p545, %s25, 1
      %s547 = smul.addr %s546, 2
      %s548 = smul.addr %s547, 8
      %s549 = scalar_lea.vmem %s8, %s548
      %p550 = scmp.lt.s32.totalorder %s25, 1
      %s551 = scalar_select %p550, %s25, 1
      %s552 = smul.addr %s551, 2
      %s553 = smul.addr %s552, 8
      %s554 = scalar_lea.vmem %s11, %s553
      %p555 = scmp.lt.s32.totalorder %s25, 1
      %s556 = scalar_select %p555, %s25, 1
      %s557 = smul.addr %s556, 8
      %s558 = scalar_lea.vmem %s12, %s557
      %p559 = scmp.lt.s32.totalorder %s25, 1
      %s560 = scalar_select %p559, %s25, 1
      %s561 = smul.addr %s560, 8
      %s562 = smul.addr %s561, 8
      %s563 = scalar_lea.vmem %s13, %s562
      %v564 = vld [vmem:[%s524] sm:$0xff]
      %v565 = vld [vmem:[%s524 + $0x8] sm:$0xff]
      %v566 = vld [vmem:[%s544] sm:$0xff]
      %568 = vset.pattern.permute.xlu0 0
      %569 = vperm.xlu0 %568, %v566
      %v570 = vpop.permute.xlu0 %569
      %v572 = vmul.f32 %v564, %v570
      %v573 = vmul.f32 %v565, %v570
      %v574 = vld [vmem:[%s529] sm:$0xff]
      %v575 = vld [vmem:[%s529 + $0x8] sm:$0xff]
      %s576 = scalar_lea.vmem %s544, 8
      %v577 = vld [vmem:[%s576] sm:$0xff]
      %579 = vset.pattern.permute.xlu0 0
      %580 = vperm.xlu0 %579, %v577
      %v581 = vpop.permute.xlu0 %580
      %v583 = vmul.f32 %v574, %v581
      %v584 = vmul.f32 %v575, %v581
      %v585 = vadd.f32 %v572, %v583
      %v586 = vadd.f32 %v573, %v584
      %v587 = vld [vmem:[%s534] sm:$0xff]
      %v588 = vld [vmem:[%s534 + $0x8] sm:$0xff]
      %s589 = scalar_lea.vmem %s544, 16
      %v590 = vld [vmem:[%s589] sm:$0xff]
      %592 = vset.pattern.permute.xlu0 0
      %593 = vperm.xlu0 %592, %v590
      %v594 = vpop.permute.xlu0 %593
      %v596 = vmul.f32 %v587, %v594
      %v597 = vmul.f32 %v588, %v594
      %v598 = vadd.f32 %v585, %v596
      %v599 = vadd.f32 %v586, %v597
      %v600 = vld [vmem:[%s539] sm:$0xff]
      %v601 = vld [vmem:[%s539 + $0x8] sm:$0xff]
      %s602 = scalar_lea.vmem %s544, 24
      %v603 = vld [vmem:[%s602] sm:$0xff]
      %605 = vset.pattern.permute.xlu0 0
      %606 = vperm.xlu0 %605, %v603
      %v607 = vpop.permute.xlu0 %606
      %v609 = vmul.f32 %v600, %v607
      %v610 = vmul.f32 %v601, %v607
      %v611 = vadd.f32 %v598, %v609
      %v612 = vadd.f32 %v599, %v610
      %v613 = vld [vmem:[%s5] sm:$0xff]
      %v614 = vld [vmem:[%s6] sm:$0xff]
      %616 = vset.pattern.permute.xlu0 0
      %617 = vperm.xlu0 %616, %v614
      %v618 = vpop.permute.xlu0 %617
      %vm620 = vcmask 64512
      %v622 = vsel %vm620, %v613, 0
      %624 = vmatprep.subr.mxu0 0.0
      %625 = vmatpush1.msra.mxu0 0.0
      %626 = vmatprep.subr.mxu0 0.0
      %627 = vmatpush1.msra.mxu0 0.0
      %628 = vmatprep.subr.mxu0 0.0
      %629 = vmatpush1.msra.mxu0 0.0
      %630 = vmatprep.subr.mxu0 0.0
      %631 = vmatpush1.msra.mxu0 0.0
      %632 = vmatprep.subr.mxu0 0.0
      %633 = vmatpush1.msra.mxu0 0.0
      %634 = vmatprep.subr.mxu0 0.0
      %635 = vmatpush1.msra.mxu0 0.0
      %636 = vmatprep.subr.mxu0 0.0
      %637 = vmatpush1.msra.mxu0 0.0
      %638 = vmatprep.subr.mxu0 0.0
      %639 = vmatpush1.msra.mxu0 0.0
      %640 = vmatprep.subr.mxu0 0.0
      %641 = vmatpush1.msra.mxu0 0.0
      %642 = vmatprep.subr.mxu0 0.0
      %643 = vmatpush1.msra.mxu0 0.0
      %644 = vmatprep.subr.mxu0 0.0
      %645 = vmatpush1.msra.mxu0 0.0
      %646 = vmatprep.subr.mxu0 0.0
      %647 = vmatpush1.msra.mxu0 0.0
      %648 = vmatprep.subr.mxu0 0.0
      %649 = vmatpush1.msra.mxu0 0.0
      %650 = vmatprep.subr.mxu0 0.0
      %651 = vmatpush1.msra.mxu0 0.0
      %652 = vmatprep.subr.mxu0 0.0
      %653 = vmatpush1.msra.mxu0 0.0
      %654 = vmatprep.subr.mxu0 %v612
      %655 = vmatpush1.msra.mxu0 %v611
      %656 = vmatprep.subr.mxu0 0.0
      %657 = vmatpush2.msra.mxu0 0.0
      %658 = vmatprep.subr.mxu0 0.0
      %659 = vmatpush2.msra.mxu0 0.0
      %660 = vmatprep.subr.mxu0 0.0
      %661 = vmatpush2.msra.mxu0 0.0
      %662 = vmatprep.subr.mxu0 0.0
      %663 = vmatpush2.msra.mxu0 0.0
      %664 = vmatprep.subr.mxu0 0.0
      %665 = vmatpush2.msra.mxu0 0.0
      %666 = vmatprep.subr.mxu0 0.0
      %667 = vmatpush2.msra.mxu0 0.0
      %668 = vmatprep.subr.mxu0 0.0
      %669 = vmatpush2.msra.mxu0 0.0
      %670 = vmatprep.subr.mxu0 0.0
      %671 = vmatpush2.msra.mxu0 0.0
      %672 = vmatprep.subr.mxu0 0.0
      %673 = vmatpush2.msra.mxu0 0.0
      %674 = vmatprep.subr.mxu0 0.0
      %675 = vmatpush2.msra.mxu0 0.0
      %676 = vmatprep.subr.mxu0 0.0
      %677 = vmatpush2.msra.mxu0 0.0
      %678 = vmatprep.subr.mxu0 0.0
      %679 = vmatpush2.msra.mxu0 0.0
      %680 = vmatprep.subr.mxu0 0.0
      %681 = vmatpush2.msra.mxu0 0.0
      %682 = vmatprep.subr.mxu0 0.0
      %683 = vmatpush2.msra.mxu0 0.0
      %684 = vmatprep.subr.mxu0 0.0
      %685 = vmatpush2.msra.mxu0 0.0
      %686 = vmatprep.subr.mxu0 0.0
      %687 = vmatpush2.msra.mxu0 0.0
      %688 = vmatprep.mubr.f32.mxu0 0.0
      %689 = vmatmul.mubr.f32.gmra.mxu0 %v622
      %v690 = vpop.f32.mrf.mxu0
      %v691 = vadd.f32 %v618, %v690
      %v692 = vpop.f32.mrf.mxu0
      %v693 = vadd.f32 %v618, %v692
      %694 = vdwg.mxu0
      %v695 = vld [vmem:[%s7] sm:$0xff]
      %697 = vset.pattern.permute.xlu0 0
      %698 = vperm.xlu0 %697, %v695
      %v699 = vpop.permute.xlu0 %698
      %v701 = vmul.f32 %v691, %v699
      %v702 = vmul.f32 %v693, %v699
      %v703 = vld [vmem:[%s549] sm:$0xff]
      %v704 = vld [vmem:[%s549 + $0x8] sm:$0xff]
      %v705 = vadd.f32 %v701, %v703
      %v706 = vadd.f32 %v702, %v704
      %707 = vst [vmem:[%s554] sm:$0xff] %v705
      %708 = vst [vmem:[%s554 + $0x8] sm:$0xff] %v706
      %v709 = vadd.f32 %v705, %v706
      %710 = vadd.xlane.f32.xlu0 %v709
      %v711 = vpop.xlane.xlu0 %710
      %v712 = vmul.f32 %v711, 0.00390625
      %vm713 = vcmask 7168
      %714 = vst.msk [vmem:[%s558] sm:$0xff] %vm713, %v712
      %v715 = vld [vmem:[%s9] sm:$0xff]
      %v716 = vld [vmem:[%s9 + $0x8] sm:$0xff]
      %v717 = vld [vmem:[%s9 + $0x10] sm:$0xff]
      %v718 = vld [vmem:[%s9 + $0x18] sm:$0xff]
      %v719 = vld [vmem:[%s10] sm:$0xff]
      %v720 = vld [vmem:[%s10 + $0x8] sm:$0xff]
      %v721 = vld [vmem:[%s10 + $0x10] sm:$0xff]
      %v722 = vld [vmem:[%s10 + $0x18] sm:$0xff]
      %724 = vset.pattern.permute.xlu0 0
      %725 = vperm.xlu0 %724, %v719
      %v726 = vpop.permute.xlu0 %725
      %729 = vset.pattern.permute.xlu0 0
      %730 = vperm.xlu0 %729, %v720
      %v731 = vpop.permute.xlu0 %730
      %734 = vset.pattern.permute.xlu0 0
      %735 = vperm.xlu0 %734, %v721
      %v736 = vpop.permute.xlu0 %735
      %739 = vset.pattern.permute.xlu0 0
      %740 = vperm.xlu0 %739, %v722
      %v741 = vpop.permute.xlu0 %740
      %v744 = vsel %vm620, %v715, 0
      %v747 = vsel %vm620, %v716, 0
      %v750 = vsel %vm620, %v717, 0
      %v753 = vsel %vm620, %v718, 0
      %755 = vmatprep.subr.mxu0 0.0
      %756 = vmatpush1.msra.mxu0 0.0
      %757 = vmatprep.subr.mxu0 0.0
      %758 = vmatpush1.msra.mxu0 0.0
      %759 = vmatprep.subr.mxu0 0.0
      %760 = vmatpush1.msra.mxu0 0.0
      %761 = vmatprep.subr.mxu0 0.0
      %762 = vmatpush1.msra.mxu0 0.0
      %763 = vmatprep.subr.mxu0 0.0
      %764 = vmatpush1.msra.mxu0 0.0
      %765 = vmatprep.subr.mxu0 0.0
      %766 = vmatpush1.msra.mxu0 0.0
      %767 = vmatprep.subr.mxu0 0.0
      %768 = vmatpush1.msra.mxu0 0.0
      %769 = vmatprep.subr.mxu0 0.0
      %770 = vmatpush1.msra.mxu0 0.0
      %771 = vmatprep.subr.mxu0 0.0
      %772 = vmatpush1.msra.mxu0 0.0
      %773 = vmatprep.subr.mxu0 0.0
      %774 = vmatpush1.msra.mxu0 0.0
      %775 = vmatprep.subr.mxu0 0.0
      %776 = vmatpush1.msra.mxu0 0.0
      %777 = vmatprep.subr.mxu0 0.0
      %778 = vmatpush1.msra.mxu0 0.0
      %779 = vmatprep.subr.mxu0 0.0
      %780 = vmatpush1.msra.mxu0 0.0
      %781 = vmatprep.subr.mxu0 0.0
      %782 = vmatpush1.msra.mxu0 0.0
      %783 = vmatprep.subr.mxu0 0.0
      %784 = vmatpush1.msra.mxu0 0.0
      %785 = vmatprep.subr.mxu0 %v706
      %786 = vmatpush1.msra.mxu0 %v705
      %787 = vmatprep.subr.mxu0 0.0
      %788 = vmatpush2.msra.mxu0 0.0
      %789 = vmatprep.subr.mxu0 0.0
      %790 = vmatpush2.msra.mxu0 0.0
      %791 = vmatprep.subr.mxu0 0.0
      %792 = vmatpush2.msra.mxu0 0.0
      %793 = vmatprep.subr.mxu0 0.0
      %794 = vmatpush2.msra.mxu0 0.0
      %795 = vmatprep.subr.mxu0 0.0
      %796 = vmatpush2.msra.mxu0 0.0
      %797 = vmatprep.subr.mxu0 0.0
      %798 = vmatpush2.msra.mxu0 0.0
      %799 = vmatprep.subr.mxu0 0.0
      %800 = vmatpush2.msra.mxu0 0.0
      %801 = vmatprep.subr.mxu0 0.0
      %802 = vmatpush2.msra.mxu0 0.0
      %803 = vmatprep.subr.mxu0 0.0
      %804 = vmatpush2.msra.mxu0 0.0
      %805 = vmatprep.subr.mxu0 0.0
      %806 = vmatpush2.msra.mxu0 0.0
      %807 = vmatprep.subr.mxu0 0.0
      %808 = vmatpush2.msra.mxu0 0.0
      %809 = vmatprep.subr.mxu0 0.0
      %810 = vmatpush2.msra.mxu0 0.0
      %811 = vmatprep.subr.mxu0 0.0
      %812 = vmatpush2.msra.mxu0 0.0
      %813 = vmatprep.subr.mxu0 0.0
      %814 = vmatpush2.msra.mxu0 0.0
      %815 = vmatprep.subr.mxu0 0.0
      %816 = vmatpush2.msra.mxu0 0.0
      %817 = vmatprep.subr.mxu0 0.0
      %818 = vmatpush2.msra.mxu0 0.0
      %819 = vmatprep.mubr.f32.mxu0 0.0
      %820 = vmatmul.mubr.f32.gmra.mxu0 %v744
      %v821 = vpop.f32.mrf.mxu0
      %v822 = vadd.f32 %v726, %v821
      %v823 = vpop.f32.mrf.mxu0
      %v824 = vadd.f32 %v726, %v823
      %825 = vmatprep.mubr.f32.mxu0 0.0
      %826 = vmatmul.mubr.f32.gmra.mxu0 %v747
      %v827 = vpop.f32.mrf.mxu0
      %v828 = vadd.f32 %v731, %v827
      %v829 = vpop.f32.mrf.mxu0
      %v830 = vadd.f32 %v731, %v829
      %831 = vmatprep.mubr.f32.mxu0 0.0
      %832 = vmatmul.mubr.f32.gmra.mxu0 %v750
      %v833 = vpop.f32.mrf.mxu0
      %v834 = vadd.f32 %v736, %v833
      %v835 = vpop.f32.mrf.mxu0
      %v836 = vadd.f32 %v736, %v835
      %837 = vmatprep.mubr.f32.mxu0 0.0
      %838 = vmatmul.mubr.f32.gmra.mxu0 %v753
      %v839 = vpop.f32.mrf.mxu0
      %v840 = vadd.f32 %v741, %v839
      %v841 = vpop.f32.mrf.mxu0
      %v842 = vadd.f32 %v741, %v841
      %843 = vdwg.mxu0
      %844 = vst [vmem:[%s563] sm:$0xff] %v822
      %845 = vst [vmem:[%s563 + $0x8] sm:$0xff] %v824
      %846 = vst [vmem:[%s563 + $0x10] sm:$0xff] %v828
      %847 = vst [vmem:[%s563 + $0x18] sm:$0xff] %v830
      %848 = vst [vmem:[%s563 + $0x20] sm:$0xff] %v834
      %849 = vst [vmem:[%s563 + $0x28] sm:$0xff] %v836
      %850 = vst [vmem:[%s563 + $0x30] sm:$0xff] %v840
      %851 = vst [vmem:[%s563 + $0x38] sm:$0xff] %v842
      %p852 = scmp.lt.s32.totalorder %s25, 1
      %s853 = scalar_select %p852, %s25, 1
      %s854 = smul.addr %s853, 2
      %s855 = smul.addr %s854, 8
      %s856 = scalar_lea.vmem %s11, %s855
      %p857 = scmp.lt.s32.totalorder %s25, 1
      %s858 = scalar_select %p857, %s25, 1
      %s859 = smul.addr %s858, 8
      %s860 = scalar_lea.vmem %s12, %s859
      %p861 = scmp.lt.s32.totalorder %s25, 1
      %s862 = scalar_select %p861, %s25, 1
      %s863 = smul.addr %s862, 8
      %s864 = smul.addr %s863, 8
      %s865 = scalar_lea.vmem %s13, %s864
      // Predicated region
      $region65: #{lkd_blocks_pallas.30} parent=63 // pred_check
        %p866 = pneg %p304
      $region66: #{lkd_blocks_pallas.30} parent=63 // pred_check_branch
        %868 = sbr.rel (%p866) target = $region68
      $region67: #{lkd_blocks_pallas.30} parent=63 // pred_region
        _
      $region68: #{lkd_blocks_pallas.30} parent=63 // pred_fallthru
        _
      // Predicated region
      $region69: #{lkd_blocks_pallas.30} parent=63 // pred_check
        %p869 = pneg %p330
      $region70: #{lkd_blocks_pallas.30} parent=63 // pred_check_branch
        %871 = sbr.rel (%p869) target = $region72
      $region71: #{lkd_blocks_pallas.30} parent=63 // pred_region
        _
      $region72: #{lkd_blocks_pallas.30} parent=63 // pred_fallthru
        _
      // Predicated region
      $region73: #{lkd_blocks_pallas.30} parent=63 // pred_check
        %p872 = pneg %p356
      $region74: #{lkd_blocks_pallas.30} parent=63 // pred_check_branch
        %874 = sbr.rel (%p872) target = $region76
      $region75: #{lkd_blocks_pallas.30} parent=63 // pred_region
        _
      $region76: #{lkd_blocks_pallas.30} parent=63 // pred_fallthru
        _
    $region64: #{lkd_blocks_pallas.30} parent=5 // pred_fallthru
      _
    %p875 = scmp.le.s32.totalorder 2, %s20
    // Predicated region
    $region77: #{lkd_blocks_pallas.30} parent=5 // pred_check
      %p876 = pneg %p875
    $region78: #{lkd_blocks_pallas.30} parent=5 // pred_check_branch
      %878 = sbr.rel (%p876) target = $region80
    $region79: #{lkd_blocks_pallas.30} parent=5 // pred_region
      %s879 = ssub.s32 %s20, 2
      // Predicated region
      $region81: #{lkd_blocks_pallas.30} parent=79 // pred_check
        %p880 = pneg %p310
      $region82: #{lkd_blocks_pallas.30} parent=79 // pred_check_branch
        %882 = sbr.rel (%p880) target = $region84
      $region83: #{lkd_blocks_pallas.30} parent=79 // pred_region
        %p883 = scmp.lt.s32.totalorder %s26, 1
        %s884 = scalar_select %p883, %s26, 1
        %s885 = smul.addr %s884, 2
        %s886 = smul.addr %s885, 8
        %s887 = scalar_lea.vmem %s11, %s886
      $region84: #{lkd_blocks_pallas.30} parent=79 // pred_fallthru
        _
      // Predicated region
      $region85: #{lkd_blocks_pallas.30} parent=79 // pred_check
        %p888 = pneg %p336
      $region86: #{lkd_blocks_pallas.30} parent=79 // pred_check_branch
        %890 = sbr.rel (%p888) target = $region88
      $region87: #{lkd_blocks_pallas.30} parent=79 // pred_region
        %p891 = scmp.lt.s32.totalorder %s26, 1
        %s892 = scalar_select %p891, %s26, 1
        %s893 = smul.addr %s892, 8
        %s894 = scalar_lea.vmem %s12, %s893
      $region88: #{lkd_blocks_pallas.30} parent=79 // pred_fallthru
        _
      // Predicated region
      $region89: #{lkd_blocks_pallas.30} parent=79 // pred_check
        %p895 = pneg %p362
      $region90: #{lkd_blocks_pallas.30} parent=79 // pred_check_branch
        %897 = sbr.rel (%p895) target = $region92
      $region91: #{lkd_blocks_pallas.30} parent=79 // pred_region
        %p898 = scmp.lt.s32.totalorder %s26, 1
        %s899 = scalar_select %p898, %s26, 1
        %s900 = smul.addr %s899, 8
        %s901 = smul.addr %s900, 8
        %s902 = scalar_lea.vmem %s13, %s901
      $region92: #{lkd_blocks_pallas.30} parent=79 // pred_fallthru
        _
    $region80: #{lkd_blocks_pallas.30} parent=5 // pred_fallthru
      _
  $region6: #{lkd_blocks_pallas.30} parent=0 // loop_footer
    %s24 = sadd.s32 1, %s20
  $region7: #{lkd_blocks_pallas.30} parent=0 // loop_footer_branch
    %19 = sbr.rel target = $region3
  $region8: #{lkd_blocks_pallas.30} parent=0 // loop_exit
    _

// kernel: lkd_blocks_pallas.32
$region0: #{lkd_blocks_pallas.32}
  #allocation0 [shape = 'u32[]', space=smem, size = 0x4, offset = 0x4, fixed_abs, tag = 'smem constant byte address 0x4 - core index']
  #allocation1 [shape = 'u32[144,128]{1,0:T(1,128)}', space=vmem, size = 0x12000, scoped, tag = 'internal scratch']
  %s0 = inlined_call_operand.vmem [shape: f32[2,32,256], index: 0, kind: input, shape index: {}]
  %s1 = inlined_call_operand.vmem [shape: f32[8,32], index: 1, kind: input, shape index: {}]
  %s2 = inlined_call_operand.vmem [shape: f32[8,1], index: 2, kind: input, shape index: {}]
  %s3 = inlined_call_operand.vmem [shape: f32[8,1], index: 3, kind: input, shape index: {}]
  %s4 = inlined_call_operand.vmem [shape: f32[8,1], index: 4, kind: input, shape index: {}]
  %s5 = inlined_call_operand.vmem [shape: f32[2,8,1], index: 5, kind: input, shape index: {}]
  %s6 = inlined_call_operand.vmem [shape: f32[2,8,256], index: 6, kind: input, shape index: {}]
  %s7 = inlined_call_operand.vmem [shape: f32[2,8,256], index: 7, kind: output, shape index: {}]
  %s8 = sld [smem:[#allocation0]]
  $region61: #{lkd_blocks_pallas.32} parent=0
    _
  %s10 = ssub.s32 1, %s8
  %s11 = scalar_select 0, %s10, %s8
  loop: start=0, step=1, limit=4
  $region2: #{lkd_blocks_pallas.32} parent=0 // loop_pre_header
    _
  $region3: #{lkd_blocks_pallas.32} parent=0 // loop_header
    %s13 = sphi 0, %s17
    %p14 = scmp.ge.s32.totalorder %s13, 4
    %s23 = sphi 0, %s25
    %s26 = sphi 0, %s23
    %s27 = sphi 0, %s26
    %s43 = sphi 0, %s27
    %s47 = sphi 0, %s47
    %s49 = sphi 0, %s47
    %s50 = sphi 0, %s49
    %s64 = sphi 0, %s50
    %s68 = sphi 0, %s68
    %s70 = sphi 0, %s68
    %s71 = sphi 0, %s70
    %s85 = sphi 0, %s71
    %s89 = sphi 0, %s89
    %s91 = sphi 0, %s89
    %s92 = sphi 0, %s91
    %s106 = sphi 0, %s92
    %s110 = sphi 0, %s110
    %s112 = sphi 0, %s110
    %s113 = sphi 0, %s112
    %s127 = sphi 0, %s113
    %s133 = sphi 0, %s135
    %s136 = sphi 0, %s133
    %s137 = sphi 0, %s136
    %s153 = sphi 0, %s137
    %s159 = sphi 0, %s161
    %s162 = sphi 0, %s159
    %s163 = sphi 0, %s162
    %s179 = sphi 0, %s163
    %s185 = sphi 0, %s187
    %s188 = sphi 0, %s185
    %s189 = sphi 0, %s188
    %s205 = sphi 0, %s189
  $region4: #{lkd_blocks_pallas.32} parent=0 // loop_header_branch
    %16 = sbr.rel (%p14) target = $region8
  $region5: #{lkd_blocks_pallas.32} parent=0 // loop_body
    %s18 = ssub.s32 %s13, 1
    %s19 = ssub.s32 %s13, 2
    %s20 = sadd.s32 %s13, 1
    %s21 = ssub.s32 %s13, %s20
    %p22 = scmp.eq.s32.totalorder %s21, 0
    %s24 = sadd.s32 %s23, 1
    %s25 = scalar_select %p22, %s23, %s24
    %p28 = pneg %p22
    %p29 = scmp.eq.s32.totalorder %s13, 1
    %p30 = por %p28, %p29
    %p31 = scmp.ne.s32.totalorder %s23, %s26
    %p32 = scmp.eq.s32.totalorder %s13, 0
    %p33 = por %p31, %p32
    %p34 = scmp.ne.s32.totalorder %s23, %s26
    %p35 = scmp.eq.s32.totalorder %s18, 1
    %p36 = por %p34, %p35
    %p37 = scmp.ne.s32.totalorder %s26, %s27
    %p38 = scmp.eq.s32.totalorder %s18, 0
    %p39 = por %p37, %p38
    %p40 = scmp.ne.s32.totalorder %s26, %s27
    %p41 = scmp.eq.s32.totalorder %s19, 1
    %p42 = por %p40, %p41
    %p44 = scmp.ne.s32.totalorder %s27, %s43
    %p45 = scmp.eq.s32.totalorder %s19, 0
    %p46 = por %p44, %p45
    %s48 = sadd.s32 %s47, 1
    %p51 = scmp.eq.s32.totalorder %s13, 1
    %p52 = scmp.ne.s32.totalorder %s47, %s49
    %p53 = scmp.eq.s32.totalorder %s13, 0
    %p54 = por %p52, %p53
    %p55 = scmp.ne.s32.totalorder %s47, %s49
    %p56 = scmp.eq.s32.totalorder %s18, 1
    %p57 = por %p55, %p56
    %p58 = scmp.ne.s32.totalorder %s49, %s50
    %p59 = scmp.eq.s32.totalorder %s18, 0
    %p60 = por %p58, %p59
    %p61 = scmp.ne.s32.totalorder %s49, %s50
    %p62 = scmp.eq.s32.totalorder %s19, 1
    %p63 = por %p61, %p62
    %p65 = scmp.ne.s32.totalorder %s50, %s64
    %p66 = scmp.eq.s32.totalorder %s19, 0
    %p67 = por %p65, %p66
    %s69 = sadd.s32 %s68, 1
    %p72 = scmp.eq.s32.totalorder %s13, 1
    %p73 = scmp.ne.s32.totalorder %s68, %s70
    %p74 = scmp.eq.s32.totalorder %s13, 0
    %p75 = por %p73, %p74
    %p76 = scmp.ne.s32.totalorder %s68, %s70
    %p77 = scmp.eq.s32.totalorder %s18, 1
    %p78 = por %p76, %p77
    %p79 = scmp.ne.s32.totalorder %s70, %s71
    %p80 = scmp.eq.s32.totalorder %s18, 0
    %p81 = por %p79, %p80
    %p82 = scmp.ne.s32.totalorder %s70, %s71
    %p83 = scmp.eq.s32.totalorder %s19, 1
    %p84 = por %p82, %p83
    %p86 = scmp.ne.s32.totalorder %s71, %s85
    %p87 = scmp.eq.s32.totalorder %s19, 0
    %p88 = por %p86, %p87
    %s90 = sadd.s32 %s89, 1
    %p93 = scmp.eq.s32.totalorder %s13, 1
    %p94 = scmp.ne.s32.totalorder %s89, %s91
    %p95 = scmp.eq.s32.totalorder %s13, 0
    %p96 = por %p94, %p95
    %p97 = scmp.ne.s32.totalorder %s89, %s91
    %p98 = scmp.eq.s32.totalorder %s18, 1
    %p99 = por %p97, %p98
    %p100 = scmp.ne.s32.totalorder %s91, %s92
    %p101 = scmp.eq.s32.totalorder %s18, 0
    %p102 = por %p100, %p101
    %p103 = scmp.ne.s32.totalorder %s91, %s92
    %p104 = scmp.eq.s32.totalorder %s19, 1
    %p105 = por %p103, %p104
    %p107 = scmp.ne.s32.totalorder %s92, %s106
    %p108 = scmp.eq.s32.totalorder %s19, 0
    %p109 = por %p107, %p108
    %s111 = sadd.s32 %s110, 1
    %p114 = scmp.eq.s32.totalorder %s13, 1
    %p115 = scmp.ne.s32.totalorder %s110, %s112
    %p116 = scmp.eq.s32.totalorder %s13, 0
    %p117 = por %p115, %p116
    %p118 = scmp.ne.s32.totalorder %s110, %s112
    %p119 = scmp.eq.s32.totalorder %s18, 1
    %p120 = por %p118, %p119
    %p121 = scmp.ne.s32.totalorder %s112, %s113
    %p122 = scmp.eq.s32.totalorder %s18, 0
    %p123 = por %p121, %p122
    %p124 = scmp.ne.s32.totalorder %s112, %s113
    %p125 = scmp.eq.s32.totalorder %s19, 1
    %p126 = por %p124, %p125
    %p128 = scmp.ne.s32.totalorder %s113, %s127
    %p129 = scmp.eq.s32.totalorder %s19, 0
    %p130 = por %p128, %p129
    %s131 = ssub.s32 %s13, %s20
    %p132 = scmp.eq.s32.totalorder %s131, 0
    %s134 = sadd.s32 %s133, 1
    %s135 = scalar_select %p132, %s133, %s134
    %p138 = pneg %p132
    %p139 = scmp.eq.s32.totalorder %s13, 1
    %p140 = por %p138, %p139
    %p141 = scmp.ne.s32.totalorder %s133, %s136
    %p142 = scmp.eq.s32.totalorder %s13, 0
    %p143 = por %p141, %p142
    %p144 = scmp.ne.s32.totalorder %s133, %s136
    %p145 = scmp.eq.s32.totalorder %s18, 1
    %p146 = por %p144, %p145
    %p147 = scmp.ne.s32.totalorder %s136, %s137
    %p148 = scmp.eq.s32.totalorder %s18, 0
    %p149 = por %p147, %p148
    %p150 = scmp.ne.s32.totalorder %s136, %s137
    %p151 = scmp.eq.s32.totalorder %s19, 1
    %p152 = por %p150, %p151
    %p154 = scmp.ne.s32.totalorder %s137, %s153
    %p155 = scmp.eq.s32.totalorder %s19, 0
    %p156 = por %p154, %p155
    %s157 = ssub.s32 %s13, %s20
    %p158 = scmp.eq.s32.totalorder %s157, 0
    %s160 = sadd.s32 %s159, 1
    %s161 = scalar_select %p158, %s159, %s160
    %p164 = pneg %p158
    %p165 = scmp.eq.s32.totalorder %s13, 1
    %p166 = por %p164, %p165
    %p167 = scmp.ne.s32.totalorder %s159, %s162
    %p168 = scmp.eq.s32.totalorder %s13, 0
    %p169 = por %p167, %p168
    %p170 = scmp.ne.s32.totalorder %s159, %s162
    %p171 = scmp.eq.s32.totalorder %s18, 1
    %p172 = por %p170, %p171
    %p173 = scmp.ne.s32.totalorder %s162, %s163
    %p174 = scmp.eq.s32.totalorder %s18, 0
    %p175 = por %p173, %p174
    %p176 = scmp.ne.s32.totalorder %s162, %s163
    %p177 = scmp.eq.s32.totalorder %s19, 1
    %p178 = por %p176, %p177
    %p180 = scmp.ne.s32.totalorder %s163, %s179
    %p181 = scmp.eq.s32.totalorder %s19, 0
    %p182 = por %p180, %p181
    %s183 = ssub.s32 %s13, %s20
    %p184 = scmp.eq.s32.totalorder %s183, 0
    %s186 = sadd.s32 %s185, 1
    %s187 = scalar_select %p184, %s185, %s186
    %p190 = pneg %p184
    %p191 = scmp.eq.s32.totalorder %s13, 1
    %p192 = por %p190, %p191
    %p193 = scmp.ne.s32.totalorder %s185, %s188
    %p194 = scmp.eq.s32.totalorder %s13, 0
    %p195 = por %p193, %p194
    %p196 = scmp.ne.s32.totalorder %s185, %s188
    %p197 = scmp.eq.s32.totalorder %s18, 1
    %p198 = por %p196, %p197
    %p199 = scmp.ne.s32.totalorder %s188, %s189
    %p200 = scmp.eq.s32.totalorder %s18, 0
    %p201 = por %p199, %p200
    %p202 = scmp.ne.s32.totalorder %s188, %s189
    %p203 = scmp.eq.s32.totalorder %s19, 1
    %p204 = por %p202, %p203
    %p206 = scmp.ne.s32.totalorder %s189, %s205
    %p207 = scmp.eq.s32.totalorder %s19, 0
    %p208 = por %p206, %p207
    %p209 = scmp.le.s32.totalorder 1, %s13
    %p210 = scmp.lt.s32.totalorder %s13, 3
    %p211 = pnand %p209, %p210
    %p212 = pneg %p211
    // Predicated region
    $region9: #{lkd_blocks_pallas.32} parent=5 // pred_check
      _
    $region10: #{lkd_blocks_pallas.32} parent=5 // pred_check_branch
      %214 = sbr.rel (%p211) target = $region12
    $region11: #{lkd_blocks_pallas.32} parent=5 // pred_region
      %s215 = ssub.s32 %s13, 1
      // Predicated region
      $region13: #{lkd_blocks_pallas.32} parent=11 // pred_check
        %p216 = pneg %p60
      $region14: #{lkd_blocks_pallas.32} parent=11 // pred_check_branch
        %218 = sbr.rel (%p216) target = $region16
      $region15: #{lkd_blocks_pallas.32} parent=11 // pred_region
        _
      $region16: #{lkd_blocks_pallas.32} parent=11 // pred_fallthru
        _
      // Predicated region
      $region17: #{lkd_blocks_pallas.32} parent=11 // pred_check
        %p219 = pneg %p81
      $region18: #{lkd_blocks_pallas.32} parent=11 // pred_check_branch
        %221 = sbr.rel (%p219) target = $region20
      $region19: #{lkd_blocks_pallas.32} parent=11 // pred_region
        _
      $region20: #{lkd_blocks_pallas.32} parent=11 // pred_fallthru
        _
      // Predicated region
      $region21: #{lkd_blocks_pallas.32} parent=11 // pred_check
        %p222 = pneg %p102
      $region22: #{lkd_blocks_pallas.32} parent=11 // pred_check_branch
        %224 = sbr.rel (%p222) target = $region24
      $region23: #{lkd_blocks_pallas.32} parent=11 // pred_region
        _
      $region24: #{lkd_blocks_pallas.32} parent=11 // pred_fallthru
        _
      // Predicated region
      $region25: #{lkd_blocks_pallas.32} parent=11 // pred_check
        %p225 = pneg %p123
      $region26: #{lkd_blocks_pallas.32} parent=11 // pred_check_branch
        %227 = sbr.rel (%p225) target = $region28
      $region27: #{lkd_blocks_pallas.32} parent=11 // pred_region
        _
      $region28: #{lkd_blocks_pallas.32} parent=11 // pred_fallthru
        _
    $region12: #{lkd_blocks_pallas.32} parent=5 // pred_fallthru
      _
    %p228 = scmp.lt.s32.totalorder %s13, 2
    // Predicated region
    $region29: #{lkd_blocks_pallas.32} parent=5 // pred_check
      %p229 = pneg %p228
    $region30: #{lkd_blocks_pallas.32} parent=5 // pred_check_branch
      %231 = sbr.rel (%p229) target = $region32
    $region31: #{lkd_blocks_pallas.32} parent=5 // pred_region
      // Predicated region
      $region33: #{lkd_blocks_pallas.32} parent=31 // pred_check
        %p232 = pneg %p33
      $region34: #{lkd_blocks_pallas.32} parent=31 // pred_check_branch
        %234 = sbr.rel (%p232) target = $region36
      $region35: #{lkd_blocks_pallas.32} parent=31 // pred_region
        %p235 = scmp.lt.s32.totalorder %s13, 1
        %s236 = scalar_select %p235, %s13, 1
        %s237 = smul.addr %s236, 8
        %s238 = smul.addr %s237, 8
        %s239 = scalar_lea.vmem %s0, %s238
      $region36: #{lkd_blocks_pallas.32} parent=31 // pred_fallthru
        _
      // Predicated region
      $region37: #{lkd_blocks_pallas.32} parent=31 // pred_check
        %p240 = pneg %p143
      $region38: #{lkd_blocks_pallas.32} parent=31 // pred_check_branch
        %242 = sbr.rel (%p240) target = $region40
      $region39: #{lkd_blocks_pallas.32} parent=31 // pred_region
        %p243 = scmp.lt.s32.totalorder %s13, 1
        %s244 = scalar_select %p243, %s13, 1
        %s245 = smul.addr %s244, 8
        %s246 = scalar_lea.vmem %s5, %s245
      $region40: #{lkd_blocks_pallas.32} parent=31 // pred_fallthru
        _
      // Predicated region
      $region41: #{lkd_blocks_pallas.32} parent=31 // pred_check
        %p247 = pneg %p169
      $region42: #{lkd_blocks_pallas.32} parent=31 // pred_check_branch
        %249 = sbr.rel (%p247) target = $region44
      $region43: #{lkd_blocks_pallas.32} parent=31 // pred_region
        %p250 = scmp.lt.s32.totalorder %s13, 1
        %s251 = scalar_select %p250, %s13, 1
        %s252 = smul.addr %s251, 2
        %s253 = smul.addr %s252, 8
        %s254 = scalar_lea.vmem %s6, %s253
      $region44: #{lkd_blocks_pallas.32} parent=31 // pred_fallthru
        _
    $region32: #{lkd_blocks_pallas.32} parent=5 // pred_fallthru
      _
    %p255 = scmp.le.s32.totalorder 1, %s13
    %p256 = scmp.lt.s32.totalorder %s13, 3
    %p257 = pnand %p255, %p256
    %p258 = pneg %p257
    // Predicated region
    $region45: #{lkd_blocks_pallas.32} parent=5 // pred_check
      _
    $region46: #{lkd_blocks_pallas.32} parent=5 // pred_check_branch
      %260 = sbr.rel (%p257) target = $region48
    $region47: #{lkd_blocks_pallas.32} parent=5 // pred_region
      %s261 = ssub.s32 %s13, 1
      %p262 = scmp.lt.s32.totalorder %s18, 1
      %s263 = scalar_select %p262, %s18, 1
      %s264 = smul.addr %s263, 8
      %s265 = smul.addr %s264, 8
      %s266 = scalar_lea.vmem %s0, %s265
      %p267 = pneg %p39
      %p268 = pneg %p36
      %p269 = pneg %p60
      %p270 = pneg %p57
      %p271 = pneg %p81
      %p272 = pneg %p78
      %p273 = pneg %p102
      %p274 = pneg %p99
      %p275 = pneg %p123
      %p276 = pneg %p120
      %p277 = scmp.lt.s32.totalorder %s18, 1
      %s278 = scalar_select %p277, %s18, 1
      %s279 = smul.addr %s278, 8
      %s280 = scalar_lea.vmem %s5, %s279
      %p281 = pneg %p149
      %p282 = pneg %p146
      %p283 = scmp.lt.s32.totalorder %s18, 1
      %s284 = scalar_select %p283, %s18, 1
      %s285 = smul.addr %s284, 2
      %s286 = smul.addr %s285, 8
      %s287 = scalar_lea.vmem %s6, %s286
      %p288 = pneg %p175
      %p289 = pneg %p172
      %p290 = pneg %p201
      %p291 = pneg %p198
      %p292 = scmp.lt.s32.totalorder %s18, 1
      %s293 = scalar_select %p292, %s18, 1
      %s294 = smul.addr %s293, 2
      %s295 = smul.addr %s294, 8
      %s296 = scalar_lea.vmem %s7, %s295
      %p297 = scmp.lt.s32.totalorder %s18, 1
      %s298 = scalar_select %p297, %s18, 1
      %s299 = smul.addr %s298, 8
      %s300 = smul.addr %s299, 8
      %s301 = scalar_lea.vmem %s0, %s300
      %p302 = scmp.lt.s32.totalorder %s18, 1
      %s303 = scalar_select %p302, %s18, 1
      %s304 = smul.addr %s303, 8
      %s305 = scalar_lea.vmem %s5, %s304
      %p306 = scmp.lt.s32.totalorder %s18, 1
      %s307 = scalar_select %p306, %s18, 1
      %s308 = smul.addr %s307, 2
      %s309 = smul.addr %s308, 8
      %s310 = scalar_lea.vmem %s6, %s309
      %p311 = scmp.lt.s32.totalorder %s18, 1
      %s312 = scalar_select %p311, %s18, 1
      %s313 = smul.addr %s312, 2
      %s314 = smul.addr %s313, 8
      %s315 = scalar_lea.vmem %s7, %s314
      %v316 = vld [vmem:[%s1] sm:$0xff]
      %v317 = vld [vmem:[%s301] sm:$0xff]
      %v318 = vld [vmem:[%s301 + $0x8] sm:$0xff]
      %v319 = vld [vmem:[%s301 + $0x10] sm:$0xff]
      %v320 = vld [vmem:[%s301 + $0x18] sm:$0xff]
      %v321 = vld [vmem:[%s301 + $0x20] sm:$0xff]
      %v322 = vld [vmem:[%s301 + $0x28] sm:$0xff]
      %v323 = vld [vmem:[%s301 + $0x30] sm:$0xff]
      %v324 = vld [vmem:[%s301 + $0x38] sm:$0xff]
      %v325 = vld [vmem:[%s2] sm:$0xff]
      %327 = vset.pattern.permute.xlu0 0
      %328 = vperm.xlu0 %327, %v325
      %v329 = vpop.permute.xlu0 %328
      %vm331 = vcmask 261120
      %v333 = vsel %vm331, %v316, 0
      %335 = vmatprep.subr.mxu0 0.0
      %336 = vmatpush1.msra.mxu0 0.0
      %337 = vmatprep.subr.mxu0 0.0
      %338 = vmatpush1.msra.mxu0 0.0
      %339 = vmatprep.subr.mxu0 0.0
      %340 = vmatpush1.msra.mxu0 0.0
      %341 = vmatprep.subr.mxu0 0.0
      %342 = vmatpush1.msra.mxu0 0.0
      %343 = vmatprep.subr.mxu0 0.0
      %344 = vmatpush1.msra.mxu0 0.0
      %345 = vmatprep.subr.mxu0 0.0
      %346 = vmatpush1.msra.mxu0 0.0
      %347 = vmatprep.subr.mxu0 0.0
      %348 = vmatpush1.msra.mxu0 0.0
      %349 = vmatprep.subr.mxu0 0.0
      %350 = vmatpush1.msra.mxu0 0.0
      %351 = vmatprep.subr.mxu0 0.0
      %352 = vmatpush1.msra.mxu0 0.0
      %353 = vmatprep.subr.mxu0 0.0
      %354 = vmatpush1.msra.mxu0 0.0
      %355 = vmatprep.subr.mxu0 0.0
      %356 = vmatpush1.msra.mxu0 0.0
      %357 = vmatprep.subr.mxu0 0.0
      %358 = vmatpush1.msra.mxu0 0.0
      %359 = vmatprep.subr.mxu0 %v324
      %360 = vmatpush1.msra.mxu0 %v323
      %361 = vmatprep.subr.mxu0 %v322
      %362 = vmatpush1.msra.mxu0 %v321
      %363 = vmatprep.subr.mxu0 %v320
      %364 = vmatpush1.msra.mxu0 %v319
      %365 = vmatprep.subr.mxu0 %v318
      %366 = vmatpush1.msra.mxu0 %v317
      %367 = vmatprep.subr.mxu0 0.0
      %368 = vmatpush2.msra.mxu0 0.0
      %369 = vmatprep.subr.mxu0 0.0
      %370 = vmatpush2.msra.mxu0 0.0
      %371 = vmatprep.subr.mxu0 0.0
      %372 = vmatpush2.msra.mxu0 0.0
      %373 = vmatprep.subr.mxu0 0.0
      %374 = vmatpush2.msra.mxu0 0.0
      %375 = vmatprep.subr.mxu0 0.0
      %376 = vmatpush2.msra.mxu0 0.0
      %377 = vmatprep.subr.mxu0 0.0
      %378 = vmatpush2.msra.mxu0 0.0
      %379 = vmatprep.subr.mxu0 0.0
      %380 = vmatpush2.msra.mxu0 0.0
      %381 = vmatprep.subr.mxu0 0.0
      %382 = vmatpush2.msra.mxu0 0.0
      %383 = vmatprep.subr.mxu0 0.0
      %384 = vmatpush2.msra.mxu0 0.0
      %385 = vmatprep.subr.mxu0 0.0
      %386 = vmatpush2.msra.mxu0 0.0
      %387 = vmatprep.subr.mxu0 0.0
      %388 = vmatpush2.msra.mxu0 0.0
      %389 = vmatprep.subr.mxu0 0.0
      %390 = vmatpush2.msra.mxu0 0.0
      %391 = vmatprep.subr.mxu0 0.0
      %392 = vmatpush2.msra.mxu0 0.0
      %393 = vmatprep.subr.mxu0 0.0
      %394 = vmatpush2.msra.mxu0 0.0
      %395 = vmatprep.subr.mxu0 0.0
      %396 = vmatpush2.msra.mxu0 0.0
      %397 = vmatprep.subr.mxu0 0.0
      %398 = vmatpush2.msra.mxu0 0.0
      %399 = vmatprep.mubr.f32.mxu0 0.0
      %400 = vmatmul.mubr.f32.gmra.mxu0 %v333
      %v401 = vpop.f32.mrf.mxu0
      %v402 = vadd.f32 %v329, %v401
      %v403 = vpop.f32.mrf.mxu0
      %v404 = vadd.f32 %v329, %v403
      %405 = vdwg.mxu0
      %v406 = vadd.f32 %v402, %v404
      %407 = vadd.xlane.f32.xlu0 %v406
      %v408 = vpop.xlane.xlu0 %407
      %v409 = vrot.slane %v408, 4
      %v410 = vadd.f32 %v408, %v409
      %v411 = vrot.slane %v410, 2
      %v412 = vadd.f32 %v410, %v411
      %v413 = vrot.slane %v412, 1
      %v414 = vadd.f32 %v412, %v413
      %v415 = vmul.f32 %v414, 0.00048828125
      %v416 = vsub.f32 %v402, %v415
      %v417 = vsub.f32 %v404, %v415
      %v418 = vmul.f32 %v416, %v416
      %v419 = vmul.f32 %v417, %v417
      %v420 = vadd.f32 %v418, %v419
      %421 = vadd.xlane.f32.xlu0 %v420
      %v422 = vpop.xlane.xlu0 %421
      %v423 = vrot.slane %v422, 4
      %v424 = vadd.f32 %v422, %v423
      %v425 = vrot.slane %v424, 2
      %v426 = vadd.f32 %v424, %v425
      %v427 = vrot.slane %v426, 1
      %v428 = vadd.f32 %v426, %v427
      %v429 = vmul.f32 %v428, 0.00048828125
      %v430 = vadd.f32 %v429, 1e-05
      %v431 = vrsqrt.pop %v430
      %v432 = vmul.f32 %v416, %v431
      %v433 = vmul.f32 %v417, %v431
      %v434 = vld [vmem:[%s3] sm:$0xff]
      %436 = vset.pattern.permute.xlu0 0
      %437 = vperm.xlu0 %436, %v434
      %v438 = vpop.permute.xlu0 %437
      %v440 = vmul.f32 %v432, %v438
      %v441 = vmul.f32 %v433, %v438
      %v442 = vld [vmem:[%s4] sm:$0xff]
      %444 = vset.pattern.permute.xlu0 0
      %445 = vperm.xlu0 %444, %v442
      %v446 = vpop.permute.xlu0 %445
      %v448 = vadd.f32 %v440, %v446
      %v449 = vadd.f32 %v441, %v446
      %v450 = vld [vmem:[%s305] sm:$0xff]
      %452 = vset.pattern.permute.xlu0 0
      %453 = vperm.xlu0 %452, %v450
      %v454 = vpop.permute.xlu0 %453
      %v456 = vmul.f32 %v448, %v454
      %v457 = vmul.f32 %v449, %v454
      %v458 = vld [vmem:[%s310] sm:$0xff]
      %v459 = vld [vmem:[%s310 + $0x8] sm:$0xff]
      %v460 = vadd.f32 %v456, %v458
      %v461 = vadd.f32 %v457, %v459
      %462 = vst [vmem:[%s315] sm:$0xff] %v460
      %463 = vst [vmem:[%s315 + $0x8] sm:$0xff] %v461
      %p464 = scmp.lt.s32.totalorder %s18, 1
      %s465 = scalar_select %p464, %s18, 1
      %s466 = smul.addr %s465, 2
      %s467 = smul.addr %s466, 8
      %s468 = scalar_lea.vmem %s7, %s467
      // Predicated region
      $region49: #{lkd_blocks_pallas.32} parent=47 // pred_check
        %p469 = pneg %p198
      $region50: #{lkd_blocks_pallas.32} parent=47 // pred_check_branch
        %471 = sbr.rel (%p469) target = $region52
      $region51: #{lkd_blocks_pallas.32} parent=47 // pred_region
        _
      $region52: #{lkd_blocks_pallas.32} parent=47 // pred_fallthru
        _
    $region48: #{lkd_blocks_pallas.32} parent=5 // pred_fallthru
      _
    %p472 = scmp.le.s32.totalorder 2, %s13
    // Predicated region
    $region53: #{lkd_blocks_pallas.32} parent=5 // pred_check
      %p473 = pneg %p472
    $region54: #{lkd_blocks_pallas.32} parent=5 // pred_check_branch
      %475 = sbr.rel (%p473) target = $region56
    $region55: #{lkd_blocks_pallas.32} parent=5 // pred_region
      %s476 = ssub.s32 %s13, 2
      // Predicated region
      $region57: #{lkd_blocks_pallas.32} parent=55 // pred_check
        %p477 = pneg %p204
      $region58: #{lkd_blocks_pallas.32} parent=55 // pred_check_branch
        %479 = sbr.rel (%p477) target = $region60
      $region59: #{lkd_blocks_pallas.32} parent=55 // pred_region
        %p480 = scmp.lt.s32.totalorder %s19, 1
        %s481 = scalar_select %p480, %s19, 1
        %s482 = smul.addr %s481, 2
        %s483 = smul.addr %s482, 8
        %s484 = scalar_lea.vmem %s7, %s483
      $region60: #{lkd_blocks_pallas.32} parent=55 // pred_fallthru
        _
    $region56: #{lkd_blocks_pallas.32} parent=5 // pred_fallthru
      _
  $region6: #{lkd_blocks_pallas.32} parent=0 // loop_footer
    %s17 = sadd.s32 1, %s13
  $region7: #{lkd_blocks_pallas.32} parent=0 // loop_footer_branch
    %12 = sbr.rel target = $region3
  $region8: #{lkd_blocks_pallas.32} parent=0 // loop_exit
    _

// kernel: lkd_blocks_pallas.31
$region0: #{lkd_blocks_pallas.31}
  #allocation0 [shape = 'u32[]', space=smem, size = 0x4, offset = 0x4, fixed_abs, tag = 'smem constant byte address 0x4 - core index']
  #allocation1 [shape = 'u32[144,128]{1,0:T(1,128)}', space=vmem, size = 0x12000, scoped, tag = 'internal scratch']
  %s0 = inlined_call_operand.vmem [shape: f32[2,9,32,256], index: 0, kind: input, shape index: {}]
  %s1 = inlined_call_operand.vmem [shape: f32[32,9], index: 1, kind: input, shape index: {}]
  %s2 = inlined_call_operand.vmem [shape: f32[32,1], index: 2, kind: input, shape index: {}]
  %s3 = inlined_call_operand.vmem [shape: f32[2,32,256], index: 3, kind: output, shape index: {}]
  %s4 = sld [smem:[#allocation0]]
  $region45: #{lkd_blocks_pallas.31} parent=0
    _
  %s6 = ssub.s32 1, %s4
  %s7 = scalar_select 0, %s6, %s4
  loop: start=0, step=1, limit=4
  $region2: #{lkd_blocks_pallas.31} parent=0 // loop_pre_header
    _
  $region3: #{lkd_blocks_pallas.31} parent=0 // loop_header
    %s9 = sphi 0, %s13
    %p10 = scmp.ge.s32.totalorder %s9, 4
    %s19 = sphi 0, %s21
    %s22 = sphi 0, %s19
    %s23 = sphi 0, %s22
    %s39 = sphi 0, %s23
    %s43 = sphi 0, %s43
    %s45 = sphi 0, %s43
    %s46 = sphi 0, %s45
    %s60 = sphi 0, %s46
    %s64 = sphi 0, %s64
    %s66 = sphi 0, %s64
    %s67 = sphi 0, %s66
    %s81 = sphi 0, %s67
    %s87 = sphi 0, %s89
    %s90 = sphi 0, %s87
    %s91 = sphi 0, %s90
    %s107 = sphi 0, %s91
  $region4: #{lkd_blocks_pallas.31} parent=0 // loop_header_branch
    %12 = sbr.rel (%p10) target = $region8
  $region5: #{lkd_blocks_pallas.31} parent=0 // loop_body
    %s14 = ssub.s32 %s9, 1
    %s15 = ssub.s32 %s9, 2
    %s16 = sadd.s32 %s9, 1
    %s17 = ssub.s32 %s9, %s16
    %p18 = scmp.eq.s32.totalorder %s17, 0
    %s20 = sadd.s32 %s19, 1
    %s21 = scalar_select %p18, %s19, %s20
    %p24 = pneg %p18
    %p25 = scmp.eq.s32.totalorder %s9, 1
    %p26 = por %p24, %p25
    %p27 = scmp.ne.s32.totalorder %s19, %s22
    %p28 = scmp.eq.s32.totalorder %s9, 0
    %p29 = por %p27, %p28
    %p30 = scmp.ne.s32.totalorder %s19, %s22
    %p31 = scmp.eq.s32.totalorder %s14, 1
    %p32 = por %p30, %p31
    %p33 = scmp.ne.s32.totalorder %s22, %s23
    %p34 = scmp.eq.s32.totalorder %s14, 0
    %p35 = por %p33, %p34
    %p36 = scmp.ne.s32.totalorder %s22, %s23
    %p37 = scmp.eq.s32.totalorder %s15, 1
    %p38 = por %p36, %p37
    %p40 = scmp.ne.s32.totalorder %s23, %s39
    %p41 = scmp.eq.s32.totalorder %s15, 0
    %p42 = por %p40, %p41
    %s44 = sadd.s32 %s43, 1
    %p47 = scmp.eq.s32.totalorder %s9, 1
    %p48 = scmp.ne.s32.totalorder %s43, %s45
    %p49 = scmp.eq.s32.totalorder %s9, 0
    %p50 = por %p48, %p49
    %p51 = scmp.ne.s32.totalorder %s43, %s45
    %p52 = scmp.eq.s32.totalorder %s14, 1
    %p53 = por %p51, %p52
    %p54 = scmp.ne.s32.totalorder %s45, %s46
    %p55 = scmp.eq.s32.totalorder %s14, 0
    %p56 = por %p54, %p55
    %p57 = scmp.ne.s32.totalorder %s45, %s46
    %p58 = scmp.eq.s32.totalorder %s15, 1
    %p59 = por %p57, %p58
    %p61 = scmp.ne.s32.totalorder %s46, %s60
    %p62 = scmp.eq.s32.totalorder %s15, 0
    %p63 = por %p61, %p62
    %s65 = sadd.s32 %s64, 1
    %p68 = scmp.eq.s32.totalorder %s9, 1
    %p69 = scmp.ne.s32.totalorder %s64, %s66
    %p70 = scmp.eq.s32.totalorder %s9, 0
    %p71 = por %p69, %p70
    %p72 = scmp.ne.s32.totalorder %s64, %s66
    %p73 = scmp.eq.s32.totalorder %s14, 1
    %p74 = por %p72, %p73
    %p75 = scmp.ne.s32.totalorder %s66, %s67
    %p76 = scmp.eq.s32.totalorder %s14, 0
    %p77 = por %p75, %p76
    %p78 = scmp.ne.s32.totalorder %s66, %s67
    %p79 = scmp.eq.s32.totalorder %s15, 1
    %p80 = por %p78, %p79
    %p82 = scmp.ne.s32.totalorder %s67, %s81
    %p83 = scmp.eq.s32.totalorder %s15, 0
    %p84 = por %p82, %p83
    %s85 = ssub.s32 %s9, %s16
    %p86 = scmp.eq.s32.totalorder %s85, 0
    %s88 = sadd.s32 %s87, 1
    %s89 = scalar_select %p86, %s87, %s88
    %p92 = pneg %p86
    %p93 = scmp.eq.s32.totalorder %s9, 1
    %p94 = por %p92, %p93
    %p95 = scmp.ne.s32.totalorder %s87, %s90
    %p96 = scmp.eq.s32.totalorder %s9, 0
    %p97 = por %p95, %p96
    %p98 = scmp.ne.s32.totalorder %s87, %s90
    %p99 = scmp.eq.s32.totalorder %s14, 1
    %p100 = por %p98, %p99
    %p101 = scmp.ne.s32.totalorder %s90, %s91
    %p102 = scmp.eq.s32.totalorder %s14, 0
    %p103 = por %p101, %p102
    %p104 = scmp.ne.s32.totalorder %s90, %s91
    %p105 = scmp.eq.s32.totalorder %s15, 1
    %p106 = por %p104, %p105
    %p108 = scmp.ne.s32.totalorder %s91, %s107
    %p109 = scmp.eq.s32.totalorder %s15, 0
    %p110 = por %p108, %p109
    %p111 = scmp.le.s32.totalorder 1, %s9
    %p112 = scmp.lt.s32.totalorder %s9, 3
    %p113 = pnand %p111, %p112
    %p114 = pneg %p113
    // Predicated region
    $region9: #{lkd_blocks_pallas.31} parent=5 // pred_check
      _
    $region10: #{lkd_blocks_pallas.31} parent=5 // pred_check_branch
      %116 = sbr.rel (%p113) target = $region12
    $region11: #{lkd_blocks_pallas.31} parent=5 // pred_region
      %s117 = ssub.s32 %s9, 1
      // Predicated region
      $region13: #{lkd_blocks_pallas.31} parent=11 // pred_check
        %p118 = pneg %p56
      $region14: #{lkd_blocks_pallas.31} parent=11 // pred_check_branch
        %120 = sbr.rel (%p118) target = $region16
      $region15: #{lkd_blocks_pallas.31} parent=11 // pred_region
        _
      $region16: #{lkd_blocks_pallas.31} parent=11 // pred_fallthru
        _
      // Predicated region
      $region17: #{lkd_blocks_pallas.31} parent=11 // pred_check
        %p121 = pneg %p77
      $region18: #{lkd_blocks_pallas.31} parent=11 // pred_check_branch
        %123 = sbr.rel (%p121) target = $region20
      $region19: #{lkd_blocks_pallas.31} parent=11 // pred_region
        _
      $region20: #{lkd_blocks_pallas.31} parent=11 // pred_fallthru
        _
    $region12: #{lkd_blocks_pallas.31} parent=5 // pred_fallthru
      _
    %p124 = scmp.lt.s32.totalorder %s9, 2
    // Predicated region
    $region21: #{lkd_blocks_pallas.31} parent=5 // pred_check
      %p125 = pneg %p124
    $region22: #{lkd_blocks_pallas.31} parent=5 // pred_check_branch
      %127 = sbr.rel (%p125) target = $region24
    $region23: #{lkd_blocks_pallas.31} parent=5 // pred_region
      // Predicated region
      $region25: #{lkd_blocks_pallas.31} parent=23 // pred_check
        %p128 = pneg %p29
      $region26: #{lkd_blocks_pallas.31} parent=23 // pred_check_branch
        %130 = sbr.rel (%p128) target = $region28
      $region27: #{lkd_blocks_pallas.31} parent=23 // pred_region
        %p131 = scmp.lt.s32.totalorder %s9, 1
        %s132 = scalar_select %p131, %s9, 1
        %s133 = smul.addr %s132, 72
        %s134 = smul.addr %s133, 8
        %s135 = scalar_lea.vmem %s0, %s134
      $region28: #{lkd_blocks_pallas.31} parent=23 // pred_fallthru
        _
    $region24: #{lkd_blocks_pallas.31} parent=5 // pred_fallthru
      _
    %p136 = scmp.le.s32.totalorder 1, %s9
    %p137 = scmp.lt.s32.totalorder %s9, 3
    %p138 = pnand %p136, %p137
    %p139 = pneg %p138
    // Predicated region
    $region29: #{lkd_blocks_pallas.31} parent=5 // pred_check
      _
    $region30: #{lkd_blocks_pallas.31} parent=5 // pred_check_branch
      %141 = sbr.rel (%p138) target = $region32
    $region31: #{lkd_blocks_pallas.31} parent=5 // pred_region
      %s142 = ssub.s32 %s9, 1
      %p143 = scmp.lt.s32.totalorder %s14, 1
      %s144 = scalar_select %p143, %s14, 1
      %s145 = smul.addr %s144, 72
      %s146 = smul.addr %s145, 8
      %s147 = scalar_lea.vmem %s0, %s146
      %p148 = pneg %p35
      %p149 = pneg %p32
      %p150 = pneg %p56
      %p151 = pneg %p53
      %p152 = pneg %p77
      %p153 = pneg %p74
      %p154 = pneg %p103
      %p155 = pneg %p100
      %p156 = scmp.lt.s32.totalorder %s14, 1
      %s157 = scalar_select %p156, %s14, 1
      %s158 = smul.addr %s157, 8
      %s159 = smul.addr %s158, 8
      %s160 = scalar_lea.vmem %s3, %s159
      %p161 = scmp.lt.s32.totalorder %s14, 1
      %s162 = scalar_select %p161, %s14, 1
      %s163 = smul.addr %s162, 72
      %s164 = smul.addr %s163, 8
      %s165 = scalar_lea.vmem %s0, %s164
      %p166 = scmp.lt.s32.totalorder %s14, 1
      %s167 = scalar_select %p166, %s14, 1
      %s168 = smul.addr %s167, 8
      %s169 = smul.addr %s168, 8
      %s170 = scalar_lea.vmem %s3, %s169
      %v171 = vld [vmem:[%s165] sm:$0xff]
      %v172 = vld [vmem:[%s165 + $0x8] sm:$0xff]
      %v173 = vld [vmem:[%s165 + $0x10] sm:$0xff]
      %v174 = vld [vmem:[%s165 + $0x18] sm:$0xff]
      %v175 = vld [vmem:[%s165 + $0x20] sm:$0xff]
      %v176 = vld [vmem:[%s165 + $0x28] sm:$0xff]
      %v177 = vld [vmem:[%s165 + $0x30] sm:$0xff]
      %v178 = vld [vmem:[%s165 + $0x38] sm:$0xff]
      %v179 = vld [vmem:[%s1] sm:$0xff]
      %v180 = vld [vmem:[%s1 + $0x8] sm:$0xff]
      %v181 = vld [vmem:[%s1 + $0x10] sm:$0xff]
      %v182 = vld [vmem:[%s1 + $0x18] sm:$0xff]
      %184 = vset.pattern.permute.xlu0 0
      %185 = vperm.xlu0 %184, %v179
      %v186 = vpop.permute.xlu0 %185
      %189 = vset.pattern.permute.xlu0 0
      %190 = vperm.xlu0 %189, %v180
      %v191 = vpop.permute.xlu0 %190
      %194 = vset.pattern.permute.xlu0 0
      %195 = vperm.xlu0 %194, %v181
      %v196 = vpop.permute.xlu0 %195
      %199 = vset.pattern.permute.xlu0 0
      %200 = vperm.xlu0 %199, %v182
      %v201 = vpop.permute.xlu0 %200
      %v203 = vmul.f32 %v171, %v186
      %v204 = vmul.f32 %v172, %v186
      %v205 = vmul.f32 %v173, %v191
      %v206 = vmul.f32 %v174, %v191
      %v207 = vmul.f32 %v175, %v196
      %v208 = vmul.f32 %v176, %v196
      %v209 = vmul.f32 %v177, %v201
      %v210 = vmul.f32 %v178, %v201
      %s211 = scalar_lea.vmem %s165, 64
      %v212 = vld [vmem:[%s211] sm:$0xff]
      %v213 = vld [vmem:[%s211 + $0x8] sm:$0xff]
      %v214 = vld [vmem:[%s211 + $0x10] sm:$0xff]
      %v215 = vld [vmem:[%s211 + $0x18] sm:$0xff]
      %v216 = vld [vmem:[%s211 + $0x20] sm:$0xff]
      %v217 = vld [vmem:[%s211 + $0x28] sm:$0xff]
      %v218 = vld [vmem:[%s211 + $0x30] sm:$0xff]
      %v219 = vld [vmem:[%s211 + $0x38] sm:$0xff]
      %220 = vset.pattern.permute.xlu0 1
      %221 = vperm.xlu0 %220, %v179
      %v222 = vpop.permute.xlu0 %221
      %224 = vset.pattern.permute.xlu0 1
      %225 = vperm.xlu0 %224, %v180
      %v226 = vpop.permute.xlu0 %225
      %228 = vset.pattern.permute.xlu0 1
      %229 = vperm.xlu0 %228, %v181
      %v230 = vpop.permute.xlu0 %229
      %232 = vset.pattern.permute.xlu0 1
      %233 = vperm.xlu0 %232, %v182
      %v234 = vpop.permute.xlu0 %233
      %v236 = vmul.f32 %v212, %v222
      %v237 = vmul.f32 %v213, %v222
      %v238 = vmul.f32 %v214, %v226
      %v239 = vmul.f32 %v215, %v226
      %v240 = vmul.f32 %v216, %v230
      %v241 = vmul.f32 %v217, %v230
      %v242 = vmul.f32 %v218, %v234
      %v243 = vmul.f32 %v219, %v234
      %v244 = vadd.f32 %v203, %v236
      %v245 = vadd.f32 %v204, %v237
      %v246 = vadd.f32 %v205, %v238
      %v247 = vadd.f32 %v206, %v239
      %v248 = vadd.f32 %v207, %v240
      %v249 = vadd.f32 %v208, %v241
      %v250 = vadd.f32 %v209, %v242
      %v251 = vadd.f32 %v210, %v243
      %s252 = scalar_lea.vmem %s165, 128
      %v253 = vld [vmem:[%s252] sm:$0xff]
      %v254 = vld [vmem:[%s252 + $0x8] sm:$0xff]
      %v255 = vld [vmem:[%s252 + $0x10] sm:$0xff]
      %v256 = vld [vmem:[%s252 + $0x18] sm:$0xff]
      %v257 = vld [vmem:[%s252 + $0x20] sm:$0xff]
      %v258 = vld [vmem:[%s252 + $0x28] sm:$0xff]
      %v259 = vld [vmem:[%s252 + $0x30] sm:$0xff]
      %v260 = vld [vmem:[%s252 + $0x38] sm:$0xff]
      %261 = vset.pattern.permute.xlu0 2
      %262 = vperm.xlu0 %261, %v179
      %v263 = vpop.permute.xlu0 %262
      %265 = vset.pattern.permute.xlu0 2
      %266 = vperm.xlu0 %265, %v180
      %v267 = vpop.permute.xlu0 %266
      %269 = vset.pattern.permute.xlu0 2
      %270 = vperm.xlu0 %269, %v181
      %v271 = vpop.permute.xlu0 %270
      %273 = vset.pattern.permute.xlu0 2
      %274 = vperm.xlu0 %273, %v182
      %v275 = vpop.permute.xlu0 %274
      %v277 = vmul.f32 %v253, %v263
      %v278 = vmul.f32 %v254, %v263
      %v279 = vmul.f32 %v255, %v267
      %v280 = vmul.f32 %v256, %v267
      %v281 = vmul.f32 %v257, %v271
      %v282 = vmul.f32 %v258, %v271
      %v283 = vmul.f32 %v259, %v275
      %v284 = vmul.f32 %v260, %v275
      %v285 = vadd.f32 %v244, %v277
      %v286 = vadd.f32 %v245, %v278
      %v287 = vadd.f32 %v246, %v279
      %v288 = vadd.f32 %v247, %v280
      %v289 = vadd.f32 %v248, %v281
      %v290 = vadd.f32 %v249, %v282
      %v291 = vadd.f32 %v250, %v283
      %v292 = vadd.f32 %v251, %v284
      %s293 = scalar_lea.vmem %s165, 192
      %v294 = vld [vmem:[%s293] sm:$0xff]
      %v295 = vld [vmem:[%s293 + $0x8] sm:$0xff]
      %v296 = vld [vmem:[%s293 + $0x10] sm:$0xff]
      %v297 = vld [vmem:[%s293 + $0x18] sm:$0xff]
      %v298 = vld [vmem:[%s293 + $0x20] sm:$0xff]
      %v299 = vld [vmem:[%s293 + $0x28] sm:$0xff]
      %v300 = vld [vmem:[%s293 + $0x30] sm:$0xff]
      %v301 = vld [vmem:[%s293 + $0x38] sm:$0xff]
      %302 = vset.pattern.permute.xlu0 3
      %303 = vperm.xlu0 %302, %v179
      %v304 = vpop.permute.xlu0 %303
      %306 = vset.pattern.permute.xlu0 3
      %307 = vperm.xlu0 %306, %v180
      %v308 = vpop.permute.xlu0 %307
      %310 = vset.pattern.permute.xlu0 3
      %311 = vperm.xlu0 %310, %v181
      %v312 = vpop.permute.xlu0 %311
      %314 = vset.pattern.permute.xlu0 3
      %315 = vperm.xlu0 %314, %v182
      %v316 = vpop.permute.xlu0 %315
      %v318 = vmul.f32 %v294, %v304
      %v319 = vmul.f32 %v295, %v304
      %v320 = vmul.f32 %v296, %v308
      %v321 = vmul.f32 %v297, %v308
      %v322 = vmul.f32 %v298, %v312
      %v323 = vmul.f32 %v299, %v312
      %v324 = vmul.f32 %v300, %v316
      %v325 = vmul.f32 %v301, %v316
      %v326 = vadd.f32 %v285, %v318
      %v327 = vadd.f32 %v286, %v319
      %v328 = vadd.f32 %v287, %v320
      %v329 = vadd.f32 %v288, %v321
      %v330 = vadd.f32 %v289, %v322
      %v331 = vadd.f32 %v290, %v323
      %v332 = vadd.f32 %v291, %v324
      %v333 = vadd.f32 %v292, %v325
      %s334 = scalar_lea.vmem %s165, 256
      %v335 = vld [vmem:[%s334] sm:$0xff]
      %v336 = vld [vmem:[%s334 + $0x8] sm:$0xff]
      %v337 = vld [vmem:[%s334 + $0x10] sm:$0xff]
      %v338 = vld [vmem:[%s334 + $0x18] sm:$0xff]
      %v339 = vld [vmem:[%s334 + $0x20] sm:$0xff]
      %v340 = vld [vmem:[%s334 + $0x28] sm:$0xff]
      %v341 = vld [vmem:[%s334 + $0x30] sm:$0xff]
      %v342 = vld [vmem:[%s334 + $0x38] sm:$0xff]
      %343 = vset.pattern.permute.xlu0 4
      %344 = vperm.xlu0 %343, %v179
      %v345 = vpop.permute.xlu0 %344
      %347 = vset.pattern.permute.xlu0 4
      %348 = vperm.xlu0 %347, %v180
      %v349 = vpop.permute.xlu0 %348
      %351 = vset.pattern.permute.xlu0 4
      %352 = vperm.xlu0 %351, %v181
      %v353 = vpop.permute.xlu0 %352
      %355 = vset.pattern.permute.xlu0 4
      %356 = vperm.xlu0 %355, %v182
      %v357 = vpop.permute.xlu0 %356
      %v359 = vmul.f32 %v335, %v345
      %v360 = vmul.f32 %v336, %v345
      %v361 = vmul.f32 %v337, %v349
      %v362 = vmul.f32 %v338, %v349
      %v363 = vmul.f32 %v339, %v353
      %v364 = vmul.f32 %v340, %v353
      %v365 = vmul.f32 %v341, %v357
      %v366 = vmul.f32 %v342, %v357
      %v367 = vadd.f32 %v326, %v359
      %v368 = vadd.f32 %v327, %v360
      %v369 = vadd.f32 %v328, %v361
      %v370 = vadd.f32 %v329, %v362
      %v371 = vadd.f32 %v330, %v363
      %v372 = vadd.f32 %v331, %v364
      %v373 = vadd.f32 %v332, %v365
      %v374 = vadd.f32 %v333, %v366
      %s375 = scalar_lea.vmem %s165, 320
      %v376 = vld [vmem:[%s375] sm:$0xff]
      %v377 = vld [vmem:[%s375 + $0x8] sm:$0xff]
      %v378 = vld [vmem:[%s375 + $0x10] sm:$0xff]
      %v379 = vld [vmem:[%s375 + $0x18] sm:$0xff]
      %v380 = vld [vmem:[%s375 + $0x20] sm:$0xff]
      %v381 = vld [vmem:[%s375 + $0x28] sm:$0xff]
      %v382 = vld [vmem:[%s375 + $0x30] sm:$0xff]
      %v383 = vld [vmem:[%s375 + $0x38] sm:$0xff]
      %384 = vset.pattern.permute.xlu0 5
      %385 = vperm.xlu0 %384, %v179
      %v386 = vpop.permute.xlu0 %385
      %388 = vset.pattern.permute.xlu0 5
      %389 = vperm.xlu0 %388, %v180
      %v390 = vpop.permute.xlu0 %389
      %392 = vset.pattern.permute.xlu0 5
      %393 = vperm.xlu0 %392, %v181
      %v394 = vpop.permute.xlu0 %393
      %396 = vset.pattern.permute.xlu0 5
      %397 = vperm.xlu0 %396, %v182
      %v398 = vpop.permute.xlu0 %397
      %v400 = vmul.f32 %v376, %v386
      %v401 = vmul.f32 %v377, %v386
      %v402 = vmul.f32 %v378, %v390
      %v403 = vmul.f32 %v379, %v390
      %v404 = vmul.f32 %v380, %v394
      %v405 = vmul.f32 %v381, %v394
      %v406 = vmul.f32 %v382, %v398
      %v407 = vmul.f32 %v383, %v398
      %v408 = vadd.f32 %v367, %v400
      %v409 = vadd.f32 %v368, %v401
      %v410 = vadd.f32 %v369, %v402
      %v411 = vadd.f32 %v370, %v403
      %v412 = vadd.f32 %v371, %v404
      %v413 = vadd.f32 %v372, %v405
      %v414 = vadd.f32 %v373, %v406
      %v415 = vadd.f32 %v374, %v407
      %s416 = scalar_lea.vmem %s165, 384
      %v417 = vld [vmem:[%s416] sm:$0xff]
      %v418 = vld [vmem:[%s416 + $0x8] sm:$0xff]
      %v419 = vld [vmem:[%s416 + $0x10] sm:$0xff]
      %v420 = vld [vmem:[%s416 + $0x18] sm:$0xff]
      %v421 = vld [vmem:[%s416 + $0x20] sm:$0xff]
      %v422 = vld [vmem:[%s416 + $0x28] sm:$0xff]
      %v423 = vld [vmem:[%s416 + $0x30] sm:$0xff]
      %v424 = vld [vmem:[%s416 + $0x38] sm:$0xff]
      %425 = vset.pattern.permute.xlu0 6
      %426 = vperm.xlu0 %425, %v179
      %v427 = vpop.permute.xlu0 %426
      %429 = vset.pattern.permute.xlu0 6
      %430 = vperm.xlu0 %429, %v180
      %v431 = vpop.permute.xlu0 %430
      %433 = vset.pattern.permute.xlu0 6
      %434 = vperm.xlu0 %433, %v181
      %v435 = vpop.permute.xlu0 %434
      %437 = vset.pattern.permute.xlu0 6
      %438 = vperm.xlu0 %437, %v182
      %v439 = vpop.permute.xlu0 %438
      %v441 = vmul.f32 %v417, %v427
      %v442 = vmul.f32 %v418, %v427
      %v443 = vmul.f32 %v419, %v431
      %v444 = vmul.f32 %v420, %v431
      %v445 = vmul.f32 %v421, %v435
      %v446 = vmul.f32 %v422, %v435
      %v447 = vmul.f32 %v423, %v439
      %v448 = vmul.f32 %v424, %v439
      %v449 = vadd.f32 %v408, %v441
      %v450 = vadd.f32 %v409, %v442
      %v451 = vadd.f32 %v410, %v443
      %v452 = vadd.f32 %v411, %v444
      %v453 = vadd.f32 %v412, %v445
      %v454 = vadd.f32 %v413, %v446
      %v455 = vadd.f32 %v414, %v447
      %v456 = vadd.f32 %v415, %v448
      %s457 = scalar_lea.vmem %s165, 448
      %v458 = vld [vmem:[%s457] sm:$0xff]
      %v459 = vld [vmem:[%s457 + $0x8] sm:$0xff]
      %v460 = vld [vmem:[%s457 + $0x10] sm:$0xff]
      %v461 = vld [vmem:[%s457 + $0x18] sm:$0xff]
      %v462 = vld [vmem:[%s457 + $0x20] sm:$0xff]
      %v463 = vld [vmem:[%s457 + $0x28] sm:$0xff]
      %v464 = vld [vmem:[%s457 + $0x30] sm:$0xff]
      %v465 = vld [vmem:[%s457 + $0x38] sm:$0xff]
      %466 = vset.pattern.permute.xlu0 7
      %467 = vperm.xlu0 %466, %v179
      %v468 = vpop.permute.xlu0 %467
      %470 = vset.pattern.permute.xlu0 7
      %471 = vperm.xlu0 %470, %v180
      %v472 = vpop.permute.xlu0 %471
      %474 = vset.pattern.permute.xlu0 7
      %475 = vperm.xlu0 %474, %v181
      %v476 = vpop.permute.xlu0 %475
      %478 = vset.pattern.permute.xlu0 7
      %479 = vperm.xlu0 %478, %v182
      %v480 = vpop.permute.xlu0 %479
      %v482 = vmul.f32 %v458, %v468
      %v483 = vmul.f32 %v459, %v468
      %v484 = vmul.f32 %v460, %v472
      %v485 = vmul.f32 %v461, %v472
      %v486 = vmul.f32 %v462, %v476
      %v487 = vmul.f32 %v463, %v476
      %v488 = vmul.f32 %v464, %v480
      %v489 = vmul.f32 %v465, %v480
      %v490 = vadd.f32 %v449, %v482
      %v491 = vadd.f32 %v450, %v483
      %v492 = vadd.f32 %v451, %v484
      %v493 = vadd.f32 %v452, %v485
      %v494 = vadd.f32 %v453, %v486
      %v495 = vadd.f32 %v454, %v487
      %v496 = vadd.f32 %v455, %v488
      %v497 = vadd.f32 %v456, %v489
      %s498 = scalar_lea.vmem %s165, 512
      %v499 = vld [vmem:[%s498] sm:$0xff]
      %v500 = vld [vmem:[%s498 + $0x8] sm:$0xff]
      %v501 = vld [vmem:[%s498 + $0x10] sm:$0xff]
      %v502 = vld [vmem:[%s498 + $0x18] sm:$0xff]
      %v503 = vld [vmem:[%s498 + $0x20] sm:$0xff]
      %v504 = vld [vmem:[%s498 + $0x28] sm:$0xff]
      %v505 = vld [vmem:[%s498 + $0x30] sm:$0xff]
      %v506 = vld [vmem:[%s498 + $0x38] sm:$0xff]
      %507 = vset.pattern.permute.xlu0 8
      %508 = vperm.xlu0 %507, %v179
      %v509 = vpop.permute.xlu0 %508
      %511 = vset.pattern.permute.xlu0 8
      %512 = vperm.xlu0 %511, %v180
      %v513 = vpop.permute.xlu0 %512
      %515 = vset.pattern.permute.xlu0 8
      %516 = vperm.xlu0 %515, %v181
      %v517 = vpop.permute.xlu0 %516
      %519 = vset.pattern.permute.xlu0 8
      %520 = vperm.xlu0 %519, %v182
      %v521 = vpop.permute.xlu0 %520
      %v523 = vmul.f32 %v499, %v509
      %v524 = vmul.f32 %v500, %v509
      %v525 = vmul.f32 %v501, %v513
      %v526 = vmul.f32 %v502, %v513
      %v527 = vmul.f32 %v503, %v517
      %v528 = vmul.f32 %v504, %v517
      %v529 = vmul.f32 %v505, %v521
      %v530 = vmul.f32 %v506, %v521
      %v531 = vadd.f32 %v490, %v523
      %v532 = vadd.f32 %v491, %v524
      %v533 = vadd.f32 %v492, %v525
      %v534 = vadd.f32 %v493, %v526
      %v535 = vadd.f32 %v494, %v527
      %v536 = vadd.f32 %v495, %v528
      %v537 = vadd.f32 %v496, %v529
      %v538 = vadd.f32 %v497, %v530
      %v539 = vld [vmem:[%s2] sm:$0xff]
      %v540 = vld [vmem:[%s2 + $0x8] sm:$0xff]
      %v541 = vld [vmem:[%s2 + $0x10] sm:$0xff]
      %v542 = vld [vmem:[%s2 + $0x18] sm:$0xff]
      %544 = vset.pattern.permute.xlu0 0
      %545 = vperm.xlu0 %544, %v539
      %v546 = vpop.permute.xlu0 %545
      %549 = vset.pattern.permute.xlu0 0
      %550 = vperm.xlu0 %549, %v540
      %v551 = vpop.permute.xlu0 %550
      %554 = vset.pattern.permute.xlu0 0
      %555 = vperm.xlu0 %554, %v541
      %v556 = vpop.permute.xlu0 %555
      %559 = vset.pattern.permute.xlu0 0
      %560 = vperm.xlu0 %559, %v542
      %v561 = vpop.permute.xlu0 %560
      %v563 = vadd.f32 %v531, %v546
      %v564 = vadd.f32 %v532, %v546
      %v565 = vadd.f32 %v533, %v551
      %v566 = vadd.f32 %v534, %v551
      %v567 = vadd.f32 %v535, %v556
      %v568 = vadd.f32 %v536, %v556
      %v569 = vadd.f32 %v537, %v561
      %v570 = vadd.f32 %v538, %v561
      %v571 = vmax.f32 %v563, 0.0
      %v572 = vmax.f32 %v564, 0.0
      %v573 = vmax.f32 %v565, 0.0
      %v574 = vmax.f32 %v566, 0.0
      %v575 = vmax.f32 %v567, 0.0
      %v576 = vmax.f32 %v568, 0.0
      %v577 = vmax.f32 %v569, 0.0
      %v578 = vmax.f32 %v570, 0.0
      %579 = vst [vmem:[%s170] sm:$0xff] %v571
      %580 = vst [vmem:[%s170 + $0x8] sm:$0xff] %v572
      %581 = vst [vmem:[%s170 + $0x10] sm:$0xff] %v573
      %582 = vst [vmem:[%s170 + $0x18] sm:$0xff] %v574
      %583 = vst [vmem:[%s170 + $0x20] sm:$0xff] %v575
      %584 = vst [vmem:[%s170 + $0x28] sm:$0xff] %v576
      %585 = vst [vmem:[%s170 + $0x30] sm:$0xff] %v577
      %586 = vst [vmem:[%s170 + $0x38] sm:$0xff] %v578
      %p587 = scmp.lt.s32.totalorder %s14, 1
      %s588 = scalar_select %p587, %s14, 1
      %s589 = smul.addr %s588, 8
      %s590 = smul.addr %s589, 8
      %s591 = scalar_lea.vmem %s3, %s590
      // Predicated region
      $region33: #{lkd_blocks_pallas.31} parent=31 // pred_check
        %p592 = pneg %p100
      $region34: #{lkd_blocks_pallas.31} parent=31 // pred_check_branch
        %594 = sbr.rel (%p592) target = $region36
      $region35: #{lkd_blocks_pallas.31} parent=31 // pred_region
        _
      $region36: #{lkd_blocks_pallas.31} parent=31 // pred_fallthru
        _
    $region32: #{lkd_blocks_pallas.31} parent=5 // pred_fallthru
      _
    %p595 = scmp.le.s32.totalorder 2, %s9
    // Predicated region
    $region37: #{lkd_blocks_pallas.31} parent=5 // pred_check
      %p596 = pneg %p595
    $region38: #{lkd_blocks_pallas.31} parent=5 // pred_check_branch
      %598 = sbr.rel (%p596) target = $region40
    $region39: #{lkd_blocks_pallas.31} parent=5 // pred_region
      %s599 = ssub.s32 %s9, 2
      // Predicated region
      $region41: #{lkd_blocks_pallas.31} parent=39 // pred_check
        %p600 = pneg %p106
      $region42: #{lkd_blocks_pallas.31} parent=39 // pred_check_branch
        %602 = sbr.rel (%p600) target = $region44
      $region43: #{lkd_blocks_pallas.31} parent=39 // pred_region
        %p603 = scmp.lt.s32.totalorder %s15, 1
        %s604 = scalar_select %p603, %s15, 1
        %s605 = smul.addr %s604, 8
        %s606 = smul.addr %s605, 8
        %s607 = scalar_lea.vmem %s3, %s606
      $region44: #{lkd_blocks_pallas.31} parent=39 // pred_fallthru
        _
    $region40: #{lkd_blocks_pallas.31} parent=5 // pred_fallthru
      _
  $region6: #{lkd_blocks_pallas.31} parent=0 // loop_footer
    %s13 = sadd.s32 1, %s9
  $region7: #{lkd_blocks_pallas.31} parent=0 // loop_footer_branch
    %8 = sbr.rel target = $region3
  $region8: #{lkd_blocks_pallas.31} parent=0 // loop_exit
    _

</llo_original>
